<compile_context>
chip_gen: v7x
topology: tpu7x:2x2x1
jax: 0.10.0
libtpu: 0.0.40
codegen_flags: <defaults>
</compile_context>

<pallas_src>
import jax
import jax.numpy as jnp
from jax.experimental import pallas as pl
from jax.experimental.pallas import tpu as pltpu

_BN_EPS = 1e-5
_C_PAD = 128          # channel lanes (zero-padded)
_CLS_PAD = 128        # class lanes   (zero-padded)
_MATMUL_DTYPE = jnp.bfloat16   # MXU input dtype (set to jnp.float32 for exact)

_VMEM = pl.BlockSpec(memory_space=pltpu.MemorySpace.VMEM)


# ----------------------------------------------------------------------------
# The single fused kernel
# ----------------------------------------------------------------------------
def _resnet_fused_kernel(xs_ref, w2_ref, g1_ref, b1_ref,
                         wb1_ref, gb1_ref, bb1_ref,
                         wb2_ref, gb2_ref, bb2_ref,
                         wl_ref, bl_ref,
                         o_ref, pad_ref):
    f32 = jnp.float32
    n = xs_ref.shape[0]
    ho, wo = xs_ref.shape[1] - 1, xs_ref.shape[2] - 1       # conv1 output H, W
    hh, wh = ho // 2, wo // 2                               # post-maxpool H, W
    cp = w2_ref.shape[-1]
    m1 = n * ho * wo                                        # conv1 rows
    m2 = n * hh * wh                                        # block rows
    hw = hh * wh

    # ---- BatchNorm(+residual)+ReLU epilogue.  Batch stats via MXU matmuls
    #      (ones @ y, ones @ y*y); biased variance; rsqrt on the EUP. --------
    def bn_relu(y, rows, g_ref, b_ref, res=None):
        ones = jnp.ones((1, rows), f32)
        ssum = jnp.dot(ones, y, preferred_element_type=f32)          # (1, cp)
        ssq = jnp.dot(ones, y * y, preferred_element_type=f32)       # (1, cp)
        mean = ssum * (1.0 / rows)
        var = ssq * (1.0 / rows) - mean * mean                       # biased
        out = g_ref[...] * ((y - mean) * jax.lax.rsqrt(var + _BN_EPS)) + b_ref[...]
        if res is not None:
            out = out + res
        return jnp.maximum(out, 0.0)

    # ---- conv1 (3x3, stride 2, pad 1) as 4 shifted sub-matmuls over the
    #      space-to-depth parity planes; f32 accumulation. -------------------
    xs = xs_ref[...].astype(_MATMUL_DTYPE)                  # (n, ho+1, wo+1, 4)
    acc1 = jnp.zeros((m1, cp), f32)
    for s_idx, (ay, ax) in enumerate(((0, 0), (0, 1), (1, 0), (1, 1))):
        tap = xs[:, ay:ay + ho, ax:ax + wo, :].reshape(m1, xs.shape[-1])
        acc1 = acc1 + jnp.dot(tap, w2_ref[s_idx], preferred_element_type=f32)
    y1 = bn_relu(acc1, m1, g1_ref, b1_ref)                  # (m1, cp)

    # ---- fused 2x2 max-pool (floor mode), all register/VMEM resident -------
    t = y1.reshape(n * ho * wh, 2, cp)
    t = jnp.maximum(t[:, 0, :], t[:, 1, :])                 # reduce over j_lo
    t = t.reshape(n * hh, 2, wh, cp)
    t = jnp.maximum(t[:, 0], t[:, 1])                       # reduce over i_lo
    h0 = t.reshape(m2, cp)                                  # block input / residual

    # ---- residual block: two 3x3 stride-1 convs as 9 shifted sub-matmuls
    #      over a zero-padded VMEM scratch tile. ------------------------------
    def conv3x3(wt_ref):
        acc = jnp.zeros((m2, cp), f32)
        for tp in range(9):
            dy, dx = tp // 3, tp % 3
            patch = pad_ref[:, dy:dy + hh, dx:dx + wh, :].reshape(m2, cp)
            acc = acc + jnp.dot(patch, wt_ref[tp], preferred_element_type=f32)
        return acc

    pad_ref[...] = jnp.zeros_like(pad_ref)                  # zero halo once
    pad_ref[:, 1:1 + hh, 1:1 + wh, :] = h0.reshape(n, hh, wh, cp).astype(pad_ref.dtype)
    h1 = bn_relu(conv3x3(wb1_ref), m2, gb1_ref, bb1_ref)

    pad_ref[:, 1:1 + hh, 1:1 + wh, :] = h1.reshape(n, hh, wh, cp).astype(pad_ref.dtype)
    h2 = bn_relu(conv3x3(wb2_ref), m2, gb2_ref, bb2_ref, res=h0)

    # ---- AdaptiveAvgPool2d(1) as an MXU matmul, then the linear head --------
    row_id = jax.lax.broadcasted_iota(jnp.int32, (n, m2), 0)
    col_id = jax.lax.broadcasted_iota(jnp.int32, (n, m2), 1)
    in_img = (col_id >= row_id * hw) & (col_id < (row_id + 1) * hw)
    pool_mat = jnp.where(in_img, 1.0 / hw, 0.0).astype(f32)           # (n, m2)
    pooled = jnp.dot(pool_mat, h2, preferred_element_type=f32)        # (n, cp)
    o_ref[...] = jnp.dot(pooled, wl_ref[...],
                         preferred_element_type=f32) + bl_ref[...]    # (n, CLS_PAD)


# ----------------------------------------------------------------------------
# Parameter re-layout helpers (wrapper-side, layout glue only)
# ----------------------------------------------------------------------------
def _conv_w_taps(w):
    """torch (Cout, Cin, 3, 3) -> (9, C_PAD, C_PAD) tap-major matmul weights."""
    co, ci = w.shape[0], w.shape[1]
    wt = jnp.transpose(w, (2, 3, 1, 0)).reshape(9, ci, co)
    wt = jnp.pad(wt, ((0, 0), (0, _C_PAD - ci), (0, _C_PAD - co)))
    return wt.astype(_MATMUL_DTYPE)


def _conv1_shift_weights(w1):
    """torch (C, 1, 3, 3) stride-2 weight -> (4 shifts, 4 parities, C_PAD)."""
    creal = w1.shape[0]
    w2 = jnp.zeros((4, 4, _C_PAD), jnp.float32)
    for s, (ay, ax) in enumerate(((0, 0), (0, 1), (1, 0), (1, 1))):
        for p, (by, bx) in enumerate(((0, 0), (0, 1), (1, 0), (1, 1))):
            dy, dx = 2 * ay + by, 2 * ax + bx
            if dy <= 2 and dx <= 2:
                w2 = w2.at[s, p, :creal].set(w1[:, 0, dy, dx])
    return w2.astype(_MATMUL_DTYPE)


def _vec(v):
    """(C,) -> (1, C_PAD) f32, zero-padded."""
    return jnp.pad(v.astype(jnp.float32), (0, _C_PAD - v.shape[0])).reshape(1, _C_PAD)


# ----------------------------------------------------------------------------
# Full ResNet forward
# ----------------------------------------------------------------------------
def resnet_forward(x_nchw, params):
    n, cin, hgt, wid = x_nchw.shape
    assert cin == 1, "module spec: conv1 expects a single input channel"
    assert hgt % 4 == 0 and wid % 4 == 0, "H, W must be divisible by 4"
    creal = params["conv1_w"].shape[0]
    ncls = params["lin_w"].shape[0]

    # space-to-depth parity planes of the zero-padded input (bijective
    # re-layout; NOT im2col): x_s2d[n,a,b,p] = xpad[n, 2a + p//2, 2b + p%2]
    xp = jnp.pad(x_nchw[:, 0].astype(jnp.float32), ((0, 0), (1, 1), (1, 1)))
    x_s2d = jnp.stack([xp[:, by::2, bx::2] for by in (0, 1) for bx in (0, 1)],
                      axis=-1)                              # (n, H/2+1, W/2+1, 4)

    w2 = _conv1_shift_weights(params["conv1_w"])
    wb1 = _conv_w_taps(params["blk_conv1_w"])
    wb2 = _conv_w_taps(params["blk_conv2_w"])
    wl = jnp.pad(params["lin_w"].T.astype(jnp.float32),
                 ((0, _C_PAD - creal), (0, _CLS_PAD - ncls)))
    bl = jnp.pad(params["lin_b"].astype(jnp.float32),
                 (0, _CLS_PAD - ncls)).reshape(1, _CLS_PAD)

    hp, wp = hgt // 4, wid // 4                              # post-maxpool H, W

    logits_pad = pl.pallas_call(
        _resnet_fused_kernel,
        out_shape=jax.ShapeDtypeStruct((n, _CLS_PAD), jnp.float32),
        in_specs=[_VMEM] * 12,
        out_specs=_VMEM,
        scratch_shapes=[pltpu.VMEM((n, hp + 2, wp + 2, _C_PAD), _MATMUL_DTYPE)],
        compiler_params=pltpu.CompilerParams(vmem_limit_bytes=32 * 1024 * 1024),
    )(x_s2d, w2,
      _vec(params["bn1_g"]), _vec(params["bn1_b"]),
      wb1, _vec(params["blk_bn1_g"]), _vec(params["blk_bn1_b"]),
      wb2, _vec(params["blk_bn2_g"]), _vec(params["blk_bn2_b"]),
      wl, bl)
    return logits_pad[:, :ncls]


# ----------------------------------------------------------------------------
if __name__ == "__main__":
    C, NUM_CLASSES = 4, 10
    ks = jax.random.split(jax.random.PRNGKey(0), 10)
    params = {
        "conv1_w":     0.3 * jax.random.normal(ks[0], (C, 1, 3, 3), jnp.float32),
        "bn1_g":       1.0 + 0.1 * jax.random.normal(ks[1], (C,), jnp.float32),
        "bn1_b":       0.1 * jax.random.normal(ks[2], (C,), jnp.float32),
        "blk_conv1_w": 0.3 * jax.random.normal(ks[3], (C, C, 3, 3), jnp.float32),
        "blk_bn1_g":   1.0 + 0.1 * jax.random.normal(ks[4], (C,), jnp.float32),
        "blk_bn1_b":   0.1 * jax.random.normal(ks[5], (C,), jnp.float32),
        "blk_conv2_w": 0.3 * jax.random.normal(ks[6], (C, C, 3, 3), jnp.float32),
        "blk_bn2_g":   1.0 + 0.1 * jax.random.normal(ks[7], (C,), jnp.float32),
        "blk_bn2_b":   0.1 * jax.random.normal(ks[8], (C,), jnp.float32),
        "lin_w":       0.3 * jax.random.normal(ks[9], (NUM_CLASSES, C), jnp.float32),
        "lin_b":       jnp.zeros((NUM_CLASSES,), jnp.float32),
    }

    x = jax.random.normal(jax.random.PRNGKey(1), (2, 1, 16, 16), jnp.float32)

    out = jax.jit(resnet_forward)(x, params)
    out = jax.block_until_ready(out)
    assert out.shape == (2, NUM_CLASSES), out.shape
    print("KERNEL_OK")
</pallas_src>

<mosaic_0001>
module attributes {stable_mosaic.version = 11 : i64} {
  func.func @_resnet_fused_kernel(%arg0: memref<2x9x9x4xf32, #tpu.memory_space<vmem>>, %arg1: memref<4x4x128xbf16, #tpu.memory_space<vmem>>, %arg2: memref<1x128xf32, #tpu.memory_space<vmem>>, %arg3: memref<1x128xf32, #tpu.memory_space<vmem>>, %arg4: memref<9x128x128xbf16, #tpu.memory_space<vmem>>, %arg5: memref<1x128xf32, #tpu.memory_space<vmem>>, %arg6: memref<1x128xf32, #tpu.memory_space<vmem>>, %arg7: memref<9x128x128xbf16, #tpu.memory_space<vmem>>, %arg8: memref<1x128xf32, #tpu.memory_space<vmem>>, %arg9: memref<1x128xf32, #tpu.memory_space<vmem>>, %arg10: memref<128x128xf32, #tpu.memory_space<vmem>>, %arg11: memref<1x128xf32, #tpu.memory_space<vmem>>, %arg12: memref<2x128xf32, #tpu.memory_space<vmem>>, %arg13: memref<2x6x6x128xbf16, #tpu.memory_space<vmem>>) attributes {dimension_semantics = [], scalar_prefetch = 0 : i64, scratch_operands = 1 : i64, tpu.core_type = #tpu.core_type<tc>} {
    %c0 = arith.constant 0 : index
    %c0_0 = arith.constant 0 : index
    %c0_1 = arith.constant 0 : index
    %c0_2 = arith.constant 0 : index
    %0 = vector.load %arg0[%c0, %c0_0, %c0_1, %c0_2] : memref<2x9x9x4xf32, #tpu.memory_space<vmem>>, vector<2x9x9x4xf32>
    %1 = arith.truncf %0 : vector<2x9x9x4xf32> to vector<2x9x9x4xbf16>
    %cst = arith.constant 0.000000e+00 : f32
    %2 = vector.broadcast %cst : f32 to vector<128x128xf32>
    %3 = vector.extract_strided_slice %1 {offsets = [0, 0, 0, 0], sizes = [2, 8, 8, 4], strides = [1, 1, 1, 1]} : vector<2x9x9x4xbf16> to vector<2x8x8x4xbf16>
    %4 = vector.shape_cast %3 : vector<2x8x8x4xbf16> to vector<128x4xbf16>
    %c0_3 = arith.constant 0 : index
    %c0_4 = arith.constant 0 : index
    %c0_5 = arith.constant 0 : index
    %5 = vector.load %arg1[%c0_3, %c0_4, %c0_5] : memref<4x4x128xbf16, #tpu.memory_space<vmem>>, vector<1x4x128xbf16>
    %6 = vector.shape_cast %5 : vector<1x4x128xbf16> to vector<4x128xbf16>
    %cst_6 = arith.constant dense<0.000000e+00> : vector<128x128xf32>
    %7 = tpu.matmul %4, %6, %cst_6 {dimension_numbers = #tpu.dot_dimension_numbers<[1], [0], [0], [1], [0, 0, 1, 1], [], []>} : vector<128x4xbf16>, vector<4x128xbf16>, vector<128x128xf32> -> vector<128x128xf32>
    %8 = arith.addf %2, %7 : vector<128x128xf32>
    %9 = vector.extract_strided_slice %1 {offsets = [0, 0, 1, 0], sizes = [2, 8, 8, 4], strides = [1, 1, 1, 1]} : vector<2x9x9x4xbf16> to vector<2x8x8x4xbf16>
    %10 = vector.shape_cast %9 : vector<2x8x8x4xbf16> to vector<128x4xbf16>
    %c1 = arith.constant 1 : index
    %c0_7 = arith.constant 0 : index
    %c0_8 = arith.constant 0 : index
    %11 = vector.load %arg1[%c1, %c0_7, %c0_8] : memref<4x4x128xbf16, #tpu.memory_space<vmem>>, vector<1x4x128xbf16>
    %12 = vector.shape_cast %11 : vector<1x4x128xbf16> to vector<4x128xbf16>
    %cst_9 = arith.constant dense<0.000000e+00> : vector<128x128xf32>
    %13 = tpu.matmul %10, %12, %cst_9 {dimension_numbers = #tpu.dot_dimension_numbers<[1], [0], [0], [1], [0, 0, 1, 1], [], []>} : vector<128x4xbf16>, vector<4x128xbf16>, vector<128x128xf32> -> vector<128x128xf32>
    %14 = arith.addf %8, %13 : vector<128x128xf32>
    %15 = vector.extract_strided_slice %1 {offsets = [0, 1, 0, 0], sizes = [2, 8, 8, 4], strides = [1, 1, 1, 1]} : vector<2x9x9x4xbf16> to vector<2x8x8x4xbf16>
    %16 = vector.shape_cast %15 : vector<2x8x8x4xbf16> to vector<128x4xbf16>
    %c2 = arith.constant 2 : index
    %c0_10 = arith.constant 0 : index
    %c0_11 = arith.constant 0 : index
    %17 = vector.load %arg1[%c2, %c0_10, %c0_11] : memref<4x4x128xbf16, #tpu.memory_space<vmem>>, vector<1x4x128xbf16>
    %18 = vector.shape_cast %17 : vector<1x4x128xbf16> to vector<4x128xbf16>
    %cst_12 = arith.constant dense<0.000000e+00> : vector<128x128xf32>
    %19 = tpu.matmul %16, %18, %cst_12 {dimension_numbers = #tpu.dot_dimension_numbers<[1], [0], [0], [1], [0, 0, 1, 1], [], []>} : vector<128x4xbf16>, vector<4x128xbf16>, vector<128x128xf32> -> vector<128x128xf32>
    %20 = arith.addf %14, %19 : vector<128x128xf32>
    %21 = vector.extract_strided_slice %1 {offsets = [0, 1, 1, 0], sizes = [2, 8, 8, 4], strides = [1, 1, 1, 1]} : vector<2x9x9x4xbf16> to vector<2x8x8x4xbf16>
    %22 = vector.shape_cast %21 : vector<2x8x8x4xbf16> to vector<128x4xbf16>
    %c3 = arith.constant 3 : index
    %c0_13 = arith.constant 0 : index
    %c0_14 = arith.constant 0 : index
    %23 = vector.load %arg1[%c3, %c0_13, %c0_14] : memref<4x4x128xbf16, #tpu.memory_space<vmem>>, vector<1x4x128xbf16>
    %24 = vector.shape_cast %23 : vector<1x4x128xbf16> to vector<4x128xbf16>
    %cst_15 = arith.constant dense<0.000000e+00> : vector<128x128xf32>
    %25 = tpu.matmul %22, %24, %cst_15 {dimension_numbers = #tpu.dot_dimension_numbers<[1], [0], [0], [1], [0, 0, 1, 1], [], []>} : vector<128x4xbf16>, vector<4x128xbf16>, vector<128x128xf32> -> vector<128x128xf32>
    %26 = arith.addf %20, %25 : vector<128x128xf32>
    %cst_16 = arith.constant 1.000000e+00 : f32
    %27 = vector.broadcast %cst_16 : f32 to vector<1x128xf32>
    %cst_17 = arith.constant dense<0.000000e+00> : vector<1x128xf32>
    %28 = tpu.matmul %27, %26, %cst_17 {dimension_numbers = #tpu.dot_dimension_numbers<[1], [0], [0], [1], [0, 0, 1, 1], [], []>} : vector<1x128xf32>, vector<128x128xf32>, vector<1x128xf32> -> vector<1x128xf32>
    %29 = arith.mulf %26, %26 : vector<128x128xf32>
    %cst_18 = arith.constant dense<0.000000e+00> : vector<1x128xf32>
    %30 = tpu.matmul %27, %29, %cst_18 {dimension_numbers = #tpu.dot_dimension_numbers<[1], [0], [0], [1], [0, 0, 1, 1], [], []>} : vector<1x128xf32>, vector<128x128xf32>, vector<1x128xf32> -> vector<1x128xf32>
    %cst_19 = arith.constant 7.812500e-03 : f32
    %31 = vector.broadcast %cst_19 : f32 to vector<1x128xf32>
    %32 = arith.mulf %28, %31 : vector<1x128xf32>
    %cst_20 = arith.constant 7.812500e-03 : f32
    %33 = vector.broadcast %cst_20 : f32 to vector<1x128xf32>
    %34 = arith.mulf %30, %33 : vector<1x128xf32>
    %35 = arith.mulf %32, %32 : vector<1x128xf32>
    %36 = arith.subf %34, %35 : vector<1x128xf32>
    %c0_21 = arith.constant 0 : index
    %c0_22 = arith.constant 0 : index
    %37 = vector.load %arg2[%c0_21, %c0_22] : memref<1x128xf32, #tpu.memory_space<vmem>>, vector<1x128xf32>
    %38 = vector.broadcast %32 : vector<1x128xf32> to vector<128x128xf32>
    %39 = arith.subf %26, %38 : vector<128x128xf32>
    %cst_23 = arith.constant 9.99999974E-6 : f32
    %40 = vector.broadcast %cst_23 : f32 to vector<1x128xf32>
    %41 = arith.addf %36, %40 : vector<1x128xf32>
    %42 = math.rsqrt %41 : vector<1x128xf32>
    %43 = vector.broadcast %42 : vector<1x128xf32> to vector<128x128xf32>
    %44 = arith.mulf %39, %43 : vector<128x128xf32>
    %45 = vector.broadcast %37 : vector<1x128xf32> to vector<128x128xf32>
    %46 = arith.mulf %45, %44 : vector<128x128xf32>
    %c0_24 = arith.constant 0 : index
    %c0_25 = arith.constant 0 : index
    %47 = vector.load %arg3[%c0_24, %c0_25] : memref<1x128xf32, #tpu.memory_space<vmem>>, vector<1x128xf32>
    %48 = vector.broadcast %47 : vector<1x128xf32> to vector<128x128xf32>
    %49 = arith.addf %46, %48 : vector<128x128xf32>
    %cst_26 = arith.constant 0.000000e+00 : f32
    %50 = vector.broadcast %cst_26 : f32 to vector<128x128xf32>
    %51 = arith.maximumf %49, %50 : vector<128x128xf32>
    %52 = vector.shape_cast %51 : vector<128x128xf32> to vector<64x2x128xf32>
    %53 = vector.extract_strided_slice %52 {offsets = [0, 0, 0], sizes = [64, 1, 128], strides = [1, 1, 1]} : vector<64x2x128xf32> to vector<64x1x128xf32>
    %54 = vector.shape_cast %53 : vector<64x1x128xf32> to vector<64x128xf32>
    %55 = vector.extract_strided_slice %52 {offsets = [0, 1, 0], sizes = [64, 1, 128], strides = [1, 1, 1]} : vector<64x2x128xf32> to vector<64x1x128xf32>
    %56 = vector.shape_cast %55 : vector<64x1x128xf32> to vector<64x128xf32>
    %57 = arith.maximumf %54, %56 : vector<64x128xf32>
    %58 = vector.shape_cast %57 : vector<64x128xf32> to vector<8x2x4x128xf32>
    %59 = vector.extract_strided_slice %58 {offsets = [0, 0, 0, 0], sizes = [8, 1, 4, 128], strides = [1, 1, 1, 1]} : vector<8x2x4x128xf32> to vector<8x1x4x128xf32>
    %60 = vector.shape_cast %59 : vector<8x1x4x128xf32> to vector<8x4x128xf32>
    %61 = vector.extract_strided_slice %58 {offsets = [0, 1, 0, 0], sizes = [8, 1, 4, 128], strides = [1, 1, 1, 1]} : vector<8x2x4x128xf32> to vector<8x1x4x128xf32>
    %62 = vector.shape_cast %61 : vector<8x1x4x128xf32> to vector<8x4x128xf32>
    %63 = arith.maximumf %60, %62 : vector<8x4x128xf32>
    %64 = vector.shape_cast %63 : vector<8x4x128xf32> to vector<32x128xf32>
    %cst_27 = arith.constant 0.000000e+00 : bf16
    %65 = vector.broadcast %cst_27 : bf16 to vector<2x6x6x128xbf16>
    %c0_28 = arith.constant 0 : index
    %c0_29 = arith.constant 0 : index
    %c0_30 = arith.constant 0 : index
    %c0_31 = arith.constant 0 : index
    %66 = vector.load %arg13[%c0_28, %c0_29, %c0_30, %c0_31] : memref<2x6x6x128xbf16, #tpu.memory_space<vmem>>, vector<2x6x6x128xbf16>
    tpu.vector_store %arg13[%c0_28, %c0_29, %c0_30, %c0_31], %65 {strides = array<i32>} : memref<2x6x6x128xbf16, #tpu.memory_space<vmem>>, vector<2x6x6x128xbf16>,
    %67 = vector.shape_cast %64 : vector<32x128xf32> to vector<2x4x4x128xf32>
    %68 = arith.truncf %67 : vector<2x4x4x128xf32> to vector<2x4x4x128xbf16>
    %c0_32 = arith.constant 0 : index
    %c1_33 = arith.constant 1 : index
    %c1_34 = arith.constant 1 : index
    %c0_35 = arith.constant 0 : index
    %69 = vector.load %arg13[%c0_32, %c1_33, %c1_34, %c0_35] : memref<2x6x6x128xbf16, #tpu.memory_space<vmem>>, vector<2x4x4x128xbf16>
    tpu.vector_store %arg13[%c0_32, %c1_33, %c1_34, %c0_35], %68 {strides = array<i32>} : memref<2x6x6x128xbf16, #tpu.memory_space<vmem>>, vector<2x4x4x128xbf16>,
    %cst_36 = arith.constant 0.000000e+00 : f32
    %70 = vector.broadcast %cst_36 : f32 to vector<32x128xf32>
    %c0_37 = arith.constant 0 : index
    %c0_38 = arith.constant 0 : index
    %c0_39 = arith.constant 0 : index
    %c0_40 = arith.constant 0 : index
    %71 = vector.load %arg13[%c0_37, %c0_38, %c0_39, %c0_40] : memref<2x6x6x128xbf16, #tpu.memory_space<vmem>>, vector<2x4x4x128xbf16>
    %72 = vector.shape_cast %71 : vector<2x4x4x128xbf16> to vector<32x128xbf16>
    %c0_41 = arith.constant 0 : index
    %c0_42 = arith.constant 0 : index
    %c0_43 = arith.constant 0 : index
    %73 = vector.load %arg4[%c0_41, %c0_42, %c0_43] : memref<9x128x128xbf16, #tpu.memory_space<vmem>>, vector<1x128x128xbf16>
    %74 = vector.shape_cast %73 : vector<1x128x128xbf16> to vector<128x128xbf16>
    %cst_44 = arith.constant dense<0.000000e+00> : vector<32x128xf32>
    %75 = tpu.matmul %72, %74, %cst_44 {dimension_numbers = #tpu.dot_dimension_numbers<[1], [0], [0], [1], [0, 0, 1, 1], [], []>} : vector<32x128xbf16>, vector<128x128xbf16>, vector<32x128xf32> -> vector<32x128xf32>
    %76 = arith.addf %70, %75 : vector<32x128xf32>
    %c0_45 = arith.constant 0 : index
    %c0_46 = arith.constant 0 : index
    %c1_47 = arith.constant 1 : index
    %c0_48 = arith.constant 0 : index
    %77 = vector.load %arg13[%c0_45, %c0_46, %c1_47, %c0_48] : memref<2x6x6x128xbf16, #tpu.memory_space<vmem>>, vector<2x4x4x128xbf16>
    %78 = vector.shape_cast %77 : vector<2x4x4x128xbf16> to vector<32x128xbf16>
    %c1_49 = arith.constant 1 : index
    %c0_50 = arith.constant 0 : index
    %c0_51 = arith.constant 0 : index
    %79 = vector.load %arg4[%c1_49, %c0_50, %c0_51] : memref<9x128x128xbf16, #tpu.memory_space<vmem>>, vector<1x128x128xbf16>
    %80 = vector.shape_cast %79 : vector<1x128x128xbf16> to vector<128x128xbf16>
    %cst_52 = arith.constant dense<0.000000e+00> : vector<32x128xf32>
    %81 = tpu.matmul %78, %80, %cst_52 {dimension_numbers = #tpu.dot_dimension_numbers<[1], [0], [0], [1], [0, 0, 1, 1], [], []>} : vector<32x128xbf16>, vector<128x128xbf16>, vector<32x128xf32> -> vector<32x128xf32>
    %82 = arith.addf %76, %81 : vector<32x128xf32>
    %c0_53 = arith.constant 0 : index
    %c0_54 = arith.constant 0 : index
    %c2_55 = arith.constant 2 : index
    %c0_56 = arith.constant 0 : index
    %83 = vector.load %arg13[%c0_53, %c0_54, %c2_55, %c0_56] : memref<2x6x6x128xbf16, #tpu.memory_space<vmem>>, vector<2x4x4x128xbf16>
    %84 = vector.shape_cast %83 : vector<2x4x4x128xbf16> to vector<32x128xbf16>
    %c2_57 = arith.constant 2 : index
    %c0_58 = arith.constant 0 : index
    %c0_59 = arith.constant 0 : index
    %85 = vector.load %arg4[%c2_57, %c0_58, %c0_59] : memref<9x128x128xbf16, #tpu.memory_space<vmem>>, vector<1x128x128xbf16>
    %86 = vector.shape_cast %85 : vector<1x128x128xbf16> to vector<128x128xbf16>
    %cst_60 = arith.constant dense<0.000000e+00> : vector<32x128xf32>
    %87 = tpu.matmul %84, %86, %cst_60 {dimension_numbers = #tpu.dot_dimension_numbers<[1], [0], [0], [1], [0, 0, 1, 1], [], []>} : vector<32x128xbf16>, vector<128x128xbf16>, vector<32x128xf32> -> vector<32x128xf32>
    %88 = arith.addf %82, %87 : vector<32x128xf32>
    %c0_61 = arith.constant 0 : index
    %c1_62 = arith.constant 1 : index
    %c0_63 = arith.constant 0 : index
    %c0_64 = arith.constant 0 : index
    %89 = vector.load %arg13[%c0_61, %c1_62, %c0_63, %c0_64] : memref<2x6x6x128xbf16, #tpu.memory_space<vmem>>, vector<2x4x4x128xbf16>
    %90 = vector.shape_cast %89 : vector<2x4x4x128xbf16> to vector<32x128xbf16>
    %c3_65 = arith.constant 3 : index
    %c0_66 = arith.constant 0 : index
    %c0_67 = arith.constant 0 : index
    %91 = vector.load %arg4[%c3_65, %c0_66, %c0_67] : memref<9x128x128xbf16, #tpu.memory_space<vmem>>, vector<1x128x128xbf16>
    %92 = vector.shape_cast %91 : vector<1x128x128xbf16> to vector<128x128xbf16>
    %cst_68 = arith.constant dense<0.000000e+00> : vector<32x128xf32>
    %93 = tpu.matmul %90, %92, %cst_68 {dimension_numbers = #tpu.dot_dimension_numbers<[1], [0], [0], [1], [0, 0, 1, 1], [], []>} : vector<32x128xbf16>, vector<128x128xbf16>, vector<32x128xf32> -> vector<32x128xf32>
    %94 = arith.addf %88, %93 : vector<32x128xf32>
    %c0_69 = arith.constant 0 : index
    %c1_70 = arith.constant 1 : index
    %c1_71 = arith.constant 1 : index
    %c0_72 = arith.constant 0 : index
    %95 = vector.load %arg13[%c0_69, %c1_70, %c1_71, %c0_72] : memref<2x6x6x128xbf16, #tpu.memory_space<vmem>>, vector<2x4x4x128xbf16>
    %96 = vector.shape_cast %95 : vector<2x4x4x128xbf16> to vector<32x128xbf16>
    %c4 = arith.constant 4 : index
    %c0_73 = arith.constant 0 : index
    %c0_74 = arith.constant 0 : index
    %97 = vector.load %arg4[%c4, %c0_73, %c0_74] : memref<9x128x128xbf16, #tpu.memory_space<vmem>>, vector<1x128x128xbf16>
    %98 = vector.shape_cast %97 : vector<1x128x128xbf16> to vector<128x128xbf16>
    %cst_75 = arith.constant dense<0.000000e+00> : vector<32x128xf32>
    %99 = tpu.matmul %96, %98, %cst_75 {dimension_numbers = #tpu.dot_dimension_numbers<[1], [0], [0], [1], [0, 0, 1, 1], [], []>} : vector<32x128xbf16>, vector<128x128xbf16>, vector<32x128xf32> -> vector<32x128xf32>
    %100 = arith.addf %94, %99 : vector<32x128xf32>
    %c0_76 = arith.constant 0 : index
    %c1_77 = arith.constant 1 : index
    %c2_78 = arith.constant 2 : index
    %c0_79 = arith.constant 0 : index
    %101 = vector.load %arg13[%c0_76, %c1_77, %c2_78, %c0_79] : memref<2x6x6x128xbf16, #tpu.memory_space<vmem>>, vector<2x4x4x128xbf16>
    %102 = vector.shape_cast %101 : vector<2x4x4x128xbf16> to vector<32x128xbf16>
    %c5 = arith.constant 5 : index
    %c0_80 = arith.constant 0 : index
    %c0_81 = arith.constant 0 : index
    %103 = vector.load %arg4[%c5, %c0_80, %c0_81] : memref<9x128x128xbf16, #tpu.memory_space<vmem>>, vector<1x128x128xbf16>
    %104 = vector.shape_cast %103 : vector<1x128x128xbf16> to vector<128x128xbf16>
    %cst_82 = arith.constant dense<0.000000e+00> : vector<32x128xf32>
    %105 = tpu.matmul %102, %104, %cst_82 {dimension_numbers = #tpu.dot_dimension_numbers<[1], [0], [0], [1], [0, 0, 1, 1], [], []>} : vector<32x128xbf16>, vector<128x128xbf16>, vector<32x128xf32> -> vector<32x128xf32>
    %106 = arith.addf %100, %105 : vector<32x128xf32>
    %c0_83 = arith.constant 0 : index
    %c2_84 = arith.constant 2 : index
    %c0_85 = arith.constant 0 : index
    %c0_86 = arith.constant 0 : index
    %107 = vector.load %arg13[%c0_83, %c2_84, %c0_85, %c0_86] : memref<2x6x6x128xbf16, #tpu.memory_space<vmem>>, vector<2x4x4x128xbf16>
    %108 = vector.shape_cast %107 : vector<2x4x4x128xbf16> to vector<32x128xbf16>
    %c6 = arith.constant 6 : index
    %c0_87 = arith.constant 0 : index
    %c0_88 = arith.constant 0 : index
    %109 = vector.load %arg4[%c6, %c0_87, %c0_88] : memref<9x128x128xbf16, #tpu.memory_space<vmem>>, vector<1x128x128xbf16>
    %110 = vector.shape_cast %109 : vector<1x128x128xbf16> to vector<128x128xbf16>
    %cst_89 = arith.constant dense<0.000000e+00> : vector<32x128xf32>
    %111 = tpu.matmul %108, %110, %cst_89 {dimension_numbers = #tpu.dot_dimension_numbers<[1], [0], [0], [1], [0, 0, 1, 1], [], []>} : vector<32x128xbf16>, vector<128x128xbf16>, vector<32x128xf32> -> vector<32x128xf32>
    %112 = arith.addf %106, %111 : vector<32x128xf32>
    %c0_90 = arith.constant 0 : index
    %c2_91 = arith.constant 2 : index
    %c1_92 = arith.constant 1 : index
    %c0_93 = arith.constant 0 : index
    %113 = vector.load %arg13[%c0_90, %c2_91, %c1_92, %c0_93] : memref<2x6x6x128xbf16, #tpu.memory_space<vmem>>, vector<2x4x4x128xbf16>
    %114 = vector.shape_cast %113 : vector<2x4x4x128xbf16> to vector<32x128xbf16>
    %c7 = arith.constant 7 : index
    %c0_94 = arith.constant 0 : index
    %c0_95 = arith.constant 0 : index
    %115 = vector.load %arg4[%c7, %c0_94, %c0_95] : memref<9x128x128xbf16, #tpu.memory_space<vmem>>, vector<1x128x128xbf16>
    %116 = vector.shape_cast %115 : vector<1x128x128xbf16> to vector<128x128xbf16>
    %cst_96 = arith.constant dense<0.000000e+00> : vector<32x128xf32>
    %117 = tpu.matmul %114, %116, %cst_96 {dimension_numbers = #tpu.dot_dimension_numbers<[1], [0], [0], [1], [0, 0, 1, 1], [], []>} : vector<32x128xbf16>, vector<128x128xbf16>, vector<32x128xf32> -> vector<32x128xf32>
    %118 = arith.addf %112, %117 : vector<32x128xf32>
    %c0_97 = arith.constant 0 : index
    %c2_98 = arith.constant 2 : index
    %c2_99 = arith.constant 2 : index
    %c0_100 = arith.constant 0 : index
    %119 = vector.load %arg13[%c0_97, %c2_98, %c2_99, %c0_100] : memref<2x6x6x128xbf16, #tpu.memory_space<vmem>>, vector<2x4x4x128xbf16>
    %120 = vector.shape_cast %119 : vector<2x4x4x128xbf16> to vector<32x128xbf16>
    %c8 = arith.constant 8 : index
    %c0_101 = arith.constant 0 : index
    %c0_102 = arith.constant 0 : index
    %121 = vector.load %arg4[%c8, %c0_101, %c0_102] : memref<9x128x128xbf16, #tpu.memory_space<vmem>>, vector<1x128x128xbf16>
    %122 = vector.shape_cast %121 : vector<1x128x128xbf16> to vector<128x128xbf16>
    %cst_103 = arith.constant dense<0.000000e+00> : vector<32x128xf32>
    %123 = tpu.matmul %120, %122, %cst_103 {dimension_numbers = #tpu.dot_dimension_numbers<[1], [0], [0], [1], [0, 0, 1, 1], [], []>} : vector<32x128xbf16>, vector<128x128xbf16>, vector<32x128xf32> -> vector<32x128xf32>
    %124 = arith.addf %118, %123 : vector<32x128xf32>
    %cst_104 = arith.constant 1.000000e+00 : f32
    %125 = vector.broadcast %cst_104 : f32 to vector<1x32xf32>
    %cst_105 = arith.constant dense<0.000000e+00> : vector<1x128xf32>
    %126 = tpu.matmul %125, %124, %cst_105 {dimension_numbers = #tpu.dot_dimension_numbers<[1], [0], [0], [1], [0, 0, 1, 1], [], []>} : vector<1x32xf32>, vector<32x128xf32>, vector<1x128xf32> -> vector<1x128xf32>
    %127 = arith.mulf %124, %124 : vector<32x128xf32>
    %cst_106 = arith.constant dense<0.000000e+00> : vector<1x128xf32>
    %128 = tpu.matmul %125, %127, %cst_106 {dimension_numbers = #tpu.dot_dimension_numbers<[1], [0], [0], [1], [0, 0, 1, 1], [], []>} : vector<1x32xf32>, vector<32x128xf32>, vector<1x128xf32> -> vector<1x128xf32>
    %cst_107 = arith.constant 3.125000e-02 : f32
    %129 = vector.broadcast %cst_107 : f32 to vector<1x128xf32>
    %130 = arith.mulf %126, %129 : vector<1x128xf32>
    %cst_108 = arith.constant 3.125000e-02 : f32
    %131 = vector.broadcast %cst_108 : f32 to vector<1x128xf32>
    %132 = arith.mulf %128, %131 : vector<1x128xf32>
    %133 = arith.mulf %130, %130 : vector<1x128xf32>
    %134 = arith.subf %132, %133 : vector<1x128xf32>
    %c0_109 = arith.constant 0 : index
    %c0_110 = arith.constant 0 : index
    %135 = vector.load %arg5[%c0_109, %c0_110] : memref<1x128xf32, #tpu.memory_space<vmem>>, vector<1x128xf32>
    %136 = vector.broadcast %130 : vector<1x128xf32> to vector<32x128xf32>
    %137 = arith.subf %124, %136 : vector<32x128xf32>
    %cst_111 = arith.constant 9.99999974E-6 : f32
    %138 = vector.broadcast %cst_111 : f32 to vector<1x128xf32>
    %139 = arith.addf %134, %138 : vector<1x128xf32>
    %140 = math.rsqrt %139 : vector<1x128xf32>
    %141 = vector.broadcast %140 : vector<1x128xf32> to vector<32x128xf32>
    %142 = arith.mulf %137, %141 : vector<32x128xf32>
    %143 = vector.broadcast %135 : vector<1x128xf32> to vector<32x128xf32>
    %144 = arith.mulf %143, %142 : vector<32x128xf32>
    %c0_112 = arith.constant 0 : index
    %c0_113 = arith.constant 0 : index
    %145 = vector.load %arg6[%c0_112, %c0_113] : memref<1x128xf32, #tpu.memory_space<vmem>>, vector<1x128xf32>
    %146 = vector.broadcast %145 : vector<1x128xf32> to vector<32x128xf32>
    %147 = arith.addf %144, %146 : vector<32x128xf32>
    %cst_114 = arith.constant 0.000000e+00 : f32
    %148 = vector.broadcast %cst_114 : f32 to vector<32x128xf32>
    %149 = arith.maximumf %147, %148 : vector<32x128xf32>
    %150 = vector.shape_cast %149 : vector<32x128xf32> to vector<2x4x4x128xf32>
    %151 = arith.truncf %150 : vector<2x4x4x128xf32> to vector<2x4x4x128xbf16>
    %c0_115 = arith.constant 0 : index
    %c1_116 = arith.constant 1 : index
    %c1_117 = arith.constant 1 : index
    %c0_118 = arith.constant 0 : index
    %152 = vector.load %arg13[%c0_115, %c1_116, %c1_117, %c0_118] : memref<2x6x6x128xbf16, #tpu.memory_space<vmem>>, vector<2x4x4x128xbf16>
    tpu.vector_store %arg13[%c0_115, %c1_116, %c1_117, %c0_118], %151 {strides = array<i32>} : memref<2x6x6x128xbf16, #tpu.memory_space<vmem>>, vector<2x4x4x128xbf16>,
    %cst_119 = arith.constant 0.000000e+00 : f32
    %153 = vector.broadcast %cst_119 : f32 to vector<32x128xf32>
    %c0_120 = arith.constant 0 : index
    %c0_121 = arith.constant 0 : index
    %c0_122 = arith.constant 0 : index
    %c0_123 = arith.constant 0 : index
    %154 = vector.load %arg13[%c0_120, %c0_121, %c0_122, %c0_123] : memref<2x6x6x128xbf16, #tpu.memory_space<vmem>>, vector<2x4x4x128xbf16>
    %155 = vector.shape_cast %154 : vector<2x4x4x128xbf16> to vector<32x128xbf16>
    %c0_124 = arith.constant 0 : index
    %c0_125 = arith.constant 0 : index
    %c0_126 = arith.constant 0 : index
    %156 = vector.load %arg7[%c0_124, %c0_125, %c0_126] : memref<9x128x128xbf16, #tpu.memory_space<vmem>>, vector<1x128x128xbf16>
    %157 = vector.shape_cast %156 : vector<1x128x128xbf16> to vector<128x128xbf16>
    %cst_127 = arith.constant dense<0.000000e+00> : vector<32x128xf32>
    %158 = tpu.matmul %155, %157, %cst_127 {dimension_numbers = #tpu.dot_dimension_numbers<[1], [0], [0], [1], [0, 0, 1, 1], [], []>} : vector<32x128xbf16>, vector<128x128xbf16>, vector<32x128xf32> -> vector<32x128xf32>
    %159 = arith.addf %153, %158 : vector<32x128xf32>
    %c0_128 = arith.constant 0 : index
    %c0_129 = arith.constant 0 : index
    %c1_130 = arith.constant 1 : index
    %c0_131 = arith.constant 0 : index
    %160 = vector.load %arg13[%c0_128, %c0_129, %c1_130, %c0_131] : memref<2x6x6x128xbf16, #tpu.memory_space<vmem>>, vector<2x4x4x128xbf16>
    %161 = vector.shape_cast %160 : vector<2x4x4x128xbf16> to vector<32x128xbf16>
    %c1_132 = arith.constant 1 : index
    %c0_133 = arith.constant 0 : index
    %c0_134 = arith.constant 0 : index
    %162 = vector.load %arg7[%c1_132, %c0_133, %c0_134] : memref<9x128x128xbf16, #tpu.memory_space<vmem>>, vector<1x128x128xbf16>
    %163 = vector.shape_cast %162 : vector<1x128x128xbf16> to vector<128x128xbf16>
    %cst_135 = arith.constant dense<0.000000e+00> : vector<32x128xf32>
    %164 = tpu.matmul %161, %163, %cst_135 {dimension_numbers = #tpu.dot_dimension_numbers<[1], [0], [0], [1], [0, 0, 1, 1], [], []>} : vector<32x128xbf16>, vector<128x128xbf16>, vector<32x128xf32> -> vector<32x128xf32>
    %165 = arith.addf %159, %164 : vector<32x128xf32>
    %c0_136 = arith.constant 0 : index
    %c0_137 = arith.constant 0 : index
    %c2_138 = arith.constant 2 : index
    %c0_139 = arith.constant 0 : index
    %166 = vector.load %arg13[%c0_136, %c0_137, %c2_138, %c0_139] : memref<2x6x6x128xbf16, #tpu.memory_space<vmem>>, vector<2x4x4x128xbf16>
    %167 = vector.shape_cast %166 : vector<2x4x4x128xbf16> to vector<32x128xbf16>
    %c2_140 = arith.constant 2 : index
    %c0_141 = arith.constant 0 : index
    %c0_142 = arith.constant 0 : index
    %168 = vector.load %arg7[%c2_140, %c0_141, %c0_142] : memref<9x128x128xbf16, #tpu.memory_space<vmem>>, vector<1x128x128xbf16>
    %169 = vector.shape_cast %168 : vector<1x128x128xbf16> to vector<128x128xbf16>
    %cst_143 = arith.constant dense<0.000000e+00> : vector<32x128xf32>
    %170 = tpu.matmul %167, %169, %cst_143 {dimension_numbers = #tpu.dot_dimension_numbers<[1], [0], [0], [1], [0, 0, 1, 1], [], []>} : vector<32x128xbf16>, vector<128x128xbf16>, vector<32x128xf32> -> vector<32x128xf32>
    %171 = arith.addf %165, %170 : vector<32x128xf32>
    %c0_144 = arith.constant 0 : index
    %c1_145 = arith.constant 1 : index
    %c0_146 = arith.constant 0 : index
    %c0_147 = arith.constant 0 : index
    %172 = vector.load %arg13[%c0_144, %c1_145, %c0_146, %c0_147] : memref<2x6x6x128xbf16, #tpu.memory_space<vmem>>, vector<2x4x4x128xbf16>
    %173 = vector.shape_cast %172 : vector<2x4x4x128xbf16> to vector<32x128xbf16>
    %c3_148 = arith.constant 3 : index
    %c0_149 = arith.constant 0 : index
    %c0_150 = arith.constant 0 : index
    %174 = vector.load %arg7[%c3_148, %c0_149, %c0_150] : memref<9x128x128xbf16, #tpu.memory_space<vmem>>, vector<1x128x128xbf16>
    %175 = vector.shape_cast %174 : vector<1x128x128xbf16> to vector<128x128xbf16>
    %cst_151 = arith.constant dense<0.000000e+00> : vector<32x128xf32>
    %176 = tpu.matmul %173, %175, %cst_151 {dimension_numbers = #tpu.dot_dimension_numbers<[1], [0], [0], [1], [0, 0, 1, 1], [], []>} : vector<32x128xbf16>, vector<128x128xbf16>, vector<32x128xf32> -> vector<32x128xf32>
    %177 = arith.addf %171, %176 : vector<32x128xf32>
    %c0_152 = arith.constant 0 : index
    %c1_153 = arith.constant 1 : index
    %c1_154 = arith.constant 1 : index
    %c0_155 = arith.constant 0 : index
    %178 = vector.load %arg13[%c0_152, %c1_153, %c1_154, %c0_155] : memref<2x6x6x128xbf16, #tpu.memory_space<vmem>>, vector<2x4x4x128xbf16>
    %179 = vector.shape_cast %178 : vector<2x4x4x128xbf16> to vector<32x128xbf16>
    %c4_156 = arith.constant 4 : index
    %c0_157 = arith.constant 0 : index
    %c0_158 = arith.constant 0 : index
    %180 = vector.load %arg7[%c4_156, %c0_157, %c0_158] : memref<9x128x128xbf16, #tpu.memory_space<vmem>>, vector<1x128x128xbf16>
    %181 = vector.shape_cast %180 : vector<1x128x128xbf16> to vector<128x128xbf16>
    %cst_159 = arith.constant dense<0.000000e+00> : vector<32x128xf32>
    %182 = tpu.matmul %179, %181, %cst_159 {dimension_numbers = #tpu.dot_dimension_numbers<[1], [0], [0], [1], [0, 0, 1, 1], [], []>} : vector<32x128xbf16>, vector<128x128xbf16>, vector<32x128xf32> -> vector<32x128xf32>
    %183 = arith.addf %177, %182 : vector<32x128xf32>
    %c0_160 = arith.constant 0 : index
    %c1_161 = arith.constant 1 : index
    %c2_162 = arith.constant 2 : index
    %c0_163 = arith.constant 0 : index
    %184 = vector.load %arg13[%c0_160, %c1_161, %c2_162, %c0_163] : memref<2x6x6x128xbf16, #tpu.memory_space<vmem>>, vector<2x4x4x128xbf16>
    %185 = vector.shape_cast %184 : vector<2x4x4x128xbf16> to vector<32x128xbf16>
    %c5_164 = arith.constant 5 : index
    %c0_165 = arith.constant 0 : index
    %c0_166 = arith.constant 0 : index
    %186 = vector.load %arg7[%c5_164, %c0_165, %c0_166] : memref<9x128x128xbf16, #tpu.memory_space<vmem>>, vector<1x128x128xbf16>
    %187 = vector.shape_cast %186 : vector<1x128x128xbf16> to vector<128x128xbf16>
    %cst_167 = arith.constant dense<0.000000e+00> : vector<32x128xf32>
    %188 = tpu.matmul %185, %187, %cst_167 {dimension_numbers = #tpu.dot_dimension_numbers<[1], [0], [0], [1], [0, 0, 1, 1], [], []>} : vector<32x128xbf16>, vector<128x128xbf16>, vector<32x128xf32> -> vector<32x128xf32>
    %189 = arith.addf %183, %188 : vector<32x128xf32>
    %c0_168 = arith.constant 0 : index
    %c2_169 = arith.constant 2 : index
    %c0_170 = arith.constant 0 : index
    %c0_171 = arith.constant 0 : index
    %190 = vector.load %arg13[%c0_168, %c2_169, %c0_170, %c0_171] : memref<2x6x6x128xbf16, #tpu.memory_space<vmem>>, vector<2x4x4x128xbf16>
    %191 = vector.shape_cast %190 : vector<2x4x4x128xbf16> to vector<32x128xbf16>
    %c6_172 = arith.constant 6 : index
    %c0_173 = arith.constant 0 : index
    %c0_174 = arith.constant 0 : index
    %192 = vector.load %arg7[%c6_172, %c0_173, %c0_174] : memref<9x128x128xbf16, #tpu.memory_space<vmem>>, vector<1x128x128xbf16>
    %193 = vector.shape_cast %192 : vector<1x128x128xbf16> to vector<128x128xbf16>
    %cst_175 = arith.constant dense<0.000000e+00> : vector<32x128xf32>
    %194 = tpu.matmul %191, %193, %cst_175 {dimension_numbers = #tpu.dot_dimension_numbers<[1], [0], [0], [1], [0, 0, 1, 1], [], []>} : vector<32x128xbf16>, vector<128x128xbf16>, vector<32x128xf32> -> vector<32x128xf32>
    %195 = arith.addf %189, %194 : vector<32x128xf32>
    %c0_176 = arith.constant 0 : index
    %c2_177 = arith.constant 2 : index
    %c1_178 = arith.constant 1 : index
    %c0_179 = arith.constant 0 : index
    %196 = vector.load %arg13[%c0_176, %c2_177, %c1_178, %c0_179] : memref<2x6x6x128xbf16, #tpu.memory_space<vmem>>, vector<2x4x4x128xbf16>
    %197 = vector.shape_cast %196 : vector<2x4x4x128xbf16> to vector<32x128xbf16>
    %c7_180 = arith.constant 7 : index
    %c0_181 = arith.constant 0 : index
    %c0_182 = arith.constant 0 : index
    %198 = vector.load %arg7[%c7_180, %c0_181, %c0_182] : memref<9x128x128xbf16, #tpu.memory_space<vmem>>, vector<1x128x128xbf16>
    %199 = vector.shape_cast %198 : vector<1x128x128xbf16> to vector<128x128xbf16>
    %cst_183 = arith.constant dense<0.000000e+00> : vector<32x128xf32>
    %200 = tpu.matmul %197, %199, %cst_183 {dimension_numbers = #tpu.dot_dimension_numbers<[1], [0], [0], [1], [0, 0, 1, 1], [], []>} : vector<32x128xbf16>, vector<128x128xbf16>, vector<32x128xf32> -> vector<32x128xf32>
    %201 = arith.addf %195, %200 : vector<32x128xf32>
    %c0_184 = arith.constant 0 : index
    %c2_185 = arith.constant 2 : index
    %c2_186 = arith.constant 2 : index
    %c0_187 = arith.constant 0 : index
    %202 = vector.load %arg13[%c0_184, %c2_185, %c2_186, %c0_187] : memref<2x6x6x128xbf16, #tpu.memory_space<vmem>>, vector<2x4x4x128xbf16>
    %203 = vector.shape_cast %202 : vector<2x4x4x128xbf16> to vector<32x128xbf16>
    %c8_188 = arith.constant 8 : index
    %c0_189 = arith.constant 0 : index
    %c0_190 = arith.constant 0 : index
    %204 = vector.load %arg7[%c8_188, %c0_189, %c0_190] : memref<9x128x128xbf16, #tpu.memory_space<vmem>>, vector<1x128x128xbf16>
    %205 = vector.shape_cast %204 : vector<1x128x128xbf16> to vector<128x128xbf16>
    %cst_191 = arith.constant dense<0.000000e+00> : vector<32x128xf32>
    %206 = tpu.matmul %203, %205, %cst_191 {dimension_numbers = #tpu.dot_dimension_numbers<[1], [0], [0], [1], [0, 0, 1, 1], [], []>} : vector<32x128xbf16>, vector<128x128xbf16>, vector<32x128xf32> -> vector<32x128xf32>
    %207 = arith.addf %201, %206 : vector<32x128xf32>
    %cst_192 = arith.constant 1.000000e+00 : f32
    %208 = vector.broadcast %cst_192 : f32 to vector<1x32xf32>
    %cst_193 = arith.constant dense<0.000000e+00> : vector<1x128xf32>
    %209 = tpu.matmul %208, %207, %cst_193 {dimension_numbers = #tpu.dot_dimension_numbers<[1], [0], [0], [1], [0, 0, 1, 1], [], []>} : vector<1x32xf32>, vector<32x128xf32>, vector<1x128xf32> -> vector<1x128xf32>
    %210 = arith.mulf %207, %207 : vector<32x128xf32>
    %cst_194 = arith.constant dense<0.000000e+00> : vector<1x128xf32>
    %211 = tpu.matmul %208, %210, %cst_194 {dimension_numbers = #tpu.dot_dimension_numbers<[1], [0], [0], [1], [0, 0, 1, 1], [], []>} : vector<1x32xf32>, vector<32x128xf32>, vector<1x128xf32> -> vector<1x128xf32>
    %cst_195 = arith.constant 3.125000e-02 : f32
    %212 = vector.broadcast %cst_195 : f32 to vector<1x128xf32>
    %213 = arith.mulf %209, %212 : vector<1x128xf32>
    %cst_196 = arith.constant 3.125000e-02 : f32
    %214 = vector.broadcast %cst_196 : f32 to vector<1x128xf32>
    %215 = arith.mulf %211, %214 : vector<1x128xf32>
    %216 = arith.mulf %213, %213 : vector<1x128xf32>
    %217 = arith.subf %215, %216 : vector<1x128xf32>
    %c0_197 = arith.constant 0 : index
    %c0_198 = arith.constant 0 : index
    %218 = vector.load %arg8[%c0_197, %c0_198] : memref<1x128xf32, #tpu.memory_space<vmem>>, vector<1x128xf32>
    %219 = vector.broadcast %213 : vector<1x128xf32> to vector<32x128xf32>
    %220 = arith.subf %207, %219 : vector<32x128xf32>
    %cst_199 = arith.constant 9.99999974E-6 : f32
    %221 = vector.broadcast %cst_199 : f32 to vector<1x128xf32>
    %222 = arith.addf %217, %221 : vector<1x128xf32>
    %223 = math.rsqrt %222 : vector<1x128xf32>
    %224 = vector.broadcast %223 : vector<1x128xf32> to vector<32x128xf32>
    %225 = arith.mulf %220, %224 : vector<32x128xf32>
    %226 = vector.broadcast %218 : vector<1x128xf32> to vector<32x128xf32>
    %227 = arith.mulf %226, %225 : vector<32x128xf32>
    %c0_200 = arith.constant 0 : index
    %c0_201 = arith.constant 0 : index
    %228 = vector.load %arg9[%c0_200, %c0_201] : memref<1x128xf32, #tpu.memory_space<vmem>>, vector<1x128xf32>
    %229 = vector.broadcast %228 : vector<1x128xf32> to vector<32x128xf32>
    %230 = arith.addf %227, %229 : vector<32x128xf32>
    %231 = arith.addf %230, %64 : vector<32x128xf32>
    %cst_202 = arith.constant 0.000000e+00 : f32
    %232 = vector.broadcast %cst_202 : f32 to vector<32x128xf32>
    %233 = arith.maximumf %231, %232 : vector<32x128xf32>
    %234 = tpu.iota {dimensions = array<i32: 0>} : vector<2x32xi32>
    %235 = tpu.iota {dimensions = array<i32: 1>} : vector<2x32xi32>
    %c16_i32 = arith.constant 16 : i32
    %236 = vector.broadcast %c16_i32 : i32 to vector<2x32xi32>
    %237 = arith.muli %234, %236 : vector<2x32xi32>
    %238 = arith.cmpi sge, %235, %237 : vector<2x32xi32>
    %c1_i32 = arith.constant 1 : i32
    %239 = vector.broadcast %c1_i32 : i32 to vector<2x32xi32>
    %240 = arith.addi %234, %239 : vector<2x32xi32>
    %c16_i32_203 = arith.constant 16 : i32
    %241 = vector.broadcast %c16_i32_203 : i32 to vector<2x32xi32>
    %242 = arith.muli %240, %241 : vector<2x32xi32>
    %243 = arith.cmpi slt, %235, %242 : vector<2x32xi32>
    %244 = arith.andi %238, %243 : vector<2x32xi1>
    %cst_204 = arith.constant 6.250000e-02 : f32
    %cst_205 = arith.constant 0.000000e+00 : f32
    %245 = vector.broadcast %cst_204 : f32 to vector<2x32xf32>
    %246 = vector.broadcast %cst_205 : f32 to vector<2x32xf32>
    %247 = arith.select %244, %245, %246 : vector<2x32xi1>, vector<2x32xf32>
    %cst_206 = arith.constant dense<0.000000e+00> : vector<2x128xf32>
    %248 = tpu.matmul %247, %233, %cst_206 {dimension_numbers = #tpu.dot_dimension_numbers<[1], [0], [0], [1], [0, 0, 1, 1], [], []>} : vector<2x32xf32>, vector<32x128xf32>, vector<2x128xf32> -> vector<2x128xf32>
    %c0_207 = arith.constant 0 : index
    %c0_208 = arith.constant 0 : index
    %249 = vector.load %arg10[%c0_207, %c0_208] : memref<128x128xf32, #tpu.memory_space<vmem>>, vector<128x128xf32>
    %cst_209 = arith.constant dense<0.000000e+00> : vector<2x128xf32>
    %250 = tpu.matmul %248, %249, %cst_209 {dimension_numbers = #tpu.dot_dimension_numbers<[1], [0], [0], [1], [0, 0, 1, 1], [], []>} : vector<2x128xf32>, vector<128x128xf32>, vector<2x128xf32> -> vector<2x128xf32>
    %c0_210 = arith.constant 0 : index
    %c0_211 = arith.constant 0 : index
    %251 = vector.load %arg11[%c0_210, %c0_211] : memref<1x128xf32, #tpu.memory_space<vmem>>, vector<1x128xf32>
    %252 = vector.broadcast %251 : vector<1x128xf32> to vector<2x128xf32>
    %253 = arith.addf %250, %252 : vector<2x128xf32>
    %c0_212 = arith.constant 0 : index
    %c0_213 = arith.constant 0 : index
    %254 = vector.load %arg12[%c0_212, %c0_213] : memref<2x128xf32, #tpu.memory_space<vmem>>, vector<2x128xf32>
    tpu.vector_store %arg12[%c0_212, %c0_213], %253 {strides = array<i32>} : memref<2x128xf32, #tpu.memory_space<vmem>>, vector<2x128xf32>,
    return
  }
}

</mosaic_0001>

<llo_original>
// kernel: resnet_forward.1
$region0: #{resnet_forward.1}
  #allocation0 [shape = 'u32[]', space=smem, size = 0x4, offset = 0x4, fixed_abs, tag = 'smem constant byte address 0x4 - core index']
  #allocation1 [shape = 'u32[144,128]{1,0:T(1,128)}', space=vmem, size = 0x12000, scoped, tag = 'internal scratch']
  #allocation2 [shape = 'bf16[2,6,6,128]{3,2,1,0:T(8,128)(2,1)}', space=vmem, size = 0x6000, scoped, tag = 'scratch operand']
  %s0 = inlined_call_operand.vmem [shape: f32[2,9,9,4], index: 0, kind: input, shape index: {}]
  %s1 = inlined_call_operand.vmem [shape: bf16[4,4,128], index: 1, kind: input, shape index: {}]
  %s2 = inlined_call_operand.vmem [shape: f32[1,128], index: 2, kind: input, shape index: {}]
  %s3 = inlined_call_operand.vmem [shape: f32[1,128], index: 3, kind: input, shape index: {}]
  %s4 = inlined_call_operand.vmem [shape: bf16[9,128,128], index: 4, kind: input, shape index: {}]
  %s5 = inlined_call_operand.vmem [shape: f32[1,128], index: 5, kind: input, shape index: {}]
  %s6 = inlined_call_operand.vmem [shape: f32[1,128], index: 6, kind: input, shape index: {}]
  %s7 = inlined_call_operand.vmem [shape: bf16[9,128,128], index: 7, kind: input, shape index: {}]
  %s8 = inlined_call_operand.vmem [shape: f32[1,128], index: 8, kind: input, shape index: {}]
  %s9 = inlined_call_operand.vmem [shape: f32[1,128], index: 9, kind: input, shape index: {}]
  %s10 = inlined_call_operand.vmem [shape: f32[128,128], index: 10, kind: input, shape index: {}]
  %s11 = inlined_call_operand.vmem [shape: f32[1,128], index: 11, kind: input, shape index: {}]
  %s12 = inlined_call_operand.hbm [shape: f32[2,128], index: 12, kind: output, shape index: {}]
  %s13 = sld [smem:[#allocation0]]
  $region58: #{resnet_forward.1} parent=0
    _
  %s15 = ssub.s32 1, %s13
  %s16 = scalar_select 0, %s15, %s13
  $region1: #{resnet_forward.1} parent=0
    #allocation3 [shape = 'u8[1024]{0}', space=vmem, size = 0x400, scoped, tag = 'output window, operand 0, single buffered']
    #allocation4 [shape = 's32[1]{0}', space=sflag, size = 0x4, scoped, tag = 'scoped memory for resnet_forward.1']
    %17 = vsyncpa [#allocation4], 0
    // Predicated region
    $region2: #{resnet_forward.1} parent=1 // pred_check
      _
    $region3: #{resnet_forward.1} parent=1 // pred_check_branch
      %19 = sbr.rel (0) target = $region5
    $region4: #{resnet_forward.1} parent=1 // pred_region
      _
    $region5: #{resnet_forward.1} parent=1 // pred_fallthru
      _
    // Predicated region
    $region6: #{resnet_forward.1} parent=1 // pred_check
      _
    $region7: #{resnet_forward.1} parent=1 // pred_check_branch
      %21 = sbr.rel (0) target = $region9
    $region8: #{resnet_forward.1} parent=1 // pred_region
      _
    $region9: #{resnet_forward.1} parent=1 // pred_fallthru
      _
    // Predicated region
    $region10: #{resnet_forward.1} parent=1 // pred_check
      _
    $region11: #{resnet_forward.1} parent=1 // pred_check_branch
      %23 = sbr.rel (0) target = $region13
    $region12: #{resnet_forward.1} parent=1 // pred_region
      _
    $region13: #{resnet_forward.1} parent=1 // pred_fallthru
      _
    // Predicated region
    $region14: #{resnet_forward.1} parent=1 // pred_check
      _
    $region15: #{resnet_forward.1} parent=1 // pred_check_branch
      %25 = sbr.rel (0) target = $region17
    $region16: #{resnet_forward.1} parent=1 // pred_region
      _
    $region17: #{resnet_forward.1} parent=1 // pred_fallthru
      _
    // Predicated region
    $region18: #{resnet_forward.1} parent=1 // pred_check
      _
    $region19: #{resnet_forward.1} parent=1 // pred_check_branch
      %27 = sbr.rel (0) target = $region21
    $region20: #{resnet_forward.1} parent=1 // pred_region
      _
    $region21: #{resnet_forward.1} parent=1 // pred_fallthru
      _
    // Predicated region
    $region22: #{resnet_forward.1} parent=1 // pred_check
      _
    $region23: #{resnet_forward.1} parent=1 // pred_check_branch
      %29 = sbr.rel (0) target = $region25
    $region24: #{resnet_forward.1} parent=1 // pred_region
      _
    $region25: #{resnet_forward.1} parent=1 // pred_fallthru
      _
    // Predicated region
    $region26: #{resnet_forward.1} parent=1 // pred_check
      _
    $region27: #{resnet_forward.1} parent=1 // pred_check_branch
      %31 = sbr.rel (0) target = $region29
    $region28: #{resnet_forward.1} parent=1 // pred_region
      _
    $region29: #{resnet_forward.1} parent=1 // pred_fallthru
      _
    // Predicated region
    $region30: #{resnet_forward.1} parent=1 // pred_check
      _
    $region31: #{resnet_forward.1} parent=1 // pred_check_branch
      %33 = sbr.rel (0) target = $region33
    $region32: #{resnet_forward.1} parent=1 // pred_region
      _
    $region33: #{resnet_forward.1} parent=1 // pred_fallthru
      _
    // Predicated region
    $region34: #{resnet_forward.1} parent=1 // pred_check
      _
    $region35: #{resnet_forward.1} parent=1 // pred_check_branch
      %35 = sbr.rel (0) target = $region37
    $region36: #{resnet_forward.1} parent=1 // pred_region
      _
    $region37: #{resnet_forward.1} parent=1 // pred_fallthru
      _
    // Predicated region
    $region38: #{resnet_forward.1} parent=1 // pred_check
      _
    $region39: #{resnet_forward.1} parent=1 // pred_check_branch
      %37 = sbr.rel (0) target = $region41
    $region40: #{resnet_forward.1} parent=1 // pred_region
      _
    $region41: #{resnet_forward.1} parent=1 // pred_fallthru
      _
    // Predicated region
    $region42: #{resnet_forward.1} parent=1 // pred_check
      _
    $region43: #{resnet_forward.1} parent=1 // pred_check_branch
      %39 = sbr.rel (0) target = $region45
    $region44: #{resnet_forward.1} parent=1 // pred_region
      _
    $region45: #{resnet_forward.1} parent=1 // pred_fallthru
      _
    // Predicated region
    $region46: #{resnet_forward.1} parent=1 // pred_check
      _
    $region47: #{resnet_forward.1} parent=1 // pred_check_branch
      %41 = sbr.rel (0) target = $region49
    $region48: #{resnet_forward.1} parent=1 // pred_region
      _
    $region49: #{resnet_forward.1} parent=1 // pred_fallthru
      _
    %v43 = vld [vmem:[%s0] sm:$0xff]
    %v44 = vld [vmem:[%s0 + $0x8] sm:$0x1]
    %v45 = vld [vmem:[%s0 + $0x10] sm:$0xff]
    %v46 = vld [vmem:[%s0 + $0x18] sm:$0x1]
    %v47 = vld [vmem:[%s0 + $0x20] sm:$0xff]
    %v48 = vld [vmem:[%s0 + $0x28] sm:$0x1]
    %v49 = vld [vmem:[%s0 + $0x30] sm:$0xff]
    %v50 = vld [vmem:[%s0 + $0x38] sm:$0x1]
    %v51 = vld [vmem:[%s0 + $0x40] sm:$0xff]
    %v52 = vld [vmem:[%s0 + $0x48] sm:$0x1]
    %v53 = vld [vmem:[%s0 + $0x50] sm:$0xff]
    %v54 = vld [vmem:[%s0 + $0x58] sm:$0x1]
    %v55 = vld [vmem:[%s0 + $0x60] sm:$0xff]
    %v56 = vld [vmem:[%s0 + $0x68] sm:$0x1]
    %v57 = vld [vmem:[%s0 + $0x70] sm:$0xff]
    %v58 = vld [vmem:[%s0 + $0x78] sm:$0x1]
    %v59 = vld [vmem:[%s0 + $0x80] sm:$0xff]
    %v60 = vld [vmem:[%s0 + $0x88] sm:$0x1]
    %v61 = vld [vmem:[%s0 + $0x90] sm:$0xff]
    %v62 = vld [vmem:[%s0 + $0x98] sm:$0x1]
    %v63 = vld [vmem:[%s0 + $0xa0] sm:$0xff]
    %v64 = vld [vmem:[%s0 + $0xa8] sm:$0x1]
    %v65 = vld [vmem:[%s0 + $0xb0] sm:$0xff]
    %v66 = vld [vmem:[%s0 + $0xb8] sm:$0x1]
    %v67 = vld [vmem:[%s0 + $0xc0] sm:$0xff]
    %v68 = vld [vmem:[%s0 + $0xc8] sm:$0x1]
    %v69 = vld [vmem:[%s0 + $0xd0] sm:$0xff]
    %v70 = vld [vmem:[%s0 + $0xd8] sm:$0x1]
    %v71 = vld [vmem:[%s0 + $0xe0] sm:$0xff]
    %v72 = vld [vmem:[%s0 + $0xe8] sm:$0x1]
    %v73 = vld [vmem:[%s0 + $0xf0] sm:$0xff]
    %v74 = vld [vmem:[%s0 + $0xf8] sm:$0x1]
    %v75 = vld [vmem:[%s0 + $0x100] sm:$0xff]
    %v76 = vld [vmem:[%s0 + $0x108] sm:$0x1]
    %v77 = vld [vmem:[%s0 + $0x110] sm:$0xff]
    %v78 = vld [vmem:[%s0 + $0x118] sm:$0x1]
    %v79 = vpack.c.bf16 %v44, %v43
    %v80 = vpack.c.bf16 %v46, %v45
    %v81 = vpack.c.bf16 %v48, %v47
    %v82 = vpack.c.bf16 %v50, %v49
    %v83 = vpack.c.bf16 %v52, %v51
    %v84 = vpack.c.bf16 %v54, %v53
    %v85 = vpack.c.bf16 %v56, %v55
    %v86 = vpack.c.bf16 %v58, %v57
    %v87 = vpack.c.bf16 %v60, %v59
    %v88 = vpack.c.bf16 %v62, %v61
    %v89 = vpack.c.bf16 %v64, %v63
    %v90 = vpack.c.bf16 %v66, %v65
    %v91 = vpack.c.bf16 %v68, %v67
    %v92 = vpack.c.bf16 %v70, %v69
    %v93 = vpack.c.bf16 %v72, %v71
    %v94 = vpack.c.bf16 %v74, %v73
    %v95 = vpack.c.bf16 %v76, %v75
    %v96 = vpack.c.bf16 %v78, %v77
    %v97 = vld [vmem:[%s1] sm:$0x3]
    %v114 = vunpack.c.l.b16 %v79
    %v115 = vunpack.c.h.b16 %v79
    %v116 = vunpack.c.l.b16 %v80
    %v117 = vunpack.c.h.b16 %v80
    %v118 = vunpack.c.l.b16 %v81
    %v119 = vunpack.c.h.b16 %v81
    %v120 = vunpack.c.l.b16 %v82
    %v121 = vunpack.c.h.b16 %v82
    %v122 = vunpack.c.l.b16 %v83
    %v123 = vunpack.c.h.b16 %v83
    %v124 = vunpack.c.l.b16 %v84
    %v125 = vunpack.c.h.b16 %v84
    %v126 = vunpack.c.l.b16 %v85
    %v127 = vunpack.c.h.b16 %v85
    %v128 = vunpack.c.l.b16 %v86
    %v129 = vunpack.c.h.b16 %v86
    %v130 = vunpack.c.l.b16 %v88
    %v131 = vunpack.c.h.b16 %v88
    %v132 = vunpack.c.l.b16 %v89
    %v133 = vunpack.c.h.b16 %v89
    %v134 = vunpack.c.l.b16 %v90
    %v135 = vunpack.c.h.b16 %v90
    %v136 = vunpack.c.l.b16 %v91
    %v137 = vunpack.c.h.b16 %v91
    %v138 = vunpack.c.l.b16 %v92
    %v139 = vunpack.c.h.b16 %v92
    %v140 = vunpack.c.l.b16 %v93
    %v141 = vunpack.c.h.b16 %v93
    %v142 = vunpack.c.l.b16 %v94
    %v143 = vunpack.c.h.b16 %v94
    %v144 = vunpack.c.l.b16 %v95
    %v145 = vunpack.c.h.b16 %v95
    %v146 = vpack.c.b16 %v114, %v114
    %v147 = vpack.c.b16 %v115, %v115
    %v148 = vpack.c.b16 %v116, %v116
    %v149 = vpack.c.b16 %v117, %v117
    %v150 = vpack.c.b16 %v118, %v118
    %v151 = vpack.c.b16 %v119, %v119
    %v152 = vpack.c.b16 %v120, %v120
    %v153 = vpack.c.b16 %v121, %v121
    %v154 = vpack.c.b16 %v122, %v122
    %v155 = vpack.c.b16 %v123, %v123
    %v156 = vpack.c.b16 %v124, %v124
    %v157 = vpack.c.b16 %v125, %v125
    %v158 = vpack.c.b16 %v126, %v126
    %v159 = vpack.c.b16 %v127, %v127
    %v160 = vpack.c.b16 %v128, %v128
    %v161 = vpack.c.b16 %v129, %v129
    %v162 = vpack.c.b16 %v130, %v130
    %v163 = vpack.c.b16 %v131, %v131
    %v164 = vpack.c.b16 %v132, %v132
    %v165 = vpack.c.b16 %v133, %v133
    %v166 = vpack.c.b16 %v134, %v134
    %v167 = vpack.c.b16 %v135, %v135
    %v168 = vpack.c.b16 %v136, %v136
    %v169 = vpack.c.b16 %v137, %v137
    %v170 = vpack.c.b16 %v138, %v138
    %v171 = vpack.c.b16 %v139, %v139
    %v172 = vpack.c.b16 %v140, %v140
    %v173 = vpack.c.b16 %v141, %v141
    %v174 = vpack.c.b16 %v142, %v142
    %v175 = vpack.c.b16 %v143, %v143
    %v176 = vpack.c.b16 %v144, %v144
    %v177 = vpack.c.b16 %v145, %v145
    %vm178 = vsmask.f32 3328
    %vm179 = vsmask.f32 7440
    %vm180 = vmor %vm178, %vm179
    %v182 = vshrl.u32 %v146, 16
    %v184 = vrot.slane %v182, 4
    %v185 = vshll.u32 %v146, 16
    %v187 = vrot.slane %v185, 5
    %v188 = vor.u32 %v184, %v187
    %v189 = vrot.slane %v188, 4
    %v191 = vshll.u32 %v147, 16
    %v193 = vrot.slane %v191, 5
    %v194 = vsel %vm180, %v189, %v193
    %v196 = vshrl.u32 %v148, 16
    %v198 = vrot.slane %v196, 4
    %v199 = vshll.u32 %v148, 16
    %v201 = vrot.slane %v199, 5
    %v202 = vor.u32 %v198, %v201
    %v203 = vrot.slane %v202, 4
    %v205 = vshll.u32 %v149, 16
    %v207 = vrot.slane %v205, 5
    %v208 = vsel %vm180, %v203, %v207
    %v210 = vshrl.u32 %v150, 16
    %v212 = vrot.slane %v210, 4
    %v213 = vshll.u32 %v150, 16
    %v215 = vrot.slane %v213, 5
    %v216 = vor.u32 %v212, %v215
    %v217 = vrot.slane %v216, 4
    %v219 = vshll.u32 %v151, 16
    %v221 = vrot.slane %v219, 5
    %v222 = vsel %vm180, %v217, %v221
    %v224 = vshrl.u32 %v152, 16
    %v226 = vrot.slane %v224, 4
    %v227 = vshll.u32 %v152, 16
    %v229 = vrot.slane %v227, 5
    %v230 = vor.u32 %v226, %v229
    %v231 = vrot.slane %v230, 4
    %v233 = vshll.u32 %v153, 16
    %v235 = vrot.slane %v233, 5
    %v236 = vsel %vm180, %v231, %v235
    %v238 = vshrl.u32 %v154, 16
    %v240 = vrot.slane %v238, 4
    %v241 = vshll.u32 %v154, 16
    %v243 = vrot.slane %v241, 5
    %v244 = vor.u32 %v240, %v243
    %v245 = vrot.slane %v244, 4
    %v247 = vshll.u32 %v155, 16
    %v249 = vrot.slane %v247, 5
    %v250 = vsel %vm180, %v245, %v249
    %v252 = vshrl.u32 %v156, 16
    %v254 = vrot.slane %v252, 4
    %v255 = vshll.u32 %v156, 16
    %v257 = vrot.slane %v255, 5
    %v258 = vor.u32 %v254, %v257
    %v259 = vrot.slane %v258, 4
    %v261 = vshll.u32 %v157, 16
    %v263 = vrot.slane %v261, 5
    %v264 = vsel %vm180, %v259, %v263
    %v266 = vshrl.u32 %v158, 16
    %v268 = vrot.slane %v266, 4
    %v269 = vshll.u32 %v158, 16
    %v271 = vrot.slane %v269, 5
    %v272 = vor.u32 %v268, %v271
    %v273 = vrot.slane %v272, 4
    %v275 = vshll.u32 %v159, 16
    %v277 = vrot.slane %v275, 5
    %v278 = vsel %vm180, %v273, %v277
    %v280 = vshrl.u32 %v160, 16
    %v282 = vrot.slane %v280, 4
    %v283 = vshll.u32 %v160, 16
    %v285 = vrot.slane %v283, 5
    %v286 = vor.u32 %v282, %v285
    %v287 = vrot.slane %v286, 4
    %v289 = vshll.u32 %v161, 16
    %v291 = vrot.slane %v289, 5
    %v292 = vsel %vm180, %v287, %v291
    %v294 = vshrl.u32 %v162, 16
    %v296 = vrot.slane %v294, 4
    %v297 = vshll.u32 %v162, 16
    %v299 = vrot.slane %v297, 5
    %v300 = vor.u32 %v296, %v299
    %v301 = vrot.slane %v300, 4
    %v303 = vshll.u32 %v163, 16
    %v305 = vrot.slane %v303, 5
    %v306 = vsel %vm180, %v301, %v305
    %v308 = vshrl.u32 %v164, 16
    %v310 = vrot.slane %v308, 4
    %v311 = vshll.u32 %v164, 16
    %v313 = vrot.slane %v311, 5
    %v314 = vor.u32 %v310, %v313
    %v315 = vrot.slane %v314, 4
    %v317 = vshll.u32 %v165, 16
    %v319 = vrot.slane %v317, 5
    %v320 = vsel %vm180, %v315, %v319
    %v322 = vshrl.u32 %v166, 16
    %v324 = vrot.slane %v322, 4
    %v325 = vshll.u32 %v166, 16
    %v327 = vrot.slane %v325, 5
    %v328 = vor.u32 %v324, %v327
    %v329 = vrot.slane %v328, 4
    %v331 = vshll.u32 %v167, 16
    %v333 = vrot.slane %v331, 5
    %v334 = vsel %vm180, %v329, %v333
    %v336 = vshrl.u32 %v168, 16
    %v338 = vrot.slane %v336, 4
    %v339 = vshll.u32 %v168, 16
    %v341 = vrot.slane %v339, 5
    %v342 = vor.u32 %v338, %v341
    %v343 = vrot.slane %v342, 4
    %v345 = vshll.u32 %v169, 16
    %v347 = vrot.slane %v345, 5
    %v348 = vsel %vm180, %v343, %v347
    %v350 = vshrl.u32 %v170, 16
    %v352 = vrot.slane %v350, 4
    %v353 = vshll.u32 %v170, 16
    %v355 = vrot.slane %v353, 5
    %v356 = vor.u32 %v352, %v355
    %v357 = vrot.slane %v356, 4
    %v359 = vshll.u32 %v171, 16
    %v361 = vrot.slane %v359, 5
    %v362 = vsel %vm180, %v357, %v361
    %v364 = vshrl.u32 %v172, 16
    %v366 = vrot.slane %v364, 4
    %v367 = vshll.u32 %v172, 16
    %v369 = vrot.slane %v367, 5
    %v370 = vor.u32 %v366, %v369
    %v371 = vrot.slane %v370, 4
    %v373 = vshll.u32 %v173, 16
    %v375 = vrot.slane %v373, 5
    %v376 = vsel %vm180, %v371, %v375
    %v378 = vshrl.u32 %v174, 16
    %v380 = vrot.slane %v378, 4
    %v381 = vshll.u32 %v174, 16
    %v383 = vrot.slane %v381, 5
    %v384 = vor.u32 %v380, %v383
    %v385 = vrot.slane %v384, 4
    %v387 = vshll.u32 %v175, 16
    %v389 = vrot.slane %v387, 5
    %v390 = vsel %vm180, %v385, %v389
    %v392 = vshrl.u32 %v176, 16
    %v394 = vrot.slane %v392, 4
    %v395 = vshll.u32 %v176, 16
    %v397 = vrot.slane %v395, 5
    %v398 = vor.u32 %v394, %v397
    %v399 = vrot.slane %v398, 4
    %v401 = vshll.u32 %v177, 16
    %v403 = vrot.slane %v401, 5
    %v404 = vsel %vm180, %v399, %v403
    %s405 = scalar_lea.vmem %s1, 2
    %v406 = vld [vmem:[%s405] sm:$0x3]
    %v407 = vunpack.c.l.b16 %v194
    %v408 = vunpack.c.l.b16 %v208
    %v409 = vunpack.c.l.b16 %v222
    %v410 = vunpack.c.l.b16 %v236
    %v411 = vunpack.c.l.b16 %v250
    %v412 = vunpack.c.l.b16 %v264
    %v413 = vunpack.c.l.b16 %v278
    %v414 = vunpack.c.l.b16 %v292
    %v415 = vunpack.c.l.b16 %v306
    %v416 = vunpack.c.l.b16 %v320
    %v417 = vunpack.c.l.b16 %v334
    %v418 = vunpack.c.l.b16 %v348
    %v419 = vunpack.c.l.b16 %v362
    %v420 = vunpack.c.l.b16 %v376
    %v421 = vunpack.c.l.b16 %v390
    %v422 = vunpack.c.l.b16 %v404
    %v423 = vpack.c.b16 %v408, %v407
    %v424 = vpack.c.b16 %v410, %v409
    %v425 = vpack.c.b16 %v412, %v411
    %v426 = vpack.c.b16 %v414, %v413
    %v427 = vpack.c.b16 %v416, %v415
    %v428 = vpack.c.b16 %v418, %v417
    %v429 = vpack.c.b16 %v420, %v419
    %v430 = vpack.c.b16 %v422, %v421
    %vm431 = vcmask 31744
    %v433 = vsel %vm431, %v423, 0
    %v436 = vsel %vm431, %v424, 0
    %v439 = vsel %vm431, %v425, 0
    %v442 = vsel %vm431, %v426, 0
    %v445 = vsel %vm431, %v427, 0
    %v448 = vsel %vm431, %v428, 0
    %v451 = vsel %vm431, %v429, 0
    %v454 = vsel %vm431, %v430, 0
    %vm456 = vcmask 1041408
    %v458 = vsel %vm456, %v406, 0
    %460 = vmatprep.subr.bf16.mxu0 0
    %461 = vmatpush1.bf16.msra.mxu0 %v458
    %462 = vmatprep.subr.bf16.mxu0 0
    %463 = vmatpush1.bf16.msra.mxu0 0
    %464 = vmatprep.subr.bf16.mxu0 0
    %465 = vmatpush1.bf16.msra.mxu0 0
    %466 = vmatprep.subr.bf16.mxu0 0
    %467 = vmatpush1.bf16.msra.mxu0 0
    %468 = vmatprep.subr.bf16.mxu0 0
    %469 = vmatpush1.bf16.msra.mxu0 0
    %470 = vmatprep.subr.bf16.mxu0 0
    %471 = vmatpush1.bf16.msra.mxu0 0
    %472 = vmatprep.subr.bf16.mxu0 0
    %473 = vmatpush1.bf16.msra.mxu0 0
    %474 = vmatprep.subr.bf16.mxu0 0
    %475 = vmatpush1.bf16.msra.mxu0 0
    %476 = vmatprep.subr.bf16.mxu0 0
    %477 = vmatpush1.bf16.msra.mxu0 0
    %478 = vmatprep.subr.bf16.mxu0 0
    %479 = vmatpush1.bf16.msra.mxu0 0
    %480 = vmatprep.subr.bf16.mxu0 0
    %481 = vmatpush1.bf16.msra.mxu0 0
    %482 = vmatprep.subr.bf16.mxu0 0
    %483 = vmatpush1.bf16.msra.mxu0 0
    %484 = vmatprep.subr.bf16.mxu0 0
    %485 = vmatpush1.bf16.msra.mxu0 0
    %486 = vmatprep.subr.bf16.mxu0 0
    %487 = vmatpush1.bf16.msra.mxu0 0
    %488 = vmatprep.subr.bf16.mxu0 0
    %489 = vmatpush1.bf16.msra.mxu0 0
    %490 = vmatprep.subr.bf16.mxu0 0
    %491 = vmatpush1.bf16.msra.mxu0 0
    %492 = vmatprep.mubr.bf16.mxu0 0
    %493 = vmatmul.mubr.bf16.gmra.mrb[0].mxu0 %v433
    %v494 = vpop.f32.mrb[0].mxu0
    %v495 = vadd.f32 0.0, %v494
    %v496 = vpop.f32.mrb[0].mxu0
    %v497 = vpop.f32.mrb[0].mxu0
    %v498 = vadd.f32 0.0, %v497
    %v499 = vpop.f32.mrb[0].mxu0
    %500 = vmatprep.mubr.bf16.mxu0 0
    %501 = vmatmul.mubr.bf16.gmra.mrb[0].mxu0 %v436
    %v502 = vpop.f32.mrb[0].mxu0
    %v503 = vadd.f32 0.0, %v502
    %v504 = vpop.f32.mrb[0].mxu0
    %v505 = vpop.f32.mrb[0].mxu0
    %v506 = vadd.f32 0.0, %v505
    %v507 = vpop.f32.mrb[0].mxu0
    %508 = vmatprep.mubr.bf16.mxu0 0
    %509 = vmatmul.mubr.bf16.gmra.mrb[0].mxu0 %v439
    %v510 = vpop.f32.mrb[0].mxu0
    %v511 = vadd.f32 0.0, %v510
    %v512 = vpop.f32.mrb[0].mxu0
    %v513 = vpop.f32.mrb[0].mxu0
    %v514 = vadd.f32 0.0, %v513
    %v515 = vpop.f32.mrb[0].mxu0
    %516 = vmatprep.mubr.bf16.mxu0 0
    %517 = vmatmul.mubr.bf16.gmra.mrb[0].mxu0 %v442
    %v518 = vpop.f32.mrb[0].mxu0
    %v519 = vadd.f32 0.0, %v518
    %v520 = vpop.f32.mrb[0].mxu0
    %v521 = vpop.f32.mrb[0].mxu0
    %v522 = vadd.f32 0.0, %v521
    %v523 = vpop.f32.mrb[0].mxu0
    %524 = vmatprep.mubr.bf16.mxu0 0
    %525 = vmatmul.mubr.bf16.gmra.mrb[0].mxu0 %v445
    %v526 = vpop.f32.mrb[0].mxu0
    %v527 = vadd.f32 0.0, %v526
    %v528 = vpop.f32.mrb[0].mxu0
    %v529 = vpop.f32.mrb[0].mxu0
    %v530 = vadd.f32 0.0, %v529
    %v531 = vpop.f32.mrb[0].mxu0
    %532 = vmatprep.mubr.bf16.mxu0 0
    %533 = vmatmul.mubr.bf16.gmra.mrb[0].mxu0 %v448
    %v534 = vpop.f32.mrb[0].mxu0
    %v535 = vadd.f32 0.0, %v534
    %v536 = vpop.f32.mrb[0].mxu0
    %v537 = vpop.f32.mrb[0].mxu0
    %v538 = vadd.f32 0.0, %v537
    %v539 = vpop.f32.mrb[0].mxu0
    %540 = vmatprep.mubr.bf16.mxu0 0
    %541 = vmatmul.mubr.bf16.gmra.mrb[0].mxu0 %v451
    %v542 = vpop.f32.mrb[0].mxu0
    %v543 = vadd.f32 0.0, %v542
    %v544 = vpop.f32.mrb[0].mxu0
    %v545 = vpop.f32.mrb[0].mxu0
    %v546 = vadd.f32 0.0, %v545
    %v547 = vpop.f32.mrb[0].mxu0
    %548 = vmatprep.mubr.bf16.mxu0 0
    %549 = vmatmul.mubr.bf16.gmra.mrb[0].mxu0 %v454
    %v550 = vpop.f32.mrb[0].mxu0
    %v551 = vadd.f32 0.0, %v550
    %v552 = vpop.f32.mrb[0].mxu0
    %v553 = vpop.f32.mrb[0].mxu0
    %v554 = vadd.f32 0.0, %v553
    %v555 = vpop.f32.mrb[0].mxu0
    %556 = vdwg.mxu0
    %v557 = vpack.c.b16 %v116, %v114
    %v558 = vpack.c.b16 %v120, %v118
    %v559 = vpack.c.b16 %v124, %v122
    %v560 = vpack.c.b16 %v128, %v126
    %v561 = vpack.c.b16 %v132, %v130
    %v562 = vpack.c.b16 %v136, %v134
    %v563 = vpack.c.b16 %v140, %v138
    %v564 = vpack.c.b16 %v144, %v142
    %v566 = vsel %vm431, %v557, 0
    %v569 = vsel %vm431, %v558, 0
    %v572 = vsel %vm431, %v559, 0
    %v575 = vsel %vm431, %v560, 0
    %v578 = vsel %vm431, %v561, 0
    %v581 = vsel %vm431, %v562, 0
    %v584 = vsel %vm431, %v563, 0
    %v587 = vsel %vm431, %v564, 0
    %v590 = vsel %vm456, %v97, 0
    %592 = vmatprep.subr.bf16.mxu0 0
    %593 = vmatpush1.bf16.msra.mxu0 %v590
    %594 = vmatprep.subr.bf16.mxu0 0
    %595 = vmatpush1.bf16.msra.mxu0 0
    %596 = vmatprep.subr.bf16.mxu0 0
    %597 = vmatpush1.bf16.msra.mxu0 0
    %598 = vmatprep.subr.bf16.mxu0 0
    %599 = vmatpush1.bf16.msra.mxu0 0
    %600 = vmatprep.subr.bf16.mxu0 0
    %601 = vmatpush1.bf16.msra.mxu0 0
    %602 = vmatprep.subr.bf16.mxu0 0
    %603 = vmatpush1.bf16.msra.mxu0 0
    %604 = vmatprep.subr.bf16.mxu0 0
    %605 = vmatpush1.bf16.msra.mxu0 0
    %606 = vmatprep.subr.bf16.mxu0 0
    %607 = vmatpush1.bf16.msra.mxu0 0
    %608 = vmatprep.subr.bf16.mxu0 0
    %609 = vmatpush1.bf16.msra.mxu0 0
    %610 = vmatprep.subr.bf16.mxu0 0
    %611 = vmatpush1.bf16.msra.mxu0 0
    %612 = vmatprep.subr.bf16.mxu0 0
    %613 = vmatpush1.bf16.msra.mxu0 0
    %614 = vmatprep.subr.bf16.mxu0 0
    %615 = vmatpush1.bf16.msra.mxu0 0
    %616 = vmatprep.subr.bf16.mxu0 0
    %617 = vmatpush1.bf16.msra.mxu0 0
    %618 = vmatprep.subr.bf16.mxu0 0
    %619 = vmatpush1.bf16.msra.mxu0 0
    %620 = vmatprep.subr.bf16.mxu0 0
    %621 = vmatpush1.bf16.msra.mxu0 0
    %622 = vmatprep.subr.bf16.mxu0 0
    %623 = vmatpush1.bf16.msra.mxu0 0
    %624 = vmatprep.mubr.bf16.mxu0 0
    %625 = vmatmul.mubr.bf16.gmra.mrb[0].mxu0 %v566
    %v626 = vpop.f32.mrb[0].mxu0
    %v627 = vadd.f32 %v495, %v626
    %v628 = vpop.f32.mrb[0].mxu0
    %v629 = vpop.f32.mrb[0].mxu0
    %v630 = vadd.f32 %v498, %v629
    %v631 = vpop.f32.mrb[0].mxu0
    %632 = vmatprep.mubr.bf16.mxu0 0
    %633 = vmatmul.mubr.bf16.gmra.mrb[0].mxu0 %v569
    %v634 = vpop.f32.mrb[0].mxu0
    %v635 = vadd.f32 %v503, %v634
    %v636 = vpop.f32.mrb[0].mxu0
    %v637 = vpop.f32.mrb[0].mxu0
    %v638 = vadd.f32 %v506, %v637
    %v639 = vpop.f32.mrb[0].mxu0
    %640 = vmatprep.mubr.bf16.mxu0 0
    %641 = vmatmul.mubr.bf16.gmra.mrb[0].mxu0 %v572
    %v642 = vpop.f32.mrb[0].mxu0
    %v643 = vadd.f32 %v511, %v642
    %v644 = vpop.f32.mrb[0].mxu0
    %v645 = vpop.f32.mrb[0].mxu0
    %v646 = vadd.f32 %v514, %v645
    %v647 = vpop.f32.mrb[0].mxu0
    %648 = vmatprep.mubr.bf16.mxu0 0
    %649 = vmatmul.mubr.bf16.gmra.mrb[0].mxu0 %v575
    %v650 = vpop.f32.mrb[0].mxu0
    %v651 = vadd.f32 %v519, %v650
    %v652 = vpop.f32.mrb[0].mxu0
    %v653 = vpop.f32.mrb[0].mxu0
    %v654 = vadd.f32 %v522, %v653
    %v655 = vpop.f32.mrb[0].mxu0
    %656 = vmatprep.mubr.bf16.mxu0 0
    %657 = vmatmul.mubr.bf16.gmra.mrb[0].mxu0 %v578
    %v658 = vpop.f32.mrb[0].mxu0
    %v659 = vadd.f32 %v527, %v658
    %v660 = vpop.f32.mrb[0].mxu0
    %v661 = vpop.f32.mrb[0].mxu0
    %v662 = vadd.f32 %v530, %v661
    %v663 = vpop.f32.mrb[0].mxu0
    %664 = vmatprep.mubr.bf16.mxu0 0
    %665 = vmatmul.mubr.bf16.gmra.mrb[0].mxu0 %v581
    %v666 = vpop.f32.mrb[0].mxu0
    %v667 = vadd.f32 %v535, %v666
    %v668 = vpop.f32.mrb[0].mxu0
    %v669 = vpop.f32.mrb[0].mxu0
    %v670 = vadd.f32 %v538, %v669
    %v671 = vpop.f32.mrb[0].mxu0
    %672 = vmatprep.mubr.bf16.mxu0 0
    %673 = vmatmul.mubr.bf16.gmra.mrb[0].mxu0 %v584
    %v674 = vpop.f32.mrb[0].mxu0
    %v675 = vadd.f32 %v543, %v674
    %v676 = vpop.f32.mrb[0].mxu0
    %v677 = vpop.f32.mrb[0].mxu0
    %v678 = vadd.f32 %v546, %v677
    %v679 = vpop.f32.mrb[0].mxu0
    %680 = vmatprep.mubr.bf16.mxu0 0
    %681 = vmatmul.mubr.bf16.gmra.mrb[0].mxu0 %v587
    %v682 = vpop.f32.mrb[0].mxu0
    %v683 = vadd.f32 %v551, %v682
    %v684 = vpop.f32.mrb[0].mxu0
    %v685 = vpop.f32.mrb[0].mxu0
    %v686 = vadd.f32 %v554, %v685
    %v687 = vpop.f32.mrb[0].mxu0
    %688 = vdwg.mxu0
    %s689 = scalar_lea.vmem %s1, 4
    %v690 = vld [vmem:[%s689] sm:$0x3]
    %v693 = vunpack.c.l.b16 %v87
    %v694 = vunpack.c.l.b16 %v96
    %v695 = vpack.c.b16 %v118, %v116
    %v696 = vpack.c.b16 %v122, %v120
    %v697 = vpack.c.b16 %v126, %v124
    %v698 = vpack.c.b16 %v693, %v128
    %v699 = vpack.c.b16 %v134, %v132
    %v700 = vpack.c.b16 %v138, %v136
    %v701 = vpack.c.b16 %v142, %v140
    %v702 = vpack.c.b16 %v694, %v144
    %v704 = vsel %vm431, %v695, 0
    %v707 = vsel %vm431, %v696, 0
    %v710 = vsel %vm431, %v697, 0
    %v713 = vsel %vm431, %v698, 0
    %v716 = vsel %vm431, %v699, 0
    %v719 = vsel %vm431, %v700, 0
    %v722 = vsel %vm431, %v701, 0
    %v725 = vsel %vm431, %v702, 0
    %v728 = vsel %vm456, %v690, 0
    %730 = vmatprep.subr.bf16.mxu0 0
    %731 = vmatpush1.bf16.msra.mxu0 %v728
    %732 = vmatprep.subr.bf16.mxu0 0
    %733 = vmatpush1.bf16.msra.mxu0 0
    %734 = vmatprep.subr.bf16.mxu0 0
    %735 = vmatpush1.bf16.msra.mxu0 0
    %736 = vmatprep.subr.bf16.mxu0 0
    %737 = vmatpush1.bf16.msra.mxu0 0
    %738 = vmatprep.subr.bf16.mxu0 0
    %739 = vmatpush1.bf16.msra.mxu0 0
    %740 = vmatprep.subr.bf16.mxu0 0
    %741 = vmatpush1.bf16.msra.mxu0 0
    %742 = vmatprep.subr.bf16.mxu0 0
    %743 = vmatpush1.bf16.msra.mxu0 0
    %744 = vmatprep.subr.bf16.mxu0 0
    %745 = vmatpush1.bf16.msra.mxu0 0
    %746 = vmatprep.subr.bf16.mxu0 0
    %747 = vmatpush1.bf16.msra.mxu0 0
    %748 = vmatprep.subr.bf16.mxu0 0
    %749 = vmatpush1.bf16.msra.mxu0 0
    %750 = vmatprep.subr.bf16.mxu0 0
    %751 = vmatpush1.bf16.msra.mxu0 0
    %752 = vmatprep.subr.bf16.mxu0 0
    %753 = vmatpush1.bf16.msra.mxu0 0
    %754 = vmatprep.subr.bf16.mxu0 0
    %755 = vmatpush1.bf16.msra.mxu0 0
    %756 = vmatprep.subr.bf16.mxu0 0
    %757 = vmatpush1.bf16.msra.mxu0 0
    %758 = vmatprep.subr.bf16.mxu0 0
    %759 = vmatpush1.bf16.msra.mxu0 0
    %760 = vmatprep.subr.bf16.mxu0 0
    %761 = vmatpush1.bf16.msra.mxu0 0
    %762 = vmatprep.mubr.bf16.mxu0 0
    %763 = vmatmul.mubr.bf16.gmra.mrb[0].mxu0 %v704
    %v764 = vpop.f32.mrb[0].mxu0
    %v765 = vadd.f32 0.0, %v764
    %v766 = vpop.f32.mrb[0].mxu0
    %v767 = vpop.f32.mrb[0].mxu0
    %v768 = vadd.f32 0.0, %v767
    %v769 = vpop.f32.mrb[0].mxu0
    %770 = vmatprep.mubr.bf16.mxu0 0
    %771 = vmatmul.mubr.bf16.gmra.mrb[0].mxu0 %v707
    %v772 = vpop.f32.mrb[0].mxu0
    %v773 = vadd.f32 0.0, %v772
    %v774 = vpop.f32.mrb[0].mxu0
    %v775 = vpop.f32.mrb[0].mxu0
    %v776 = vadd.f32 0.0, %v775
    %v777 = vpop.f32.mrb[0].mxu0
    %778 = vmatprep.mubr.bf16.mxu0 0
    %779 = vmatmul.mubr.bf16.gmra.mrb[0].mxu0 %v710
    %v780 = vpop.f32.mrb[0].mxu0
    %v781 = vadd.f32 0.0, %v780
    %v782 = vpop.f32.mrb[0].mxu0
    %v783 = vpop.f32.mrb[0].mxu0
    %v784 = vadd.f32 0.0, %v783
    %v785 = vpop.f32.mrb[0].mxu0
    %786 = vmatprep.mubr.bf16.mxu0 0
    %787 = vmatmul.mubr.bf16.gmra.mrb[0].mxu0 %v713
    %v788 = vpop.f32.mrb[0].mxu0
    %v789 = vadd.f32 0.0, %v788
    %v790 = vpop.f32.mrb[0].mxu0
    %v791 = vpop.f32.mrb[0].mxu0
    %v792 = vadd.f32 0.0, %v791
    %v793 = vpop.f32.mrb[0].mxu0
    %794 = vmatprep.mubr.bf16.mxu0 0
    %795 = vmatmul.mubr.bf16.gmra.mrb[0].mxu0 %v716
    %v796 = vpop.f32.mrb[0].mxu0
    %v797 = vadd.f32 0.0, %v796
    %v798 = vpop.f32.mrb[0].mxu0
    %v799 = vpop.f32.mrb[0].mxu0
    %v800 = vadd.f32 0.0, %v799
    %v801 = vpop.f32.mrb[0].mxu0
    %802 = vmatprep.mubr.bf16.mxu0 0
    %803 = vmatmul.mubr.bf16.gmra.mrb[0].mxu0 %v719
    %v804 = vpop.f32.mrb[0].mxu0
    %v805 = vadd.f32 0.0, %v804
    %v806 = vpop.f32.mrb[0].mxu0
    %v807 = vpop.f32.mrb[0].mxu0
    %v808 = vadd.f32 0.0, %v807
    %v809 = vpop.f32.mrb[0].mxu0
    %810 = vmatprep.mubr.bf16.mxu0 0
    %811 = vmatmul.mubr.bf16.gmra.mrb[0].mxu0 %v722
    %v812 = vpop.f32.mrb[0].mxu0
    %v813 = vadd.f32 0.0, %v812
    %v814 = vpop.f32.mrb[0].mxu0
    %v815 = vpop.f32.mrb[0].mxu0
    %v816 = vadd.f32 0.0, %v815
    %v817 = vpop.f32.mrb[0].mxu0
    %818 = vmatprep.mubr.bf16.mxu0 0
    %819 = vmatmul.mubr.bf16.gmra.mrb[0].mxu0 %v725
    %v820 = vpop.f32.mrb[0].mxu0
    %v821 = vadd.f32 0.0, %v820
    %v822 = vpop.f32.mrb[0].mxu0
    %v823 = vpop.f32.mrb[0].mxu0
    %v824 = vadd.f32 0.0, %v823
    %v825 = vpop.f32.mrb[0].mxu0
    %826 = vdwg.mxu0
    %v827 = vadd.f32 %v627, %v765
    %v828 = vadd.f32 %v630, %v768
    %v829 = vadd.f32 %v635, %v773
    %v830 = vadd.f32 %v638, %v776
    %v831 = vadd.f32 %v643, %v781
    %v832 = vadd.f32 %v646, %v784
    %v833 = vadd.f32 %v651, %v789
    %v834 = vadd.f32 %v654, %v792
    %v835 = vadd.f32 %v659, %v797
    %v836 = vadd.f32 %v662, %v800
    %v837 = vadd.f32 %v667, %v805
    %v838 = vadd.f32 %v670, %v808
    %v839 = vadd.f32 %v675, %v813
    %v840 = vadd.f32 %v678, %v816
    %v841 = vadd.f32 %v683, %v821
    %v842 = vadd.f32 %v686, %v824
    %v843 = vunpack.c.h.b16 %v87
    %v844 = vunpack.c.h.b16 %v96
    %v845 = vpack.c.b16 %v693, %v693
    %v846 = vpack.c.b16 %v843, %v843
    %v847 = vpack.c.b16 %v694, %v694
    %v848 = vpack.c.b16 %v844, %v844
    %v850 = vshrl.u32 %v845, 16
    %v852 = vrot.slane %v850, 4
    %v853 = vshll.u32 %v845, 16
    %v855 = vrot.slane %v853, 5
    %v856 = vor.u32 %v852, %v855
    %v857 = vrot.slane %v856, 4
    %v859 = vshll.u32 %v846, 16
    %v861 = vrot.slane %v859, 5
    %v862 = vsel %vm180, %v857, %v861
    %v864 = vshrl.u32 %v847, 16
    %v866 = vrot.slane %v864, 4
    %v867 = vshll.u32 %v847, 16
    %v869 = vrot.slane %v867, 5
    %v870 = vor.u32 %v866, %v869
    %v871 = vrot.slane %v870, 4
    %v873 = vshll.u32 %v848, 16
    %v875 = vrot.slane %v873, 5
    %v876 = vsel %vm180, %v871, %v875
    %s877 = scalar_lea.vmem %s1, 6
    %v878 = vld [vmem:[%s877] sm:$0x3]
    %v879 = vunpack.c.l.b16 %v862
    %v880 = vunpack.c.l.b16 %v876
    %v881 = vpack.c.b16 %v409, %v408
    %v882 = vpack.c.b16 %v411, %v410
    %v883 = vpack.c.b16 %v413, %v412
    %v884 = vpack.c.b16 %v879, %v414
    %v885 = vpack.c.b16 %v417, %v416
    %v886 = vpack.c.b16 %v419, %v418
    %v887 = vpack.c.b16 %v421, %v420
    %v888 = vpack.c.b16 %v880, %v422
    %v890 = vsel %vm431, %v881, 0
    %v893 = vsel %vm431, %v882, 0
    %v896 = vsel %vm431, %v883, 0
    %v899 = vsel %vm431, %v884, 0
    %v902 = vsel %vm431, %v885, 0
    %v905 = vsel %vm431, %v886, 0
    %v908 = vsel %vm431, %v887, 0
    %v911 = vsel %vm431, %v888, 0
    %v914 = vsel %vm456, %v878, 0
    %916 = vmatprep.subr.bf16.mxu0 0
    %917 = vmatpush1.bf16.msra.mxu0 %v914
    %918 = vmatprep.subr.bf16.mxu0 0
    %919 = vmatpush1.bf16.msra.mxu0 0
    %920 = vmatprep.subr.bf16.mxu0 0
    %921 = vmatpush1.bf16.msra.mxu0 0
    %922 = vmatprep.subr.bf16.mxu0 0
    %923 = vmatpush1.bf16.msra.mxu0 0
    %924 = vmatprep.subr.bf16.mxu0 0
    %925 = vmatpush1.bf16.msra.mxu0 0
    %926 = vmatprep.subr.bf16.mxu0 0
    %927 = vmatpush1.bf16.msra.mxu0 0
    %928 = vmatprep.subr.bf16.mxu0 0
    %929 = vmatpush1.bf16.msra.mxu0 0
    %930 = vmatprep.subr.bf16.mxu0 0
    %931 = vmatpush1.bf16.msra.mxu0 0
    %932 = vmatprep.subr.bf16.mxu0 0
    %933 = vmatpush1.bf16.msra.mxu0 0
    %934 = vmatprep.subr.bf16.mxu0 0
    %935 = vmatpush1.bf16.msra.mxu0 0
    %936 = vmatprep.subr.bf16.mxu0 0
    %937 = vmatpush1.bf16.msra.mxu0 0
    %938 = vmatprep.subr.bf16.mxu0 0
    %939 = vmatpush1.bf16.msra.mxu0 0
    %940 = vmatprep.subr.bf16.mxu0 0
    %941 = vmatpush1.bf16.msra.mxu0 0
    %942 = vmatprep.subr.bf16.mxu0 0
    %943 = vmatpush1.bf16.msra.mxu0 0
    %944 = vmatprep.subr.bf16.mxu0 0
    %945 = vmatpush1.bf16.msra.mxu0 0
    %946 = vmatprep.subr.bf16.mxu0 0
    %947 = vmatpush1.bf16.msra.mxu0 0
    %948 = vmatprep.mubr.bf16.mxu0 0
    %949 = vmatmul.mubr.bf16.gmra.mrb[0].mxu0 %v890
    %v950 = vpop.f32.mrb[0].mxu0
    %v951 = vadd.f32 0.0, %v950
    %v952 = vpop.f32.mrb[0].mxu0
    %v953 = vpop.f32.mrb[0].mxu0
    %v954 = vadd.f32 0.0, %v953
    %v955 = vpop.f32.mrb[0].mxu0
    %956 = vmatprep.mubr.bf16.mxu0 0
    %957 = vmatmul.mubr.bf16.gmra.mrb[0].mxu0 %v893
    %v958 = vpop.f32.mrb[0].mxu0
    %v959 = vadd.f32 0.0, %v958
    %v960 = vpop.f32.mrb[0].mxu0
    %v961 = vpop.f32.mrb[0].mxu0
    %v962 = vadd.f32 0.0, %v961
    %v963 = vpop.f32.mrb[0].mxu0
    %964 = vmatprep.mubr.bf16.mxu0 0
    %965 = vmatmul.mubr.bf16.gmra.mrb[0].mxu0 %v896
    %v966 = vpop.f32.mrb[0].mxu0
    %v967 = vadd.f32 0.0, %v966
    %v968 = vpop.f32.mrb[0].mxu0
    %v969 = vpop.f32.mrb[0].mxu0
    %v970 = vadd.f32 0.0, %v969
    %v971 = vpop.f32.mrb[0].mxu0
    %972 = vmatprep.mubr.bf16.mxu0 0
    %973 = vmatmul.mubr.bf16.gmra.mrb[0].mxu0 %v899
    %v974 = vpop.f32.mrb[0].mxu0
    %v975 = vadd.f32 0.0, %v974
    %v976 = vpop.f32.mrb[0].mxu0
    %v977 = vpop.f32.mrb[0].mxu0
    %v978 = vadd.f32 0.0, %v977
    %v979 = vpop.f32.mrb[0].mxu0
    %980 = vmatprep.mubr.bf16.mxu0 0
    %981 = vmatmul.mubr.bf16.gmra.mrb[0].mxu0 %v902
    %v982 = vpop.f32.mrb[0].mxu0
    %v983 = vadd.f32 0.0, %v982
    %v984 = vpop.f32.mrb[0].mxu0
    %v985 = vpop.f32.mrb[0].mxu0
    %v986 = vadd.f32 0.0, %v985
    %v987 = vpop.f32.mrb[0].mxu0
    %988 = vmatprep.mubr.bf16.mxu0 0
    %989 = vmatmul.mubr.bf16.gmra.mrb[0].mxu0 %v905
    %v990 = vpop.f32.mrb[0].mxu0
    %v991 = vadd.f32 0.0, %v990
    %v992 = vpop.f32.mrb[0].mxu0
    %v993 = vpop.f32.mrb[0].mxu0
    %v994 = vadd.f32 0.0, %v993
    %v995 = vpop.f32.mrb[0].mxu0
    %996 = vmatprep.mubr.bf16.mxu0 0
    %997 = vmatmul.mubr.bf16.gmra.mrb[0].mxu0 %v908
    %v998 = vpop.f32.mrb[0].mxu0
    %v999 = vadd.f32 0.0, %v998
    %v1000 = vpop.f32.mrb[0].mxu0
    %v1001 = vpop.f32.mrb[0].mxu0
    %v1002 = vadd.f32 0.0, %v1001
    %v1003 = vpop.f32.mrb[0].mxu0
    %1004 = vmatprep.mubr.bf16.mxu0 0
    %1005 = vmatmul.mubr.bf16.gmra.mrb[0].mxu0 %v911
    %v1006 = vpop.f32.mrb[0].mxu0
    %v1007 = vadd.f32 0.0, %v1006
    %v1008 = vpop.f32.mrb[0].mxu0
    %v1009 = vpop.f32.mrb[0].mxu0
    %v1010 = vadd.f32 0.0, %v1009
    %v1011 = vpop.f32.mrb[0].mxu0
    %1012 = vdwg.mxu0
    %v1013 = vadd.f32 %v827, %v951
    %v1014 = vadd.f32 %v828, %v954
    %v1015 = vadd.f32 %v829, %v959
    %v1016 = vadd.f32 %v830, %v962
    %v1017 = vadd.f32 %v831, %v967
    %v1018 = vadd.f32 %v832, %v970
    %v1019 = vadd.f32 %v833, %v975
    %v1020 = vadd.f32 %v834, %v978
    %v1021 = vadd.f32 %v835, %v983
    %v1022 = vadd.f32 %v836, %v986
    %v1023 = vadd.f32 %v837, %v991
    %v1024 = vadd.f32 %v838, %v994
    %v1025 = vadd.f32 %v839, %v999
    %v1026 = vadd.f32 %v840, %v1002
    %v1027 = vadd.f32 %v841, %v1007
    %v1028 = vadd.f32 %v842, %v1010
    %1029 = vmatprep.subr.mxu0 0.0
    %1030 = vmatpush1.msra.mxu0 %v1013
    %1031 = vmatprep.subr.mxu0 0.0
    %1032 = vmatpush1.msra.mxu0 %v1014
    %1033 = vmatprep.subr.mxu0 0.0
    %1034 = vmatpush1.msra.mxu0 %v1015
    %1035 = vmatprep.subr.mxu0 0.0
    %1036 = vmatpush1.msra.mxu0 %v1016
    %1037 = vmatprep.subr.mxu0 0.0
    %1038 = vmatpush1.msra.mxu0 %v1017
    %1039 = vmatprep.subr.mxu0 0.0
    %1040 = vmatpush1.msra.mxu0 %v1018
    %1041 = vmatprep.subr.mxu0 0.0
    %1042 = vmatpush1.msra.mxu0 %v1019
    %1043 = vmatprep.subr.mxu0 0.0
    %1044 = vmatpush1.msra.mxu0 %v1020
    %1045 = vmatprep.subr.mxu0 0.0
    %1046 = vmatpush1.msra.mxu0 %v1021
    %1047 = vmatprep.subr.mxu0 0.0
    %1048 = vmatpush1.msra.mxu0 %v1022
    %1049 = vmatprep.subr.mxu0 0.0
    %1050 = vmatpush1.msra.mxu0 %v1023
    %1051 = vmatprep.subr.mxu0 0.0
    %1052 = vmatpush1.msra.mxu0 %v1024
    %1053 = vmatprep.subr.mxu0 0.0
    %1054 = vmatpush1.msra.mxu0 %v1025
    %1055 = vmatprep.subr.mxu0 0.0
    %1056 = vmatpush1.msra.mxu0 %v1026
    %1057 = vmatprep.subr.mxu0 0.0
    %1058 = vmatpush1.msra.mxu0 %v1027
    %1059 = vmatprep.subr.mxu0 0.0
    %1060 = vmatpush1.msra.mxu0 %v1028
    %1061 = vmatprep.subr.mxu0 0.0
    %1062 = vmatpush1.msra.mxu0 0.0
    %1063 = vmatprep.subr.mxu0 0.0
    %1064 = vmatpush1.msra.mxu0 0.0
    %1065 = vmatprep.subr.mxu0 0.0
    %1066 = vmatpush1.msra.mxu0 0.0
    %1067 = vmatprep.subr.mxu0 0.0
    %1068 = vmatpush1.msra.mxu0 0.0
    %1069 = vmatprep.subr.mxu0 0.0
    %1070 = vmatpush1.msra.mxu0 0.0
    %1071 = vmatprep.subr.mxu0 0.0
    %1072 = vmatpush1.msra.mxu0 0.0
    %1073 = vmatprep.subr.mxu0 0.0
    %1074 = vmatpush1.msra.mxu0 0.0
    %1075 = vmatprep.subr.mxu0 0.0
    %1076 = vmatpush1.msra.mxu0 0.0
    %1077 = vmatprep.subr.mxu0 0.0
    %1078 = vmatpush1.msra.mxu0 0.0
    %1079 = vmatprep.subr.mxu0 0.0
    %1080 = vmatpush1.msra.mxu0 0.0
    %1081 = vmatprep.subr.mxu0 0.0
    %1082 = vmatpush1.msra.mxu0 0.0
    %1083 = vmatprep.subr.mxu0 0.0
    %1084 = vmatpush1.msra.mxu0 0.0
    %1085 = vmatprep.subr.mxu0 0.0
    %1086 = vmatpush1.msra.mxu0 0.0
    %1087 = vmatprep.subr.mxu0 0.0
    %1088 = vmatpush1.msra.mxu0 0.0
    %1089 = vmatprep.subr.mxu0 0.0
    %1090 = vmatpush1.msra.mxu0 0.0
    %1091 = vmatprep.subr.mxu0 0.0
    %1092 = vmatpush1.msra.mxu0 0.0
    %1093 = vmatprep.mubr.f32.mxu0 0.0
    %1094 = vmatmul.mubr.f32.gmra.mrb[0].mxu0 1.0
    %v1095 = vpop.f32.mrb[0].mxu0
    %v1096 = vadd.f32 0.0, %v1095
    %v1097 = vpop.f32.mrb[0].mxu0
    %1098 = vdwg.mxu0
    %v1099 = vmul.f32 %v1013, %v1013
    %v1100 = vmul.f32 %v1014, %v1014
    %v1101 = vmul.f32 %v1015, %v1015
    %v1102 = vmul.f32 %v1016, %v1016
    %v1103 = vmul.f32 %v1017, %v1017
    %v1104 = vmul.f32 %v1018, %v1018
    %v1105 = vmul.f32 %v1019, %v1019
    %v1106 = vmul.f32 %v1020, %v1020
    %v1107 = vmul.f32 %v1021, %v1021
    %v1108 = vmul.f32 %v1022, %v1022
    %v1109 = vmul.f32 %v1023, %v1023
    %v1110 = vmul.f32 %v1024, %v1024
    %v1111 = vmul.f32 %v1025, %v1025
    %v1112 = vmul.f32 %v1026, %v1026
    %v1113 = vmul.f32 %v1027, %v1027
    %v1114 = vmul.f32 %v1028, %v1028
    %1115 = vmatprep.subr.mxu0 0.0
    %1116 = vmatpush1.msra.mxu0 %v1099
    %1117 = vmatprep.subr.mxu0 0.0
    %1118 = vmatpush1.msra.mxu0 %v1100
    %1119 = vmatprep.subr.mxu0 0.0
    %1120 = vmatpush1.msra.mxu0 %v1101
    %1121 = vmatprep.subr.mxu0 0.0
    %1122 = vmatpush1.msra.mxu0 %v1102
    %1123 = vmatprep.subr.mxu0 0.0
    %1124 = vmatpush1.msra.mxu0 %v1103
    %1125 = vmatprep.subr.mxu0 0.0
    %1126 = vmatpush1.msra.mxu0 %v1104
    %1127 = vmatprep.subr.mxu0 0.0
    %1128 = vmatpush1.msra.mxu0 %v1105
    %1129 = vmatprep.subr.mxu0 0.0
    %1130 = vmatpush1.msra.mxu0 %v1106
    %1131 = vmatprep.subr.mxu0 0.0
    %1132 = vmatpush1.msra.mxu0 %v1107
    %1133 = vmatprep.subr.mxu0 0.0
    %1134 = vmatpush1.msra.mxu0 %v1108
    %1135 = vmatprep.subr.mxu0 0.0
    %1136 = vmatpush1.msra.mxu0 %v1109
    %1137 = vmatprep.subr.mxu0 0.0
    %1138 = vmatpush1.msra.mxu0 %v1110
    %1139 = vmatprep.subr.mxu0 0.0
    %1140 = vmatpush1.msra.mxu0 %v1111
    %1141 = vmatprep.subr.mxu0 0.0
    %1142 = vmatpush1.msra.mxu0 %v1112
    %1143 = vmatprep.subr.mxu0 0.0
    %1144 = vmatpush1.msra.mxu0 %v1113
    %1145 = vmatprep.subr.mxu0 0.0
    %1146 = vmatpush1.msra.mxu0 %v1114
    %1147 = vmatprep.subr.mxu0 0.0
    %1148 = vmatpush1.msra.mxu0 0.0
    %1149 = vmatprep.subr.mxu0 0.0
    %1150 = vmatpush1.msra.mxu0 0.0
    %1151 = vmatprep.subr.mxu0 0.0
    %1152 = vmatpush1.msra.mxu0 0.0
    %1153 = vmatprep.subr.mxu0 0.0
    %1154 = vmatpush1.msra.mxu0 0.0
    %1155 = vmatprep.subr.mxu0 0.0
    %1156 = vmatpush1.msra.mxu0 0.0
    %1157 = vmatprep.subr.mxu0 0.0
    %1158 = vmatpush1.msra.mxu0 0.0
    %1159 = vmatprep.subr.mxu0 0.0
    %1160 = vmatpush1.msra.mxu0 0.0
    %1161 = vmatprep.subr.mxu0 0.0
    %1162 = vmatpush1.msra.mxu0 0.0
    %1163 = vmatprep.subr.mxu0 0.0
    %1164 = vmatpush1.msra.mxu0 0.0
    %1165 = vmatprep.subr.mxu0 0.0
    %1166 = vmatpush1.msra.mxu0 0.0
    %1167 = vmatprep.subr.mxu0 0.0
    %1168 = vmatpush1.msra.mxu0 0.0
    %1169 = vmatprep.subr.mxu0 0.0
    %1170 = vmatpush1.msra.mxu0 0.0
    %1171 = vmatprep.subr.mxu0 0.0
    %1172 = vmatpush1.msra.mxu0 0.0
    %1173 = vmatprep.subr.mxu0 0.0
    %1174 = vmatpush1.msra.mxu0 0.0
    %1175 = vmatprep.subr.mxu0 0.0
    %1176 = vmatpush1.msra.mxu0 0.0
    %1177 = vmatprep.subr.mxu0 0.0
    %1178 = vmatpush1.msra.mxu0 0.0
    %1179 = vmatprep.mubr.f32.mxu0 0.0
    %1180 = vmatmul.mubr.f32.gmra.mrb[0].mxu0 1.0
    %v1181 = vpop.f32.mrb[0].mxu0
    %v1182 = vadd.f32 0.0, %v1181
    %v1183 = vpop.f32.mrb[0].mxu0
    %1184 = vdwg.mxu0
    %v1185 = vmul.f32 %v1096, 0.0078125
    %v1186 = vmul.f32 %v1182, 0.0078125
    %v1187 = vmul.f32 %v1185, %v1185
    %v1188 = vsub.f32 %v1186, %v1187
    %v1189 = vld [vmem:[%s2] sm:$0x1]
    %v1190 = vlaneseq
    %v1191 = vshrl.u32 %v1190, 7
    %v1192 = vsub.s32 0, %v1191
    %v1193 = vrot.slane %v1185, %v1192
    %v1194 = vsub.f32 %v1013, %v1193
    %v1195 = vsub.f32 %v1014, %v1193
    %v1196 = vsub.f32 %v1015, %v1193
    %v1197 = vsub.f32 %v1016, %v1193
    %v1198 = vsub.f32 %v1017, %v1193
    %v1199 = vsub.f32 %v1018, %v1193
    %v1200 = vsub.f32 %v1019, %v1193
    %v1201 = vsub.f32 %v1020, %v1193
    %v1202 = vsub.f32 %v1021, %v1193
    %v1203 = vsub.f32 %v1022, %v1193
    %v1204 = vsub.f32 %v1023, %v1193
    %v1205 = vsub.f32 %v1024, %v1193
    %v1206 = vsub.f32 %v1025, %v1193
    %v1207 = vsub.f32 %v1026, %v1193
    %v1208 = vsub.f32 %v1027, %v1193
    %v1209 = vsub.f32 %v1028, %v1193
    %v1210 = vadd.f32 %v1188, 1e-05
    %v1211 = vrsqrt.pop %v1210
    %v1212 = vlaneseq
    %v1213 = vshrl.u32 %v1212, 7
    %v1214 = vsub.s32 0, %v1213
    %v1215 = vrot.slane %v1211, %v1214
    %v1216 = vmul.f32 %v1194, %v1215
    %v1217 = vmul.f32 %v1195, %v1215
    %v1218 = vmul.f32 %v1196, %v1215
    %v1219 = vmul.f32 %v1197, %v1215
    %v1220 = vmul.f32 %v1198, %v1215
    %v1221 = vmul.f32 %v1199, %v1215
    %v1222 = vmul.f32 %v1200, %v1215
    %v1223 = vmul.f32 %v1201, %v1215
    %v1224 = vmul.f32 %v1202, %v1215
    %v1225 = vmul.f32 %v1203, %v1215
    %v1226 = vmul.f32 %v1204, %v1215
    %v1227 = vmul.f32 %v1205, %v1215
    %v1228 = vmul.f32 %v1206, %v1215
    %v1229 = vmul.f32 %v1207, %v1215
    %v1230 = vmul.f32 %v1208, %v1215
    %v1231 = vmul.f32 %v1209, %v1215
    %v1233 = vlaneseq
    %v1234 = vshrl.u32 %v1233, 7
    %v1235 = vsub.s32 0, %v1234
    %v1236 = vrot.slane %v1189, %v1235
    %v1238 = vmul.f32 %v1236, %v1216
    %v1239 = vmul.f32 %v1236, %v1217
    %v1240 = vmul.f32 %v1236, %v1218
    %v1241 = vmul.f32 %v1236, %v1219
    %v1242 = vmul.f32 %v1236, %v1220
    %v1243 = vmul.f32 %v1236, %v1221
    %v1244 = vmul.f32 %v1236, %v1222
    %v1245 = vmul.f32 %v1236, %v1223
    %v1246 = vmul.f32 %v1236, %v1224
    %v1247 = vmul.f32 %v1236, %v1225
    %v1248 = vmul.f32 %v1236, %v1226
    %v1249 = vmul.f32 %v1236, %v1227
    %v1250 = vmul.f32 %v1236, %v1228
    %v1251 = vmul.f32 %v1236, %v1229
    %v1252 = vmul.f32 %v1236, %v1230
    %v1253 = vmul.f32 %v1236, %v1231
    %v1254 = vld [vmem:[%s3] sm:$0x1]
    %v1256 = vlaneseq
    %v1257 = vshrl.u32 %v1256, 7
    %v1258 = vsub.s32 0, %v1257
    %v1259 = vrot.slane %v1254, %v1258
    %v1261 = vadd.f32 %v1238, %v1259
    %v1262 = vadd.f32 %v1239, %v1259
    %v1263 = vadd.f32 %v1240, %v1259
    %v1264 = vadd.f32 %v1241, %v1259
    %v1265 = vadd.f32 %v1242, %v1259
    %v1266 = vadd.f32 %v1243, %v1259
    %v1267 = vadd.f32 %v1244, %v1259
    %v1268 = vadd.f32 %v1245, %v1259
    %v1269 = vadd.f32 %v1246, %v1259
    %v1270 = vadd.f32 %v1247, %v1259
    %v1271 = vadd.f32 %v1248, %v1259
    %v1272 = vadd.f32 %v1249, %v1259
    %v1273 = vadd.f32 %v1250, %v1259
    %v1274 = vadd.f32 %v1251, %v1259
    %v1275 = vadd.f32 %v1252, %v1259
    %v1276 = vadd.f32 %v1253, %v1259
    %v1277 = vmax.f32 %v1261, 0.0
    %v1278 = vmax.f32 %v1262, 0.0
    %v1279 = vmax.f32 %v1263, 0.0
    %v1280 = vmax.f32 %v1264, 0.0
    %v1281 = vmax.f32 %v1265, 0.0
    %v1282 = vmax.f32 %v1266, 0.0
    %v1283 = vmax.f32 %v1267, 0.0
    %v1284 = vmax.f32 %v1268, 0.0
    %v1285 = vmax.f32 %v1269, 0.0
    %v1286 = vmax.f32 %v1270, 0.0
    %v1287 = vmax.f32 %v1271, 0.0
    %v1288 = vmax.f32 %v1272, 0.0
    %v1289 = vmax.f32 %v1273, 0.0
    %v1290 = vmax.f32 %v1274, 0.0
    %v1291 = vmax.f32 %v1275, 0.0
    %v1292 = vmax.f32 %v1276, 0.0
    %v1309 = vcombine.high %v1277, %v1277
    %v1311 = vunpack.c.l.s4 1983009808
    %v1312 = vunpack.c.0.s8 %v1311
    %v1313 = vlaneseq
    %v1314 = vshrl.u32 %v1313, 7
    %v1315 = vsub.s32 %v1312, %v1314
    %v1316 = vrot.slane %v1277, %v1315
    %v1318 = vunpack.c.l.s4 1983009808
    %v1319 = vunpack.c.0.s8 %v1318
    %v1320 = vlaneseq
    %v1321 = vshrl.u32 %v1320, 7
    %v1322 = vsub.s32 %v1319, %v1321
    %v1323 = vrot.slane %v1309, %v1322
    %v1324 = vcombine.high %v1316, %v1316
    %v1325 = vcombine.high %v1323, %v1323
    %v1326 = vcombine.high %v1278, %v1278
    %v1328 = vunpack.c.l.s4 1983009808
    %v1329 = vunpack.c.0.s8 %v1328
    %v1330 = vlaneseq
    %v1331 = vshrl.u32 %v1330, 7
    %v1332 = vsub.s32 %v1329, %v1331
    %v1333 = vrot.slane %v1278, %v1332
    %v1335 = vunpack.c.l.s4 1983009808
    %v1336 = vunpack.c.0.s8 %v1335
    %v1337 = vlaneseq
    %v1338 = vshrl.u32 %v1337, 7
    %v1339 = vsub.s32 %v1336, %v1338
    %v1340 = vrot.slane %v1326, %v1339
    %v1341 = vcombine.high %v1333, %v1333
    %v1342 = vcombine.high %v1340, %v1340
    %v1343 = vcombine.high %v1279, %v1279
    %v1345 = vunpack.c.l.s4 1983009808
    %v1346 = vunpack.c.0.s8 %v1345
    %v1347 = vlaneseq
    %v1348 = vshrl.u32 %v1347, 7
    %v1349 = vsub.s32 %v1346, %v1348
    %v1350 = vrot.slane %v1279, %v1349
    %v1352 = vunpack.c.l.s4 1983009808
    %v1353 = vunpack.c.0.s8 %v1352
    %v1354 = vlaneseq
    %v1355 = vshrl.u32 %v1354, 7
    %v1356 = vsub.s32 %v1353, %v1355
    %v1357 = vrot.slane %v1343, %v1356
    %v1358 = vcombine.high %v1350, %v1350
    %v1359 = vcombine.high %v1357, %v1357
    %v1360 = vcombine.high %v1280, %v1280
    %v1362 = vunpack.c.l.s4 1983009808
    %v1363 = vunpack.c.0.s8 %v1362
    %v1364 = vlaneseq
    %v1365 = vshrl.u32 %v1364, 7
    %v1366 = vsub.s32 %v1363, %v1365
    %v1367 = vrot.slane %v1280, %v1366
    %v1369 = vunpack.c.l.s4 1983009808
    %v1370 = vunpack.c.0.s8 %v1369
    %v1371 = vlaneseq
    %v1372 = vshrl.u32 %v1371, 7
    %v1373 = vsub.s32 %v1370, %v1372
    %v1374 = vrot.slane %v1360, %v1373
    %v1375 = vcombine.high %v1367, %v1367
    %v1376 = vcombine.high %v1374, %v1374
    %v1377 = vcombine.high %v1281, %v1281
    %v1379 = vunpack.c.l.s4 1983009808
    %v1380 = vunpack.c.0.s8 %v1379
    %v1381 = vlaneseq
    %v1382 = vshrl.u32 %v1381, 7
    %v1383 = vsub.s32 %v1380, %v1382
    %v1384 = vrot.slane %v1281, %v1383
    %v1386 = vunpack.c.l.s4 1983009808
    %v1387 = vunpack.c.0.s8 %v1386
    %v1388 = vlaneseq
    %v1389 = vshrl.u32 %v1388, 7
    %v1390 = vsub.s32 %v1387, %v1389
    %v1391 = vrot.slane %v1377, %v1390
    %v1392 = vcombine.high %v1384, %v1384
    %v1393 = vcombine.high %v1391, %v1391
    %v1394 = vcombine.high %v1282, %v1282
    %v1396 = vunpack.c.l.s4 1983009808
    %v1397 = vunpack.c.0.s8 %v1396
    %v1398 = vlaneseq
    %v1399 = vshrl.u32 %v1398, 7
    %v1400 = vsub.s32 %v1397, %v1399
    %v1401 = vrot.slane %v1282, %v1400
    %v1403 = vunpack.c.l.s4 1983009808
    %v1404 = vunpack.c.0.s8 %v1403
    %v1405 = vlaneseq
    %v1406 = vshrl.u32 %v1405, 7
    %v1407 = vsub.s32 %v1404, %v1406
    %v1408 = vrot.slane %v1394, %v1407
    %v1409 = vcombine.high %v1401, %v1401
    %v1410 = vcombine.high %v1408, %v1408
    %v1411 = vcombine.high %v1283, %v1283
    %v1413 = vunpack.c.l.s4 1983009808
    %v1414 = vunpack.c.0.s8 %v1413
    %v1415 = vlaneseq
    %v1416 = vshrl.u32 %v1415, 7
    %v1417 = vsub.s32 %v1414, %v1416
    %v1418 = vrot.slane %v1283, %v1417
    %v1420 = vunpack.c.l.s4 1983009808
    %v1421 = vunpack.c.0.s8 %v1420
    %v1422 = vlaneseq
    %v1423 = vshrl.u32 %v1422, 7
    %v1424 = vsub.s32 %v1421, %v1423
    %v1425 = vrot.slane %v1411, %v1424
    %v1426 = vcombine.high %v1418, %v1418
    %v1427 = vcombine.high %v1425, %v1425
    %v1428 = vcombine.high %v1284, %v1284
    %v1430 = vunpack.c.l.s4 1983009808
    %v1431 = vunpack.c.0.s8 %v1430
    %v1432 = vlaneseq
    %v1433 = vshrl.u32 %v1432, 7
    %v1434 = vsub.s32 %v1431, %v1433
    %v1435 = vrot.slane %v1284, %v1434
    %v1437 = vunpack.c.l.s4 1983009808
    %v1438 = vunpack.c.0.s8 %v1437
    %v1439 = vlaneseq
    %v1440 = vshrl.u32 %v1439, 7
    %v1441 = vsub.s32 %v1438, %v1440
    %v1442 = vrot.slane %v1428, %v1441
    %v1443 = vcombine.high %v1435, %v1435
    %v1444 = vcombine.high %v1442, %v1442
    %v1445 = vcombine.high %v1285, %v1285
    %v1447 = vunpack.c.l.s4 1983009808
    %v1448 = vunpack.c.0.s8 %v1447
    %v1449 = vlaneseq
    %v1450 = vshrl.u32 %v1449, 7
    %v1451 = vsub.s32 %v1448, %v1450
    %v1452 = vrot.slane %v1285, %v1451
    %v1454 = vunpack.c.l.s4 1983009808
    %v1455 = vunpack.c.0.s8 %v1454
    %v1456 = vlaneseq
    %v1457 = vshrl.u32 %v1456, 7
    %v1458 = vsub.s32 %v1455, %v1457
    %v1459 = vrot.slane %v1445, %v1458
    %v1460 = vcombine.high %v1452, %v1452
    %v1461 = vcombine.high %v1459, %v1459
    %v1462 = vcombine.high %v1286, %v1286
    %v1464 = vunpack.c.l.s4 1983009808
    %v1465 = vunpack.c.0.s8 %v1464
    %v1466 = vlaneseq
    %v1467 = vshrl.u32 %v1466, 7
    %v1468 = vsub.s32 %v1465, %v1467
    %v1469 = vrot.slane %v1286, %v1468
    %v1471 = vunpack.c.l.s4 1983009808
    %v1472 = vunpack.c.0.s8 %v1471
    %v1473 = vlaneseq
    %v1474 = vshrl.u32 %v1473, 7
    %v1475 = vsub.s32 %v1472, %v1474
    %v1476 = vrot.slane %v1462, %v1475
    %v1477 = vcombine.high %v1469, %v1469
    %v1478 = vcombine.high %v1476, %v1476
    %v1479 = vcombine.high %v1287, %v1287
    %v1481 = vunpack.c.l.s4 1983009808
    %v1482 = vunpack.c.0.s8 %v1481
    %v1483 = vlaneseq
    %v1484 = vshrl.u32 %v1483, 7
    %v1485 = vsub.s32 %v1482, %v1484
    %v1486 = vrot.slane %v1287, %v1485
    %v1488 = vunpack.c.l.s4 1983009808
    %v1489 = vunpack.c.0.s8 %v1488
    %v1490 = vlaneseq
    %v1491 = vshrl.u32 %v1490, 7
    %v1492 = vsub.s32 %v1489, %v1491
    %v1493 = vrot.slane %v1479, %v1492
    %v1494 = vcombine.high %v1486, %v1486
    %v1495 = vcombine.high %v1493, %v1493
    %v1496 = vcombine.high %v1288, %v1288
    %v1498 = vunpack.c.l.s4 1983009808
    %v1499 = vunpack.c.0.s8 %v1498
    %v1500 = vlaneseq
    %v1501 = vshrl.u32 %v1500, 7
    %v1502 = vsub.s32 %v1499, %v1501
    %v1503 = vrot.slane %v1288, %v1502
    %v1505 = vunpack.c.l.s4 1983009808
    %v1506 = vunpack.c.0.s8 %v1505
    %v1507 = vlaneseq
    %v1508 = vshrl.u32 %v1507, 7
    %v1509 = vsub.s32 %v1506, %v1508
    %v1510 = vrot.slane %v1496, %v1509
    %v1511 = vcombine.high %v1503, %v1503
    %v1512 = vcombine.high %v1510, %v1510
    %v1513 = vcombine.high %v1289, %v1289
    %v1515 = vunpack.c.l.s4 1983009808
    %v1516 = vunpack.c.0.s8 %v1515
    %v1517 = vlaneseq
    %v1518 = vshrl.u32 %v1517, 7
    %v1519 = vsub.s32 %v1516, %v1518
    %v1520 = vrot.slane %v1289, %v1519
    %v1522 = vunpack.c.l.s4 1983009808
    %v1523 = vunpack.c.0.s8 %v1522
    %v1524 = vlaneseq
    %v1525 = vshrl.u32 %v1524, 7
    %v1526 = vsub.s32 %v1523, %v1525
    %v1527 = vrot.slane %v1513, %v1526
    %v1528 = vcombine.high %v1520, %v1520
    %v1529 = vcombine.high %v1527, %v1527
    %v1530 = vcombine.high %v1290, %v1290
    %v1532 = vunpack.c.l.s4 1983009808
    %v1533 = vunpack.c.0.s8 %v1532
    %v1534 = vlaneseq
    %v1535 = vshrl.u32 %v1534, 7
    %v1536 = vsub.s32 %v1533, %v1535
    %v1537 = vrot.slane %v1290, %v1536
    %v1539 = vunpack.c.l.s4 1983009808
    %v1540 = vunpack.c.0.s8 %v1539
    %v1541 = vlaneseq
    %v1542 = vshrl.u32 %v1541, 7
    %v1543 = vsub.s32 %v1540, %v1542
    %v1544 = vrot.slane %v1530, %v1543
    %v1545 = vcombine.high %v1537, %v1537
    %v1546 = vcombine.high %v1544, %v1544
    %v1547 = vcombine.high %v1291, %v1291
    %v1549 = vunpack.c.l.s4 1983009808
    %v1550 = vunpack.c.0.s8 %v1549
    %v1551 = vlaneseq
    %v1552 = vshrl.u32 %v1551, 7
    %v1553 = vsub.s32 %v1550, %v1552
    %v1554 = vrot.slane %v1291, %v1553
    %v1556 = vunpack.c.l.s4 1983009808
    %v1557 = vunpack.c.0.s8 %v1556
    %v1558 = vlaneseq
    %v1559 = vshrl.u32 %v1558, 7
    %v1560 = vsub.s32 %v1557, %v1559
    %v1561 = vrot.slane %v1547, %v1560
    %v1562 = vcombine.high %v1554, %v1554
    %v1563 = vcombine.high %v1561, %v1561
    %v1564 = vcombine.high %v1292, %v1292
    %v1566 = vunpack.c.l.s4 1983009808
    %v1567 = vunpack.c.0.s8 %v1566
    %v1568 = vlaneseq
    %v1569 = vshrl.u32 %v1568, 7
    %v1570 = vsub.s32 %v1567, %v1569
    %v1571 = vrot.slane %v1292, %v1570
    %v1573 = vunpack.c.l.s4 1983009808
    %v1574 = vunpack.c.0.s8 %v1573
    %v1575 = vlaneseq
    %v1576 = vshrl.u32 %v1575, 7
    %v1577 = vsub.s32 %v1574, %v1576
    %v1578 = vrot.slane %v1564, %v1577
    %v1579 = vcombine.high %v1571, %v1571
    %v1580 = vcombine.high %v1578, %v1578
    %v1645 = vrot.slane %v1316, 7
    %v1646 = vrot.slane %v1645, 2
    %v1647 = vrot.slane %v1324, 7
    %v1648 = vrot.slane %v1647, 2
    %v1649 = vrot.slane %v1323, 7
    %v1650 = vrot.slane %v1649, 2
    %v1651 = vrot.slane %v1325, 7
    %v1652 = vrot.slane %v1651, 2
    %v1653 = vrot.slane %v1333, 7
    %v1654 = vrot.slane %v1653, 2
    %v1655 = vrot.slane %v1341, 7
    %v1656 = vrot.slane %v1655, 2
    %v1657 = vrot.slane %v1340, 7
    %v1658 = vrot.slane %v1657, 2
    %v1659 = vrot.slane %v1342, 7
    %v1660 = vrot.slane %v1659, 2
    %v1661 = vrot.slane %v1350, 7
    %v1662 = vrot.slane %v1661, 2
    %v1663 = vrot.slane %v1358, 7
    %v1664 = vrot.slane %v1663, 2
    %v1665 = vrot.slane %v1357, 7
    %v1666 = vrot.slane %v1665, 2
    %v1667 = vrot.slane %v1359, 7
    %v1668 = vrot.slane %v1667, 2
    %v1669 = vrot.slane %v1367, 7
    %v1670 = vrot.slane %v1669, 2
    %v1671 = vrot.slane %v1375, 7
    %v1672 = vrot.slane %v1671, 2
    %v1673 = vrot.slane %v1374, 7
    %v1674 = vrot.slane %v1673, 2
    %v1675 = vrot.slane %v1376, 7
    %v1676 = vrot.slane %v1675, 2
    %v1677 = vrot.slane %v1384, 7
    %v1678 = vrot.slane %v1677, 2
    %v1679 = vrot.slane %v1392, 7
    %v1680 = vrot.slane %v1679, 2
    %v1681 = vrot.slane %v1391, 7
    %v1682 = vrot.slane %v1681, 2
    %v1683 = vrot.slane %v1393, 7
    %v1684 = vrot.slane %v1683, 2
    %v1685 = vrot.slane %v1401, 7
    %v1686 = vrot.slane %v1685, 2
    %v1687 = vrot.slane %v1409, 7
    %v1688 = vrot.slane %v1687, 2
    %v1689 = vrot.slane %v1408, 7
    %v1690 = vrot.slane %v1689, 2
    %v1691 = vrot.slane %v1410, 7
    %v1692 = vrot.slane %v1691, 2
    %v1693 = vrot.slane %v1418, 7
    %v1694 = vrot.slane %v1693, 2
    %v1695 = vrot.slane %v1426, 7
    %v1696 = vrot.slane %v1695, 2
    %v1697 = vrot.slane %v1425, 7
    %v1698 = vrot.slane %v1697, 2
    %v1699 = vrot.slane %v1427, 7
    %v1700 = vrot.slane %v1699, 2
    %v1701 = vrot.slane %v1435, 7
    %v1702 = vrot.slane %v1701, 2
    %v1703 = vrot.slane %v1443, 7
    %v1704 = vrot.slane %v1703, 2
    %v1705 = vrot.slane %v1442, 7
    %v1706 = vrot.slane %v1705, 2
    %v1707 = vrot.slane %v1444, 7
    %v1708 = vrot.slane %v1707, 2
    %v1709 = vrot.slane %v1452, 7
    %v1710 = vrot.slane %v1709, 2
    %v1711 = vrot.slane %v1460, 7
    %v1712 = vrot.slane %v1711, 2
    %v1713 = vrot.slane %v1459, 7
    %v1714 = vrot.slane %v1713, 2
    %v1715 = vrot.slane %v1461, 7
    %v1716 = vrot.slane %v1715, 2
    %v1717 = vrot.slane %v1469, 7
    %v1718 = vrot.slane %v1717, 2
    %v1719 = vrot.slane %v1477, 7
    %v1720 = vrot.slane %v1719, 2
    %v1721 = vrot.slane %v1476, 7
    %v1722 = vrot.slane %v1721, 2
    %v1723 = vrot.slane %v1478, 7
    %v1724 = vrot.slane %v1723, 2
    %v1725 = vrot.slane %v1486, 7
    %v1726 = vrot.slane %v1725, 2
    %v1727 = vrot.slane %v1494, 7
    %v1728 = vrot.slane %v1727, 2
    %v1729 = vrot.slane %v1493, 7
    %v1730 = vrot.slane %v1729, 2
    %v1731 = vrot.slane %v1495, 7
    %v1732 = vrot.slane %v1731, 2
    %v1733 = vrot.slane %v1503, 7
    %v1734 = vrot.slane %v1733, 2
    %v1735 = vrot.slane %v1511, 7
    %v1736 = vrot.slane %v1735, 2
    %v1737 = vrot.slane %v1510, 7
    %v1738 = vrot.slane %v1737, 2
    %v1739 = vrot.slane %v1512, 7
    %v1740 = vrot.slane %v1739, 2
    %v1741 = vrot.slane %v1520, 7
    %v1742 = vrot.slane %v1741, 2
    %v1743 = vrot.slane %v1528, 7
    %v1744 = vrot.slane %v1743, 2
    %v1745 = vrot.slane %v1527, 7
    %v1746 = vrot.slane %v1745, 2
    %v1747 = vrot.slane %v1529, 7
    %v1748 = vrot.slane %v1747, 2
    %v1749 = vrot.slane %v1537, 7
    %v1750 = vrot.slane %v1749, 2
    %v1751 = vrot.slane %v1545, 7
    %v1752 = vrot.slane %v1751, 2
    %v1753 = vrot.slane %v1544, 7
    %v1754 = vrot.slane %v1753, 2
    %v1755 = vrot.slane %v1546, 7
    %v1756 = vrot.slane %v1755, 2
    %v1757 = vrot.slane %v1554, 7
    %v1758 = vrot.slane %v1757, 2
    %v1759 = vrot.slane %v1562, 7
    %v1760 = vrot.slane %v1759, 2
    %v1761 = vrot.slane %v1561, 7
    %v1762 = vrot.slane %v1761, 2
    %v1763 = vrot.slane %v1563, 7
    %v1764 = vrot.slane %v1763, 2
    %v1765 = vrot.slane %v1571, 7
    %v1766 = vrot.slane %v1765, 2
    %v1767 = vrot.slane %v1579, 7
    %v1768 = vrot.slane %v1767, 2
    %v1769 = vrot.slane %v1578, 7
    %v1770 = vrot.slane %v1769, 2
    %v1771 = vrot.slane %v1580, 7
    %v1772 = vrot.slane %v1771, 2
    %v1837 = vmax.f32 %v1316, %v1646
    %v1838 = vmax.f32 %v1324, %v1648
    %v1839 = vmax.f32 %v1323, %v1650
    %v1840 = vmax.f32 %v1325, %v1652
    %v1841 = vmax.f32 %v1333, %v1654
    %v1842 = vmax.f32 %v1341, %v1656
    %v1843 = vmax.f32 %v1340, %v1658
    %v1844 = vmax.f32 %v1342, %v1660
    %v1845 = vmax.f32 %v1350, %v1662
    %v1846 = vmax.f32 %v1358, %v1664
    %v1847 = vmax.f32 %v1357, %v1666
    %v1848 = vmax.f32 %v1359, %v1668
    %v1849 = vmax.f32 %v1367, %v1670
    %v1850 = vmax.f32 %v1375, %v1672
    %v1851 = vmax.f32 %v1374, %v1674
    %v1852 = vmax.f32 %v1376, %v1676
    %v1853 = vmax.f32 %v1384, %v1678
    %v1854 = vmax.f32 %v1392, %v1680
    %v1855 = vmax.f32 %v1391, %v1682
    %v1856 = vmax.f32 %v1393, %v1684
    %v1857 = vmax.f32 %v1401, %v1686
    %v1858 = vmax.f32 %v1409, %v1688
    %v1859 = vmax.f32 %v1408, %v1690
    %v1860 = vmax.f32 %v1410, %v1692
    %v1861 = vmax.f32 %v1418, %v1694
    %v1862 = vmax.f32 %v1426, %v1696
    %v1863 = vmax.f32 %v1425, %v1698
    %v1864 = vmax.f32 %v1427, %v1700
    %v1865 = vmax.f32 %v1435, %v1702
    %v1866 = vmax.f32 %v1443, %v1704
    %v1867 = vmax.f32 %v1442, %v1706
    %v1868 = vmax.f32 %v1444, %v1708
    %v1869 = vmax.f32 %v1452, %v1710
    %v1870 = vmax.f32 %v1460, %v1712
    %v1871 = vmax.f32 %v1459, %v1714
    %v1872 = vmax.f32 %v1461, %v1716
    %v1873 = vmax.f32 %v1469, %v1718
    %v1874 = vmax.f32 %v1477, %v1720
    %v1875 = vmax.f32 %v1476, %v1722
    %v1876 = vmax.f32 %v1478, %v1724
    %v1877 = vmax.f32 %v1486, %v1726
    %v1878 = vmax.f32 %v1494, %v1728
    %v1879 = vmax.f32 %v1493, %v1730
    %v1880 = vmax.f32 %v1495, %v1732
    %v1881 = vmax.f32 %v1503, %v1734
    %v1882 = vmax.f32 %v1511, %v1736
    %v1883 = vmax.f32 %v1510, %v1738
    %v1884 = vmax.f32 %v1512, %v1740
    %v1885 = vmax.f32 %v1520, %v1742
    %v1886 = vmax.f32 %v1528, %v1744
    %v1887 = vmax.f32 %v1527, %v1746
    %v1888 = vmax.f32 %v1529, %v1748
    %v1889 = vmax.f32 %v1537, %v1750
    %v1890 = vmax.f32 %v1545, %v1752
    %v1891 = vmax.f32 %v1544, %v1754
    %v1892 = vmax.f32 %v1546, %v1756
    %v1893 = vmax.f32 %v1554, %v1758
    %v1894 = vmax.f32 %v1562, %v1760
    %v1895 = vmax.f32 %v1561, %v1762
    %v1896 = vmax.f32 %v1563, %v1764
    %v1897 = vmax.f32 %v1571, %v1766
    %v1898 = vmax.f32 %v1579, %v1768
    %v1899 = vmax.f32 %v1578, %v1770
    %v1900 = vmax.f32 %v1580, %v1772
    %v1901 = vmax.f32 %v1837, %v1841
    %v1902 = vmax.f32 %v1838, %v1842
    %v1903 = vmax.f32 %v1839, %v1843
    %v1904 = vmax.f32 %v1840, %v1844
    %v1905 = vmax.f32 %v1845, %v1849
    %v1906 = vmax.f32 %v1846, %v1850
    %v1907 = vmax.f32 %v1847, %v1851
    %v1908 = vmax.f32 %v1848, %v1852
    %v1909 = vmax.f32 %v1853, %v1857
    %v1910 = vmax.f32 %v1854, %v1858
    %v1911 = vmax.f32 %v1855, %v1859
    %v1912 = vmax.f32 %v1856, %v1860
    %v1913 = vmax.f32 %v1861, %v1865
    %v1914 = vmax.f32 %v1862, %v1866
    %v1915 = vmax.f32 %v1863, %v1867
    %v1916 = vmax.f32 %v1864, %v1868
    %v1917 = vmax.f32 %v1869, %v1873
    %v1918 = vmax.f32 %v1870, %v1874
    %v1919 = vmax.f32 %v1871, %v1875
    %v1920 = vmax.f32 %v1872, %v1876
    %v1921 = vmax.f32 %v1877, %v1881
    %v1922 = vmax.f32 %v1878, %v1882
    %v1923 = vmax.f32 %v1879, %v1883
    %v1924 = vmax.f32 %v1880, %v1884
    %v1925 = vmax.f32 %v1885, %v1889
    %v1926 = vmax.f32 %v1886, %v1890
    %v1927 = vmax.f32 %v1887, %v1891
    %v1928 = vmax.f32 %v1888, %v1892
    %v1929 = vmax.f32 %v1893, %v1897
    %v1930 = vmax.f32 %v1894, %v1898
    %v1931 = vmax.f32 %v1895, %v1899
    %v1932 = vmax.f32 %v1896, %v1900
    %1933 = vst [vmem:[#allocation2] sm:$0x7] 0
    %1934 = vst [vmem:[#allocation2 + $0x4] sm:$0x7] 0
    %1935 = vst [vmem:[#allocation2 + $0x8] sm:$0x7] 0
    %1936 = vst [vmem:[#allocation2 + $0xc] sm:$0x7] 0
    %1937 = vst [vmem:[#allocation2 + $0x10] sm:$0x7] 0
    %1938 = vst [vmem:[#allocation2 + $0x14] sm:$0x7] 0
    %1939 = vst [vmem:[#allocation2 + $0x18] sm:$0x7] 0
    %1940 = vst [vmem:[#allocation2 + $0x1c] sm:$0x7] 0
    %1941 = vst [vmem:[#allocation2 + $0x20] sm:$0x7] 0
    %1942 = vst [vmem:[#allocation2 + $0x24] sm:$0x7] 0
    %1943 = vst [vmem:[#allocation2 + $0x28] sm:$0x7] 0
    %1944 = vst [vmem:[#allocation2 + $0x2c] sm:$0x7] 0
    %v1945 = vpack.c.bf16 %v1901, %v1901
    %v1946 = vpack.c.bf16 %v1902, %v1902
    %v1947 = vpack.c.bf16 %v1903, %v1903
    %v1948 = vpack.c.bf16 %v1904, %v1904
    %v1949 = vpack.c.bf16 %v1905, %v1905
    %v1950 = vpack.c.bf16 %v1906, %v1906
    %v1951 = vpack.c.bf16 %v1907, %v1907
    %v1952 = vpack.c.bf16 %v1908, %v1908
    %v1953 = vpack.c.bf16 %v1909, %v1909
    %v1954 = vpack.c.bf16 %v1910, %v1910
    %v1955 = vpack.c.bf16 %v1911, %v1911
    %v1956 = vpack.c.bf16 %v1912, %v1912
    %v1957 = vpack.c.bf16 %v1913, %v1913
    %v1958 = vpack.c.bf16 %v1914, %v1914
    %v1959 = vpack.c.bf16 %v1915, %v1915
    %v1960 = vpack.c.bf16 %v1916, %v1916
    %v1961 = vpack.c.bf16 %v1917, %v1917
    %v1962 = vpack.c.bf16 %v1918, %v1918
    %v1963 = vpack.c.bf16 %v1919, %v1919
    %v1964 = vpack.c.bf16 %v1920, %v1920
    %v1965 = vpack.c.bf16 %v1921, %v1921
    %v1966 = vpack.c.bf16 %v1922, %v1922
    %v1967 = vpack.c.bf16 %v1923, %v1923
    %v1968 = vpack.c.bf16 %v1924, %v1924
    %v1969 = vpack.c.bf16 %v1925, %v1925
    %v1970 = vpack.c.bf16 %v1926, %v1926
    %v1971 = vpack.c.bf16 %v1927, %v1927
    %v1972 = vpack.c.bf16 %v1928, %v1928
    %v1973 = vpack.c.bf16 %v1929, %v1929
    %v1974 = vpack.c.bf16 %v1930, %v1930
    %v1975 = vpack.c.bf16 %v1931, %v1931
    %v1976 = vpack.c.bf16 %v1932, %v1932
    %v2009 = vunpack.c.l.b16 %v1945
    %v2010 = vunpack.c.l.b16 %v1946
    %v2011 = vunpack.c.l.b16 %v1947
    %v2012 = vunpack.c.l.b16 %v1948
    %v2013 = vunpack.c.l.b16 %v1949
    %v2014 = vunpack.c.l.b16 %v1950
    %v2015 = vunpack.c.l.b16 %v1951
    %v2016 = vunpack.c.l.b16 %v1952
    %v2017 = vunpack.c.l.b16 %v1953
    %v2018 = vunpack.c.l.b16 %v1954
    %v2019 = vunpack.c.l.b16 %v1955
    %v2020 = vunpack.c.l.b16 %v1956
    %v2021 = vunpack.c.l.b16 %v1957
    %v2022 = vunpack.c.l.b16 %v1958
    %v2023 = vunpack.c.l.b16 %v1959
    %v2024 = vunpack.c.l.b16 %v1960
    %v2025 = vunpack.c.l.b16 %v1961
    %v2026 = vunpack.c.l.b16 %v1962
    %v2027 = vunpack.c.l.b16 %v1963
    %v2028 = vunpack.c.l.b16 %v1964
    %v2029 = vunpack.c.l.b16 %v1965
    %v2030 = vunpack.c.l.b16 %v1966
    %v2031 = vunpack.c.l.b16 %v1967
    %v2032 = vunpack.c.l.b16 %v1968
    %v2033 = vunpack.c.l.b16 %v1969
    %v2034 = vunpack.c.l.b16 %v1970
    %v2035 = vunpack.c.l.b16 %v1971
    %v2036 = vunpack.c.l.b16 %v1972
    %v2037 = vunpack.c.l.b16 %v1973
    %v2038 = vunpack.c.l.b16 %v1974
    %v2039 = vunpack.c.l.b16 %v1975
    %v2040 = vunpack.c.l.b16 %v1976
    %v2041 = vpack.c.b16 %v2009, %v2009
    %v2042 = vpack.c.b16 %v2010, %v2010
    %v2043 = vpack.c.b16 %v2011, %v2011
    %v2044 = vpack.c.b16 %v2012, %v2012
    %v2045 = vpack.c.b16 %v2013, %v2013
    %v2046 = vpack.c.b16 %v2014, %v2014
    %v2047 = vpack.c.b16 %v2015, %v2015
    %v2048 = vpack.c.b16 %v2016, %v2016
    %v2049 = vpack.c.b16 %v2017, %v2017
    %v2050 = vpack.c.b16 %v2018, %v2018
    %v2051 = vpack.c.b16 %v2019, %v2019
    %v2052 = vpack.c.b16 %v2020, %v2020
    %v2053 = vpack.c.b16 %v2021, %v2021
    %v2054 = vpack.c.b16 %v2022, %v2022
    %v2055 = vpack.c.b16 %v2023, %v2023
    %v2056 = vpack.c.b16 %v2024, %v2024
    %v2057 = vpack.c.b16 %v2025, %v2025
    %v2058 = vpack.c.b16 %v2026, %v2026
    %v2059 = vpack.c.b16 %v2027, %v2027
    %v2060 = vpack.c.b16 %v2028, %v2028
    %v2061 = vpack.c.b16 %v2029, %v2029
    %v2062 = vpack.c.b16 %v2030, %v2030
    %v2063 = vpack.c.b16 %v2031, %v2031
    %v2064 = vpack.c.b16 %v2032, %v2032
    %v2065 = vpack.c.b16 %v2033, %v2033
    %v2066 = vpack.c.b16 %v2034, %v2034
    %v2067 = vpack.c.b16 %v2035, %v2035
    %v2068 = vpack.c.b16 %v2036, %v2036
    %v2069 = vpack.c.b16 %v2037, %v2037
    %v2070 = vpack.c.b16 %v2038, %v2038
    %v2071 = vpack.c.b16 %v2039, %v2039
    %v2072 = vpack.c.b16 %v2040, %v2040
    %v2073 = vunpack.c.l.b16 %v2041
    %v2074 = vunpack.c.l.b16 %v2042
    %v2075 = vunpack.c.l.b16 %v2043
    %v2076 = vunpack.c.l.b16 %v2044
    %v2077 = vunpack.c.l.b16 %v2045
    %v2078 = vunpack.c.l.b16 %v2046
    %v2079 = vunpack.c.l.b16 %v2047
    %v2080 = vunpack.c.l.b16 %v2048
    %v2081 = vunpack.c.l.b16 %v2049
    %v2082 = vunpack.c.l.b16 %v2050
    %v2083 = vunpack.c.l.b16 %v2051
    %v2084 = vunpack.c.l.b16 %v2052
    %v2085 = vunpack.c.l.b16 %v2053
    %v2086 = vunpack.c.l.b16 %v2054
    %v2087 = vunpack.c.l.b16 %v2055
    %v2088 = vunpack.c.l.b16 %v2056
    %v2089 = vunpack.c.l.b16 %v2057
    %v2090 = vunpack.c.l.b16 %v2058
    %v2091 = vunpack.c.l.b16 %v2059
    %v2092 = vunpack.c.l.b16 %v2060
    %v2093 = vunpack.c.l.b16 %v2061
    %v2094 = vunpack.c.l.b16 %v2062
    %v2095 = vunpack.c.l.b16 %v2063
    %v2096 = vunpack.c.l.b16 %v2064
    %v2097 = vunpack.c.l.b16 %v2065
    %v2098 = vunpack.c.l.b16 %v2066
    %v2099 = vunpack.c.l.b16 %v2067
    %v2100 = vunpack.c.l.b16 %v2068
    %v2101 = vunpack.c.l.b16 %v2069
    %v2102 = vunpack.c.l.b16 %v2070
    %v2103 = vunpack.c.l.b16 %v2071
    %v2104 = vunpack.c.l.b16 %v2072
    %v2105 = vrot.slane %v2073, 7
    %v2106 = vrot.slane %v2074, 6
    %vm2107 = vcmask 1042434
    %v2108 = vsel %vm2107, %v2106, %v2105
    %v2109 = vrot.slane %v2075, 5
    %vm2110 = vcmask 1043459
    %v2111 = vsel %vm2110, %v2109, %v2108
    %v2112 = vrot.slane %v2076, 4
    %vm2113 = vcmask 1044484
    %v2114 = vsel %vm2113, %v2112, %v2111
    %v2115 = vrot.slane %v2077, 7
    %v2116 = vrot.slane %v2078, 6
    %v2117 = vsel %vm2107, %v2116, %v2115
    %v2118 = vrot.slane %v2079, 5
    %v2119 = vsel %vm2110, %v2118, %v2117
    %v2120 = vrot.slane %v2080, 4
    %v2121 = vsel %vm2113, %v2120, %v2119
    %v2122 = vrot.slane %v2081, 7
    %v2123 = vrot.slane %v2082, 6
    %v2124 = vsel %vm2107, %v2123, %v2122
    %v2125 = vrot.slane %v2083, 5
    %v2126 = vsel %vm2110, %v2125, %v2124
    %v2127 = vrot.slane %v2084, 4
    %v2128 = vsel %vm2113, %v2127, %v2126
    %v2129 = vrot.slane %v2085, 7
    %v2130 = vrot.slane %v2086, 6
    %v2131 = vsel %vm2107, %v2130, %v2129
    %v2132 = vrot.slane %v2087, 5
    %v2133 = vsel %vm2110, %v2132, %v2131
    %v2134 = vrot.slane %v2088, 4
    %v2135 = vsel %vm2113, %v2134, %v2133
    %v2136 = vrot.slane %v2089, 7
    %v2137 = vrot.slane %v2090, 6
    %v2138 = vsel %vm2107, %v2137, %v2136
    %v2139 = vrot.slane %v2091, 5
    %v2140 = vsel %vm2110, %v2139, %v2138
    %v2141 = vrot.slane %v2092, 4
    %v2142 = vsel %vm2113, %v2141, %v2140
    %v2143 = vrot.slane %v2093, 7
    %v2144 = vrot.slane %v2094, 6
    %v2145 = vsel %vm2107, %v2144, %v2143
    %v2146 = vrot.slane %v2095, 5
    %v2147 = vsel %vm2110, %v2146, %v2145
    %v2148 = vrot.slane %v2096, 4
    %v2149 = vsel %vm2113, %v2148, %v2147
    %v2150 = vrot.slane %v2097, 7
    %v2151 = vrot.slane %v2098, 6
    %v2152 = vsel %vm2107, %v2151, %v2150
    %v2153 = vrot.slane %v2099, 5
    %v2154 = vsel %vm2110, %v2153, %v2152
    %v2155 = vrot.slane %v2100, 4
    %v2156 = vsel %vm2113, %v2155, %v2154
    %v2157 = vrot.slane %v2101, 7
    %v2158 = vrot.slane %v2102, 6
    %v2159 = vsel %vm2107, %v2158, %v2157
    %v2160 = vrot.slane %v2103, 5
    %v2161 = vsel %vm2110, %v2160, %v2159
    %v2162 = vrot.slane %v2104, 4
    %v2163 = vsel %vm2113, %v2162, %v2161
    %v2164 = vpack.c.b16 %v2114, %v2114
    %v2165 = vpack.c.b16 %v2121, %v2121
    %v2166 = vpack.c.b16 %v2128, %v2128
    %v2167 = vpack.c.b16 %v2135, %v2135
    %v2168 = vpack.c.b16 %v2142, %v2142
    %v2169 = vpack.c.b16 %v2149, %v2149
    %v2170 = vpack.c.b16 %v2156, %v2156
    %v2171 = vpack.c.b16 %v2163, %v2163
    %s2180 = scalar_lea.vmem [#allocation2], 4
    %vm2181 = vcmask 1042432
    %vm2182 = vsmask.f32 2306
    %vm2183 = vmand %vm2181, %vm2182
    %v2184 = vld [vmem:[%s2180] sm:$0x7]
    %v2185 = vsel %vm2183, %v2164, %v2184
    %2186 = vst [vmem:[%s2180] sm:$0x7] %v2185
    %v2187 = vld [vmem:[%s2180 + $0x4] sm:$0x7]
    %v2188 = vsel %vm2183, %v2165, %v2187
    %2189 = vst [vmem:[%s2180 + $0x4] sm:$0x7] %v2188
    %v2190 = vld [vmem:[%s2180 + $0x8] sm:$0x7]
    %v2191 = vsel %vm2183, %v2166, %v2190
    %2192 = vst [vmem:[%s2180 + $0x8] sm:$0x7] %v2191
    %v2193 = vld [vmem:[%s2180 + $0xc] sm:$0x7]
    %v2194 = vsel %vm2183, %v2167, %v2193
    %2195 = vst [vmem:[%s2180 + $0xc] sm:$0x7] %v2194
    %v2196 = vld [vmem:[%s2180 + $0x18] sm:$0x7]
    %v2197 = vsel %vm2183, %v2168, %v2196
    %2198 = vst [vmem:[%s2180 + $0x18] sm:$0x7] %v2197
    %v2199 = vld [vmem:[%s2180 + $0x1c] sm:$0x7]
    %v2200 = vsel %vm2183, %v2169, %v2199
    %2201 = vst [vmem:[%s2180 + $0x1c] sm:$0x7] %v2200
    %v2202 = vld [vmem:[%s2180 + $0x20] sm:$0x7]
    %v2203 = vsel %vm2183, %v2170, %v2202
    %2204 = vst [vmem:[%s2180 + $0x20] sm:$0x7] %v2203
    %v2205 = vld [vmem:[%s2180 + $0x24] sm:$0x7]
    %v2206 = vsel %vm2183, %v2171, %v2205
    %2207 = vst [vmem:[%s2180 + $0x24] sm:$0x7] %v2206
    %v2208 = vld [vmem:[#allocation2] sm:$0x3]
    %v2209 = vld [vmem:[#allocation2 + $0x4] sm:$0x3]
    %v2210 = vld [vmem:[#allocation2 + $0x8] sm:$0x3]
    %v2211 = vld [vmem:[#allocation2 + $0xc] sm:$0x3]
    %v2212 = vld [vmem:[#allocation2 + $0x18] sm:$0x3]
    %v2213 = vld [vmem:[#allocation2 + $0x1c] sm:$0x3]
    %v2214 = vld [vmem:[#allocation2 + $0x20] sm:$0x3]
    %v2215 = vld [vmem:[#allocation2 + $0x24] sm:$0x3]
    %v2216 = vld [vmem:[%s4] sm:$0xf]
    %v2217 = vld [vmem:[%s4 + $0x4] sm:$0xf]
    %v2218 = vld [vmem:[%s4 + $0x8] sm:$0xf]
    %v2219 = vld [vmem:[%s4 + $0xc] sm:$0xf]
    %v2220 = vld [vmem:[%s4 + $0x10] sm:$0xf]
    %v2221 = vld [vmem:[%s4 + $0x14] sm:$0xf]
    %v2222 = vld [vmem:[%s4 + $0x18] sm:$0xf]
    %v2223 = vld [vmem:[%s4 + $0x1c] sm:$0xf]
    %v2224 = vld [vmem:[%s4 + $0x20] sm:$0xf]
    %v2225 = vld [vmem:[%s4 + $0x24] sm:$0xf]
    %v2226 = vld [vmem:[%s4 + $0x28] sm:$0xf]
    %v2227 = vld [vmem:[%s4 + $0x2c] sm:$0xf]
    %v2228 = vld [vmem:[%s4 + $0x30] sm:$0xf]
    %v2229 = vld [vmem:[%s4 + $0x34] sm:$0xf]
    %v2230 = vld [vmem:[%s4 + $0x38] sm:$0xf]
    %v2231 = vld [vmem:[%s4 + $0x3c] sm:$0xf]
    %v2232 = vld [vmem:[#allocation2] sm:$0x7]
    %v2233 = vld [vmem:[#allocation2 + $0x4] sm:$0x7]
    %v2234 = vld [vmem:[#allocation2 + $0x8] sm:$0x7]
    %v2235 = vld [vmem:[#allocation2 + $0xc] sm:$0x7]
    %v2236 = vld [vmem:[#allocation2 + $0x18] sm:$0x7]
    %v2237 = vld [vmem:[#allocation2 + $0x1c] sm:$0x7]
    %v2238 = vld [vmem:[#allocation2 + $0x20] sm:$0x7]
    %v2239 = vld [vmem:[#allocation2 + $0x24] sm:$0x7]
    %v2249 = vunpack.c.l.s4 1983009808
    %v2250 = vunpack.c.0.s8 %v2249
    %v2251 = vlaneseq
    %v2252 = vshrl.u32 %v2251, 7
    %v2253 = vsub.s32 %v2250, %v2252
    %v2254 = vrot.slane %v2232, %v2253
    %v2255 = vcombine.high %v2254, %v2254
    %v2257 = vunpack.c.l.s4 1983009808
    %v2258 = vunpack.c.0.s8 %v2257
    %v2259 = vlaneseq
    %v2260 = vshrl.u32 %v2259, 7
    %v2261 = vsub.s32 %v2258, %v2260
    %v2262 = vrot.slane %v2233, %v2261
    %v2263 = vcombine.high %v2262, %v2262
    %v2265 = vunpack.c.l.s4 1983009808
    %v2266 = vunpack.c.0.s8 %v2265
    %v2267 = vlaneseq
    %v2268 = vshrl.u32 %v2267, 7
    %v2269 = vsub.s32 %v2266, %v2268
    %v2270 = vrot.slane %v2234, %v2269
    %v2271 = vcombine.high %v2270, %v2270
    %v2273 = vunpack.c.l.s4 1983009808
    %v2274 = vunpack.c.0.s8 %v2273
    %v2275 = vlaneseq
    %v2276 = vshrl.u32 %v2275, 7
    %v2277 = vsub.s32 %v2274, %v2276
    %v2278 = vrot.slane %v2235, %v2277
    %v2279 = vcombine.high %v2278, %v2278
    %v2281 = vunpack.c.l.s4 1983009808
    %v2282 = vunpack.c.0.s8 %v2281
    %v2283 = vlaneseq
    %v2284 = vshrl.u32 %v2283, 7
    %v2285 = vsub.s32 %v2282, %v2284
    %v2286 = vrot.slane %v2236, %v2285
    %v2287 = vcombine.high %v2286, %v2286
    %v2289 = vunpack.c.l.s4 1983009808
    %v2290 = vunpack.c.0.s8 %v2289
    %v2291 = vlaneseq
    %v2292 = vshrl.u32 %v2291, 7
    %v2293 = vsub.s32 %v2290, %v2292
    %v2294 = vrot.slane %v2237, %v2293
    %v2295 = vcombine.high %v2294, %v2294
    %v2297 = vunpack.c.l.s4 1983009808
    %v2298 = vunpack.c.0.s8 %v2297
    %v2299 = vlaneseq
    %v2300 = vshrl.u32 %v2299, 7
    %v2301 = vsub.s32 %v2298, %v2300
    %v2302 = vrot.slane %v2238, %v2301
    %v2303 = vcombine.high %v2302, %v2302
    %v2305 = vunpack.c.l.s4 1983009808
    %v2306 = vunpack.c.0.s8 %v2305
    %v2307 = vlaneseq
    %v2308 = vshrl.u32 %v2307, 7
    %v2309 = vsub.s32 %v2306, %v2308
    %v2310 = vrot.slane %v2239, %v2309
    %v2311 = vcombine.high %v2310, %v2310
    %vm2312 = vsmask.f32 1280
    %vm2313 = vsmask.f32 3336
    %vm2314 = vmor %vm2312, %vm2313
    %vm2315 = vsmask.f32 5392
    %vm2316 = vmor %vm2314, %vm2315
    %vm2317 = vsmask.f32 7448
    %vm2318 = vmor %vm2316, %vm2317
    %v2320 = vshrl.u32 %v2254, 16
    %v2322 = vrot.slane %v2320, 6
    %v2323 = vshll.u32 %v2254, 16
    %v2325 = vrot.slane %v2323, 7
    %v2326 = vor.u32 %v2322, %v2325
    %v2327 = vrot.slane %v2326, 2
    %v2329 = vshll.u32 %v2255, 16
    %v2331 = vrot.slane %v2329, 7
    %v2332 = vsel %vm2318, %v2327, %v2331
    %v2334 = vshrl.u32 %v2262, 16
    %v2336 = vrot.slane %v2334, 6
    %v2337 = vshll.u32 %v2262, 16
    %v2339 = vrot.slane %v2337, 7
    %v2340 = vor.u32 %v2336, %v2339
    %v2341 = vrot.slane %v2340, 2
    %v2343 = vshll.u32 %v2263, 16
    %v2345 = vrot.slane %v2343, 7
    %v2346 = vsel %vm2318, %v2341, %v2345
    %v2348 = vshrl.u32 %v2270, 16
    %v2350 = vrot.slane %v2348, 6
    %v2351 = vshll.u32 %v2270, 16
    %v2353 = vrot.slane %v2351, 7
    %v2354 = vor.u32 %v2350, %v2353
    %v2355 = vrot.slane %v2354, 2
    %v2357 = vshll.u32 %v2271, 16
    %v2359 = vrot.slane %v2357, 7
    %v2360 = vsel %vm2318, %v2355, %v2359
    %v2362 = vshrl.u32 %v2278, 16
    %v2364 = vrot.slane %v2362, 6
    %v2365 = vshll.u32 %v2278, 16
    %v2367 = vrot.slane %v2365, 7
    %v2368 = vor.u32 %v2364, %v2367
    %v2369 = vrot.slane %v2368, 2
    %v2371 = vshll.u32 %v2279, 16
    %v2373 = vrot.slane %v2371, 7
    %v2374 = vsel %vm2318, %v2369, %v2373
    %v2376 = vshrl.u32 %v2286, 16
    %v2378 = vrot.slane %v2376, 6
    %v2379 = vshll.u32 %v2286, 16
    %v2381 = vrot.slane %v2379, 7
    %v2382 = vor.u32 %v2378, %v2381
    %v2383 = vrot.slane %v2382, 2
    %v2385 = vshll.u32 %v2287, 16
    %v2387 = vrot.slane %v2385, 7
    %v2388 = vsel %vm2318, %v2383, %v2387
    %v2390 = vshrl.u32 %v2294, 16
    %v2392 = vrot.slane %v2390, 6
    %v2393 = vshll.u32 %v2294, 16
    %v2395 = vrot.slane %v2393, 7
    %v2396 = vor.u32 %v2392, %v2395
    %v2397 = vrot.slane %v2396, 2
    %v2399 = vshll.u32 %v2295, 16
    %v2401 = vrot.slane %v2399, 7
    %v2402 = vsel %vm2318, %v2397, %v2401
    %v2404 = vshrl.u32 %v2302, 16
    %v2406 = vrot.slane %v2404, 6
    %v2407 = vshll.u32 %v2302, 16
    %v2409 = vrot.slane %v2407, 7
    %v2410 = vor.u32 %v2406, %v2409
    %v2411 = vrot.slane %v2410, 2
    %v2413 = vshll.u32 %v2303, 16
    %v2415 = vrot.slane %v2413, 7
    %v2416 = vsel %vm2318, %v2411, %v2415
    %v2418 = vshrl.u32 %v2310, 16
    %v2420 = vrot.slane %v2418, 6
    %v2421 = vshll.u32 %v2310, 16
    %v2423 = vrot.slane %v2421, 7
    %v2424 = vor.u32 %v2420, %v2423
    %v2425 = vrot.slane %v2424, 2
    %v2427 = vshll.u32 %v2311, 16
    %v2429 = vrot.slane %v2427, 7
    %v2430 = vsel %vm2318, %v2425, %v2429
    %s2431 = scalar_lea.vmem %s4, 64
    %v2432 = vld [vmem:[%s2431] sm:$0xf]
    %v2433 = vld [vmem:[%s2431 + $0x4] sm:$0xf]
    %v2434 = vld [vmem:[%s2431 + $0x8] sm:$0xf]
    %v2435 = vld [vmem:[%s2431 + $0xc] sm:$0xf]
    %v2436 = vld [vmem:[%s2431 + $0x10] sm:$0xf]
    %v2437 = vld [vmem:[%s2431 + $0x14] sm:$0xf]
    %v2438 = vld [vmem:[%s2431 + $0x18] sm:$0xf]
    %v2439 = vld [vmem:[%s2431 + $0x1c] sm:$0xf]
    %v2440 = vld [vmem:[%s2431 + $0x20] sm:$0xf]
    %v2441 = vld [vmem:[%s2431 + $0x24] sm:$0xf]
    %v2442 = vld [vmem:[%s2431 + $0x28] sm:$0xf]
    %v2443 = vld [vmem:[%s2431 + $0x2c] sm:$0xf]
    %v2444 = vld [vmem:[%s2431 + $0x30] sm:$0xf]
    %v2445 = vld [vmem:[%s2431 + $0x34] sm:$0xf]
    %v2446 = vld [vmem:[%s2431 + $0x38] sm:$0xf]
    %v2447 = vld [vmem:[%s2431 + $0x3c] sm:$0xf]
    %v2448 = vcombine.low %v2332, %v2346
    %v2449 = vcombine.low %v2360, %v2374
    %v2451 = vunpack.c.l.s4 1983009808
    %v2452 = vunpack.c.0.s8 %v2451
    %v2453 = vlaneseq
    %v2454 = vshrl.u32 %v2453, 7
    %v2455 = vsub.s32 %v2452, %v2454
    %v2456 = vrot.slane %v2448, %v2455
    %v2458 = vunpack.c.l.s4 1983009808
    %v2459 = vunpack.c.0.s8 %v2458
    %v2460 = vlaneseq
    %v2461 = vshrl.u32 %v2460, 7
    %v2462 = vsub.s32 %v2459, %v2461
    %v2463 = vrot.slane %v2449, %v2462
    %v2464 = vcombine.low %v2456, %v2463
    %v2465 = vcombine.low %v2388, %v2402
    %v2466 = vcombine.low %v2416, %v2430
    %v2468 = vunpack.c.l.s4 1983009808
    %v2469 = vunpack.c.0.s8 %v2468
    %v2470 = vlaneseq
    %v2471 = vshrl.u32 %v2470, 7
    %v2472 = vsub.s32 %v2469, %v2471
    %v2473 = vrot.slane %v2465, %v2472
    %v2475 = vunpack.c.l.s4 1983009808
    %v2476 = vunpack.c.0.s8 %v2475
    %v2477 = vlaneseq
    %v2478 = vshrl.u32 %v2477, 7
    %v2479 = vsub.s32 %v2476, %v2478
    %v2480 = vrot.slane %v2466, %v2479
    %v2481 = vcombine.low %v2473, %v2480
    %v2500 = vunpack.c.l.b16 %v2432
    %v2501 = vunpack.c.l.b16 %v2433
    %v2502 = vunpack.c.l.b16 %v2434
    %v2503 = vunpack.c.l.b16 %v2435
    %v2504 = vunpack.c.l.b16 %v2436
    %v2505 = vunpack.c.l.b16 %v2437
    %v2506 = vunpack.c.l.b16 %v2438
    %v2507 = vunpack.c.l.b16 %v2439
    %v2508 = vunpack.c.l.b16 %v2440
    %v2509 = vunpack.c.l.b16 %v2441
    %v2510 = vunpack.c.l.b16 %v2442
    %v2511 = vunpack.c.l.b16 %v2443
    %v2512 = vunpack.c.l.b16 %v2444
    %v2513 = vunpack.c.l.b16 %v2445
    %v2514 = vunpack.c.l.b16 %v2446
    %v2515 = vunpack.c.l.b16 %v2447
    %v2516 = vpack.c.b16 %v2501, %v2500
    %v2517 = vpack.c.b16 %v2503, %v2502
    %v2518 = vpack.c.b16 %v2505, %v2504
    %v2519 = vpack.c.b16 %v2507, %v2506
    %v2520 = vpack.c.b16 %v2509, %v2508
    %v2521 = vpack.c.b16 %v2511, %v2510
    %v2522 = vpack.c.b16 %v2513, %v2512
    %v2523 = vpack.c.b16 %v2515, %v2514
    %2532 = vmatprep.subr.bf16.mxu0 0
    %2533 = vmatpush1.bf16.msra.mxu0 %v2516
    %2534 = vmatprep.subr.bf16.mxu0 0
    %2535 = vmatpush1.bf16.msra.mxu0 %v2517
    %2536 = vmatprep.subr.bf16.mxu0 0
    %2537 = vmatpush1.bf16.msra.mxu0 %v2518
    %2538 = vmatprep.subr.bf16.mxu0 0
    %2539 = vmatpush1.bf16.msra.mxu0 %v2519
    %2540 = vmatprep.subr.bf16.mxu0 0
    %2541 = vmatpush1.bf16.msra.mxu0 %v2520
    %2542 = vmatprep.subr.bf16.mxu0 0
    %2543 = vmatpush1.bf16.msra.mxu0 %v2521
    %2544 = vmatprep.subr.bf16.mxu0 0
    %2545 = vmatpush1.bf16.msra.mxu0 %v2522
    %2546 = vmatprep.subr.bf16.mxu0 0
    %2547 = vmatpush1.bf16.msra.mxu0 %v2523
    %2548 = vmatprep.subr.bf16.mxu0 0
    %2549 = vmatpush1.bf16.msra.mxu0 0
    %2550 = vmatprep.subr.bf16.mxu0 0
    %2551 = vmatpush1.bf16.msra.mxu0 0
    %2552 = vmatprep.subr.bf16.mxu0 0
    %2553 = vmatpush1.bf16.msra.mxu0 0
    %2554 = vmatprep.subr.bf16.mxu0 0
    %2555 = vmatpush1.bf16.msra.mxu0 0
    %2556 = vmatprep.subr.bf16.mxu0 0
    %2557 = vmatpush1.bf16.msra.mxu0 0
    %2558 = vmatprep.subr.bf16.mxu0 0
    %2559 = vmatpush1.bf16.msra.mxu0 0
    %2560 = vmatprep.subr.bf16.mxu0 0
    %2561 = vmatpush1.bf16.msra.mxu0 0
    %2562 = vmatprep.subr.bf16.mxu0 0
    %2563 = vmatpush1.bf16.msra.mxu0 0
    %2564 = vmatprep.mubr.bf16.mxu0 0
    %2565 = vmatmul.mubr.bf16.gmra.mrb[0].mxu0 %v2464
    %v2566 = vpop.f32.mrb[0].mxu0
    %v2567 = vadd.f32 0.0, %v2566
    %v2568 = vpop.f32.mrb[0].mxu0
    %v2569 = vpop.f32.mrb[0].mxu0
    %v2570 = vadd.f32 0.0, %v2569
    %v2571 = vpop.f32.mrb[0].mxu0
    %2572 = vmatprep.mubr.bf16.mxu0 0
    %2573 = vmatmul.mubr.bf16.gmra.mrb[0].mxu0 %v2481
    %v2574 = vpop.f32.mrb[0].mxu0
    %v2575 = vadd.f32 0.0, %v2574
    %v2576 = vpop.f32.mrb[0].mxu0
    %v2577 = vpop.f32.mrb[0].mxu0
    %v2578 = vadd.f32 0.0, %v2577
    %v2579 = vpop.f32.mrb[0].mxu0
    %2580 = vdwg.mxu0
    %v2589 = vcombine.low %v2208, %v2209
    %v2590 = vcombine.low %v2210, %v2211
    %v2592 = vunpack.c.l.s4 1983009808
    %v2593 = vunpack.c.0.s8 %v2592
    %v2594 = vlaneseq
    %v2595 = vshrl.u32 %v2594, 7
    %v2596 = vsub.s32 %v2593, %v2595
    %v2597 = vrot.slane %v2589, %v2596
    %v2599 = vunpack.c.l.s4 1983009808
    %v2600 = vunpack.c.0.s8 %v2599
    %v2601 = vlaneseq
    %v2602 = vshrl.u32 %v2601, 7
    %v2603 = vsub.s32 %v2600, %v2602
    %v2604 = vrot.slane %v2590, %v2603
    %v2605 = vcombine.low %v2597, %v2604
    %v2606 = vcombine.low %v2212, %v2213
    %v2607 = vcombine.low %v2214, %v2215
    %v2609 = vunpack.c.l.s4 1983009808
    %v2610 = vunpack.c.0.s8 %v2609
    %v2611 = vlaneseq
    %v2612 = vshrl.u32 %v2611, 7
    %v2613 = vsub.s32 %v2610, %v2612
    %v2614 = vrot.slane %v2606, %v2613
    %v2616 = vunpack.c.l.s4 1983009808
    %v2617 = vunpack.c.0.s8 %v2616
    %v2618 = vlaneseq
    %v2619 = vshrl.u32 %v2618, 7
    %v2620 = vsub.s32 %v2617, %v2619
    %v2621 = vrot.slane %v2607, %v2620
    %v2622 = vcombine.low %v2614, %v2621
    %v2641 = vunpack.c.l.b16 %v2216
    %v2642 = vunpack.c.l.b16 %v2217
    %v2643 = vunpack.c.l.b16 %v2218
    %v2644 = vunpack.c.l.b16 %v2219
    %v2645 = vunpack.c.l.b16 %v2220
    %v2646 = vunpack.c.l.b16 %v2221
    %v2647 = vunpack.c.l.b16 %v2222
    %v2648 = vunpack.c.l.b16 %v2223
    %v2649 = vunpack.c.l.b16 %v2224
    %v2650 = vunpack.c.l.b16 %v2225
    %v2651 = vunpack.c.l.b16 %v2226
    %v2652 = vunpack.c.l.b16 %v2227
    %v2653 = vunpack.c.l.b16 %v2228
    %v2654 = vunpack.c.l.b16 %v2229
    %v2655 = vunpack.c.l.b16 %v2230
    %v2656 = vunpack.c.l.b16 %v2231
    %v2657 = vpack.c.b16 %v2642, %v2641
    %v2658 = vpack.c.b16 %v2644, %v2643
    %v2659 = vpack.c.b16 %v2646, %v2645
    %v2660 = vpack.c.b16 %v2648, %v2647
    %v2661 = vpack.c.b16 %v2650, %v2649
    %v2662 = vpack.c.b16 %v2652, %v2651
    %v2663 = vpack.c.b16 %v2654, %v2653
    %v2664 = vpack.c.b16 %v2656, %v2655
    %2673 = vmatprep.subr.bf16.mxu0 0
    %2674 = vmatpush1.bf16.msra.mxu0 %v2657
    %2675 = vmatprep.subr.bf16.mxu0 0
    %2676 = vmatpush1.bf16.msra.mxu0 %v2658
    %2677 = vmatprep.subr.bf16.mxu0 0
    %2678 = vmatpush1.bf16.msra.mxu0 %v2659
    %2679 = vmatprep.subr.bf16.mxu0 0
    %2680 = vmatpush1.bf16.msra.mxu0 %v2660
    %2681 = vmatprep.subr.bf16.mxu0 0
    %2682 = vmatpush1.bf16.msra.mxu0 %v2661
    %2683 = vmatprep.subr.bf16.mxu0 0
    %2684 = vmatpush1.bf16.msra.mxu0 %v2662
    %2685 = vmatprep.subr.bf16.mxu0 0
    %2686 = vmatpush1.bf16.msra.mxu0 %v2663
    %2687 = vmatprep.subr.bf16.mxu0 0
    %2688 = vmatpush1.bf16.msra.mxu0 %v2664
    %2689 = vmatprep.subr.bf16.mxu0 0
    %2690 = vmatpush1.bf16.msra.mxu0 0
    %2691 = vmatprep.subr.bf16.mxu0 0
    %2692 = vmatpush1.bf16.msra.mxu0 0
    %2693 = vmatprep.subr.bf16.mxu0 0
    %2694 = vmatpush1.bf16.msra.mxu0 0
    %2695 = vmatprep.subr.bf16.mxu0 0
    %2696 = vmatpush1.bf16.msra.mxu0 0
    %2697 = vmatprep.subr.bf16.mxu0 0
    %2698 = vmatpush1.bf16.msra.mxu0 0
    %2699 = vmatprep.subr.bf16.mxu0 0
    %2700 = vmatpush1.bf16.msra.mxu0 0
    %2701 = vmatprep.subr.bf16.mxu0 0
    %2702 = vmatpush1.bf16.msra.mxu0 0
    %2703 = vmatprep.subr.bf16.mxu0 0
    %2704 = vmatpush1.bf16.msra.mxu0 0
    %2705 = vmatprep.mubr.bf16.mxu0 0
    %2706 = vmatmul.mubr.bf16.gmra.mrb[0].mxu0 %v2605
    %v2707 = vpop.f32.mrb[0].mxu0
    %v2708 = vadd.f32 %v2567, %v2707
    %v2709 = vpop.f32.mrb[0].mxu0
    %v2710 = vpop.f32.mrb[0].mxu0
    %v2711 = vadd.f32 %v2570, %v2710
    %v2712 = vpop.f32.mrb[0].mxu0
    %2713 = vmatprep.mubr.bf16.mxu0 0
    %2714 = vmatmul.mubr.bf16.gmra.mrb[0].mxu0 %v2622
    %v2715 = vpop.f32.mrb[0].mxu0
    %v2716 = vadd.f32 %v2575, %v2715
    %v2717 = vpop.f32.mrb[0].mxu0
    %v2718 = vpop.f32.mrb[0].mxu0
    %v2719 = vadd.f32 %v2578, %v2718
    %v2720 = vpop.f32.mrb[0].mxu0
    %2721 = vdwg.mxu0
    %v2722 = vld [vmem:[#allocation2] sm:$0x6]
    %v2723 = vld [vmem:[#allocation2 + $0x4] sm:$0x6]
    %v2724 = vld [vmem:[#allocation2 + $0x8] sm:$0x6]
    %v2725 = vld [vmem:[#allocation2 + $0xc] sm:$0x6]
    %v2726 = vld [vmem:[#allocation2 + $0x18] sm:$0x6]
    %v2727 = vld [vmem:[#allocation2 + $0x1c] sm:$0x6]
    %v2728 = vld [vmem:[#allocation2 + $0x20] sm:$0x6]
    %v2729 = vld [vmem:[#allocation2 + $0x24] sm:$0x6]
    %v2739 = vunpack.c.l.s4 1983009808
    %v2740 = vunpack.c.0.s8 %v2739
    %v2741 = vlaneseq
    %v2742 = vshrl.u32 %v2741, 7
    %v2743 = vsub.s32 %v2740, %v2742
    %v2744 = vrot.slane %v2722, %v2743
    %v2745 = vcombine.high %v2744, %v2744
    %v2747 = vunpack.c.l.s4 1983009808
    %v2748 = vunpack.c.0.s8 %v2747
    %v2749 = vlaneseq
    %v2750 = vshrl.u32 %v2749, 7
    %v2751 = vsub.s32 %v2748, %v2750
    %v2752 = vrot.slane %v2723, %v2751
    %v2753 = vcombine.high %v2752, %v2752
    %v2755 = vunpack.c.l.s4 1983009808
    %v2756 = vunpack.c.0.s8 %v2755
    %v2757 = vlaneseq
    %v2758 = vshrl.u32 %v2757, 7
    %v2759 = vsub.s32 %v2756, %v2758
    %v2760 = vrot.slane %v2724, %v2759
    %v2761 = vcombine.high %v2760, %v2760
    %v2763 = vunpack.c.l.s4 1983009808
    %v2764 = vunpack.c.0.s8 %v2763
    %v2765 = vlaneseq
    %v2766 = vshrl.u32 %v2765, 7
    %v2767 = vsub.s32 %v2764, %v2766
    %v2768 = vrot.slane %v2725, %v2767
    %v2769 = vcombine.high %v2768, %v2768
    %v2771 = vunpack.c.l.s4 1983009808
    %v2772 = vunpack.c.0.s8 %v2771
    %v2773 = vlaneseq
    %v2774 = vshrl.u32 %v2773, 7
    %v2775 = vsub.s32 %v2772, %v2774
    %v2776 = vrot.slane %v2726, %v2775
    %v2777 = vcombine.high %v2776, %v2776
    %v2779 = vunpack.c.l.s4 1983009808
    %v2780 = vunpack.c.0.s8 %v2779
    %v2781 = vlaneseq
    %v2782 = vshrl.u32 %v2781, 7
    %v2783 = vsub.s32 %v2780, %v2782
    %v2784 = vrot.slane %v2727, %v2783
    %v2785 = vcombine.high %v2784, %v2784
    %v2787 = vunpack.c.l.s4 1983009808
    %v2788 = vunpack.c.0.s8 %v2787
    %v2789 = vlaneseq
    %v2790 = vshrl.u32 %v2789, 7
    %v2791 = vsub.s32 %v2788, %v2790
    %v2792 = vrot.slane %v2728, %v2791
    %v2793 = vcombine.high %v2792, %v2792
    %v2795 = vunpack.c.l.s4 1983009808
    %v2796 = vunpack.c.0.s8 %v2795
    %v2797 = vlaneseq
    %v2798 = vshrl.u32 %v2797, 7
    %v2799 = vsub.s32 %v2796, %v2798
    %v2800 = vrot.slane %v2729, %v2799
    %v2801 = vcombine.high %v2800, %v2800
    %vm2802 = vcmask 1040384
    %vm2803 = vcmask 1042434
    %vm2804 = vmor %vm2802, %vm2803
    %vm2805 = vcmask 1044484
    %vm2806 = vmor %vm2804, %vm2805
    %vm2807 = vcmask 1046534
    %vm2808 = vmor %vm2806, %vm2807
    %v2809 = vrot.slane %v2744, 7
    %v2810 = vrot.slane %v2809, 2
    %v2811 = vrot.slane %v2745, 7
    %v2812 = vsel %vm2808, %v2810, %v2811
    %v2813 = vrot.slane %v2752, 7
    %v2814 = vrot.slane %v2813, 2
    %v2815 = vrot.slane %v2753, 7
    %v2816 = vsel %vm2808, %v2814, %v2815
    %v2817 = vrot.slane %v2760, 7
    %v2818 = vrot.slane %v2817, 2
    %v2819 = vrot.slane %v2761, 7
    %v2820 = vsel %vm2808, %v2818, %v2819
    %v2821 = vrot.slane %v2768, 7
    %v2822 = vrot.slane %v2821, 2
    %v2823 = vrot.slane %v2769, 7
    %v2824 = vsel %vm2808, %v2822, %v2823
    %v2825 = vrot.slane %v2776, 7
    %v2826 = vrot.slane %v2825, 2
    %v2827 = vrot.slane %v2777, 7
    %v2828 = vsel %vm2808, %v2826, %v2827
    %v2829 = vrot.slane %v2784, 7
    %v2830 = vrot.slane %v2829, 2
    %v2831 = vrot.slane %v2785, 7
    %v2832 = vsel %vm2808, %v2830, %v2831
    %v2833 = vrot.slane %v2792, 7
    %v2834 = vrot.slane %v2833, 2
    %v2835 = vrot.slane %v2793, 7
    %v2836 = vsel %vm2808, %v2834, %v2835
    %v2837 = vrot.slane %v2800, 7
    %v2838 = vrot.slane %v2837, 2
    %v2839 = vrot.slane %v2801, 7
    %v2840 = vsel %vm2808, %v2838, %v2839
    %s2841 = scalar_lea.vmem %s4, 128
    %v2842 = vld [vmem:[%s2841] sm:$0xf]
    %v2843 = vld [vmem:[%s2841 + $0x4] sm:$0xf]
    %v2844 = vld [vmem:[%s2841 + $0x8] sm:$0xf]
    %v2845 = vld [vmem:[%s2841 + $0xc] sm:$0xf]
    %v2846 = vld [vmem:[%s2841 + $0x10] sm:$0xf]
    %v2847 = vld [vmem:[%s2841 + $0x14] sm:$0xf]
    %v2848 = vld [vmem:[%s2841 + $0x18] sm:$0xf]
    %v2849 = vld [vmem:[%s2841 + $0x1c] sm:$0xf]
    %v2850 = vld [vmem:[%s2841 + $0x20] sm:$0xf]
    %v2851 = vld [vmem:[%s2841 + $0x24] sm:$0xf]
    %v2852 = vld [vmem:[%s2841 + $0x28] sm:$0xf]
    %v2853 = vld [vmem:[%s2841 + $0x2c] sm:$0xf]
    %v2854 = vld [vmem:[%s2841 + $0x30] sm:$0xf]
    %v2855 = vld [vmem:[%s2841 + $0x34] sm:$0xf]
    %v2856 = vld [vmem:[%s2841 + $0x38] sm:$0xf]
    %v2857 = vld [vmem:[%s2841 + $0x3c] sm:$0xf]
    %v2858 = vcombine.low %v2812, %v2816
    %v2859 = vcombine.low %v2820, %v2824
    %v2861 = vunpack.c.l.s4 1983009808
    %v2862 = vunpack.c.0.s8 %v2861
    %v2863 = vlaneseq
    %v2864 = vshrl.u32 %v2863, 7
    %v2865 = vsub.s32 %v2862, %v2864
    %v2866 = vrot.slane %v2858, %v2865
    %v2868 = vunpack.c.l.s4 1983009808
    %v2869 = vunpack.c.0.s8 %v2868
    %v2870 = vlaneseq
    %v2871 = vshrl.u32 %v2870, 7
    %v2872 = vsub.s32 %v2869, %v2871
    %v2873 = vrot.slane %v2859, %v2872
    %v2874 = vcombine.low %v2866, %v2873
    %v2875 = vcombine.low %v2828, %v2832
    %v2876 = vcombine.low %v2836, %v2840
    %v2878 = vunpack.c.l.s4 1983009808
    %v2879 = vunpack.c.0.s8 %v2878
    %v2880 = vlaneseq
    %v2881 = vshrl.u32 %v2880, 7
    %v2882 = vsub.s32 %v2879, %v2881
    %v2883 = vrot.slane %v2875, %v2882
    %v2885 = vunpack.c.l.s4 1983009808
    %v2886 = vunpack.c.0.s8 %v2885
    %v2887 = vlaneseq
    %v2888 = vshrl.u32 %v2887, 7
    %v2889 = vsub.s32 %v2886, %v2888
    %v2890 = vrot.slane %v2876, %v2889
    %v2891 = vcombine.low %v2883, %v2890
    %v2910 = vunpack.c.l.b16 %v2842
    %v2911 = vunpack.c.l.b16 %v2843
    %v2912 = vunpack.c.l.b16 %v2844
    %v2913 = vunpack.c.l.b16 %v2845
    %v2914 = vunpack.c.l.b16 %v2846
    %v2915 = vunpack.c.l.b16 %v2847
    %v2916 = vunpack.c.l.b16 %v2848
    %v2917 = vunpack.c.l.b16 %v2849
    %v2918 = vunpack.c.l.b16 %v2850
    %v2919 = vunpack.c.l.b16 %v2851
    %v2920 = vunpack.c.l.b16 %v2852
    %v2921 = vunpack.c.l.b16 %v2853
    %v2922 = vunpack.c.l.b16 %v2854
    %v2923 = vunpack.c.l.b16 %v2855
    %v2924 = vunpack.c.l.b16 %v2856
    %v2925 = vunpack.c.l.b16 %v2857
    %v2926 = vpack.c.b16 %v2911, %v2910
    %v2927 = vpack.c.b16 %v2913, %v2912
    %v2928 = vpack.c.b16 %v2915, %v2914
    %v2929 = vpack.c.b16 %v2917, %v2916
    %v2930 = vpack.c.b16 %v2919, %v2918
    %v2931 = vpack.c.b16 %v2921, %v2920
    %v2932 = vpack.c.b16 %v2923, %v2922
    %v2933 = vpack.c.b16 %v2925, %v2924
    %2942 = vmatprep.subr.bf16.mxu0 0
    %2943 = vmatpush1.bf16.msra.mxu0 %v2926
    %2944 = vmatprep.subr.bf16.mxu0 0
    %2945 = vmatpush1.bf16.msra.mxu0 %v2927
    %2946 = vmatprep.subr.bf16.mxu0 0
    %2947 = vmatpush1.bf16.msra.mxu0 %v2928
    %2948 = vmatprep.subr.bf16.mxu0 0
    %2949 = vmatpush1.bf16.msra.mxu0 %v2929
    %2950 = vmatprep.subr.bf16.mxu0 0
    %2951 = vmatpush1.bf16.msra.mxu0 %v2930
    %2952 = vmatprep.subr.bf16.mxu0 0
    %2953 = vmatpush1.bf16.msra.mxu0 %v2931
    %2954 = vmatprep.subr.bf16.mxu0 0
    %2955 = vmatpush1.bf16.msra.mxu0 %v2932
    %2956 = vmatprep.subr.bf16.mxu0 0
    %2957 = vmatpush1.bf16.msra.mxu0 %v2933
    %2958 = vmatprep.subr.bf16.mxu0 0
    %2959 = vmatpush1.bf16.msra.mxu0 0
    %2960 = vmatprep.subr.bf16.mxu0 0
    %2961 = vmatpush1.bf16.msra.mxu0 0
    %2962 = vmatprep.subr.bf16.mxu0 0
    %2963 = vmatpush1.bf16.msra.mxu0 0
    %2964 = vmatprep.subr.bf16.mxu0 0
    %2965 = vmatpush1.bf16.msra.mxu0 0
    %2966 = vmatprep.subr.bf16.mxu0 0
    %2967 = vmatpush1.bf16.msra.mxu0 0
    %2968 = vmatprep.subr.bf16.mxu0 0
    %2969 = vmatpush1.bf16.msra.mxu0 0
    %2970 = vmatprep.subr.bf16.mxu0 0
    %2971 = vmatpush1.bf16.msra.mxu0 0
    %2972 = vmatprep.subr.bf16.mxu0 0
    %2973 = vmatpush1.bf16.msra.mxu0 0
    %2974 = vmatprep.mubr.bf16.mxu0 0
    %2975 = vmatmul.mubr.bf16.gmra.mrb[0].mxu0 %v2874
    %v2976 = vpop.f32.mrb[0].mxu0
    %v2977 = vadd.f32 0.0, %v2976
    %v2978 = vpop.f32.mrb[0].mxu0
    %v2979 = vpop.f32.mrb[0].mxu0
    %v2980 = vadd.f32 0.0, %v2979
    %v2981 = vpop.f32.mrb[0].mxu0
    %2982 = vmatprep.mubr.bf16.mxu0 0
    %2983 = vmatmul.mubr.bf16.gmra.mrb[0].mxu0 %v2891
    %v2984 = vpop.f32.mrb[0].mxu0
    %v2985 = vadd.f32 0.0, %v2984
    %v2986 = vpop.f32.mrb[0].mxu0
    %v2987 = vpop.f32.mrb[0].mxu0
    %v2988 = vadd.f32 0.0, %v2987
    %v2989 = vpop.f32.mrb[0].mxu0
    %2990 = vdwg.mxu0
    %v2991 = vadd.f32 %v2708, %v2977
    %v2992 = vadd.f32 %v2711, %v2980
    %v2993 = vadd.f32 %v2716, %v2985
    %v2994 = vadd.f32 %v2719, %v2988
    %v2995 = vld [vmem:[%s2180] sm:$0x3]
    %v2996 = vld [vmem:[%s2180 + $0x4] sm:$0x3]
    %v2997 = vld [vmem:[%s2180 + $0x8] sm:$0x3]
    %v2998 = vld [vmem:[%s2180 + $0xc] sm:$0x3]
    %v2999 = vld [vmem:[%s2180 + $0x18] sm:$0x3]
    %v3000 = vld [vmem:[%s2180 + $0x1c] sm:$0x3]
    %v3001 = vld [vmem:[%s2180 + $0x20] sm:$0x3]
    %v3002 = vld [vmem:[%s2180 + $0x24] sm:$0x3]
    %s3003 = scalar_lea.vmem %s4, 192
    %v3004 = vld [vmem:[%s3003] sm:$0xf]
    %v3005 = vld [vmem:[%s3003 + $0x4] sm:$0xf]
    %v3006 = vld [vmem:[%s3003 + $0x8] sm:$0xf]
    %v3007 = vld [vmem:[%s3003 + $0xc] sm:$0xf]
    %v3008 = vld [vmem:[%s3003 + $0x10] sm:$0xf]
    %v3009 = vld [vmem:[%s3003 + $0x14] sm:$0xf]
    %v3010 = vld [vmem:[%s3003 + $0x18] sm:$0xf]
    %v3011 = vld [vmem:[%s3003 + $0x1c] sm:$0xf]
    %v3012 = vld [vmem:[%s3003 + $0x20] sm:$0xf]
    %v3013 = vld [vmem:[%s3003 + $0x24] sm:$0xf]
    %v3014 = vld [vmem:[%s3003 + $0x28] sm:$0xf]
    %v3015 = vld [vmem:[%s3003 + $0x2c] sm:$0xf]
    %v3016 = vld [vmem:[%s3003 + $0x30] sm:$0xf]
    %v3017 = vld [vmem:[%s3003 + $0x34] sm:$0xf]
    %v3018 = vld [vmem:[%s3003 + $0x38] sm:$0xf]
    %v3019 = vld [vmem:[%s3003 + $0x3c] sm:$0xf]
    %v3028 = vcombine.low %v2995, %v2996
    %v3029 = vcombine.low %v2997, %v2998
    %v3031 = vunpack.c.l.s4 1983009808
    %v3032 = vunpack.c.0.s8 %v3031
    %v3033 = vlaneseq
    %v3034 = vshrl.u32 %v3033, 7
    %v3035 = vsub.s32 %v3032, %v3034
    %v3036 = vrot.slane %v3028, %v3035
    %v3038 = vunpack.c.l.s4 1983009808
    %v3039 = vunpack.c.0.s8 %v3038
    %v3040 = vlaneseq
    %v3041 = vshrl.u32 %v3040, 7
    %v3042 = vsub.s32 %v3039, %v3041
    %v3043 = vrot.slane %v3029, %v3042
    %v3044 = vcombine.low %v3036, %v3043
    %v3045 = vcombine.low %v2999, %v3000
    %v3046 = vcombine.low %v3001, %v3002
    %v3048 = vunpack.c.l.s4 1983009808
    %v3049 = vunpack.c.0.s8 %v3048
    %v3050 = vlaneseq
    %v3051 = vshrl.u32 %v3050, 7
    %v3052 = vsub.s32 %v3049, %v3051
    %v3053 = vrot.slane %v3045, %v3052
    %v3055 = vunpack.c.l.s4 1983009808
    %v3056 = vunpack.c.0.s8 %v3055
    %v3057 = vlaneseq
    %v3058 = vshrl.u32 %v3057, 7
    %v3059 = vsub.s32 %v3056, %v3058
    %v3060 = vrot.slane %v3046, %v3059
    %v3061 = vcombine.low %v3053, %v3060
    %v3080 = vunpack.c.l.b16 %v3004
    %v3081 = vunpack.c.l.b16 %v3005
    %v3082 = vunpack.c.l.b16 %v3006
    %v3083 = vunpack.c.l.b16 %v3007
    %v3084 = vunpack.c.l.b16 %v3008
    %v3085 = vunpack.c.l.b16 %v3009
    %v3086 = vunpack.c.l.b16 %v3010
    %v3087 = vunpack.c.l.b16 %v3011
    %v3088 = vunpack.c.l.b16 %v3012
    %v3089 = vunpack.c.l.b16 %v3013
    %v3090 = vunpack.c.l.b16 %v3014
    %v3091 = vunpack.c.l.b16 %v3015
    %v3092 = vunpack.c.l.b16 %v3016
    %v3093 = vunpack.c.l.b16 %v3017
    %v3094 = vunpack.c.l.b16 %v3018
    %v3095 = vunpack.c.l.b16 %v3019
    %v3096 = vpack.c.b16 %v3081, %v3080
    %v3097 = vpack.c.b16 %v3083, %v3082
    %v3098 = vpack.c.b16 %v3085, %v3084
    %v3099 = vpack.c.b16 %v3087, %v3086
    %v3100 = vpack.c.b16 %v3089, %v3088
    %v3101 = vpack.c.b16 %v3091, %v3090
    %v3102 = vpack.c.b16 %v3093, %v3092
    %v3103 = vpack.c.b16 %v3095, %v3094
    %3112 = vmatprep.subr.bf16.mxu0 0
    %3113 = vmatpush1.bf16.msra.mxu0 %v3096
    %3114 = vmatprep.subr.bf16.mxu0 0
    %3115 = vmatpush1.bf16.msra.mxu0 %v3097
    %3116 = vmatprep.subr.bf16.mxu0 0
    %3117 = vmatpush1.bf16.msra.mxu0 %v3098
    %3118 = vmatprep.subr.bf16.mxu0 0
    %3119 = vmatpush1.bf16.msra.mxu0 %v3099
    %3120 = vmatprep.subr.bf16.mxu0 0
    %3121 = vmatpush1.bf16.msra.mxu0 %v3100
    %3122 = vmatprep.subr.bf16.mxu0 0
    %3123 = vmatpush1.bf16.msra.mxu0 %v3101
    %3124 = vmatprep.subr.bf16.mxu0 0
    %3125 = vmatpush1.bf16.msra.mxu0 %v3102
    %3126 = vmatprep.subr.bf16.mxu0 0
    %3127 = vmatpush1.bf16.msra.mxu0 %v3103
    %3128 = vmatprep.subr.bf16.mxu0 0
    %3129 = vmatpush1.bf16.msra.mxu0 0
    %3130 = vmatprep.subr.bf16.mxu0 0
    %3131 = vmatpush1.bf16.msra.mxu0 0
    %3132 = vmatprep.subr.bf16.mxu0 0
    %3133 = vmatpush1.bf16.msra.mxu0 0
    %3134 = vmatprep.subr.bf16.mxu0 0
    %3135 = vmatpush1.bf16.msra.mxu0 0
    %3136 = vmatprep.subr.bf16.mxu0 0
    %3137 = vmatpush1.bf16.msra.mxu0 0
    %3138 = vmatprep.subr.bf16.mxu0 0
    %3139 = vmatpush1.bf16.msra.mxu0 0
    %3140 = vmatprep.subr.bf16.mxu0 0
    %3141 = vmatpush1.bf16.msra.mxu0 0
    %3142 = vmatprep.subr.bf16.mxu0 0
    %3143 = vmatpush1.bf16.msra.mxu0 0
    %3144 = vmatprep.mubr.bf16.mxu0 0
    %3145 = vmatmul.mubr.bf16.gmra.mrb[0].mxu0 %v3044
    %v3146 = vpop.f32.mrb[0].mxu0
    %v3147 = vadd.f32 0.0, %v3146
    %v3148 = vpop.f32.mrb[0].mxu0
    %v3149 = vpop.f32.mrb[0].mxu0
    %v3150 = vadd.f32 0.0, %v3149
    %v3151 = vpop.f32.mrb[0].mxu0
    %3152 = vmatprep.mubr.bf16.mxu0 0
    %3153 = vmatmul.mubr.bf16.gmra.mrb[0].mxu0 %v3061
    %v3154 = vpop.f32.mrb[0].mxu0
    %v3155 = vadd.f32 0.0, %v3154
    %v3156 = vpop.f32.mrb[0].mxu0
    %v3157 = vpop.f32.mrb[0].mxu0
    %v3158 = vadd.f32 0.0, %v3157
    %v3159 = vpop.f32.mrb[0].mxu0
    %3160 = vdwg.mxu0
    %v3161 = vadd.f32 %v2991, %v3147
    %v3162 = vadd.f32 %v2992, %v3150
    %v3163 = vadd.f32 %v2993, %v3155
    %v3164 = vadd.f32 %v2994, %v3158
    %v3165 = vld [vmem:[%s2180] sm:$0x7]
    %v3166 = vld [vmem:[%s2180 + $0x4] sm:$0x7]
    %v3167 = vld [vmem:[%s2180 + $0x8] sm:$0x7]
    %v3168 = vld [vmem:[%s2180 + $0xc] sm:$0x7]
    %v3169 = vld [vmem:[%s2180 + $0x18] sm:$0x7]
    %v3170 = vld [vmem:[%s2180 + $0x1c] sm:$0x7]
    %v3171 = vld [vmem:[%s2180 + $0x20] sm:$0x7]
    %v3172 = vld [vmem:[%s2180 + $0x24] sm:$0x7]
    %v3182 = vunpack.c.l.s4 1983009808
    %v3183 = vunpack.c.0.s8 %v3182
    %v3184 = vlaneseq
    %v3185 = vshrl.u32 %v3184, 7
    %v3186 = vsub.s32 %v3183, %v3185
    %v3187 = vrot.slane %v3165, %v3186
    %v3188 = vcombine.high %v3187, %v3187
    %v3190 = vunpack.c.l.s4 1983009808
    %v3191 = vunpack.c.0.s8 %v3190
    %v3192 = vlaneseq
    %v3193 = vshrl.u32 %v3192, 7
    %v3194 = vsub.s32 %v3191, %v3193
    %v3195 = vrot.slane %v3166, %v3194
    %v3196 = vcombine.high %v3195, %v3195
    %v3198 = vunpack.c.l.s4 1983009808
    %v3199 = vunpack.c.0.s8 %v3198
    %v3200 = vlaneseq
    %v3201 = vshrl.u32 %v3200, 7
    %v3202 = vsub.s32 %v3199, %v3201
    %v3203 = vrot.slane %v3167, %v3202
    %v3204 = vcombine.high %v3203, %v3203
    %v3206 = vunpack.c.l.s4 1983009808
    %v3207 = vunpack.c.0.s8 %v3206
    %v3208 = vlaneseq
    %v3209 = vshrl.u32 %v3208, 7
    %v3210 = vsub.s32 %v3207, %v3209
    %v3211 = vrot.slane %v3168, %v3210
    %v3212 = vcombine.high %v3211, %v3211
    %v3214 = vunpack.c.l.s4 1983009808
    %v3215 = vunpack.c.0.s8 %v3214
    %v3216 = vlaneseq
    %v3217 = vshrl.u32 %v3216, 7
    %v3218 = vsub.s32 %v3215, %v3217
    %v3219 = vrot.slane %v3169, %v3218
    %v3220 = vcombine.high %v3219, %v3219
    %v3222 = vunpack.c.l.s4 1983009808
    %v3223 = vunpack.c.0.s8 %v3222
    %v3224 = vlaneseq
    %v3225 = vshrl.u32 %v3224, 7
    %v3226 = vsub.s32 %v3223, %v3225
    %v3227 = vrot.slane %v3170, %v3226
    %v3228 = vcombine.high %v3227, %v3227
    %v3230 = vunpack.c.l.s4 1983009808
    %v3231 = vunpack.c.0.s8 %v3230
    %v3232 = vlaneseq
    %v3233 = vshrl.u32 %v3232, 7
    %v3234 = vsub.s32 %v3231, %v3233
    %v3235 = vrot.slane %v3171, %v3234
    %v3236 = vcombine.high %v3235, %v3235
    %v3238 = vunpack.c.l.s4 1983009808
    %v3239 = vunpack.c.0.s8 %v3238
    %v3240 = vlaneseq
    %v3241 = vshrl.u32 %v3240, 7
    %v3242 = vsub.s32 %v3239, %v3241
    %v3243 = vrot.slane %v3172, %v3242
    %v3244 = vcombine.high %v3243, %v3243
    %v3246 = vshrl.u32 %v3187, 16
    %v3248 = vrot.slane %v3246, 6
    %v3249 = vshll.u32 %v3187, 16
    %v3251 = vrot.slane %v3249, 7
    %v3252 = vor.u32 %v3248, %v3251
    %v3253 = vrot.slane %v3252, 2
    %v3255 = vshll.u32 %v3188, 16
    %v3257 = vrot.slane %v3255, 7
    %v3258 = vsel %vm2318, %v3253, %v3257
    %v3260 = vshrl.u32 %v3195, 16
    %v3262 = vrot.slane %v3260, 6
    %v3263 = vshll.u32 %v3195, 16
    %v3265 = vrot.slane %v3263, 7
    %v3266 = vor.u32 %v3262, %v3265
    %v3267 = vrot.slane %v3266, 2
    %v3269 = vshll.u32 %v3196, 16
    %v3271 = vrot.slane %v3269, 7
    %v3272 = vsel %vm2318, %v3267, %v3271
    %v3274 = vshrl.u32 %v3203, 16
    %v3276 = vrot.slane %v3274, 6
    %v3277 = vshll.u32 %v3203, 16
    %v3279 = vrot.slane %v3277, 7
    %v3280 = vor.u32 %v3276, %v3279
    %v3281 = vrot.slane %v3280, 2
    %v3283 = vshll.u32 %v3204, 16
    %v3285 = vrot.slane %v3283, 7
    %v3286 = vsel %vm2318, %v3281, %v3285
    %v3288 = vshrl.u32 %v3211, 16
    %v3290 = vrot.slane %v3288, 6
    %v3291 = vshll.u32 %v3211, 16
    %v3293 = vrot.slane %v3291, 7
    %v3294 = vor.u32 %v3290, %v3293
    %v3295 = vrot.slane %v3294, 2
    %v3297 = vshll.u32 %v3212, 16
    %v3299 = vrot.slane %v3297, 7
    %v3300 = vsel %vm2318, %v3295, %v3299
    %v3302 = vshrl.u32 %v3219, 16
    %v3304 = vrot.slane %v3302, 6
    %v3305 = vshll.u32 %v3219, 16
    %v3307 = vrot.slane %v3305, 7
    %v3308 = vor.u32 %v3304, %v3307
    %v3309 = vrot.slane %v3308, 2
    %v3311 = vshll.u32 %v3220, 16
    %v3313 = vrot.slane %v3311, 7
    %v3314 = vsel %vm2318, %v3309, %v3313
    %v3316 = vshrl.u32 %v3227, 16
    %v3318 = vrot.slane %v3316, 6
    %v3319 = vshll.u32 %v3227, 16
    %v3321 = vrot.slane %v3319, 7
    %v3322 = vor.u32 %v3318, %v3321
    %v3323 = vrot.slane %v3322, 2
    %v3325 = vshll.u32 %v3228, 16
    %v3327 = vrot.slane %v3325, 7
    %v3328 = vsel %vm2318, %v3323, %v3327
    %v3330 = vshrl.u32 %v3235, 16
    %v3332 = vrot.slane %v3330, 6
    %v3333 = vshll.u32 %v3235, 16
    %v3335 = vrot.slane %v3333, 7
    %v3336 = vor.u32 %v3332, %v3335
    %v3337 = vrot.slane %v3336, 2
    %v3339 = vshll.u32 %v3236, 16
    %v3341 = vrot.slane %v3339, 7
    %v3342 = vsel %vm2318, %v3337, %v3341
    %v3344 = vshrl.u32 %v3243, 16
    %v3346 = vrot.slane %v3344, 6
    %v3347 = vshll.u32 %v3243, 16
    %v3349 = vrot.slane %v3347, 7
    %v3350 = vor.u32 %v3346, %v3349
    %v3351 = vrot.slane %v3350, 2
    %v3353 = vshll.u32 %v3244, 16
    %v3355 = vrot.slane %v3353, 7
    %v3356 = vsel %vm2318, %v3351, %v3355
    %s3357 = scalar_lea.vmem %s4, 256
    %v3358 = vld [vmem:[%s3357] sm:$0xf]
    %v3359 = vld [vmem:[%s3357 + $0x4] sm:$0xf]
    %v3360 = vld [vmem:[%s3357 + $0x8] sm:$0xf]
    %v3361 = vld [vmem:[%s3357 + $0xc] sm:$0xf]
    %v3362 = vld [vmem:[%s3357 + $0x10] sm:$0xf]
    %v3363 = vld [vmem:[%s3357 + $0x14] sm:$0xf]
    %v3364 = vld [vmem:[%s3357 + $0x18] sm:$0xf]
    %v3365 = vld [vmem:[%s3357 + $0x1c] sm:$0xf]
    %v3366 = vld [vmem:[%s3357 + $0x20] sm:$0xf]
    %v3367 = vld [vmem:[%s3357 + $0x24] sm:$0xf]
    %v3368 = vld [vmem:[%s3357 + $0x28] sm:$0xf]
    %v3369 = vld [vmem:[%s3357 + $0x2c] sm:$0xf]
    %v3370 = vld [vmem:[%s3357 + $0x30] sm:$0xf]
    %v3371 = vld [vmem:[%s3357 + $0x34] sm:$0xf]
    %v3372 = vld [vmem:[%s3357 + $0x38] sm:$0xf]
    %v3373 = vld [vmem:[%s3357 + $0x3c] sm:$0xf]
    %v3374 = vcombine.low %v3258, %v3272
    %v3375 = vcombine.low %v3286, %v3300
    %v3377 = vunpack.c.l.s4 1983009808
    %v3378 = vunpack.c.0.s8 %v3377
    %v3379 = vlaneseq
    %v3380 = vshrl.u32 %v3379, 7
    %v3381 = vsub.s32 %v3378, %v3380
    %v3382 = vrot.slane %v3374, %v3381
    %v3384 = vunpack.c.l.s4 1983009808
    %v3385 = vunpack.c.0.s8 %v3384
    %v3386 = vlaneseq
    %v3387 = vshrl.u32 %v3386, 7
    %v3388 = vsub.s32 %v3385, %v3387
    %v3389 = vrot.slane %v3375, %v3388
    %v3390 = vcombine.low %v3382, %v3389
    %v3391 = vcombine.low %v3314, %v3328
    %v3392 = vcombine.low %v3342, %v3356
    %v3394 = vunpack.c.l.s4 1983009808
    %v3395 = vunpack.c.0.s8 %v3394
    %v3396 = vlaneseq
    %v3397 = vshrl.u32 %v3396, 7
    %v3398 = vsub.s32 %v3395, %v3397
    %v3399 = vrot.slane %v3391, %v3398
    %v3401 = vunpack.c.l.s4 1983009808
    %v3402 = vunpack.c.0.s8 %v3401
    %v3403 = vlaneseq
    %v3404 = vshrl.u32 %v3403, 7
    %v3405 = vsub.s32 %v3402, %v3404
    %v3406 = vrot.slane %v3392, %v3405
    %v3407 = vcombine.low %v3399, %v3406
    %v3426 = vunpack.c.l.b16 %v3358
    %v3427 = vunpack.c.l.b16 %v3359
    %v3428 = vunpack.c.l.b16 %v3360
    %v3429 = vunpack.c.l.b16 %v3361
    %v3430 = vunpack.c.l.b16 %v3362
    %v3431 = vunpack.c.l.b16 %v3363
    %v3432 = vunpack.c.l.b16 %v3364
    %v3433 = vunpack.c.l.b16 %v3365
    %v3434 = vunpack.c.l.b16 %v3366
    %v3435 = vunpack.c.l.b16 %v3367
    %v3436 = vunpack.c.l.b16 %v3368
    %v3437 = vunpack.c.l.b16 %v3369
    %v3438 = vunpack.c.l.b16 %v3370
    %v3439 = vunpack.c.l.b16 %v3371
    %v3440 = vunpack.c.l.b16 %v3372
    %v3441 = vunpack.c.l.b16 %v3373
    %v3442 = vpack.c.b16 %v3427, %v3426
    %v3443 = vpack.c.b16 %v3429, %v3428
    %v3444 = vpack.c.b16 %v3431, %v3430
    %v3445 = vpack.c.b16 %v3433, %v3432
    %v3446 = vpack.c.b16 %v3435, %v3434
    %v3447 = vpack.c.b16 %v3437, %v3436
    %v3448 = vpack.c.b16 %v3439, %v3438
    %v3449 = vpack.c.b16 %v3441, %v3440
    %3458 = vmatprep.subr.bf16.mxu0 0
    %3459 = vmatpush1.bf16.msra.mxu0 %v3442
    %3460 = vmatprep.subr.bf16.mxu0 0
    %3461 = vmatpush1.bf16.msra.mxu0 %v3443
    %3462 = vmatprep.subr.bf16.mxu0 0
    %3463 = vmatpush1.bf16.msra.mxu0 %v3444
    %3464 = vmatprep.subr.bf16.mxu0 0
    %3465 = vmatpush1.bf16.msra.mxu0 %v3445
    %3466 = vmatprep.subr.bf16.mxu0 0
    %3467 = vmatpush1.bf16.msra.mxu0 %v3446
    %3468 = vmatprep.subr.bf16.mxu0 0
    %3469 = vmatpush1.bf16.msra.mxu0 %v3447
    %3470 = vmatprep.subr.bf16.mxu0 0
    %3471 = vmatpush1.bf16.msra.mxu0 %v3448
    %3472 = vmatprep.subr.bf16.mxu0 0
    %3473 = vmatpush1.bf16.msra.mxu0 %v3449
    %3474 = vmatprep.subr.bf16.mxu0 0
    %3475 = vmatpush1.bf16.msra.mxu0 0
    %3476 = vmatprep.subr.bf16.mxu0 0
    %3477 = vmatpush1.bf16.msra.mxu0 0
    %3478 = vmatprep.subr.bf16.mxu0 0
    %3479 = vmatpush1.bf16.msra.mxu0 0
    %3480 = vmatprep.subr.bf16.mxu0 0
    %3481 = vmatpush1.bf16.msra.mxu0 0
    %3482 = vmatprep.subr.bf16.mxu0 0
    %3483 = vmatpush1.bf16.msra.mxu0 0
    %3484 = vmatprep.subr.bf16.mxu0 0
    %3485 = vmatpush1.bf16.msra.mxu0 0
    %3486 = vmatprep.subr.bf16.mxu0 0
    %3487 = vmatpush1.bf16.msra.mxu0 0
    %3488 = vmatprep.subr.bf16.mxu0 0
    %3489 = vmatpush1.bf16.msra.mxu0 0
    %3490 = vmatprep.mubr.bf16.mxu0 0
    %3491 = vmatmul.mubr.bf16.gmra.mrb[0].mxu0 %v3390
    %v3492 = vpop.f32.mrb[0].mxu0
    %v3493 = vadd.f32 0.0, %v3492
    %v3494 = vpop.f32.mrb[0].mxu0
    %v3495 = vpop.f32.mrb[0].mxu0
    %v3496 = vadd.f32 0.0, %v3495
    %v3497 = vpop.f32.mrb[0].mxu0
    %3498 = vmatprep.mubr.bf16.mxu0 0
    %3499 = vmatmul.mubr.bf16.gmra.mrb[0].mxu0 %v3407
    %v3500 = vpop.f32.mrb[0].mxu0
    %v3501 = vadd.f32 0.0, %v3500
    %v3502 = vpop.f32.mrb[0].mxu0
    %v3503 = vpop.f32.mrb[0].mxu0
    %v3504 = vadd.f32 0.0, %v3503
    %v3505 = vpop.f32.mrb[0].mxu0
    %3506 = vdwg.mxu0
    %v3507 = vadd.f32 %v3161, %v3493
    %v3508 = vadd.f32 %v3162, %v3496
    %v3509 = vadd.f32 %v3163, %v3501
    %v3510 = vadd.f32 %v3164, %v3504
    %v3511 = vld [vmem:[%s2180] sm:$0x6]
    %v3512 = vld [vmem:[%s2180 + $0x4] sm:$0x6]
    %v3513 = vld [vmem:[%s2180 + $0x8] sm:$0x6]
    %v3514 = vld [vmem:[%s2180 + $0xc] sm:$0x6]
    %v3515 = vld [vmem:[%s2180 + $0x18] sm:$0x6]
    %v3516 = vld [vmem:[%s2180 + $0x1c] sm:$0x6]
    %v3517 = vld [vmem:[%s2180 + $0x20] sm:$0x6]
    %v3518 = vld [vmem:[%s2180 + $0x24] sm:$0x6]
    %v3528 = vunpack.c.l.s4 1983009808
    %v3529 = vunpack.c.0.s8 %v3528
    %v3530 = vlaneseq
    %v3531 = vshrl.u32 %v3530, 7
    %v3532 = vsub.s32 %v3529, %v3531
    %v3533 = vrot.slane %v3511, %v3532
    %v3534 = vcombine.high %v3533, %v3533
    %v3536 = vunpack.c.l.s4 1983009808
    %v3537 = vunpack.c.0.s8 %v3536
    %v3538 = vlaneseq
    %v3539 = vshrl.u32 %v3538, 7
    %v3540 = vsub.s32 %v3537, %v3539
    %v3541 = vrot.slane %v3512, %v3540
    %v3542 = vcombine.high %v3541, %v3541
    %v3544 = vunpack.c.l.s4 1983009808
    %v3545 = vunpack.c.0.s8 %v3544
    %v3546 = vlaneseq
    %v3547 = vshrl.u32 %v3546, 7
    %v3548 = vsub.s32 %v3545, %v3547
    %v3549 = vrot.slane %v3513, %v3548
    %v3550 = vcombine.high %v3549, %v3549
    %v3552 = vunpack.c.l.s4 1983009808
    %v3553 = vunpack.c.0.s8 %v3552
    %v3554 = vlaneseq
    %v3555 = vshrl.u32 %v3554, 7
    %v3556 = vsub.s32 %v3553, %v3555
    %v3557 = vrot.slane %v3514, %v3556
    %v3558 = vcombine.high %v3557, %v3557
    %v3560 = vunpack.c.l.s4 1983009808
    %v3561 = vunpack.c.0.s8 %v3560
    %v3562 = vlaneseq
    %v3563 = vshrl.u32 %v3562, 7
    %v3564 = vsub.s32 %v3561, %v3563
    %v3565 = vrot.slane %v3515, %v3564
    %v3566 = vcombine.high %v3565, %v3565
    %v3568 = vunpack.c.l.s4 1983009808
    %v3569 = vunpack.c.0.s8 %v3568
    %v3570 = vlaneseq
    %v3571 = vshrl.u32 %v3570, 7
    %v3572 = vsub.s32 %v3569, %v3571
    %v3573 = vrot.slane %v3516, %v3572
    %v3574 = vcombine.high %v3573, %v3573
    %v3576 = vunpack.c.l.s4 1983009808
    %v3577 = vunpack.c.0.s8 %v3576
    %v3578 = vlaneseq
    %v3579 = vshrl.u32 %v3578, 7
    %v3580 = vsub.s32 %v3577, %v3579
    %v3581 = vrot.slane %v3517, %v3580
    %v3582 = vcombine.high %v3581, %v3581
    %v3584 = vunpack.c.l.s4 1983009808
    %v3585 = vunpack.c.0.s8 %v3584
    %v3586 = vlaneseq
    %v3587 = vshrl.u32 %v3586, 7
    %v3588 = vsub.s32 %v3585, %v3587
    %v3589 = vrot.slane %v3518, %v3588
    %v3590 = vcombine.high %v3589, %v3589
    %v3591 = vrot.slane %v3533, 7
    %v3592 = vrot.slane %v3591, 2
    %v3593 = vrot.slane %v3534, 7
    %v3594 = vsel %vm2808, %v3592, %v3593
    %v3595 = vrot.slane %v3541, 7
    %v3596 = vrot.slane %v3595, 2
    %v3597 = vrot.slane %v3542, 7
    %v3598 = vsel %vm2808, %v3596, %v3597
    %v3599 = vrot.slane %v3549, 7
    %v3600 = vrot.slane %v3599, 2
    %v3601 = vrot.slane %v3550, 7
    %v3602 = vsel %vm2808, %v3600, %v3601
    %v3603 = vrot.slane %v3557, 7
    %v3604 = vrot.slane %v3603, 2
    %v3605 = vrot.slane %v3558, 7
    %v3606 = vsel %vm2808, %v3604, %v3605
    %v3607 = vrot.slane %v3565, 7
    %v3608 = vrot.slane %v3607, 2
    %v3609 = vrot.slane %v3566, 7
    %v3610 = vsel %vm2808, %v3608, %v3609
    %v3611 = vrot.slane %v3573, 7
    %v3612 = vrot.slane %v3611, 2
    %v3613 = vrot.slane %v3574, 7
    %v3614 = vsel %vm2808, %v3612, %v3613
    %v3615 = vrot.slane %v3581, 7
    %v3616 = vrot.slane %v3615, 2
    %v3617 = vrot.slane %v3582, 7
    %v3618 = vsel %vm2808, %v3616, %v3617
    %v3619 = vrot.slane %v3589, 7
    %v3620 = vrot.slane %v3619, 2
    %v3621 = vrot.slane %v3590, 7
    %v3622 = vsel %vm2808, %v3620, %v3621
    %s3623 = scalar_lea.vmem %s4, 320
    %v3624 = vld [vmem:[%s3623] sm:$0xf]
    %v3625 = vld [vmem:[%s3623 + $0x4] sm:$0xf]
    %v3626 = vld [vmem:[%s3623 + $0x8] sm:$0xf]
    %v3627 = vld [vmem:[%s3623 + $0xc] sm:$0xf]
    %v3628 = vld [vmem:[%s3623 + $0x10] sm:$0xf]
    %v3629 = vld [vmem:[%s3623 + $0x14] sm:$0xf]
    %v3630 = vld [vmem:[%s3623 + $0x18] sm:$0xf]
    %v3631 = vld [vmem:[%s3623 + $0x1c] sm:$0xf]
    %v3632 = vld [vmem:[%s3623 + $0x20] sm:$0xf]
    %v3633 = vld [vmem:[%s3623 + $0x24] sm:$0xf]
    %v3634 = vld [vmem:[%s3623 + $0x28] sm:$0xf]
    %v3635 = vld [vmem:[%s3623 + $0x2c] sm:$0xf]
    %v3636 = vld [vmem:[%s3623 + $0x30] sm:$0xf]
    %v3637 = vld [vmem:[%s3623 + $0x34] sm:$0xf]
    %v3638 = vld [vmem:[%s3623 + $0x38] sm:$0xf]
    %v3639 = vld [vmem:[%s3623 + $0x3c] sm:$0xf]
    %v3640 = vcombine.low %v3594, %v3598
    %v3641 = vcombine.low %v3602, %v3606
    %v3643 = vunpack.c.l.s4 1983009808
    %v3644 = vunpack.c.0.s8 %v3643
    %v3645 = vlaneseq
    %v3646 = vshrl.u32 %v3645, 7
    %v3647 = vsub.s32 %v3644, %v3646
    %v3648 = vrot.slane %v3640, %v3647
    %v3650 = vunpack.c.l.s4 1983009808
    %v3651 = vunpack.c.0.s8 %v3650
    %v3652 = vlaneseq
    %v3653 = vshrl.u32 %v3652, 7
    %v3654 = vsub.s32 %v3651, %v3653
    %v3655 = vrot.slane %v3641, %v3654
    %v3656 = vcombine.low %v3648, %v3655
    %v3657 = vcombine.low %v3610, %v3614
    %v3658 = vcombine.low %v3618, %v3622
    %v3660 = vunpack.c.l.s4 1983009808
    %v3661 = vunpack.c.0.s8 %v3660
    %v3662 = vlaneseq
    %v3663 = vshrl.u32 %v3662, 7
    %v3664 = vsub.s32 %v3661, %v3663
    %v3665 = vrot.slane %v3657, %v3664
    %v3667 = vunpack.c.l.s4 1983009808
    %v3668 = vunpack.c.0.s8 %v3667
    %v3669 = vlaneseq
    %v3670 = vshrl.u32 %v3669, 7
    %v3671 = vsub.s32 %v3668, %v3670
    %v3672 = vrot.slane %v3658, %v3671
    %v3673 = vcombine.low %v3665, %v3672
    %v3692 = vunpack.c.l.b16 %v3624
    %v3693 = vunpack.c.l.b16 %v3625
    %v3694 = vunpack.c.l.b16 %v3626
    %v3695 = vunpack.c.l.b16 %v3627
    %v3696 = vunpack.c.l.b16 %v3628
    %v3697 = vunpack.c.l.b16 %v3629
    %v3698 = vunpack.c.l.b16 %v3630
    %v3699 = vunpack.c.l.b16 %v3631
    %v3700 = vunpack.c.l.b16 %v3632
    %v3701 = vunpack.c.l.b16 %v3633
    %v3702 = vunpack.c.l.b16 %v3634
    %v3703 = vunpack.c.l.b16 %v3635
    %v3704 = vunpack.c.l.b16 %v3636
    %v3705 = vunpack.c.l.b16 %v3637
    %v3706 = vunpack.c.l.b16 %v3638
    %v3707 = vunpack.c.l.b16 %v3639
    %v3708 = vpack.c.b16 %v3693, %v3692
    %v3709 = vpack.c.b16 %v3695, %v3694
    %v3710 = vpack.c.b16 %v3697, %v3696
    %v3711 = vpack.c.b16 %v3699, %v3698
    %v3712 = vpack.c.b16 %v3701, %v3700
    %v3713 = vpack.c.b16 %v3703, %v3702
    %v3714 = vpack.c.b16 %v3705, %v3704
    %v3715 = vpack.c.b16 %v3707, %v3706
    %3724 = vmatprep.subr.bf16.mxu0 0
    %3725 = vmatpush1.bf16.msra.mxu0 %v3708
    %3726 = vmatprep.subr.bf16.mxu0 0
    %3727 = vmatpush1.bf16.msra.mxu0 %v3709
    %3728 = vmatprep.subr.bf16.mxu0 0
    %3729 = vmatpush1.bf16.msra.mxu0 %v3710
    %3730 = vmatprep.subr.bf16.mxu0 0
    %3731 = vmatpush1.bf16.msra.mxu0 %v3711
    %3732 = vmatprep.subr.bf16.mxu0 0
    %3733 = vmatpush1.bf16.msra.mxu0 %v3712
    %3734 = vmatprep.subr.bf16.mxu0 0
    %3735 = vmatpush1.bf16.msra.mxu0 %v3713
    %3736 = vmatprep.subr.bf16.mxu0 0
    %3737 = vmatpush1.bf16.msra.mxu0 %v3714
    %3738 = vmatprep.subr.bf16.mxu0 0
    %3739 = vmatpush1.bf16.msra.mxu0 %v3715
    %3740 = vmatprep.subr.bf16.mxu0 0
    %3741 = vmatpush1.bf16.msra.mxu0 0
    %3742 = vmatprep.subr.bf16.mxu0 0
    %3743 = vmatpush1.bf16.msra.mxu0 0
    %3744 = vmatprep.subr.bf16.mxu0 0
    %3745 = vmatpush1.bf16.msra.mxu0 0
    %3746 = vmatprep.subr.bf16.mxu0 0
    %3747 = vmatpush1.bf16.msra.mxu0 0
    %3748 = vmatprep.subr.bf16.mxu0 0
    %3749 = vmatpush1.bf16.msra.mxu0 0
    %3750 = vmatprep.subr.bf16.mxu0 0
    %3751 = vmatpush1.bf16.msra.mxu0 0
    %3752 = vmatprep.subr.bf16.mxu0 0
    %3753 = vmatpush1.bf16.msra.mxu0 0
    %3754 = vmatprep.subr.bf16.mxu0 0
    %3755 = vmatpush1.bf16.msra.mxu0 0
    %3756 = vmatprep.mubr.bf16.mxu0 0
    %3757 = vmatmul.mubr.bf16.gmra.mrb[0].mxu0 %v3656
    %v3758 = vpop.f32.mrb[0].mxu0
    %v3759 = vadd.f32 0.0, %v3758
    %v3760 = vpop.f32.mrb[0].mxu0
    %v3761 = vpop.f32.mrb[0].mxu0
    %v3762 = vadd.f32 0.0, %v3761
    %v3763 = vpop.f32.mrb[0].mxu0
    %3764 = vmatprep.mubr.bf16.mxu0 0
    %3765 = vmatmul.mubr.bf16.gmra.mrb[0].mxu0 %v3673
    %v3766 = vpop.f32.mrb[0].mxu0
    %v3767 = vadd.f32 0.0, %v3766
    %v3768 = vpop.f32.mrb[0].mxu0
    %v3769 = vpop.f32.mrb[0].mxu0
    %v3770 = vadd.f32 0.0, %v3769
    %v3771 = vpop.f32.mrb[0].mxu0
    %3772 = vdwg.mxu0
    %v3773 = vadd.f32 %v3507, %v3759
    %v3774 = vadd.f32 %v3508, %v3762
    %v3775 = vadd.f32 %v3509, %v3767
    %v3776 = vadd.f32 %v3510, %v3770
    %s3777 = scalar_lea.vmem [#allocation2], 8
    %v3778 = vld [vmem:[%s3777] sm:$0x3]
    %v3779 = vld [vmem:[%s3777 + $0x4] sm:$0x3]
    %v3780 = vld [vmem:[%s3777 + $0x8] sm:$0x3]
    %v3781 = vld [vmem:[%s3777 + $0xc] sm:$0x3]
    %v3782 = vld [vmem:[%s3777 + $0x18] sm:$0x3]
    %v3783 = vld [vmem:[%s3777 + $0x1c] sm:$0x3]
    %v3784 = vld [vmem:[%s3777 + $0x20] sm:$0x3]
    %v3785 = vld [vmem:[%s3777 + $0x24] sm:$0x3]
    %s3786 = scalar_lea.vmem %s4, 384
    %v3787 = vld [vmem:[%s3786] sm:$0xf]
    %v3788 = vld [vmem:[%s3786 + $0x4] sm:$0xf]
    %v3789 = vld [vmem:[%s3786 + $0x8] sm:$0xf]
    %v3790 = vld [vmem:[%s3786 + $0xc] sm:$0xf]
    %v3791 = vld [vmem:[%s3786 + $0x10] sm:$0xf]
    %v3792 = vld [vmem:[%s3786 + $0x14] sm:$0xf]
    %v3793 = vld [vmem:[%s3786 + $0x18] sm:$0xf]
    %v3794 = vld [vmem:[%s3786 + $0x1c] sm:$0xf]
    %v3795 = vld [vmem:[%s3786 + $0x20] sm:$0xf]
    %v3796 = vld [vmem:[%s3786 + $0x24] sm:$0xf]
    %v3797 = vld [vmem:[%s3786 + $0x28] sm:$0xf]
    %v3798 = vld [vmem:[%s3786 + $0x2c] sm:$0xf]
    %v3799 = vld [vmem:[%s3786 + $0x30] sm:$0xf]
    %v3800 = vld [vmem:[%s3786 + $0x34] sm:$0xf]
    %v3801 = vld [vmem:[%s3786 + $0x38] sm:$0xf]
    %v3802 = vld [vmem:[%s3786 + $0x3c] sm:$0xf]
    %v3811 = vcombine.low %v3778, %v3779
    %v3812 = vcombine.low %v3780, %v3781
    %v3814 = vunpack.c.l.s4 1983009808
    %v3815 = vunpack.c.0.s8 %v3814
    %v3816 = vlaneseq
    %v3817 = vshrl.u32 %v3816, 7
    %v3818 = vsub.s32 %v3815, %v3817
    %v3819 = vrot.slane %v3811, %v3818
    %v3821 = vunpack.c.l.s4 1983009808
    %v3822 = vunpack.c.0.s8 %v3821
    %v3823 = vlaneseq
    %v3824 = vshrl.u32 %v3823, 7
    %v3825 = vsub.s32 %v3822, %v3824
    %v3826 = vrot.slane %v3812, %v3825
    %v3827 = vcombine.low %v3819, %v3826
    %v3828 = vcombine.low %v3782, %v3783
    %v3829 = vcombine.low %v3784, %v3785
    %v3831 = vunpack.c.l.s4 1983009808
    %v3832 = vunpack.c.0.s8 %v3831
    %v3833 = vlaneseq
    %v3834 = vshrl.u32 %v3833, 7
    %v3835 = vsub.s32 %v3832, %v3834
    %v3836 = vrot.slane %v3828, %v3835
    %v3838 = vunpack.c.l.s4 1983009808
    %v3839 = vunpack.c.0.s8 %v3838
    %v3840 = vlaneseq
    %v3841 = vshrl.u32 %v3840, 7
    %v3842 = vsub.s32 %v3839, %v3841
    %v3843 = vrot.slane %v3829, %v3842
    %v3844 = vcombine.low %v3836, %v3843
    %v3863 = vunpack.c.l.b16 %v3787
    %v3864 = vunpack.c.l.b16 %v3788
    %v3865 = vunpack.c.l.b16 %v3789
    %v3866 = vunpack.c.l.b16 %v3790
    %v3867 = vunpack.c.l.b16 %v3791
    %v3868 = vunpack.c.l.b16 %v3792
    %v3869 = vunpack.c.l.b16 %v3793
    %v3870 = vunpack.c.l.b16 %v3794
    %v3871 = vunpack.c.l.b16 %v3795
    %v3872 = vunpack.c.l.b16 %v3796
    %v3873 = vunpack.c.l.b16 %v3797
    %v3874 = vunpack.c.l.b16 %v3798
    %v3875 = vunpack.c.l.b16 %v3799
    %v3876 = vunpack.c.l.b16 %v3800
    %v3877 = vunpack.c.l.b16 %v3801
    %v3878 = vunpack.c.l.b16 %v3802
    %v3879 = vpack.c.b16 %v3864, %v3863
    %v3880 = vpack.c.b16 %v3866, %v3865
    %v3881 = vpack.c.b16 %v3868, %v3867
    %v3882 = vpack.c.b16 %v3870, %v3869
    %v3883 = vpack.c.b16 %v3872, %v3871
    %v3884 = vpack.c.b16 %v3874, %v3873
    %v3885 = vpack.c.b16 %v3876, %v3875
    %v3886 = vpack.c.b16 %v3878, %v3877
    %3895 = vmatprep.subr.bf16.mxu0 0
    %3896 = vmatpush1.bf16.msra.mxu0 %v3879
    %3897 = vmatprep.subr.bf16.mxu0 0
    %3898 = vmatpush1.bf16.msra.mxu0 %v3880
    %3899 = vmatprep.subr.bf16.mxu0 0
    %3900 = vmatpush1.bf16.msra.mxu0 %v3881
    %3901 = vmatprep.subr.bf16.mxu0 0
    %3902 = vmatpush1.bf16.msra.mxu0 %v3882
    %3903 = vmatprep.subr.bf16.mxu0 0
    %3904 = vmatpush1.bf16.msra.mxu0 %v3883
    %3905 = vmatprep.subr.bf16.mxu0 0
    %3906 = vmatpush1.bf16.msra.mxu0 %v3884
    %3907 = vmatprep.subr.bf16.mxu0 0
    %3908 = vmatpush1.bf16.msra.mxu0 %v3885
    %3909 = vmatprep.subr.bf16.mxu0 0
    %3910 = vmatpush1.bf16.msra.mxu0 %v3886
    %3911 = vmatprep.subr.bf16.mxu0 0
    %3912 = vmatpush1.bf16.msra.mxu0 0
    %3913 = vmatprep.subr.bf16.mxu0 0
    %3914 = vmatpush1.bf16.msra.mxu0 0
    %3915 = vmatprep.subr.bf16.mxu0 0
    %3916 = vmatpush1.bf16.msra.mxu0 0
    %3917 = vmatprep.subr.bf16.mxu0 0
    %3918 = vmatpush1.bf16.msra.mxu0 0
    %3919 = vmatprep.subr.bf16.mxu0 0
    %3920 = vmatpush1.bf16.msra.mxu0 0
    %3921 = vmatprep.subr.bf16.mxu0 0
    %3922 = vmatpush1.bf16.msra.mxu0 0
    %3923 = vmatprep.subr.bf16.mxu0 0
    %3924 = vmatpush1.bf16.msra.mxu0 0
    %3925 = vmatprep.subr.bf16.mxu0 0
    %3926 = vmatpush1.bf16.msra.mxu0 0
    %3927 = vmatprep.mubr.bf16.mxu0 0
    %3928 = vmatmul.mubr.bf16.gmra.mrb[0].mxu0 %v3827
    %v3929 = vpop.f32.mrb[0].mxu0
    %v3930 = vadd.f32 0.0, %v3929
    %v3931 = vpop.f32.mrb[0].mxu0
    %v3932 = vpop.f32.mrb[0].mxu0
    %v3933 = vadd.f32 0.0, %v3932
    %v3934 = vpop.f32.mrb[0].mxu0
    %3935 = vmatprep.mubr.bf16.mxu0 0
    %3936 = vmatmul.mubr.bf16.gmra.mrb[0].mxu0 %v3844
    %v3937 = vpop.f32.mrb[0].mxu0
    %v3938 = vadd.f32 0.0, %v3937
    %v3939 = vpop.f32.mrb[0].mxu0
    %v3940 = vpop.f32.mrb[0].mxu0
    %v3941 = vadd.f32 0.0, %v3940
    %v3942 = vpop.f32.mrb[0].mxu0
    %3943 = vdwg.mxu0
    %v3944 = vadd.f32 %v3773, %v3930
    %v3945 = vadd.f32 %v3774, %v3933
    %v3946 = vadd.f32 %v3775, %v3938
    %v3947 = vadd.f32 %v3776, %v3941
    %v3948 = vld [vmem:[%s3777] sm:$0x7]
    %v3949 = vld [vmem:[%s3777 + $0x4] sm:$0x7]
    %v3950 = vld [vmem:[%s3777 + $0x8] sm:$0x7]
    %v3951 = vld [vmem:[%s3777 + $0xc] sm:$0x7]
    %v3952 = vld [vmem:[%s3777 + $0x18] sm:$0x7]
    %v3953 = vld [vmem:[%s3777 + $0x1c] sm:$0x7]
    %v3954 = vld [vmem:[%s3777 + $0x20] sm:$0x7]
    %v3955 = vld [vmem:[%s3777 + $0x24] sm:$0x7]
    %v3965 = vunpack.c.l.s4 1983009808
    %v3966 = vunpack.c.0.s8 %v3965
    %v3967 = vlaneseq
    %v3968 = vshrl.u32 %v3967, 7
    %v3969 = vsub.s32 %v3966, %v3968
    %v3970 = vrot.slane %v3948, %v3969
    %v3971 = vcombine.high %v3970, %v3970
    %v3973 = vunpack.c.l.s4 1983009808
    %v3974 = vunpack.c.0.s8 %v3973
    %v3975 = vlaneseq
    %v3976 = vshrl.u32 %v3975, 7
    %v3977 = vsub.s32 %v3974, %v3976
    %v3978 = vrot.slane %v3949, %v3977
    %v3979 = vcombine.high %v3978, %v3978
    %v3981 = vunpack.c.l.s4 1983009808
    %v3982 = vunpack.c.0.s8 %v3981
    %v3983 = vlaneseq
    %v3984 = vshrl.u32 %v3983, 7
    %v3985 = vsub.s32 %v3982, %v3984
    %v3986 = vrot.slane %v3950, %v3985
    %v3987 = vcombine.high %v3986, %v3986
    %v3989 = vunpack.c.l.s4 1983009808
    %v3990 = vunpack.c.0.s8 %v3989
    %v3991 = vlaneseq
    %v3992 = vshrl.u32 %v3991, 7
    %v3993 = vsub.s32 %v3990, %v3992
    %v3994 = vrot.slane %v3951, %v3993
    %v3995 = vcombine.high %v3994, %v3994
    %v3997 = vunpack.c.l.s4 1983009808
    %v3998 = vunpack.c.0.s8 %v3997
    %v3999 = vlaneseq
    %v4000 = vshrl.u32 %v3999, 7
    %v4001 = vsub.s32 %v3998, %v4000
    %v4002 = vrot.slane %v3952, %v4001
    %v4003 = vcombine.high %v4002, %v4002
    %v4005 = vunpack.c.l.s4 1983009808
    %v4006 = vunpack.c.0.s8 %v4005
    %v4007 = vlaneseq
    %v4008 = vshrl.u32 %v4007, 7
    %v4009 = vsub.s32 %v4006, %v4008
    %v4010 = vrot.slane %v3953, %v4009
    %v4011 = vcombine.high %v4010, %v4010
    %v4013 = vunpack.c.l.s4 1983009808
    %v4014 = vunpack.c.0.s8 %v4013
    %v4015 = vlaneseq
    %v4016 = vshrl.u32 %v4015, 7
    %v4017 = vsub.s32 %v4014, %v4016
    %v4018 = vrot.slane %v3954, %v4017
    %v4019 = vcombine.high %v4018, %v4018
    %v4021 = vunpack.c.l.s4 1983009808
    %v4022 = vunpack.c.0.s8 %v4021
    %v4023 = vlaneseq
    %v4024 = vshrl.u32 %v4023, 7
    %v4025 = vsub.s32 %v4022, %v4024
    %v4026 = vrot.slane %v3955, %v4025
    %v4027 = vcombine.high %v4026, %v4026
    %v4029 = vshrl.u32 %v3970, 16
    %v4031 = vrot.slane %v4029, 6
    %v4032 = vshll.u32 %v3970, 16
    %v4034 = vrot.slane %v4032, 7
    %v4035 = vor.u32 %v4031, %v4034
    %v4036 = vrot.slane %v4035, 2
    %v4038 = vshll.u32 %v3971, 16
    %v4040 = vrot.slane %v4038, 7
    %v4041 = vsel %vm2318, %v4036, %v4040
    %v4043 = vshrl.u32 %v3978, 16
    %v4045 = vrot.slane %v4043, 6
    %v4046 = vshll.u32 %v3978, 16
    %v4048 = vrot.slane %v4046, 7
    %v4049 = vor.u32 %v4045, %v4048
    %v4050 = vrot.slane %v4049, 2
    %v4052 = vshll.u32 %v3979, 16
    %v4054 = vrot.slane %v4052, 7
    %v4055 = vsel %vm2318, %v4050, %v4054
    %v4057 = vshrl.u32 %v3986, 16
    %v4059 = vrot.slane %v4057, 6
    %v4060 = vshll.u32 %v3986, 16
    %v4062 = vrot.slane %v4060, 7
    %v4063 = vor.u32 %v4059, %v4062
    %v4064 = vrot.slane %v4063, 2
    %v4066 = vshll.u32 %v3987, 16
    %v4068 = vrot.slane %v4066, 7
    %v4069 = vsel %vm2318, %v4064, %v4068
    %v4071 = vshrl.u32 %v3994, 16
    %v4073 = vrot.slane %v4071, 6
    %v4074 = vshll.u32 %v3994, 16
    %v4076 = vrot.slane %v4074, 7
    %v4077 = vor.u32 %v4073, %v4076
    %v4078 = vrot.slane %v4077, 2
    %v4080 = vshll.u32 %v3995, 16
    %v4082 = vrot.slane %v4080, 7
    %v4083 = vsel %vm2318, %v4078, %v4082
    %v4085 = vshrl.u32 %v4002, 16
    %v4087 = vrot.slane %v4085, 6
    %v4088 = vshll.u32 %v4002, 16
    %v4090 = vrot.slane %v4088, 7
    %v4091 = vor.u32 %v4087, %v4090
    %v4092 = vrot.slane %v4091, 2
    %v4094 = vshll.u32 %v4003, 16
    %v4096 = vrot.slane %v4094, 7
    %v4097 = vsel %vm2318, %v4092, %v4096
    %v4099 = vshrl.u32 %v4010, 16
    %v4101 = vrot.slane %v4099, 6
    %v4102 = vshll.u32 %v4010, 16
    %v4104 = vrot.slane %v4102, 7
    %v4105 = vor.u32 %v4101, %v4104
    %v4106 = vrot.slane %v4105, 2
    %v4108 = vshll.u32 %v4011, 16
    %v4110 = vrot.slane %v4108, 7
    %v4111 = vsel %vm2318, %v4106, %v4110
    %v4113 = vshrl.u32 %v4018, 16
    %v4115 = vrot.slane %v4113, 6
    %v4116 = vshll.u32 %v4018, 16
    %v4118 = vrot.slane %v4116, 7
    %v4119 = vor.u32 %v4115, %v4118
    %v4120 = vrot.slane %v4119, 2
    %v4122 = vshll.u32 %v4019, 16
    %v4124 = vrot.slane %v4122, 7
    %v4125 = vsel %vm2318, %v4120, %v4124
    %v4127 = vshrl.u32 %v4026, 16
    %v4129 = vrot.slane %v4127, 6
    %v4130 = vshll.u32 %v4026, 16
    %v4132 = vrot.slane %v4130, 7
    %v4133 = vor.u32 %v4129, %v4132
    %v4134 = vrot.slane %v4133, 2
    %v4136 = vshll.u32 %v4027, 16
    %v4138 = vrot.slane %v4136, 7
    %v4139 = vsel %vm2318, %v4134, %v4138
    %s4140 = scalar_lea.vmem %s4, 448
    %v4141 = vld [vmem:[%s4140] sm:$0xf]
    %v4142 = vld [vmem:[%s4140 + $0x4] sm:$0xf]
    %v4143 = vld [vmem:[%s4140 + $0x8] sm:$0xf]
    %v4144 = vld [vmem:[%s4140 + $0xc] sm:$0xf]
    %v4145 = vld [vmem:[%s4140 + $0x10] sm:$0xf]
    %v4146 = vld [vmem:[%s4140 + $0x14] sm:$0xf]
    %v4147 = vld [vmem:[%s4140 + $0x18] sm:$0xf]
    %v4148 = vld [vmem:[%s4140 + $0x1c] sm:$0xf]
    %v4149 = vld [vmem:[%s4140 + $0x20] sm:$0xf]
    %v4150 = vld [vmem:[%s4140 + $0x24] sm:$0xf]
    %v4151 = vld [vmem:[%s4140 + $0x28] sm:$0xf]
    %v4152 = vld [vmem:[%s4140 + $0x2c] sm:$0xf]
    %v4153 = vld [vmem:[%s4140 + $0x30] sm:$0xf]
    %v4154 = vld [vmem:[%s4140 + $0x34] sm:$0xf]
    %v4155 = vld [vmem:[%s4140 + $0x38] sm:$0xf]
    %v4156 = vld [vmem:[%s4140 + $0x3c] sm:$0xf]
    %v4157 = vcombine.low %v4041, %v4055
    %v4158 = vcombine.low %v4069, %v4083
    %v4160 = vunpack.c.l.s4 1983009808
    %v4161 = vunpack.c.0.s8 %v4160
    %v4162 = vlaneseq
    %v4163 = vshrl.u32 %v4162, 7
    %v4164 = vsub.s32 %v4161, %v4163
    %v4165 = vrot.slane %v4157, %v4164
    %v4167 = vunpack.c.l.s4 1983009808
    %v4168 = vunpack.c.0.s8 %v4167
    %v4169 = vlaneseq
    %v4170 = vshrl.u32 %v4169, 7
    %v4171 = vsub.s32 %v4168, %v4170
    %v4172 = vrot.slane %v4158, %v4171
    %v4173 = vcombine.low %v4165, %v4172
    %v4174 = vcombine.low %v4097, %v4111
    %v4175 = vcombine.low %v4125, %v4139
    %v4177 = vunpack.c.l.s4 1983009808
    %v4178 = vunpack.c.0.s8 %v4177
    %v4179 = vlaneseq
    %v4180 = vshrl.u32 %v4179, 7
    %v4181 = vsub.s32 %v4178, %v4180
    %v4182 = vrot.slane %v4174, %v4181
    %v4184 = vunpack.c.l.s4 1983009808
    %v4185 = vunpack.c.0.s8 %v4184
    %v4186 = vlaneseq
    %v4187 = vshrl.u32 %v4186, 7
    %v4188 = vsub.s32 %v4185, %v4187
    %v4189 = vrot.slane %v4175, %v4188
    %v4190 = vcombine.low %v4182, %v4189
    %v4209 = vunpack.c.l.b16 %v4141
    %v4210 = vunpack.c.l.b16 %v4142
    %v4211 = vunpack.c.l.b16 %v4143
    %v4212 = vunpack.c.l.b16 %v4144
    %v4213 = vunpack.c.l.b16 %v4145
    %v4214 = vunpack.c.l.b16 %v4146
    %v4215 = vunpack.c.l.b16 %v4147
    %v4216 = vunpack.c.l.b16 %v4148
    %v4217 = vunpack.c.l.b16 %v4149
    %v4218 = vunpack.c.l.b16 %v4150
    %v4219 = vunpack.c.l.b16 %v4151
    %v4220 = vunpack.c.l.b16 %v4152
    %v4221 = vunpack.c.l.b16 %v4153
    %v4222 = vunpack.c.l.b16 %v4154
    %v4223 = vunpack.c.l.b16 %v4155
    %v4224 = vunpack.c.l.b16 %v4156
    %v4225 = vpack.c.b16 %v4210, %v4209
    %v4226 = vpack.c.b16 %v4212, %v4211
    %v4227 = vpack.c.b16 %v4214, %v4213
    %v4228 = vpack.c.b16 %v4216, %v4215
    %v4229 = vpack.c.b16 %v4218, %v4217
    %v4230 = vpack.c.b16 %v4220, %v4219
    %v4231 = vpack.c.b16 %v4222, %v4221
    %v4232 = vpack.c.b16 %v4224, %v4223
    %4241 = vmatprep.subr.bf16.mxu0 0
    %4242 = vmatpush1.bf16.msra.mxu0 %v4225
    %4243 = vmatprep.subr.bf16.mxu0 0
    %4244 = vmatpush1.bf16.msra.mxu0 %v4226
    %4245 = vmatprep.subr.bf16.mxu0 0
    %4246 = vmatpush1.bf16.msra.mxu0 %v4227
    %4247 = vmatprep.subr.bf16.mxu0 0
    %4248 = vmatpush1.bf16.msra.mxu0 %v4228
    %4249 = vmatprep.subr.bf16.mxu0 0
    %4250 = vmatpush1.bf16.msra.mxu0 %v4229
    %4251 = vmatprep.subr.bf16.mxu0 0
    %4252 = vmatpush1.bf16.msra.mxu0 %v4230
    %4253 = vmatprep.subr.bf16.mxu0 0
    %4254 = vmatpush1.bf16.msra.mxu0 %v4231
    %4255 = vmatprep.subr.bf16.mxu0 0
    %4256 = vmatpush1.bf16.msra.mxu0 %v4232
    %4257 = vmatprep.subr.bf16.mxu0 0
    %4258 = vmatpush1.bf16.msra.mxu0 0
    %4259 = vmatprep.subr.bf16.mxu0 0
    %4260 = vmatpush1.bf16.msra.mxu0 0
    %4261 = vmatprep.subr.bf16.mxu0 0
    %4262 = vmatpush1.bf16.msra.mxu0 0
    %4263 = vmatprep.subr.bf16.mxu0 0
    %4264 = vmatpush1.bf16.msra.mxu0 0
    %4265 = vmatprep.subr.bf16.mxu0 0
    %4266 = vmatpush1.bf16.msra.mxu0 0
    %4267 = vmatprep.subr.bf16.mxu0 0
    %4268 = vmatpush1.bf16.msra.mxu0 0
    %4269 = vmatprep.subr.bf16.mxu0 0
    %4270 = vmatpush1.bf16.msra.mxu0 0
    %4271 = vmatprep.subr.bf16.mxu0 0
    %4272 = vmatpush1.bf16.msra.mxu0 0
    %4273 = vmatprep.mubr.bf16.mxu0 0
    %4274 = vmatmul.mubr.bf16.gmra.mrb[0].mxu0 %v4173
    %v4275 = vpop.f32.mrb[0].mxu0
    %v4276 = vadd.f32 0.0, %v4275
    %v4277 = vpop.f32.mrb[0].mxu0
    %v4278 = vpop.f32.mrb[0].mxu0
    %v4279 = vadd.f32 0.0, %v4278
    %v4280 = vpop.f32.mrb[0].mxu0
    %4281 = vmatprep.mubr.bf16.mxu0 0
    %4282 = vmatmul.mubr.bf16.gmra.mrb[0].mxu0 %v4190
    %v4283 = vpop.f32.mrb[0].mxu0
    %v4284 = vadd.f32 0.0, %v4283
    %v4285 = vpop.f32.mrb[0].mxu0
    %v4286 = vpop.f32.mrb[0].mxu0
    %v4287 = vadd.f32 0.0, %v4286
    %v4288 = vpop.f32.mrb[0].mxu0
    %4289 = vdwg.mxu0
    %v4290 = vadd.f32 %v3944, %v4276
    %v4291 = vadd.f32 %v3945, %v4279
    %v4292 = vadd.f32 %v3946, %v4284
    %v4293 = vadd.f32 %v3947, %v4287
    %v4294 = vld [vmem:[%s3777] sm:$0x6]
    %v4295 = vld [vmem:[%s3777 + $0x4] sm:$0x6]
    %v4296 = vld [vmem:[%s3777 + $0x8] sm:$0x6]
    %v4297 = vld [vmem:[%s3777 + $0xc] sm:$0x6]
    %v4298 = vld [vmem:[%s3777 + $0x18] sm:$0x6]
    %v4299 = vld [vmem:[%s3777 + $0x1c] sm:$0x6]
    %v4300 = vld [vmem:[%s3777 + $0x20] sm:$0x6]
    %v4301 = vld [vmem:[%s3777 + $0x24] sm:$0x6]
    %v4311 = vunpack.c.l.s4 1983009808
    %v4312 = vunpack.c.0.s8 %v4311
    %v4313 = vlaneseq
    %v4314 = vshrl.u32 %v4313, 7
    %v4315 = vsub.s32 %v4312, %v4314
    %v4316 = vrot.slane %v4294, %v4315
    %v4317 = vcombine.high %v4316, %v4316
    %v4319 = vunpack.c.l.s4 1983009808
    %v4320 = vunpack.c.0.s8 %v4319
    %v4321 = vlaneseq
    %v4322 = vshrl.u32 %v4321, 7
    %v4323 = vsub.s32 %v4320, %v4322
    %v4324 = vrot.slane %v4295, %v4323
    %v4325 = vcombine.high %v4324, %v4324
    %v4327 = vunpack.c.l.s4 1983009808
    %v4328 = vunpack.c.0.s8 %v4327
    %v4329 = vlaneseq
    %v4330 = vshrl.u32 %v4329, 7
    %v4331 = vsub.s32 %v4328, %v4330
    %v4332 = vrot.slane %v4296, %v4331
    %v4333 = vcombine.high %v4332, %v4332
    %v4335 = vunpack.c.l.s4 1983009808
    %v4336 = vunpack.c.0.s8 %v4335
    %v4337 = vlaneseq
    %v4338 = vshrl.u32 %v4337, 7
    %v4339 = vsub.s32 %v4336, %v4338
    %v4340 = vrot.slane %v4297, %v4339
    %v4341 = vcombine.high %v4340, %v4340
    %v4343 = vunpack.c.l.s4 1983009808
    %v4344 = vunpack.c.0.s8 %v4343
    %v4345 = vlaneseq
    %v4346 = vshrl.u32 %v4345, 7
    %v4347 = vsub.s32 %v4344, %v4346
    %v4348 = vrot.slane %v4298, %v4347
    %v4349 = vcombine.high %v4348, %v4348
    %v4351 = vunpack.c.l.s4 1983009808
    %v4352 = vunpack.c.0.s8 %v4351
    %v4353 = vlaneseq
    %v4354 = vshrl.u32 %v4353, 7
    %v4355 = vsub.s32 %v4352, %v4354
    %v4356 = vrot.slane %v4299, %v4355
    %v4357 = vcombine.high %v4356, %v4356
    %v4359 = vunpack.c.l.s4 1983009808
    %v4360 = vunpack.c.0.s8 %v4359
    %v4361 = vlaneseq
    %v4362 = vshrl.u32 %v4361, 7
    %v4363 = vsub.s32 %v4360, %v4362
    %v4364 = vrot.slane %v4300, %v4363
    %v4365 = vcombine.high %v4364, %v4364
    %v4367 = vunpack.c.l.s4 1983009808
    %v4368 = vunpack.c.0.s8 %v4367
    %v4369 = vlaneseq
    %v4370 = vshrl.u32 %v4369, 7
    %v4371 = vsub.s32 %v4368, %v4370
    %v4372 = vrot.slane %v4301, %v4371
    %v4373 = vcombine.high %v4372, %v4372
    %v4374 = vrot.slane %v4316, 7
    %v4375 = vrot.slane %v4374, 2
    %v4376 = vrot.slane %v4317, 7
    %v4377 = vsel %vm2808, %v4375, %v4376
    %v4378 = vrot.slane %v4324, 7
    %v4379 = vrot.slane %v4378, 2
    %v4380 = vrot.slane %v4325, 7
    %v4381 = vsel %vm2808, %v4379, %v4380
    %v4382 = vrot.slane %v4332, 7
    %v4383 = vrot.slane %v4382, 2
    %v4384 = vrot.slane %v4333, 7
    %v4385 = vsel %vm2808, %v4383, %v4384
    %v4386 = vrot.slane %v4340, 7
    %v4387 = vrot.slane %v4386, 2
    %v4388 = vrot.slane %v4341, 7
    %v4389 = vsel %vm2808, %v4387, %v4388
    %v4390 = vrot.slane %v4348, 7
    %v4391 = vrot.slane %v4390, 2
    %v4392 = vrot.slane %v4349, 7
    %v4393 = vsel %vm2808, %v4391, %v4392
    %v4394 = vrot.slane %v4356, 7
    %v4395 = vrot.slane %v4394, 2
    %v4396 = vrot.slane %v4357, 7
    %v4397 = vsel %vm2808, %v4395, %v4396
    %v4398 = vrot.slane %v4364, 7
    %v4399 = vrot.slane %v4398, 2
    %v4400 = vrot.slane %v4365, 7
    %v4401 = vsel %vm2808, %v4399, %v4400
    %v4402 = vrot.slane %v4372, 7
    %v4403 = vrot.slane %v4402, 2
    %v4404 = vrot.slane %v4373, 7
    %v4405 = vsel %vm2808, %v4403, %v4404
    %s4406 = scalar_lea.vmem %s4, 512
    %v4407 = vld [vmem:[%s4406] sm:$0xf]
    %v4408 = vld [vmem:[%s4406 + $0x4] sm:$0xf]
    %v4409 = vld [vmem:[%s4406 + $0x8] sm:$0xf]
    %v4410 = vld [vmem:[%s4406 + $0xc] sm:$0xf]
    %v4411 = vld [vmem:[%s4406 + $0x10] sm:$0xf]
    %v4412 = vld [vmem:[%s4406 + $0x14] sm:$0xf]
    %v4413 = vld [vmem:[%s4406 + $0x18] sm:$0xf]
    %v4414 = vld [vmem:[%s4406 + $0x1c] sm:$0xf]
    %v4415 = vld [vmem:[%s4406 + $0x20] sm:$0xf]
    %v4416 = vld [vmem:[%s4406 + $0x24] sm:$0xf]
    %v4417 = vld [vmem:[%s4406 + $0x28] sm:$0xf]
    %v4418 = vld [vmem:[%s4406 + $0x2c] sm:$0xf]
    %v4419 = vld [vmem:[%s4406 + $0x30] sm:$0xf]
    %v4420 = vld [vmem:[%s4406 + $0x34] sm:$0xf]
    %v4421 = vld [vmem:[%s4406 + $0x38] sm:$0xf]
    %v4422 = vld [vmem:[%s4406 + $0x3c] sm:$0xf]
    %v4423 = vcombine.low %v4377, %v4381
    %v4424 = vcombine.low %v4385, %v4389
    %v4426 = vunpack.c.l.s4 1983009808
    %v4427 = vunpack.c.0.s8 %v4426
    %v4428 = vlaneseq
    %v4429 = vshrl.u32 %v4428, 7
    %v4430 = vsub.s32 %v4427, %v4429
    %v4431 = vrot.slane %v4423, %v4430
    %v4433 = vunpack.c.l.s4 1983009808
    %v4434 = vunpack.c.0.s8 %v4433
    %v4435 = vlaneseq
    %v4436 = vshrl.u32 %v4435, 7
    %v4437 = vsub.s32 %v4434, %v4436
    %v4438 = vrot.slane %v4424, %v4437
    %v4439 = vcombine.low %v4431, %v4438
    %v4440 = vcombine.low %v4393, %v4397
    %v4441 = vcombine.low %v4401, %v4405
    %v4443 = vunpack.c.l.s4 1983009808
    %v4444 = vunpack.c.0.s8 %v4443
    %v4445 = vlaneseq
    %v4446 = vshrl.u32 %v4445, 7
    %v4447 = vsub.s32 %v4444, %v4446
    %v4448 = vrot.slane %v4440, %v4447
    %v4450 = vunpack.c.l.s4 1983009808
    %v4451 = vunpack.c.0.s8 %v4450
    %v4452 = vlaneseq
    %v4453 = vshrl.u32 %v4452, 7
    %v4454 = vsub.s32 %v4451, %v4453
    %v4455 = vrot.slane %v4441, %v4454
    %v4456 = vcombine.low %v4448, %v4455
    %v4475 = vunpack.c.l.b16 %v4407
    %v4476 = vunpack.c.l.b16 %v4408
    %v4477 = vunpack.c.l.b16 %v4409
    %v4478 = vunpack.c.l.b16 %v4410
    %v4479 = vunpack.c.l.b16 %v4411
    %v4480 = vunpack.c.l.b16 %v4412
    %v4481 = vunpack.c.l.b16 %v4413
    %v4482 = vunpack.c.l.b16 %v4414
    %v4483 = vunpack.c.l.b16 %v4415
    %v4484 = vunpack.c.l.b16 %v4416
    %v4485 = vunpack.c.l.b16 %v4417
    %v4486 = vunpack.c.l.b16 %v4418
    %v4487 = vunpack.c.l.b16 %v4419
    %v4488 = vunpack.c.l.b16 %v4420
    %v4489 = vunpack.c.l.b16 %v4421
    %v4490 = vunpack.c.l.b16 %v4422
    %v4491 = vpack.c.b16 %v4476, %v4475
    %v4492 = vpack.c.b16 %v4478, %v4477
    %v4493 = vpack.c.b16 %v4480, %v4479
    %v4494 = vpack.c.b16 %v4482, %v4481
    %v4495 = vpack.c.b16 %v4484, %v4483
    %v4496 = vpack.c.b16 %v4486, %v4485
    %v4497 = vpack.c.b16 %v4488, %v4487
    %v4498 = vpack.c.b16 %v4490, %v4489
    %4507 = vmatprep.subr.bf16.mxu0 0
    %4508 = vmatpush1.bf16.msra.mxu0 %v4491
    %4509 = vmatprep.subr.bf16.mxu0 0
    %4510 = vmatpush1.bf16.msra.mxu0 %v4492
    %4511 = vmatprep.subr.bf16.mxu0 0
    %4512 = vmatpush1.bf16.msra.mxu0 %v4493
    %4513 = vmatprep.subr.bf16.mxu0 0
    %4514 = vmatpush1.bf16.msra.mxu0 %v4494
    %4515 = vmatprep.subr.bf16.mxu0 0
    %4516 = vmatpush1.bf16.msra.mxu0 %v4495
    %4517 = vmatprep.subr.bf16.mxu0 0
    %4518 = vmatpush1.bf16.msra.mxu0 %v4496
    %4519 = vmatprep.subr.bf16.mxu0 0
    %4520 = vmatpush1.bf16.msra.mxu0 %v4497
    %4521 = vmatprep.subr.bf16.mxu0 0
    %4522 = vmatpush1.bf16.msra.mxu0 %v4498
    %4523 = vmatprep.subr.bf16.mxu0 0
    %4524 = vmatpush1.bf16.msra.mxu0 0
    %4525 = vmatprep.subr.bf16.mxu0 0
    %4526 = vmatpush1.bf16.msra.mxu0 0
    %4527 = vmatprep.subr.bf16.mxu0 0
    %4528 = vmatpush1.bf16.msra.mxu0 0
    %4529 = vmatprep.subr.bf16.mxu0 0
    %4530 = vmatpush1.bf16.msra.mxu0 0
    %4531 = vmatprep.subr.bf16.mxu0 0
    %4532 = vmatpush1.bf16.msra.mxu0 0
    %4533 = vmatprep.subr.bf16.mxu0 0
    %4534 = vmatpush1.bf16.msra.mxu0 0
    %4535 = vmatprep.subr.bf16.mxu0 0
    %4536 = vmatpush1.bf16.msra.mxu0 0
    %4537 = vmatprep.subr.bf16.mxu0 0
    %4538 = vmatpush1.bf16.msra.mxu0 0
    %4539 = vmatprep.mubr.bf16.mxu0 0
    %4540 = vmatmul.mubr.bf16.gmra.mrb[0].mxu0 %v4439
    %v4541 = vpop.f32.mrb[0].mxu0
    %v4542 = vadd.f32 0.0, %v4541
    %v4543 = vpop.f32.mrb[0].mxu0
    %v4544 = vpop.f32.mrb[0].mxu0
    %v4545 = vadd.f32 0.0, %v4544
    %v4546 = vpop.f32.mrb[0].mxu0
    %4547 = vmatprep.mubr.bf16.mxu0 0
    %4548 = vmatmul.mubr.bf16.gmra.mrb[0].mxu0 %v4456
    %v4549 = vpop.f32.mrb[0].mxu0
    %v4550 = vadd.f32 0.0, %v4549
    %v4551 = vpop.f32.mrb[0].mxu0
    %v4552 = vpop.f32.mrb[0].mxu0
    %v4553 = vadd.f32 0.0, %v4552
    %v4554 = vpop.f32.mrb[0].mxu0
    %4555 = vdwg.mxu0
    %v4556 = vadd.f32 %v4290, %v4542
    %v4557 = vadd.f32 %v4291, %v4545
    %v4558 = vadd.f32 %v4292, %v4550
    %v4559 = vadd.f32 %v4293, %v4553
    %vm4560 = vcmask 261120
    %v4562 = vsel %vm4560, 1.0, 0
    %4564 = vmatprep.subr.mxu0 0.0
    %4565 = vmatpush1.msra.mxu0 %v4556
    %4566 = vmatprep.subr.mxu0 0.0
    %4567 = vmatpush1.msra.mxu0 %v4557
    %4568 = vmatprep.subr.mxu0 0.0
    %4569 = vmatpush1.msra.mxu0 %v4558
    %4570 = vmatprep.subr.mxu0 0.0
    %4571 = vmatpush1.msra.mxu0 %v4559
    %4572 = vmatprep.subr.mxu0 0.0
    %4573 = vmatpush1.msra.mxu0 0.0
    %4574 = vmatprep.subr.mxu0 0.0
    %4575 = vmatpush1.msra.mxu0 0.0
    %4576 = vmatprep.subr.mxu0 0.0
    %4577 = vmatpush1.msra.mxu0 0.0
    %4578 = vmatprep.subr.mxu0 0.0
    %4579 = vmatpush1.msra.mxu0 0.0
    %4580 = vmatprep.subr.mxu0 0.0
    %4581 = vmatpush1.msra.mxu0 0.0
    %4582 = vmatprep.subr.mxu0 0.0
    %4583 = vmatpush1.msra.mxu0 0.0
    %4584 = vmatprep.subr.mxu0 0.0
    %4585 = vmatpush1.msra.mxu0 0.0
    %4586 = vmatprep.subr.mxu0 0.0
    %4587 = vmatpush1.msra.mxu0 0.0
    %4588 = vmatprep.subr.mxu0 0.0
    %4589 = vmatpush1.msra.mxu0 0.0
    %4590 = vmatprep.subr.mxu0 0.0
    %4591 = vmatpush1.msra.mxu0 0.0
    %4592 = vmatprep.subr.mxu0 0.0
    %4593 = vmatpush1.msra.mxu0 0.0
    %4594 = vmatprep.subr.mxu0 0.0
    %4595 = vmatpush1.msra.mxu0 0.0
    %4596 = vmatprep.subr.mxu0 0.0
    %4597 = vmatpush1.msra.mxu0 0.0
    %4598 = vmatprep.subr.mxu0 0.0
    %4599 = vmatpush1.msra.mxu0 0.0
    %4600 = vmatprep.subr.mxu0 0.0
    %4601 = vmatpush1.msra.mxu0 0.0
    %4602 = vmatprep.subr.mxu0 0.0
    %4603 = vmatpush1.msra.mxu0 0.0
    %4604 = vmatprep.subr.mxu0 0.0
    %4605 = vmatpush1.msra.mxu0 0.0
    %4606 = vmatprep.subr.mxu0 0.0
    %4607 = vmatpush1.msra.mxu0 0.0
    %4608 = vmatprep.subr.mxu0 0.0
    %4609 = vmatpush1.msra.mxu0 0.0
    %4610 = vmatprep.subr.mxu0 0.0
    %4611 = vmatpush1.msra.mxu0 0.0
    %4612 = vmatprep.subr.mxu0 0.0
    %4613 = vmatpush1.msra.mxu0 0.0
    %4614 = vmatprep.subr.mxu0 0.0
    %4615 = vmatpush1.msra.mxu0 0.0
    %4616 = vmatprep.subr.mxu0 0.0
    %4617 = vmatpush1.msra.mxu0 0.0
    %4618 = vmatprep.subr.mxu0 0.0
    %4619 = vmatpush1.msra.mxu0 0.0
    %4620 = vmatprep.subr.mxu0 0.0
    %4621 = vmatpush1.msra.mxu0 0.0
    %4622 = vmatprep.subr.mxu0 0.0
    %4623 = vmatpush1.msra.mxu0 0.0
    %4624 = vmatprep.subr.mxu0 0.0
    %4625 = vmatpush1.msra.mxu0 0.0
    %4626 = vmatprep.subr.mxu0 0.0
    %4627 = vmatpush1.msra.mxu0 0.0
    %4628 = vmatprep.mubr.f32.mxu0 0.0
    %4629 = vmatmul.mubr.f32.gmra.mrb[0].mxu0 %v4562
    %v4630 = vpop.f32.mrb[0].mxu0
    %v4631 = vadd.f32 0.0, %v4630
    %v4632 = vpop.f32.mrb[0].mxu0
    %4633 = vdwg.mxu0
    %v4634 = vmul.f32 %v4556, %v4556
    %v4635 = vmul.f32 %v4557, %v4557
    %v4636 = vmul.f32 %v4558, %v4558
    %v4637 = vmul.f32 %v4559, %v4559
    %4638 = vmatprep.subr.mxu0 0.0
    %4639 = vmatpush1.msra.mxu0 %v4634
    %4640 = vmatprep.subr.mxu0 0.0
    %4641 = vmatpush1.msra.mxu0 %v4635
    %4642 = vmatprep.subr.mxu0 0.0
    %4643 = vmatpush1.msra.mxu0 %v4636
    %4644 = vmatprep.subr.mxu0 0.0
    %4645 = vmatpush1.msra.mxu0 %v4637
    %4646 = vmatprep.subr.mxu0 0.0
    %4647 = vmatpush1.msra.mxu0 0.0
    %4648 = vmatprep.subr.mxu0 0.0
    %4649 = vmatpush1.msra.mxu0 0.0
    %4650 = vmatprep.subr.mxu0 0.0
    %4651 = vmatpush1.msra.mxu0 0.0
    %4652 = vmatprep.subr.mxu0 0.0
    %4653 = vmatpush1.msra.mxu0 0.0
    %4654 = vmatprep.subr.mxu0 0.0
    %4655 = vmatpush1.msra.mxu0 0.0
    %4656 = vmatprep.subr.mxu0 0.0
    %4657 = vmatpush1.msra.mxu0 0.0
    %4658 = vmatprep.subr.mxu0 0.0
    %4659 = vmatpush1.msra.mxu0 0.0
    %4660 = vmatprep.subr.mxu0 0.0
    %4661 = vmatpush1.msra.mxu0 0.0
    %4662 = vmatprep.subr.mxu0 0.0
    %4663 = vmatpush1.msra.mxu0 0.0
    %4664 = vmatprep.subr.mxu0 0.0
    %4665 = vmatpush1.msra.mxu0 0.0
    %4666 = vmatprep.subr.mxu0 0.0
    %4667 = vmatpush1.msra.mxu0 0.0
    %4668 = vmatprep.subr.mxu0 0.0
    %4669 = vmatpush1.msra.mxu0 0.0
    %4670 = vmatprep.subr.mxu0 0.0
    %4671 = vmatpush1.msra.mxu0 0.0
    %4672 = vmatprep.subr.mxu0 0.0
    %4673 = vmatpush1.msra.mxu0 0.0
    %4674 = vmatprep.subr.mxu0 0.0
    %4675 = vmatpush1.msra.mxu0 0.0
    %4676 = vmatprep.subr.mxu0 0.0
    %4677 = vmatpush1.msra.mxu0 0.0
    %4678 = vmatprep.subr.mxu0 0.0
    %4679 = vmatpush1.msra.mxu0 0.0
    %4680 = vmatprep.subr.mxu0 0.0
    %4681 = vmatpush1.msra.mxu0 0.0
    %4682 = vmatprep.subr.mxu0 0.0
    %4683 = vmatpush1.msra.mxu0 0.0
    %4684 = vmatprep.subr.mxu0 0.0
    %4685 = vmatpush1.msra.mxu0 0.0
    %4686 = vmatprep.subr.mxu0 0.0
    %4687 = vmatpush1.msra.mxu0 0.0
    %4688 = vmatprep.subr.mxu0 0.0
    %4689 = vmatpush1.msra.mxu0 0.0
    %4690 = vmatprep.subr.mxu0 0.0
    %4691 = vmatpush1.msra.mxu0 0.0
    %4692 = vmatprep.subr.mxu0 0.0
    %4693 = vmatpush1.msra.mxu0 0.0
    %4694 = vmatprep.subr.mxu0 0.0
    %4695 = vmatpush1.msra.mxu0 0.0
    %4696 = vmatprep.subr.mxu0 0.0
    %4697 = vmatpush1.msra.mxu0 0.0
    %4698 = vmatprep.subr.mxu0 0.0
    %4699 = vmatpush1.msra.mxu0 0.0
    %4700 = vmatprep.subr.mxu0 0.0
    %4701 = vmatpush1.msra.mxu0 0.0
    %4702 = vmatprep.mubr.f32.mxu0 0.0
    %4703 = vmatmul.mubr.f32.gmra.mrb[0].mxu0 %v4562
    %v4704 = vpop.f32.mrb[0].mxu0
    %v4705 = vadd.f32 0.0, %v4704
    %v4706 = vpop.f32.mrb[0].mxu0
    %4707 = vdwg.mxu0
    %v4708 = vmul.f32 %v4631, 0.03125
    %v4709 = vmul.f32 %v4705, 0.03125
    %v4710 = vmul.f32 %v4708, %v4708
    %v4711 = vsub.f32 %v4709, %v4710
    %v4712 = vld [vmem:[%s5] sm:$0x1]
    %v4713 = vlaneseq
    %v4714 = vshrl.u32 %v4713, 7
    %v4715 = vsub.s32 0, %v4714
    %v4716 = vrot.slane %v4708, %v4715
    %v4717 = vsub.f32 %v4556, %v4716
    %v4718 = vsub.f32 %v4557, %v4716
    %v4719 = vsub.f32 %v4558, %v4716
    %v4720 = vsub.f32 %v4559, %v4716
    %v4721 = vadd.f32 %v4711, 1e-05
    %v4722 = vrsqrt.pop %v4721
    %v4723 = vlaneseq
    %v4724 = vshrl.u32 %v4723, 7
    %v4725 = vsub.s32 0, %v4724
    %v4726 = vrot.slane %v4722, %v4725
    %v4727 = vmul.f32 %v4717, %v4726
    %v4728 = vmul.f32 %v4718, %v4726
    %v4729 = vmul.f32 %v4719, %v4726
    %v4730 = vmul.f32 %v4720, %v4726
    %v4732 = vlaneseq
    %v4733 = vshrl.u32 %v4732, 7
    %v4734 = vsub.s32 0, %v4733
    %v4735 = vrot.slane %v4712, %v4734
    %v4737 = vmul.f32 %v4735, %v4727
    %v4738 = vmul.f32 %v4735, %v4728
    %v4739 = vmul.f32 %v4735, %v4729
    %v4740 = vmul.f32 %v4735, %v4730
    %v4741 = vld [vmem:[%s6] sm:$0x1]
    %v4743 = vlaneseq
    %v4744 = vshrl.u32 %v4743, 7
    %v4745 = vsub.s32 0, %v4744
    %v4746 = vrot.slane %v4741, %v4745
    %v4748 = vadd.f32 %v4737, %v4746
    %v4749 = vadd.f32 %v4738, %v4746
    %v4750 = vadd.f32 %v4739, %v4746
    %v4751 = vadd.f32 %v4740, %v4746
    %v4752 = vmax.f32 %v4748, 0.0
    %v4753 = vmax.f32 %v4749, 0.0
    %v4754 = vmax.f32 %v4750, 0.0
    %v4755 = vmax.f32 %v4751, 0.0
    %v4760 = vcombine.high %v4752, %v4752
    %v4761 = vcombine.high %v4753, %v4753
    %v4762 = vcombine.high %v4754, %v4754
    %v4763 = vcombine.high %v4755, %v4755
    %v4768 = vpack.c.bf16 %v4752, %v4752
    %v4769 = vpack.c.bf16 %v4760, %v4760
    %v4770 = vpack.c.bf16 %v4753, %v4753
    %v4771 = vpack.c.bf16 %v4761, %v4761
    %v4772 = vpack.c.bf16 %v4754, %v4754
    %v4773 = vpack.c.bf16 %v4762, %v4762
    %v4774 = vpack.c.bf16 %v4755, %v4755
    %v4775 = vpack.c.bf16 %v4763, %v4763
    %v4784 = vunpack.c.l.b16 %v4768
    %v4785 = vunpack.c.l.b16 %v4769
    %v4786 = vunpack.c.l.b16 %v4770
    %v4787 = vunpack.c.l.b16 %v4771
    %v4788 = vunpack.c.l.b16 %v4772
    %v4789 = vunpack.c.l.b16 %v4773
    %v4790 = vunpack.c.l.b16 %v4774
    %v4791 = vunpack.c.l.b16 %v4775
    %v4792 = vpack.c.b16 %v4784, %v4784
    %v4793 = vpack.c.b16 %v4785, %v4785
    %v4794 = vpack.c.b16 %v4786, %v4786
    %v4795 = vpack.c.b16 %v4787, %v4787
    %v4796 = vpack.c.b16 %v4788, %v4788
    %v4797 = vpack.c.b16 %v4789, %v4789
    %v4798 = vpack.c.b16 %v4790, %v4790
    %v4799 = vpack.c.b16 %v4791, %v4791
    %v4801 = vshrl.u32 %v4792, 16
    %v4803 = vrot.slane %v4801, 7
    %v4804 = vshll.u32 %v4792, 16
    %v4806 = vor.u32 %v4803, %v4804
    %v4808 = vshrl.u32 %v4793, 16
    %v4810 = vrot.slane %v4808, 7
    %v4811 = vshll.u32 %v4793, 16
    %v4813 = vor.u32 %v4810, %v4811
    %v4815 = vshrl.u32 %v4794, 16
    %v4817 = vrot.slane %v4815, 7
    %v4818 = vshll.u32 %v4794, 16
    %v4820 = vor.u32 %v4817, %v4818
    %v4822 = vshrl.u32 %v4795, 16
    %v4824 = vrot.slane %v4822, 7
    %v4825 = vshll.u32 %v4795, 16
    %v4827 = vor.u32 %v4824, %v4825
    %v4829 = vshrl.u32 %v4796, 16
    %v4831 = vrot.slane %v4829, 7
    %v4832 = vshll.u32 %v4796, 16
    %v4834 = vor.u32 %v4831, %v4832
    %v4836 = vshrl.u32 %v4797, 16
    %v4838 = vrot.slane %v4836, 7
    %v4839 = vshll.u32 %v4797, 16
    %v4841 = vor.u32 %v4838, %v4839
    %v4843 = vshrl.u32 %v4798, 16
    %v4845 = vrot.slane %v4843, 7
    %v4846 = vshll.u32 %v4798, 16
    %v4848 = vor.u32 %v4845, %v4846
    %v4850 = vshrl.u32 %v4799, 16
    %v4852 = vrot.slane %v4850, 7
    %v4853 = vshll.u32 %v4799, 16
    %v4855 = vor.u32 %v4852, %v4853
    %v4864 = vld [vmem:[%s2180] sm:$0x7]
    %v4865 = vsel %vm2183, %v4806, %v4864
    %4866 = vst [vmem:[%s2180] sm:$0x7] %v4865
    %v4867 = vld [vmem:[%s2180 + $0x4] sm:$0x7]
    %v4868 = vsel %vm2183, %v4813, %v4867
    %4869 = vst [vmem:[%s2180 + $0x4] sm:$0x7] %v4868
    %v4870 = vld [vmem:[%s2180 + $0x8] sm:$0x7]
    %v4871 = vsel %vm2183, %v4820, %v4870
    %4872 = vst [vmem:[%s2180 + $0x8] sm:$0x7] %v4871
    %v4873 = vld [vmem:[%s2180 + $0xc] sm:$0x7]
    %v4874 = vsel %vm2183, %v4827, %v4873
    %4875 = vst [vmem:[%s2180 + $0xc] sm:$0x7] %v4874
    %v4876 = vld [vmem:[%s2180 + $0x18] sm:$0x7]
    %v4877 = vsel %vm2183, %v4834, %v4876
    %4878 = vst [vmem:[%s2180 + $0x18] sm:$0x7] %v4877
    %v4879 = vld [vmem:[%s2180 + $0x1c] sm:$0x7]
    %v4880 = vsel %vm2183, %v4841, %v4879
    %4881 = vst [vmem:[%s2180 + $0x1c] sm:$0x7] %v4880
    %v4882 = vld [vmem:[%s2180 + $0x20] sm:$0x7]
    %v4883 = vsel %vm2183, %v4848, %v4882
    %4884 = vst [vmem:[%s2180 + $0x20] sm:$0x7] %v4883
    %v4885 = vld [vmem:[%s2180 + $0x24] sm:$0x7]
    %v4886 = vsel %vm2183, %v4855, %v4885
    %4887 = vst [vmem:[%s2180 + $0x24] sm:$0x7] %v4886
    %v4888 = vld [vmem:[#allocation2] sm:$0x3]
    %v4889 = vld [vmem:[#allocation2 + $0x4] sm:$0x3]
    %v4890 = vld [vmem:[#allocation2 + $0x8] sm:$0x3]
    %v4891 = vld [vmem:[#allocation2 + $0xc] sm:$0x3]
    %v4892 = vld [vmem:[#allocation2 + $0x18] sm:$0x3]
    %v4893 = vld [vmem:[#allocation2 + $0x1c] sm:$0x3]
    %v4894 = vld [vmem:[#allocation2 + $0x20] sm:$0x3]
    %v4895 = vld [vmem:[#allocation2 + $0x24] sm:$0x3]
    %v4896 = vld [vmem:[%s7] sm:$0xf]
    %v4897 = vld [vmem:[%s7 + $0x4] sm:$0xf]
    %v4898 = vld [vmem:[%s7 + $0x8] sm:$0xf]
    %v4899 = vld [vmem:[%s7 + $0xc] sm:$0xf]
    %v4900 = vld [vmem:[%s7 + $0x10] sm:$0xf]
    %v4901 = vld [vmem:[%s7 + $0x14] sm:$0xf]
    %v4902 = vld [vmem:[%s7 + $0x18] sm:$0xf]
    %v4903 = vld [vmem:[%s7 + $0x1c] sm:$0xf]
    %v4904 = vld [vmem:[%s7 + $0x20] sm:$0xf]
    %v4905 = vld [vmem:[%s7 + $0x24] sm:$0xf]
    %v4906 = vld [vmem:[%s7 + $0x28] sm:$0xf]
    %v4907 = vld [vmem:[%s7 + $0x2c] sm:$0xf]
    %v4908 = vld [vmem:[%s7 + $0x30] sm:$0xf]
    %v4909 = vld [vmem:[%s7 + $0x34] sm:$0xf]
    %v4910 = vld [vmem:[%s7 + $0x38] sm:$0xf]
    %v4911 = vld [vmem:[%s7 + $0x3c] sm:$0xf]
    %v4912 = vld [vmem:[#allocation2] sm:$0x7]
    %v4913 = vld [vmem:[#allocation2 + $0x4] sm:$0x7]
    %v4914 = vld [vmem:[#allocation2 + $0x8] sm:$0x7]
    %v4915 = vld [vmem:[#allocation2 + $0xc] sm:$0x7]
    %v4916 = vld [vmem:[#allocation2 + $0x18] sm:$0x7]
    %v4917 = vld [vmem:[#allocation2 + $0x1c] sm:$0x7]
    %v4918 = vld [vmem:[#allocation2 + $0x20] sm:$0x7]
    %v4919 = vld [vmem:[#allocation2 + $0x24] sm:$0x7]
    %v4929 = vunpack.c.l.s4 1983009808
    %v4930 = vunpack.c.0.s8 %v4929
    %v4931 = vlaneseq
    %v4932 = vshrl.u32 %v4931, 7
    %v4933 = vsub.s32 %v4930, %v4932
    %v4934 = vrot.slane %v4912, %v4933
    %v4935 = vcombine.high %v4934, %v4934
    %v4937 = vunpack.c.l.s4 1983009808
    %v4938 = vunpack.c.0.s8 %v4937
    %v4939 = vlaneseq
    %v4940 = vshrl.u32 %v4939, 7
    %v4941 = vsub.s32 %v4938, %v4940
    %v4942 = vrot.slane %v4913, %v4941
    %v4943 = vcombine.high %v4942, %v4942
    %v4945 = vunpack.c.l.s4 1983009808
    %v4946 = vunpack.c.0.s8 %v4945
    %v4947 = vlaneseq
    %v4948 = vshrl.u32 %v4947, 7
    %v4949 = vsub.s32 %v4946, %v4948
    %v4950 = vrot.slane %v4914, %v4949
    %v4951 = vcombine.high %v4950, %v4950
    %v4953 = vunpack.c.l.s4 1983009808
    %v4954 = vunpack.c.0.s8 %v4953
    %v4955 = vlaneseq
    %v4956 = vshrl.u32 %v4955, 7
    %v4957 = vsub.s32 %v4954, %v4956
    %v4958 = vrot.slane %v4915, %v4957
    %v4959 = vcombine.high %v4958, %v4958
    %v4961 = vunpack.c.l.s4 1983009808
    %v4962 = vunpack.c.0.s8 %v4961
    %v4963 = vlaneseq
    %v4964 = vshrl.u32 %v4963, 7
    %v4965 = vsub.s32 %v4962, %v4964
    %v4966 = vrot.slane %v4916, %v4965
    %v4967 = vcombine.high %v4966, %v4966
    %v4969 = vunpack.c.l.s4 1983009808
    %v4970 = vunpack.c.0.s8 %v4969
    %v4971 = vlaneseq
    %v4972 = vshrl.u32 %v4971, 7
    %v4973 = vsub.s32 %v4970, %v4972
    %v4974 = vrot.slane %v4917, %v4973
    %v4975 = vcombine.high %v4974, %v4974
    %v4977 = vunpack.c.l.s4 1983009808
    %v4978 = vunpack.c.0.s8 %v4977
    %v4979 = vlaneseq
    %v4980 = vshrl.u32 %v4979, 7
    %v4981 = vsub.s32 %v4978, %v4980
    %v4982 = vrot.slane %v4918, %v4981
    %v4983 = vcombine.high %v4982, %v4982
    %v4985 = vunpack.c.l.s4 1983009808
    %v4986 = vunpack.c.0.s8 %v4985
    %v4987 = vlaneseq
    %v4988 = vshrl.u32 %v4987, 7
    %v4989 = vsub.s32 %v4986, %v4988
    %v4990 = vrot.slane %v4919, %v4989
    %v4991 = vcombine.high %v4990, %v4990
    %v4993 = vshrl.u32 %v4934, 16
    %v4995 = vrot.slane %v4993, 6
    %v4996 = vshll.u32 %v4934, 16
    %v4998 = vrot.slane %v4996, 7
    %v4999 = vor.u32 %v4995, %v4998
    %v5000 = vrot.slane %v4999, 2
    %v5002 = vshll.u32 %v4935, 16
    %v5004 = vrot.slane %v5002, 7
    %v5005 = vsel %vm2318, %v5000, %v5004
    %v5007 = vshrl.u32 %v4942, 16
    %v5009 = vrot.slane %v5007, 6
    %v5010 = vshll.u32 %v4942, 16
    %v5012 = vrot.slane %v5010, 7
    %v5013 = vor.u32 %v5009, %v5012
    %v5014 = vrot.slane %v5013, 2
    %v5016 = vshll.u32 %v4943, 16
    %v5018 = vrot.slane %v5016, 7
    %v5019 = vsel %vm2318, %v5014, %v5018
    %v5021 = vshrl.u32 %v4950, 16
    %v5023 = vrot.slane %v5021, 6
    %v5024 = vshll.u32 %v4950, 16
    %v5026 = vrot.slane %v5024, 7
    %v5027 = vor.u32 %v5023, %v5026
    %v5028 = vrot.slane %v5027, 2
    %v5030 = vshll.u32 %v4951, 16
    %v5032 = vrot.slane %v5030, 7
    %v5033 = vsel %vm2318, %v5028, %v5032
    %v5035 = vshrl.u32 %v4958, 16
    %v5037 = vrot.slane %v5035, 6
    %v5038 = vshll.u32 %v4958, 16
    %v5040 = vrot.slane %v5038, 7
    %v5041 = vor.u32 %v5037, %v5040
    %v5042 = vrot.slane %v5041, 2
    %v5044 = vshll.u32 %v4959, 16
    %v5046 = vrot.slane %v5044, 7
    %v5047 = vsel %vm2318, %v5042, %v5046
    %v5049 = vshrl.u32 %v4966, 16
    %v5051 = vrot.slane %v5049, 6
    %v5052 = vshll.u32 %v4966, 16
    %v5054 = vrot.slane %v5052, 7
    %v5055 = vor.u32 %v5051, %v5054
    %v5056 = vrot.slane %v5055, 2
    %v5058 = vshll.u32 %v4967, 16
    %v5060 = vrot.slane %v5058, 7
    %v5061 = vsel %vm2318, %v5056, %v5060
    %v5063 = vshrl.u32 %v4974, 16
    %v5065 = vrot.slane %v5063, 6
    %v5066 = vshll.u32 %v4974, 16
    %v5068 = vrot.slane %v5066, 7
    %v5069 = vor.u32 %v5065, %v5068
    %v5070 = vrot.slane %v5069, 2
    %v5072 = vshll.u32 %v4975, 16
    %v5074 = vrot.slane %v5072, 7
    %v5075 = vsel %vm2318, %v5070, %v5074
    %v5077 = vshrl.u32 %v4982, 16
    %v5079 = vrot.slane %v5077, 6
    %v5080 = vshll.u32 %v4982, 16
    %v5082 = vrot.slane %v5080, 7
    %v5083 = vor.u32 %v5079, %v5082
    %v5084 = vrot.slane %v5083, 2
    %v5086 = vshll.u32 %v4983, 16
    %v5088 = vrot.slane %v5086, 7
    %v5089 = vsel %vm2318, %v5084, %v5088
    %v5091 = vshrl.u32 %v4990, 16
    %v5093 = vrot.slane %v5091, 6
    %v5094 = vshll.u32 %v4990, 16
    %v5096 = vrot.slane %v5094, 7
    %v5097 = vor.u32 %v5093, %v5096
    %v5098 = vrot.slane %v5097, 2
    %v5100 = vshll.u32 %v4991, 16
    %v5102 = vrot.slane %v5100, 7
    %v5103 = vsel %vm2318, %v5098, %v5102
    %s5104 = scalar_lea.vmem %s7, 64
    %v5105 = vld [vmem:[%s5104] sm:$0xf]
    %v5106 = vld [vmem:[%s5104 + $0x4] sm:$0xf]
    %v5107 = vld [vmem:[%s5104 + $0x8] sm:$0xf]
    %v5108 = vld [vmem:[%s5104 + $0xc] sm:$0xf]
    %v5109 = vld [vmem:[%s5104 + $0x10] sm:$0xf]
    %v5110 = vld [vmem:[%s5104 + $0x14] sm:$0xf]
    %v5111 = vld [vmem:[%s5104 + $0x18] sm:$0xf]
    %v5112 = vld [vmem:[%s5104 + $0x1c] sm:$0xf]
    %v5113 = vld [vmem:[%s5104 + $0x20] sm:$0xf]
    %v5114 = vld [vmem:[%s5104 + $0x24] sm:$0xf]
    %v5115 = vld [vmem:[%s5104 + $0x28] sm:$0xf]
    %v5116 = vld [vmem:[%s5104 + $0x2c] sm:$0xf]
    %v5117 = vld [vmem:[%s5104 + $0x30] sm:$0xf]
    %v5118 = vld [vmem:[%s5104 + $0x34] sm:$0xf]
    %v5119 = vld [vmem:[%s5104 + $0x38] sm:$0xf]
    %v5120 = vld [vmem:[%s5104 + $0x3c] sm:$0xf]
    %v5121 = vcombine.low %v5005, %v5019
    %v5122 = vcombine.low %v5033, %v5047
    %v5124 = vunpack.c.l.s4 1983009808
    %v5125 = vunpack.c.0.s8 %v5124
    %v5126 = vlaneseq
    %v5127 = vshrl.u32 %v5126, 7
    %v5128 = vsub.s32 %v5125, %v5127
    %v5129 = vrot.slane %v5121, %v5128
    %v5131 = vunpack.c.l.s4 1983009808
    %v5132 = vunpack.c.0.s8 %v5131
    %v5133 = vlaneseq
    %v5134 = vshrl.u32 %v5133, 7
    %v5135 = vsub.s32 %v5132, %v5134
    %v5136 = vrot.slane %v5122, %v5135
    %v5137 = vcombine.low %v5129, %v5136
    %v5138 = vcombine.low %v5061, %v5075
    %v5139 = vcombine.low %v5089, %v5103
    %v5141 = vunpack.c.l.s4 1983009808
    %v5142 = vunpack.c.0.s8 %v5141
    %v5143 = vlaneseq
    %v5144 = vshrl.u32 %v5143, 7
    %v5145 = vsub.s32 %v5142, %v5144
    %v5146 = vrot.slane %v5138, %v5145
    %v5148 = vunpack.c.l.s4 1983009808
    %v5149 = vunpack.c.0.s8 %v5148
    %v5150 = vlaneseq
    %v5151 = vshrl.u32 %v5150, 7
    %v5152 = vsub.s32 %v5149, %v5151
    %v5153 = vrot.slane %v5139, %v5152
    %v5154 = vcombine.low %v5146, %v5153
    %v5173 = vunpack.c.l.b16 %v5105
    %v5174 = vunpack.c.l.b16 %v5106
    %v5175 = vunpack.c.l.b16 %v5107
    %v5176 = vunpack.c.l.b16 %v5108
    %v5177 = vunpack.c.l.b16 %v5109
    %v5178 = vunpack.c.l.b16 %v5110
    %v5179 = vunpack.c.l.b16 %v5111
    %v5180 = vunpack.c.l.b16 %v5112
    %v5181 = vunpack.c.l.b16 %v5113
    %v5182 = vunpack.c.l.b16 %v5114
    %v5183 = vunpack.c.l.b16 %v5115
    %v5184 = vunpack.c.l.b16 %v5116
    %v5185 = vunpack.c.l.b16 %v5117
    %v5186 = vunpack.c.l.b16 %v5118
    %v5187 = vunpack.c.l.b16 %v5119
    %v5188 = vunpack.c.l.b16 %v5120
    %v5189 = vpack.c.b16 %v5174, %v5173
    %v5190 = vpack.c.b16 %v5176, %v5175
    %v5191 = vpack.c.b16 %v5178, %v5177
    %v5192 = vpack.c.b16 %v5180, %v5179
    %v5193 = vpack.c.b16 %v5182, %v5181
    %v5194 = vpack.c.b16 %v5184, %v5183
    %v5195 = vpack.c.b16 %v5186, %v5185
    %v5196 = vpack.c.b16 %v5188, %v5187
    %5205 = vmatprep.subr.bf16.mxu0 0
    %5206 = vmatpush1.bf16.msra.mxu0 %v5189
    %5207 = vmatprep.subr.bf16.mxu0 0
    %5208 = vmatpush1.bf16.msra.mxu0 %v5190
    %5209 = vmatprep.subr.bf16.mxu0 0
    %5210 = vmatpush1.bf16.msra.mxu0 %v5191
    %5211 = vmatprep.subr.bf16.mxu0 0
    %5212 = vmatpush1.bf16.msra.mxu0 %v5192
    %5213 = vmatprep.subr.bf16.mxu0 0
    %5214 = vmatpush1.bf16.msra.mxu0 %v5193
    %5215 = vmatprep.subr.bf16.mxu0 0
    %5216 = vmatpush1.bf16.msra.mxu0 %v5194
    %5217 = vmatprep.subr.bf16.mxu0 0
    %5218 = vmatpush1.bf16.msra.mxu0 %v5195
    %5219 = vmatprep.subr.bf16.mxu0 0
    %5220 = vmatpush1.bf16.msra.mxu0 %v5196
    %5221 = vmatprep.subr.bf16.mxu0 0
    %5222 = vmatpush1.bf16.msra.mxu0 0
    %5223 = vmatprep.subr.bf16.mxu0 0
    %5224 = vmatpush1.bf16.msra.mxu0 0
    %5225 = vmatprep.subr.bf16.mxu0 0
    %5226 = vmatpush1.bf16.msra.mxu0 0
    %5227 = vmatprep.subr.bf16.mxu0 0
    %5228 = vmatpush1.bf16.msra.mxu0 0
    %5229 = vmatprep.subr.bf16.mxu0 0
    %5230 = vmatpush1.bf16.msra.mxu0 0
    %5231 = vmatprep.subr.bf16.mxu0 0
    %5232 = vmatpush1.bf16.msra.mxu0 0
    %5233 = vmatprep.subr.bf16.mxu0 0
    %5234 = vmatpush1.bf16.msra.mxu0 0
    %5235 = vmatprep.subr.bf16.mxu0 0
    %5236 = vmatpush1.bf16.msra.mxu0 0
    %5237 = vmatprep.mubr.bf16.mxu0 0
    %5238 = vmatmul.mubr.bf16.gmra.mrb[0].mxu0 %v5137
    %v5239 = vpop.f32.mrb[0].mxu0
    %v5240 = vadd.f32 0.0, %v5239
    %v5241 = vpop.f32.mrb[0].mxu0
    %v5242 = vpop.f32.mrb[0].mxu0
    %v5243 = vadd.f32 0.0, %v5242
    %v5244 = vpop.f32.mrb[0].mxu0
    %5245 = vmatprep.mubr.bf16.mxu0 0
    %5246 = vmatmul.mubr.bf16.gmra.mrb[0].mxu0 %v5154
    %v5247 = vpop.f32.mrb[0].mxu0
    %v5248 = vadd.f32 0.0, %v5247
    %v5249 = vpop.f32.mrb[0].mxu0
    %v5250 = vpop.f32.mrb[0].mxu0
    %v5251 = vadd.f32 0.0, %v5250
    %v5252 = vpop.f32.mrb[0].mxu0
    %5253 = vdwg.mxu0
    %v5262 = vcombine.low %v4888, %v4889
    %v5263 = vcombine.low %v4890, %v4891
    %v5265 = vunpack.c.l.s4 1983009808
    %v5266 = vunpack.c.0.s8 %v5265
    %v5267 = vlaneseq
    %v5268 = vshrl.u32 %v5267, 7
    %v5269 = vsub.s32 %v5266, %v5268
    %v5270 = vrot.slane %v5262, %v5269
    %v5272 = vunpack.c.l.s4 1983009808
    %v5273 = vunpack.c.0.s8 %v5272
    %v5274 = vlaneseq
    %v5275 = vshrl.u32 %v5274, 7
    %v5276 = vsub.s32 %v5273, %v5275
    %v5277 = vrot.slane %v5263, %v5276
    %v5278 = vcombine.low %v5270, %v5277
    %v5279 = vcombine.low %v4892, %v4893
    %v5280 = vcombine.low %v4894, %v4895
    %v5282 = vunpack.c.l.s4 1983009808
    %v5283 = vunpack.c.0.s8 %v5282
    %v5284 = vlaneseq
    %v5285 = vshrl.u32 %v5284, 7
    %v5286 = vsub.s32 %v5283, %v5285
    %v5287 = vrot.slane %v5279, %v5286
    %v5289 = vunpack.c.l.s4 1983009808
    %v5290 = vunpack.c.0.s8 %v5289
    %v5291 = vlaneseq
    %v5292 = vshrl.u32 %v5291, 7
    %v5293 = vsub.s32 %v5290, %v5292
    %v5294 = vrot.slane %v5280, %v5293
    %v5295 = vcombine.low %v5287, %v5294
    %v5314 = vunpack.c.l.b16 %v4896
    %v5315 = vunpack.c.l.b16 %v4897
    %v5316 = vunpack.c.l.b16 %v4898
    %v5317 = vunpack.c.l.b16 %v4899
    %v5318 = vunpack.c.l.b16 %v4900
    %v5319 = vunpack.c.l.b16 %v4901
    %v5320 = vunpack.c.l.b16 %v4902
    %v5321 = vunpack.c.l.b16 %v4903
    %v5322 = vunpack.c.l.b16 %v4904
    %v5323 = vunpack.c.l.b16 %v4905
    %v5324 = vunpack.c.l.b16 %v4906
    %v5325 = vunpack.c.l.b16 %v4907
    %v5326 = vunpack.c.l.b16 %v4908
    %v5327 = vunpack.c.l.b16 %v4909
    %v5328 = vunpack.c.l.b16 %v4910
    %v5329 = vunpack.c.l.b16 %v4911
    %v5330 = vpack.c.b16 %v5315, %v5314
    %v5331 = vpack.c.b16 %v5317, %v5316
    %v5332 = vpack.c.b16 %v5319, %v5318
    %v5333 = vpack.c.b16 %v5321, %v5320
    %v5334 = vpack.c.b16 %v5323, %v5322
    %v5335 = vpack.c.b16 %v5325, %v5324
    %v5336 = vpack.c.b16 %v5327, %v5326
    %v5337 = vpack.c.b16 %v5329, %v5328
    %5346 = vmatprep.subr.bf16.mxu0 0
    %5347 = vmatpush1.bf16.msra.mxu0 %v5330
    %5348 = vmatprep.subr.bf16.mxu0 0
    %5349 = vmatpush1.bf16.msra.mxu0 %v5331
    %5350 = vmatprep.subr.bf16.mxu0 0
    %5351 = vmatpush1.bf16.msra.mxu0 %v5332
    %5352 = vmatprep.subr.bf16.mxu0 0
    %5353 = vmatpush1.bf16.msra.mxu0 %v5333
    %5354 = vmatprep.subr.bf16.mxu0 0
    %5355 = vmatpush1.bf16.msra.mxu0 %v5334
    %5356 = vmatprep.subr.bf16.mxu0 0
    %5357 = vmatpush1.bf16.msra.mxu0 %v5335
    %5358 = vmatprep.subr.bf16.mxu0 0
    %5359 = vmatpush1.bf16.msra.mxu0 %v5336
    %5360 = vmatprep.subr.bf16.mxu0 0
    %5361 = vmatpush1.bf16.msra.mxu0 %v5337
    %5362 = vmatprep.subr.bf16.mxu0 0
    %5363 = vmatpush1.bf16.msra.mxu0 0
    %5364 = vmatprep.subr.bf16.mxu0 0
    %5365 = vmatpush1.bf16.msra.mxu0 0
    %5366 = vmatprep.subr.bf16.mxu0 0
    %5367 = vmatpush1.bf16.msra.mxu0 0
    %5368 = vmatprep.subr.bf16.mxu0 0
    %5369 = vmatpush1.bf16.msra.mxu0 0
    %5370 = vmatprep.subr.bf16.mxu0 0
    %5371 = vmatpush1.bf16.msra.mxu0 0
    %5372 = vmatprep.subr.bf16.mxu0 0
    %5373 = vmatpush1.bf16.msra.mxu0 0
    %5374 = vmatprep.subr.bf16.mxu0 0
    %5375 = vmatpush1.bf16.msra.mxu0 0
    %5376 = vmatprep.subr.bf16.mxu0 0
    %5377 = vmatpush1.bf16.msra.mxu0 0
    %5378 = vmatprep.mubr.bf16.mxu0 0
    %5379 = vmatmul.mubr.bf16.gmra.mrb[0].mxu0 %v5278
    %v5380 = vpop.f32.mrb[0].mxu0
    %v5381 = vadd.f32 %v5240, %v5380
    %v5382 = vpop.f32.mrb[0].mxu0
    %v5383 = vpop.f32.mrb[0].mxu0
    %v5384 = vadd.f32 %v5243, %v5383
    %v5385 = vpop.f32.mrb[0].mxu0
    %5386 = vmatprep.mubr.bf16.mxu0 0
    %5387 = vmatmul.mubr.bf16.gmra.mrb[0].mxu0 %v5295
    %v5388 = vpop.f32.mrb[0].mxu0
    %v5389 = vadd.f32 %v5248, %v5388
    %v5390 = vpop.f32.mrb[0].mxu0
    %v5391 = vpop.f32.mrb[0].mxu0
    %v5392 = vadd.f32 %v5251, %v5391
    %v5393 = vpop.f32.mrb[0].mxu0
    %5394 = vdwg.mxu0
    %v5395 = vld [vmem:[#allocation2] sm:$0x6]
    %v5396 = vld [vmem:[#allocation2 + $0x4] sm:$0x6]
    %v5397 = vld [vmem:[#allocation2 + $0x8] sm:$0x6]
    %v5398 = vld [vmem:[#allocation2 + $0xc] sm:$0x6]
    %v5399 = vld [vmem:[#allocation2 + $0x18] sm:$0x6]
    %v5400 = vld [vmem:[#allocation2 + $0x1c] sm:$0x6]
    %v5401 = vld [vmem:[#allocation2 + $0x20] sm:$0x6]
    %v5402 = vld [vmem:[#allocation2 + $0x24] sm:$0x6]
    %v5412 = vunpack.c.l.s4 1983009808
    %v5413 = vunpack.c.0.s8 %v5412
    %v5414 = vlaneseq
    %v5415 = vshrl.u32 %v5414, 7
    %v5416 = vsub.s32 %v5413, %v5415
    %v5417 = vrot.slane %v5395, %v5416
    %v5418 = vcombine.high %v5417, %v5417
    %v5420 = vunpack.c.l.s4 1983009808
    %v5421 = vunpack.c.0.s8 %v5420
    %v5422 = vlaneseq
    %v5423 = vshrl.u32 %v5422, 7
    %v5424 = vsub.s32 %v5421, %v5423
    %v5425 = vrot.slane %v5396, %v5424
    %v5426 = vcombine.high %v5425, %v5425
    %v5428 = vunpack.c.l.s4 1983009808
    %v5429 = vunpack.c.0.s8 %v5428
    %v5430 = vlaneseq
    %v5431 = vshrl.u32 %v5430, 7
    %v5432 = vsub.s32 %v5429, %v5431
    %v5433 = vrot.slane %v5397, %v5432
    %v5434 = vcombine.high %v5433, %v5433
    %v5436 = vunpack.c.l.s4 1983009808
    %v5437 = vunpack.c.0.s8 %v5436
    %v5438 = vlaneseq
    %v5439 = vshrl.u32 %v5438, 7
    %v5440 = vsub.s32 %v5437, %v5439
    %v5441 = vrot.slane %v5398, %v5440
    %v5442 = vcombine.high %v5441, %v5441
    %v5444 = vunpack.c.l.s4 1983009808
    %v5445 = vunpack.c.0.s8 %v5444
    %v5446 = vlaneseq
    %v5447 = vshrl.u32 %v5446, 7
    %v5448 = vsub.s32 %v5445, %v5447
    %v5449 = vrot.slane %v5399, %v5448
    %v5450 = vcombine.high %v5449, %v5449
    %v5452 = vunpack.c.l.s4 1983009808
    %v5453 = vunpack.c.0.s8 %v5452
    %v5454 = vlaneseq
    %v5455 = vshrl.u32 %v5454, 7
    %v5456 = vsub.s32 %v5453, %v5455
    %v5457 = vrot.slane %v5400, %v5456
    %v5458 = vcombine.high %v5457, %v5457
    %v5460 = vunpack.c.l.s4 1983009808
    %v5461 = vunpack.c.0.s8 %v5460
    %v5462 = vlaneseq
    %v5463 = vshrl.u32 %v5462, 7
    %v5464 = vsub.s32 %v5461, %v5463
    %v5465 = vrot.slane %v5401, %v5464
    %v5466 = vcombine.high %v5465, %v5465
    %v5468 = vunpack.c.l.s4 1983009808
    %v5469 = vunpack.c.0.s8 %v5468
    %v5470 = vlaneseq
    %v5471 = vshrl.u32 %v5470, 7
    %v5472 = vsub.s32 %v5469, %v5471
    %v5473 = vrot.slane %v5402, %v5472
    %v5474 = vcombine.high %v5473, %v5473
    %v5475 = vrot.slane %v5417, 7
    %v5476 = vrot.slane %v5475, 2
    %v5477 = vrot.slane %v5418, 7
    %v5478 = vsel %vm2808, %v5476, %v5477
    %v5479 = vrot.slane %v5425, 7
    %v5480 = vrot.slane %v5479, 2
    %v5481 = vrot.slane %v5426, 7
    %v5482 = vsel %vm2808, %v5480, %v5481
    %v5483 = vrot.slane %v5433, 7
    %v5484 = vrot.slane %v5483, 2
    %v5485 = vrot.slane %v5434, 7
    %v5486 = vsel %vm2808, %v5484, %v5485
    %v5487 = vrot.slane %v5441, 7
    %v5488 = vrot.slane %v5487, 2
    %v5489 = vrot.slane %v5442, 7
    %v5490 = vsel %vm2808, %v5488, %v5489
    %v5491 = vrot.slane %v5449, 7
    %v5492 = vrot.slane %v5491, 2
    %v5493 = vrot.slane %v5450, 7
    %v5494 = vsel %vm2808, %v5492, %v5493
    %v5495 = vrot.slane %v5457, 7
    %v5496 = vrot.slane %v5495, 2
    %v5497 = vrot.slane %v5458, 7
    %v5498 = vsel %vm2808, %v5496, %v5497
    %v5499 = vrot.slane %v5465, 7
    %v5500 = vrot.slane %v5499, 2
    %v5501 = vrot.slane %v5466, 7
    %v5502 = vsel %vm2808, %v5500, %v5501
    %v5503 = vrot.slane %v5473, 7
    %v5504 = vrot.slane %v5503, 2
    %v5505 = vrot.slane %v5474, 7
    %v5506 = vsel %vm2808, %v5504, %v5505
    %s5507 = scalar_lea.vmem %s7, 128
    %v5508 = vld [vmem:[%s5507] sm:$0xf]
    %v5509 = vld [vmem:[%s5507 + $0x4] sm:$0xf]
    %v5510 = vld [vmem:[%s5507 + $0x8] sm:$0xf]
    %v5511 = vld [vmem:[%s5507 + $0xc] sm:$0xf]
    %v5512 = vld [vmem:[%s5507 + $0x10] sm:$0xf]
    %v5513 = vld [vmem:[%s5507 + $0x14] sm:$0xf]
    %v5514 = vld [vmem:[%s5507 + $0x18] sm:$0xf]
    %v5515 = vld [vmem:[%s5507 + $0x1c] sm:$0xf]
    %v5516 = vld [vmem:[%s5507 + $0x20] sm:$0xf]
    %v5517 = vld [vmem:[%s5507 + $0x24] sm:$0xf]
    %v5518 = vld [vmem:[%s5507 + $0x28] sm:$0xf]
    %v5519 = vld [vmem:[%s5507 + $0x2c] sm:$0xf]
    %v5520 = vld [vmem:[%s5507 + $0x30] sm:$0xf]
    %v5521 = vld [vmem:[%s5507 + $0x34] sm:$0xf]
    %v5522 = vld [vmem:[%s5507 + $0x38] sm:$0xf]
    %v5523 = vld [vmem:[%s5507 + $0x3c] sm:$0xf]
    %v5524 = vcombine.low %v5478, %v5482
    %v5525 = vcombine.low %v5486, %v5490
    %v5527 = vunpack.c.l.s4 1983009808
    %v5528 = vunpack.c.0.s8 %v5527
    %v5529 = vlaneseq
    %v5530 = vshrl.u32 %v5529, 7
    %v5531 = vsub.s32 %v5528, %v5530
    %v5532 = vrot.slane %v5524, %v5531
    %v5534 = vunpack.c.l.s4 1983009808
    %v5535 = vunpack.c.0.s8 %v5534
    %v5536 = vlaneseq
    %v5537 = vshrl.u32 %v5536, 7
    %v5538 = vsub.s32 %v5535, %v5537
    %v5539 = vrot.slane %v5525, %v5538
    %v5540 = vcombine.low %v5532, %v5539
    %v5541 = vcombine.low %v5494, %v5498
    %v5542 = vcombine.low %v5502, %v5506
    %v5544 = vunpack.c.l.s4 1983009808
    %v5545 = vunpack.c.0.s8 %v5544
    %v5546 = vlaneseq
    %v5547 = vshrl.u32 %v5546, 7
    %v5548 = vsub.s32 %v5545, %v5547
    %v5549 = vrot.slane %v5541, %v5548
    %v5551 = vunpack.c.l.s4 1983009808
    %v5552 = vunpack.c.0.s8 %v5551
    %v5553 = vlaneseq
    %v5554 = vshrl.u32 %v5553, 7
    %v5555 = vsub.s32 %v5552, %v5554
    %v5556 = vrot.slane %v5542, %v5555
    %v5557 = vcombine.low %v5549, %v5556
    %v5576 = vunpack.c.l.b16 %v5508
    %v5577 = vunpack.c.l.b16 %v5509
    %v5578 = vunpack.c.l.b16 %v5510
    %v5579 = vunpack.c.l.b16 %v5511
    %v5580 = vunpack.c.l.b16 %v5512
    %v5581 = vunpack.c.l.b16 %v5513
    %v5582 = vunpack.c.l.b16 %v5514
    %v5583 = vunpack.c.l.b16 %v5515
    %v5584 = vunpack.c.l.b16 %v5516
    %v5585 = vunpack.c.l.b16 %v5517
    %v5586 = vunpack.c.l.b16 %v5518
    %v5587 = vunpack.c.l.b16 %v5519
    %v5588 = vunpack.c.l.b16 %v5520
    %v5589 = vunpack.c.l.b16 %v5521
    %v5590 = vunpack.c.l.b16 %v5522
    %v5591 = vunpack.c.l.b16 %v5523
    %v5592 = vpack.c.b16 %v5577, %v5576
    %v5593 = vpack.c.b16 %v5579, %v5578
    %v5594 = vpack.c.b16 %v5581, %v5580
    %v5595 = vpack.c.b16 %v5583, %v5582
    %v5596 = vpack.c.b16 %v5585, %v5584
    %v5597 = vpack.c.b16 %v5587, %v5586
    %v5598 = vpack.c.b16 %v5589, %v5588
    %v5599 = vpack.c.b16 %v5591, %v5590
    %5608 = vmatprep.subr.bf16.mxu0 0
    %5609 = vmatpush1.bf16.msra.mxu0 %v5592
    %5610 = vmatprep.subr.bf16.mxu0 0
    %5611 = vmatpush1.bf16.msra.mxu0 %v5593
    %5612 = vmatprep.subr.bf16.mxu0 0
    %5613 = vmatpush1.bf16.msra.mxu0 %v5594
    %5614 = vmatprep.subr.bf16.mxu0 0
    %5615 = vmatpush1.bf16.msra.mxu0 %v5595
    %5616 = vmatprep.subr.bf16.mxu0 0
    %5617 = vmatpush1.bf16.msra.mxu0 %v5596
    %5618 = vmatprep.subr.bf16.mxu0 0
    %5619 = vmatpush1.bf16.msra.mxu0 %v5597
    %5620 = vmatprep.subr.bf16.mxu0 0
    %5621 = vmatpush1.bf16.msra.mxu0 %v5598
    %5622 = vmatprep.subr.bf16.mxu0 0
    %5623 = vmatpush1.bf16.msra.mxu0 %v5599
    %5624 = vmatprep.subr.bf16.mxu0 0
    %5625 = vmatpush1.bf16.msra.mxu0 0
    %5626 = vmatprep.subr.bf16.mxu0 0
    %5627 = vmatpush1.bf16.msra.mxu0 0
    %5628 = vmatprep.subr.bf16.mxu0 0
    %5629 = vmatpush1.bf16.msra.mxu0 0
    %5630 = vmatprep.subr.bf16.mxu0 0
    %5631 = vmatpush1.bf16.msra.mxu0 0
    %5632 = vmatprep.subr.bf16.mxu0 0
    %5633 = vmatpush1.bf16.msra.mxu0 0
    %5634 = vmatprep.subr.bf16.mxu0 0
    %5635 = vmatpush1.bf16.msra.mxu0 0
    %5636 = vmatprep.subr.bf16.mxu0 0
    %5637 = vmatpush1.bf16.msra.mxu0 0
    %5638 = vmatprep.subr.bf16.mxu0 0
    %5639 = vmatpush1.bf16.msra.mxu0 0
    %5640 = vmatprep.mubr.bf16.mxu0 0
    %5641 = vmatmul.mubr.bf16.gmra.mrb[0].mxu0 %v5540
    %v5642 = vpop.f32.mrb[0].mxu0
    %v5643 = vadd.f32 0.0, %v5642
    %v5644 = vpop.f32.mrb[0].mxu0
    %v5645 = vpop.f32.mrb[0].mxu0
    %v5646 = vadd.f32 0.0, %v5645
    %v5647 = vpop.f32.mrb[0].mxu0
    %5648 = vmatprep.mubr.bf16.mxu0 0
    %5649 = vmatmul.mubr.bf16.gmra.mrb[0].mxu0 %v5557
    %v5650 = vpop.f32.mrb[0].mxu0
    %v5651 = vadd.f32 0.0, %v5650
    %v5652 = vpop.f32.mrb[0].mxu0
    %v5653 = vpop.f32.mrb[0].mxu0
    %v5654 = vadd.f32 0.0, %v5653
    %v5655 = vpop.f32.mrb[0].mxu0
    %5656 = vdwg.mxu0
    %v5657 = vadd.f32 %v5381, %v5643
    %v5658 = vadd.f32 %v5384, %v5646
    %v5659 = vadd.f32 %v5389, %v5651
    %v5660 = vadd.f32 %v5392, %v5654
    %v5661 = vld [vmem:[%s2180] sm:$0x3]
    %v5662 = vld [vmem:[%s2180 + $0x4] sm:$0x3]
    %v5663 = vld [vmem:[%s2180 + $0x8] sm:$0x3]
    %v5664 = vld [vmem:[%s2180 + $0xc] sm:$0x3]
    %v5665 = vld [vmem:[%s2180 + $0x18] sm:$0x3]
    %v5666 = vld [vmem:[%s2180 + $0x1c] sm:$0x3]
    %v5667 = vld [vmem:[%s2180 + $0x20] sm:$0x3]
    %v5668 = vld [vmem:[%s2180 + $0x24] sm:$0x3]
    %s5669 = scalar_lea.vmem %s7, 192
    %v5670 = vld [vmem:[%s5669] sm:$0xf]
    %v5671 = vld [vmem:[%s5669 + $0x4] sm:$0xf]
    %v5672 = vld [vmem:[%s5669 + $0x8] sm:$0xf]
    %v5673 = vld [vmem:[%s5669 + $0xc] sm:$0xf]
    %v5674 = vld [vmem:[%s5669 + $0x10] sm:$0xf]
    %v5675 = vld [vmem:[%s5669 + $0x14] sm:$0xf]
    %v5676 = vld [vmem:[%s5669 + $0x18] sm:$0xf]
    %v5677 = vld [vmem:[%s5669 + $0x1c] sm:$0xf]
    %v5678 = vld [vmem:[%s5669 + $0x20] sm:$0xf]
    %v5679 = vld [vmem:[%s5669 + $0x24] sm:$0xf]
    %v5680 = vld [vmem:[%s5669 + $0x28] sm:$0xf]
    %v5681 = vld [vmem:[%s5669 + $0x2c] sm:$0xf]
    %v5682 = vld [vmem:[%s5669 + $0x30] sm:$0xf]
    %v5683 = vld [vmem:[%s5669 + $0x34] sm:$0xf]
    %v5684 = vld [vmem:[%s5669 + $0x38] sm:$0xf]
    %v5685 = vld [vmem:[%s5669 + $0x3c] sm:$0xf]
    %v5694 = vcombine.low %v5661, %v5662
    %v5695 = vcombine.low %v5663, %v5664
    %v5697 = vunpack.c.l.s4 1983009808
    %v5698 = vunpack.c.0.s8 %v5697
    %v5699 = vlaneseq
    %v5700 = vshrl.u32 %v5699, 7
    %v5701 = vsub.s32 %v5698, %v5700
    %v5702 = vrot.slane %v5694, %v5701
    %v5704 = vunpack.c.l.s4 1983009808
    %v5705 = vunpack.c.0.s8 %v5704
    %v5706 = vlaneseq
    %v5707 = vshrl.u32 %v5706, 7
    %v5708 = vsub.s32 %v5705, %v5707
    %v5709 = vrot.slane %v5695, %v5708
    %v5710 = vcombine.low %v5702, %v5709
    %v5711 = vcombine.low %v5665, %v5666
    %v5712 = vcombine.low %v5667, %v5668
    %v5714 = vunpack.c.l.s4 1983009808
    %v5715 = vunpack.c.0.s8 %v5714
    %v5716 = vlaneseq
    %v5717 = vshrl.u32 %v5716, 7
    %v5718 = vsub.s32 %v5715, %v5717
    %v5719 = vrot.slane %v5711, %v5718
    %v5721 = vunpack.c.l.s4 1983009808
    %v5722 = vunpack.c.0.s8 %v5721
    %v5723 = vlaneseq
    %v5724 = vshrl.u32 %v5723, 7
    %v5725 = vsub.s32 %v5722, %v5724
    %v5726 = vrot.slane %v5712, %v5725
    %v5727 = vcombine.low %v5719, %v5726
    %v5746 = vunpack.c.l.b16 %v5670
    %v5747 = vunpack.c.l.b16 %v5671
    %v5748 = vunpack.c.l.b16 %v5672
    %v5749 = vunpack.c.l.b16 %v5673
    %v5750 = vunpack.c.l.b16 %v5674
    %v5751 = vunpack.c.l.b16 %v5675
    %v5752 = vunpack.c.l.b16 %v5676
    %v5753 = vunpack.c.l.b16 %v5677
    %v5754 = vunpack.c.l.b16 %v5678
    %v5755 = vunpack.c.l.b16 %v5679
    %v5756 = vunpack.c.l.b16 %v5680
    %v5757 = vunpack.c.l.b16 %v5681
    %v5758 = vunpack.c.l.b16 %v5682
    %v5759 = vunpack.c.l.b16 %v5683
    %v5760 = vunpack.c.l.b16 %v5684
    %v5761 = vunpack.c.l.b16 %v5685
    %v5762 = vpack.c.b16 %v5747, %v5746
    %v5763 = vpack.c.b16 %v5749, %v5748
    %v5764 = vpack.c.b16 %v5751, %v5750
    %v5765 = vpack.c.b16 %v5753, %v5752
    %v5766 = vpack.c.b16 %v5755, %v5754
    %v5767 = vpack.c.b16 %v5757, %v5756
    %v5768 = vpack.c.b16 %v5759, %v5758
    %v5769 = vpack.c.b16 %v5761, %v5760
    %5778 = vmatprep.subr.bf16.mxu0 0
    %5779 = vmatpush1.bf16.msra.mxu0 %v5762
    %5780 = vmatprep.subr.bf16.mxu0 0
    %5781 = vmatpush1.bf16.msra.mxu0 %v5763
    %5782 = vmatprep.subr.bf16.mxu0 0
    %5783 = vmatpush1.bf16.msra.mxu0 %v5764
    %5784 = vmatprep.subr.bf16.mxu0 0
    %5785 = vmatpush1.bf16.msra.mxu0 %v5765
    %5786 = vmatprep.subr.bf16.mxu0 0
    %5787 = vmatpush1.bf16.msra.mxu0 %v5766
    %5788 = vmatprep.subr.bf16.mxu0 0
    %5789 = vmatpush1.bf16.msra.mxu0 %v5767
    %5790 = vmatprep.subr.bf16.mxu0 0
    %5791 = vmatpush1.bf16.msra.mxu0 %v5768
    %5792 = vmatprep.subr.bf16.mxu0 0
    %5793 = vmatpush1.bf16.msra.mxu0 %v5769
    %5794 = vmatprep.subr.bf16.mxu0 0
    %5795 = vmatpush1.bf16.msra.mxu0 0
    %5796 = vmatprep.subr.bf16.mxu0 0
    %5797 = vmatpush1.bf16.msra.mxu0 0
    %5798 = vmatprep.subr.bf16.mxu0 0
    %5799 = vmatpush1.bf16.msra.mxu0 0
    %5800 = vmatprep.subr.bf16.mxu0 0
    %5801 = vmatpush1.bf16.msra.mxu0 0
    %5802 = vmatprep.subr.bf16.mxu0 0
    %5803 = vmatpush1.bf16.msra.mxu0 0
    %5804 = vmatprep.subr.bf16.mxu0 0
    %5805 = vmatpush1.bf16.msra.mxu0 0
    %5806 = vmatprep.subr.bf16.mxu0 0
    %5807 = vmatpush1.bf16.msra.mxu0 0
    %5808 = vmatprep.subr.bf16.mxu0 0
    %5809 = vmatpush1.bf16.msra.mxu0 0
    %5810 = vmatprep.mubr.bf16.mxu0 0
    %5811 = vmatmul.mubr.bf16.gmra.mrb[0].mxu0 %v5710
    %v5812 = vpop.f32.mrb[0].mxu0
    %v5813 = vadd.f32 0.0, %v5812
    %v5814 = vpop.f32.mrb[0].mxu0
    %v5815 = vpop.f32.mrb[0].mxu0
    %v5816 = vadd.f32 0.0, %v5815
    %v5817 = vpop.f32.mrb[0].mxu0
    %5818 = vmatprep.mubr.bf16.mxu0 0
    %5819 = vmatmul.mubr.bf16.gmra.mrb[0].mxu0 %v5727
    %v5820 = vpop.f32.mrb[0].mxu0
    %v5821 = vadd.f32 0.0, %v5820
    %v5822 = vpop.f32.mrb[0].mxu0
    %v5823 = vpop.f32.mrb[0].mxu0
    %v5824 = vadd.f32 0.0, %v5823
    %v5825 = vpop.f32.mrb[0].mxu0
    %5826 = vdwg.mxu0
    %v5827 = vadd.f32 %v5657, %v5813
    %v5828 = vadd.f32 %v5658, %v5816
    %v5829 = vadd.f32 %v5659, %v5821
    %v5830 = vadd.f32 %v5660, %v5824
    %v5831 = vld [vmem:[%s2180] sm:$0x7]
    %v5832 = vld [vmem:[%s2180 + $0x4] sm:$0x7]
    %v5833 = vld [vmem:[%s2180 + $0x8] sm:$0x7]
    %v5834 = vld [vmem:[%s2180 + $0xc] sm:$0x7]
    %v5835 = vld [vmem:[%s2180 + $0x18] sm:$0x7]
    %v5836 = vld [vmem:[%s2180 + $0x1c] sm:$0x7]
    %v5837 = vld [vmem:[%s2180 + $0x20] sm:$0x7]
    %v5838 = vld [vmem:[%s2180 + $0x24] sm:$0x7]
    %v5848 = vunpack.c.l.s4 1983009808
    %v5849 = vunpack.c.0.s8 %v5848
    %v5850 = vlaneseq
    %v5851 = vshrl.u32 %v5850, 7
    %v5852 = vsub.s32 %v5849, %v5851
    %v5853 = vrot.slane %v5831, %v5852
    %v5854 = vcombine.high %v5853, %v5853
    %v5856 = vunpack.c.l.s4 1983009808
    %v5857 = vunpack.c.0.s8 %v5856
    %v5858 = vlaneseq
    %v5859 = vshrl.u32 %v5858, 7
    %v5860 = vsub.s32 %v5857, %v5859
    %v5861 = vrot.slane %v5832, %v5860
    %v5862 = vcombine.high %v5861, %v5861
    %v5864 = vunpack.c.l.s4 1983009808
    %v5865 = vunpack.c.0.s8 %v5864
    %v5866 = vlaneseq
    %v5867 = vshrl.u32 %v5866, 7
    %v5868 = vsub.s32 %v5865, %v5867
    %v5869 = vrot.slane %v5833, %v5868
    %v5870 = vcombine.high %v5869, %v5869
    %v5872 = vunpack.c.l.s4 1983009808
    %v5873 = vunpack.c.0.s8 %v5872
    %v5874 = vlaneseq
    %v5875 = vshrl.u32 %v5874, 7
    %v5876 = vsub.s32 %v5873, %v5875
    %v5877 = vrot.slane %v5834, %v5876
    %v5878 = vcombine.high %v5877, %v5877
    %v5880 = vunpack.c.l.s4 1983009808
    %v5881 = vunpack.c.0.s8 %v5880
    %v5882 = vlaneseq
    %v5883 = vshrl.u32 %v5882, 7
    %v5884 = vsub.s32 %v5881, %v5883
    %v5885 = vrot.slane %v5835, %v5884
    %v5886 = vcombine.high %v5885, %v5885
    %v5888 = vunpack.c.l.s4 1983009808
    %v5889 = vunpack.c.0.s8 %v5888
    %v5890 = vlaneseq
    %v5891 = vshrl.u32 %v5890, 7
    %v5892 = vsub.s32 %v5889, %v5891
    %v5893 = vrot.slane %v5836, %v5892
    %v5894 = vcombine.high %v5893, %v5893
    %v5896 = vunpack.c.l.s4 1983009808
    %v5897 = vunpack.c.0.s8 %v5896
    %v5898 = vlaneseq
    %v5899 = vshrl.u32 %v5898, 7
    %v5900 = vsub.s32 %v5897, %v5899
    %v5901 = vrot.slane %v5837, %v5900
    %v5902 = vcombine.high %v5901, %v5901
    %v5904 = vunpack.c.l.s4 1983009808
    %v5905 = vunpack.c.0.s8 %v5904
    %v5906 = vlaneseq
    %v5907 = vshrl.u32 %v5906, 7
    %v5908 = vsub.s32 %v5905, %v5907
    %v5909 = vrot.slane %v5838, %v5908
    %v5910 = vcombine.high %v5909, %v5909
    %v5912 = vshrl.u32 %v5853, 16
    %v5914 = vrot.slane %v5912, 6
    %v5915 = vshll.u32 %v5853, 16
    %v5917 = vrot.slane %v5915, 7
    %v5918 = vor.u32 %v5914, %v5917
    %v5919 = vrot.slane %v5918, 2
    %v5921 = vshll.u32 %v5854, 16
    %v5923 = vrot.slane %v5921, 7
    %v5924 = vsel %vm2318, %v5919, %v5923
    %v5926 = vshrl.u32 %v5861, 16
    %v5928 = vrot.slane %v5926, 6
    %v5929 = vshll.u32 %v5861, 16
    %v5931 = vrot.slane %v5929, 7
    %v5932 = vor.u32 %v5928, %v5931
    %v5933 = vrot.slane %v5932, 2
    %v5935 = vshll.u32 %v5862, 16
    %v5937 = vrot.slane %v5935, 7
    %v5938 = vsel %vm2318, %v5933, %v5937
    %v5940 = vshrl.u32 %v5869, 16
    %v5942 = vrot.slane %v5940, 6
    %v5943 = vshll.u32 %v5869, 16
    %v5945 = vrot.slane %v5943, 7
    %v5946 = vor.u32 %v5942, %v5945
    %v5947 = vrot.slane %v5946, 2
    %v5949 = vshll.u32 %v5870, 16
    %v5951 = vrot.slane %v5949, 7
    %v5952 = vsel %vm2318, %v5947, %v5951
    %v5954 = vshrl.u32 %v5877, 16
    %v5956 = vrot.slane %v5954, 6
    %v5957 = vshll.u32 %v5877, 16
    %v5959 = vrot.slane %v5957, 7
    %v5960 = vor.u32 %v5956, %v5959
    %v5961 = vrot.slane %v5960, 2
    %v5963 = vshll.u32 %v5878, 16
    %v5965 = vrot.slane %v5963, 7
    %v5966 = vsel %vm2318, %v5961, %v5965
    %v5968 = vshrl.u32 %v5885, 16
    %v5970 = vrot.slane %v5968, 6
    %v5971 = vshll.u32 %v5885, 16
    %v5973 = vrot.slane %v5971, 7
    %v5974 = vor.u32 %v5970, %v5973
    %v5975 = vrot.slane %v5974, 2
    %v5977 = vshll.u32 %v5886, 16
    %v5979 = vrot.slane %v5977, 7
    %v5980 = vsel %vm2318, %v5975, %v5979
    %v5982 = vshrl.u32 %v5893, 16
    %v5984 = vrot.slane %v5982, 6
    %v5985 = vshll.u32 %v5893, 16
    %v5987 = vrot.slane %v5985, 7
    %v5988 = vor.u32 %v5984, %v5987
    %v5989 = vrot.slane %v5988, 2
    %v5991 = vshll.u32 %v5894, 16
    %v5993 = vrot.slane %v5991, 7
    %v5994 = vsel %vm2318, %v5989, %v5993
    %v5996 = vshrl.u32 %v5901, 16
    %v5998 = vrot.slane %v5996, 6
    %v5999 = vshll.u32 %v5901, 16
    %v6001 = vrot.slane %v5999, 7
    %v6002 = vor.u32 %v5998, %v6001
    %v6003 = vrot.slane %v6002, 2
    %v6005 = vshll.u32 %v5902, 16
    %v6007 = vrot.slane %v6005, 7
    %v6008 = vsel %vm2318, %v6003, %v6007
    %v6010 = vshrl.u32 %v5909, 16
    %v6012 = vrot.slane %v6010, 6
    %v6013 = vshll.u32 %v5909, 16
    %v6015 = vrot.slane %v6013, 7
    %v6016 = vor.u32 %v6012, %v6015
    %v6017 = vrot.slane %v6016, 2
    %v6019 = vshll.u32 %v5910, 16
    %v6021 = vrot.slane %v6019, 7
    %v6022 = vsel %vm2318, %v6017, %v6021
    %s6023 = scalar_lea.vmem %s7, 256
    %v6024 = vld [vmem:[%s6023] sm:$0xf]
    %v6025 = vld [vmem:[%s6023 + $0x4] sm:$0xf]
    %v6026 = vld [vmem:[%s6023 + $0x8] sm:$0xf]
    %v6027 = vld [vmem:[%s6023 + $0xc] sm:$0xf]
    %v6028 = vld [vmem:[%s6023 + $0x10] sm:$0xf]
    %v6029 = vld [vmem:[%s6023 + $0x14] sm:$0xf]
    %v6030 = vld [vmem:[%s6023 + $0x18] sm:$0xf]
    %v6031 = vld [vmem:[%s6023 + $0x1c] sm:$0xf]
    %v6032 = vld [vmem:[%s6023 + $0x20] sm:$0xf]
    %v6033 = vld [vmem:[%s6023 + $0x24] sm:$0xf]
    %v6034 = vld [vmem:[%s6023 + $0x28] sm:$0xf]
    %v6035 = vld [vmem:[%s6023 + $0x2c] sm:$0xf]
    %v6036 = vld [vmem:[%s6023 + $0x30] sm:$0xf]
    %v6037 = vld [vmem:[%s6023 + $0x34] sm:$0xf]
    %v6038 = vld [vmem:[%s6023 + $0x38] sm:$0xf]
    %v6039 = vld [vmem:[%s6023 + $0x3c] sm:$0xf]
    %v6040 = vcombine.low %v5924, %v5938
    %v6041 = vcombine.low %v5952, %v5966
    %v6043 = vunpack.c.l.s4 1983009808
    %v6044 = vunpack.c.0.s8 %v6043
    %v6045 = vlaneseq
    %v6046 = vshrl.u32 %v6045, 7
    %v6047 = vsub.s32 %v6044, %v6046
    %v6048 = vrot.slane %v6040, %v6047
    %v6050 = vunpack.c.l.s4 1983009808
    %v6051 = vunpack.c.0.s8 %v6050
    %v6052 = vlaneseq
    %v6053 = vshrl.u32 %v6052, 7
    %v6054 = vsub.s32 %v6051, %v6053
    %v6055 = vrot.slane %v6041, %v6054
    %v6056 = vcombine.low %v6048, %v6055
    %v6057 = vcombine.low %v5980, %v5994
    %v6058 = vcombine.low %v6008, %v6022
    %v6060 = vunpack.c.l.s4 1983009808
    %v6061 = vunpack.c.0.s8 %v6060
    %v6062 = vlaneseq
    %v6063 = vshrl.u32 %v6062, 7
    %v6064 = vsub.s32 %v6061, %v6063
    %v6065 = vrot.slane %v6057, %v6064
    %v6067 = vunpack.c.l.s4 1983009808
    %v6068 = vunpack.c.0.s8 %v6067
    %v6069 = vlaneseq
    %v6070 = vshrl.u32 %v6069, 7
    %v6071 = vsub.s32 %v6068, %v6070
    %v6072 = vrot.slane %v6058, %v6071
    %v6073 = vcombine.low %v6065, %v6072
    %v6092 = vunpack.c.l.b16 %v6024
    %v6093 = vunpack.c.l.b16 %v6025
    %v6094 = vunpack.c.l.b16 %v6026
    %v6095 = vunpack.c.l.b16 %v6027
    %v6096 = vunpack.c.l.b16 %v6028
    %v6097 = vunpack.c.l.b16 %v6029
    %v6098 = vunpack.c.l.b16 %v6030
    %v6099 = vunpack.c.l.b16 %v6031
    %v6100 = vunpack.c.l.b16 %v6032
    %v6101 = vunpack.c.l.b16 %v6033
    %v6102 = vunpack.c.l.b16 %v6034
    %v6103 = vunpack.c.l.b16 %v6035
    %v6104 = vunpack.c.l.b16 %v6036
    %v6105 = vunpack.c.l.b16 %v6037
    %v6106 = vunpack.c.l.b16 %v6038
    %v6107 = vunpack.c.l.b16 %v6039
    %v6108 = vpack.c.b16 %v6093, %v6092
    %v6109 = vpack.c.b16 %v6095, %v6094
    %v6110 = vpack.c.b16 %v6097, %v6096
    %v6111 = vpack.c.b16 %v6099, %v6098
    %v6112 = vpack.c.b16 %v6101, %v6100
    %v6113 = vpack.c.b16 %v6103, %v6102
    %v6114 = vpack.c.b16 %v6105, %v6104
    %v6115 = vpack.c.b16 %v6107, %v6106
    %6124 = vmatprep.subr.bf16.mxu0 0
    %6125 = vmatpush1.bf16.msra.mxu0 %v6108
    %6126 = vmatprep.subr.bf16.mxu0 0
    %6127 = vmatpush1.bf16.msra.mxu0 %v6109
    %6128 = vmatprep.subr.bf16.mxu0 0
    %6129 = vmatpush1.bf16.msra.mxu0 %v6110
    %6130 = vmatprep.subr.bf16.mxu0 0
    %6131 = vmatpush1.bf16.msra.mxu0 %v6111
    %6132 = vmatprep.subr.bf16.mxu0 0
    %6133 = vmatpush1.bf16.msra.mxu0 %v6112
    %6134 = vmatprep.subr.bf16.mxu0 0
    %6135 = vmatpush1.bf16.msra.mxu0 %v6113
    %6136 = vmatprep.subr.bf16.mxu0 0
    %6137 = vmatpush1.bf16.msra.mxu0 %v6114
    %6138 = vmatprep.subr.bf16.mxu0 0
    %6139 = vmatpush1.bf16.msra.mxu0 %v6115
    %6140 = vmatprep.subr.bf16.mxu0 0
    %6141 = vmatpush1.bf16.msra.mxu0 0
    %6142 = vmatprep.subr.bf16.mxu0 0
    %6143 = vmatpush1.bf16.msra.mxu0 0
    %6144 = vmatprep.subr.bf16.mxu0 0
    %6145 = vmatpush1.bf16.msra.mxu0 0
    %6146 = vmatprep.subr.bf16.mxu0 0
    %6147 = vmatpush1.bf16.msra.mxu0 0
    %6148 = vmatprep.subr.bf16.mxu0 0
    %6149 = vmatpush1.bf16.msra.mxu0 0
    %6150 = vmatprep.subr.bf16.mxu0 0
    %6151 = vmatpush1.bf16.msra.mxu0 0
    %6152 = vmatprep.subr.bf16.mxu0 0
    %6153 = vmatpush1.bf16.msra.mxu0 0
    %6154 = vmatprep.subr.bf16.mxu0 0
    %6155 = vmatpush1.bf16.msra.mxu0 0
    %6156 = vmatprep.mubr.bf16.mxu0 0
    %6157 = vmatmul.mubr.bf16.gmra.mrb[0].mxu0 %v6056
    %v6158 = vpop.f32.mrb[0].mxu0
    %v6159 = vadd.f32 0.0, %v6158
    %v6160 = vpop.f32.mrb[0].mxu0
    %v6161 = vpop.f32.mrb[0].mxu0
    %v6162 = vadd.f32 0.0, %v6161
    %v6163 = vpop.f32.mrb[0].mxu0
    %6164 = vmatprep.mubr.bf16.mxu0 0
    %6165 = vmatmul.mubr.bf16.gmra.mrb[0].mxu0 %v6073
    %v6166 = vpop.f32.mrb[0].mxu0
    %v6167 = vadd.f32 0.0, %v6166
    %v6168 = vpop.f32.mrb[0].mxu0
    %v6169 = vpop.f32.mrb[0].mxu0
    %v6170 = vadd.f32 0.0, %v6169
    %v6171 = vpop.f32.mrb[0].mxu0
    %6172 = vdwg.mxu0
    %v6173 = vadd.f32 %v5827, %v6159
    %v6174 = vadd.f32 %v5828, %v6162
    %v6175 = vadd.f32 %v5829, %v6167
    %v6176 = vadd.f32 %v5830, %v6170
    %v6177 = vld [vmem:[%s2180] sm:$0x6]
    %v6178 = vld [vmem:[%s2180 + $0x4] sm:$0x6]
    %v6179 = vld [vmem:[%s2180 + $0x8] sm:$0x6]
    %v6180 = vld [vmem:[%s2180 + $0xc] sm:$0x6]
    %v6181 = vld [vmem:[%s2180 + $0x18] sm:$0x6]
    %v6182 = vld [vmem:[%s2180 + $0x1c] sm:$0x6]
    %v6183 = vld [vmem:[%s2180 + $0x20] sm:$0x6]
    %v6184 = vld [vmem:[%s2180 + $0x24] sm:$0x6]
    %v6194 = vunpack.c.l.s4 1983009808
    %v6195 = vunpack.c.0.s8 %v6194
    %v6196 = vlaneseq
    %v6197 = vshrl.u32 %v6196, 7
    %v6198 = vsub.s32 %v6195, %v6197
    %v6199 = vrot.slane %v6177, %v6198
    %v6200 = vcombine.high %v6199, %v6199
    %v6202 = vunpack.c.l.s4 1983009808
    %v6203 = vunpack.c.0.s8 %v6202
    %v6204 = vlaneseq
    %v6205 = vshrl.u32 %v6204, 7
    %v6206 = vsub.s32 %v6203, %v6205
    %v6207 = vrot.slane %v6178, %v6206
    %v6208 = vcombine.high %v6207, %v6207
    %v6210 = vunpack.c.l.s4 1983009808
    %v6211 = vunpack.c.0.s8 %v6210
    %v6212 = vlaneseq
    %v6213 = vshrl.u32 %v6212, 7
    %v6214 = vsub.s32 %v6211, %v6213
    %v6215 = vrot.slane %v6179, %v6214
    %v6216 = vcombine.high %v6215, %v6215
    %v6218 = vunpack.c.l.s4 1983009808
    %v6219 = vunpack.c.0.s8 %v6218
    %v6220 = vlaneseq
    %v6221 = vshrl.u32 %v6220, 7
    %v6222 = vsub.s32 %v6219, %v6221
    %v6223 = vrot.slane %v6180, %v6222
    %v6224 = vcombine.high %v6223, %v6223
    %v6226 = vunpack.c.l.s4 1983009808
    %v6227 = vunpack.c.0.s8 %v6226
    %v6228 = vlaneseq
    %v6229 = vshrl.u32 %v6228, 7
    %v6230 = vsub.s32 %v6227, %v6229
    %v6231 = vrot.slane %v6181, %v6230
    %v6232 = vcombine.high %v6231, %v6231
    %v6234 = vunpack.c.l.s4 1983009808
    %v6235 = vunpack.c.0.s8 %v6234
    %v6236 = vlaneseq
    %v6237 = vshrl.u32 %v6236, 7
    %v6238 = vsub.s32 %v6235, %v6237
    %v6239 = vrot.slane %v6182, %v6238
    %v6240 = vcombine.high %v6239, %v6239
    %v6242 = vunpack.c.l.s4 1983009808
    %v6243 = vunpack.c.0.s8 %v6242
    %v6244 = vlaneseq
    %v6245 = vshrl.u32 %v6244, 7
    %v6246 = vsub.s32 %v6243, %v6245
    %v6247 = vrot.slane %v6183, %v6246
    %v6248 = vcombine.high %v6247, %v6247
    %v6250 = vunpack.c.l.s4 1983009808
    %v6251 = vunpack.c.0.s8 %v6250
    %v6252 = vlaneseq
    %v6253 = vshrl.u32 %v6252, 7
    %v6254 = vsub.s32 %v6251, %v6253
    %v6255 = vrot.slane %v6184, %v6254
    %v6256 = vcombine.high %v6255, %v6255
    %v6257 = vrot.slane %v6199, 7
    %v6258 = vrot.slane %v6257, 2
    %v6259 = vrot.slane %v6200, 7
    %v6260 = vsel %vm2808, %v6258, %v6259
    %v6261 = vrot.slane %v6207, 7
    %v6262 = vrot.slane %v6261, 2
    %v6263 = vrot.slane %v6208, 7
    %v6264 = vsel %vm2808, %v6262, %v6263
    %v6265 = vrot.slane %v6215, 7
    %v6266 = vrot.slane %v6265, 2
    %v6267 = vrot.slane %v6216, 7
    %v6268 = vsel %vm2808, %v6266, %v6267
    %v6269 = vrot.slane %v6223, 7
    %v6270 = vrot.slane %v6269, 2
    %v6271 = vrot.slane %v6224, 7
    %v6272 = vsel %vm2808, %v6270, %v6271
    %v6273 = vrot.slane %v6231, 7
    %v6274 = vrot.slane %v6273, 2
    %v6275 = vrot.slane %v6232, 7
    %v6276 = vsel %vm2808, %v6274, %v6275
    %v6277 = vrot.slane %v6239, 7
    %v6278 = vrot.slane %v6277, 2
    %v6279 = vrot.slane %v6240, 7
    %v6280 = vsel %vm2808, %v6278, %v6279
    %v6281 = vrot.slane %v6247, 7
    %v6282 = vrot.slane %v6281, 2
    %v6283 = vrot.slane %v6248, 7
    %v6284 = vsel %vm2808, %v6282, %v6283
    %v6285 = vrot.slane %v6255, 7
    %v6286 = vrot.slane %v6285, 2
    %v6287 = vrot.slane %v6256, 7
    %v6288 = vsel %vm2808, %v6286, %v6287
    %s6289 = scalar_lea.vmem %s7, 320
    %v6290 = vld [vmem:[%s6289] sm:$0xf]
    %v6291 = vld [vmem:[%s6289 + $0x4] sm:$0xf]
    %v6292 = vld [vmem:[%s6289 + $0x8] sm:$0xf]
    %v6293 = vld [vmem:[%s6289 + $0xc] sm:$0xf]
    %v6294 = vld [vmem:[%s6289 + $0x10] sm:$0xf]
    %v6295 = vld [vmem:[%s6289 + $0x14] sm:$0xf]
    %v6296 = vld [vmem:[%s6289 + $0x18] sm:$0xf]
    %v6297 = vld [vmem:[%s6289 + $0x1c] sm:$0xf]
    %v6298 = vld [vmem:[%s6289 + $0x20] sm:$0xf]
    %v6299 = vld [vmem:[%s6289 + $0x24] sm:$0xf]
    %v6300 = vld [vmem:[%s6289 + $0x28] sm:$0xf]
    %v6301 = vld [vmem:[%s6289 + $0x2c] sm:$0xf]
    %v6302 = vld [vmem:[%s6289 + $0x30] sm:$0xf]
    %v6303 = vld [vmem:[%s6289 + $0x34] sm:$0xf]
    %v6304 = vld [vmem:[%s6289 + $0x38] sm:$0xf]
    %v6305 = vld [vmem:[%s6289 + $0x3c] sm:$0xf]
    %v6306 = vcombine.low %v6260, %v6264
    %v6307 = vcombine.low %v6268, %v6272
    %v6309 = vunpack.c.l.s4 1983009808
    %v6310 = vunpack.c.0.s8 %v6309
    %v6311 = vlaneseq
    %v6312 = vshrl.u32 %v6311, 7
    %v6313 = vsub.s32 %v6310, %v6312
    %v6314 = vrot.slane %v6306, %v6313
    %v6316 = vunpack.c.l.s4 1983009808
    %v6317 = vunpack.c.0.s8 %v6316
    %v6318 = vlaneseq
    %v6319 = vshrl.u32 %v6318, 7
    %v6320 = vsub.s32 %v6317, %v6319
    %v6321 = vrot.slane %v6307, %v6320
    %v6322 = vcombine.low %v6314, %v6321
    %v6323 = vcombine.low %v6276, %v6280
    %v6324 = vcombine.low %v6284, %v6288
    %v6326 = vunpack.c.l.s4 1983009808
    %v6327 = vunpack.c.0.s8 %v6326
    %v6328 = vlaneseq
    %v6329 = vshrl.u32 %v6328, 7
    %v6330 = vsub.s32 %v6327, %v6329
    %v6331 = vrot.slane %v6323, %v6330
    %v6333 = vunpack.c.l.s4 1983009808
    %v6334 = vunpack.c.0.s8 %v6333
    %v6335 = vlaneseq
    %v6336 = vshrl.u32 %v6335, 7
    %v6337 = vsub.s32 %v6334, %v6336
    %v6338 = vrot.slane %v6324, %v6337
    %v6339 = vcombine.low %v6331, %v6338
    %v6358 = vunpack.c.l.b16 %v6290
    %v6359 = vunpack.c.l.b16 %v6291
    %v6360 = vunpack.c.l.b16 %v6292
    %v6361 = vunpack.c.l.b16 %v6293
    %v6362 = vunpack.c.l.b16 %v6294
    %v6363 = vunpack.c.l.b16 %v6295
    %v6364 = vunpack.c.l.b16 %v6296
    %v6365 = vunpack.c.l.b16 %v6297
    %v6366 = vunpack.c.l.b16 %v6298
    %v6367 = vunpack.c.l.b16 %v6299
    %v6368 = vunpack.c.l.b16 %v6300
    %v6369 = vunpack.c.l.b16 %v6301
    %v6370 = vunpack.c.l.b16 %v6302
    %v6371 = vunpack.c.l.b16 %v6303
    %v6372 = vunpack.c.l.b16 %v6304
    %v6373 = vunpack.c.l.b16 %v6305
    %v6374 = vpack.c.b16 %v6359, %v6358
    %v6375 = vpack.c.b16 %v6361, %v6360
    %v6376 = vpack.c.b16 %v6363, %v6362
    %v6377 = vpack.c.b16 %v6365, %v6364
    %v6378 = vpack.c.b16 %v6367, %v6366
    %v6379 = vpack.c.b16 %v6369, %v6368
    %v6380 = vpack.c.b16 %v6371, %v6370
    %v6381 = vpack.c.b16 %v6373, %v6372
    %6390 = vmatprep.subr.bf16.mxu0 0
    %6391 = vmatpush1.bf16.msra.mxu0 %v6374
    %6392 = vmatprep.subr.bf16.mxu0 0
    %6393 = vmatpush1.bf16.msra.mxu0 %v6375
    %6394 = vmatprep.subr.bf16.mxu0 0
    %6395 = vmatpush1.bf16.msra.mxu0 %v6376
    %6396 = vmatprep.subr.bf16.mxu0 0
    %6397 = vmatpush1.bf16.msra.mxu0 %v6377
    %6398 = vmatprep.subr.bf16.mxu0 0
    %6399 = vmatpush1.bf16.msra.mxu0 %v6378
    %6400 = vmatprep.subr.bf16.mxu0 0
    %6401 = vmatpush1.bf16.msra.mxu0 %v6379
    %6402 = vmatprep.subr.bf16.mxu0 0
    %6403 = vmatpush1.bf16.msra.mxu0 %v6380
    %6404 = vmatprep.subr.bf16.mxu0 0
    %6405 = vmatpush1.bf16.msra.mxu0 %v6381
    %6406 = vmatprep.subr.bf16.mxu0 0
    %6407 = vmatpush1.bf16.msra.mxu0 0
    %6408 = vmatprep.subr.bf16.mxu0 0
    %6409 = vmatpush1.bf16.msra.mxu0 0
    %6410 = vmatprep.subr.bf16.mxu0 0
    %6411 = vmatpush1.bf16.msra.mxu0 0
    %6412 = vmatprep.subr.bf16.mxu0 0
    %6413 = vmatpush1.bf16.msra.mxu0 0
    %6414 = vmatprep.subr.bf16.mxu0 0
    %6415 = vmatpush1.bf16.msra.mxu0 0
    %6416 = vmatprep.subr.bf16.mxu0 0
    %6417 = vmatpush1.bf16.msra.mxu0 0
    %6418 = vmatprep.subr.bf16.mxu0 0
    %6419 = vmatpush1.bf16.msra.mxu0 0
    %6420 = vmatprep.subr.bf16.mxu0 0
    %6421 = vmatpush1.bf16.msra.mxu0 0
    %6422 = vmatprep.mubr.bf16.mxu0 0
    %6423 = vmatmul.mubr.bf16.gmra.mrb[0].mxu0 %v6322
    %v6424 = vpop.f32.mrb[0].mxu0
    %v6425 = vadd.f32 0.0, %v6424
    %v6426 = vpop.f32.mrb[0].mxu0
    %v6427 = vpop.f32.mrb[0].mxu0
    %v6428 = vadd.f32 0.0, %v6427
    %v6429 = vpop.f32.mrb[0].mxu0
    %6430 = vmatprep.mubr.bf16.mxu0 0
    %6431 = vmatmul.mubr.bf16.gmra.mrb[0].mxu0 %v6339
    %v6432 = vpop.f32.mrb[0].mxu0
    %v6433 = vadd.f32 0.0, %v6432
    %v6434 = vpop.f32.mrb[0].mxu0
    %v6435 = vpop.f32.mrb[0].mxu0
    %v6436 = vadd.f32 0.0, %v6435
    %v6437 = vpop.f32.mrb[0].mxu0
    %6438 = vdwg.mxu0
    %v6439 = vadd.f32 %v6173, %v6425
    %v6440 = vadd.f32 %v6174, %v6428
    %v6441 = vadd.f32 %v6175, %v6433
    %v6442 = vadd.f32 %v6176, %v6436
    %v6443 = vld [vmem:[%s3777] sm:$0x3]
    %v6444 = vld [vmem:[%s3777 + $0x4] sm:$0x3]
    %v6445 = vld [vmem:[%s3777 + $0x8] sm:$0x3]
    %v6446 = vld [vmem:[%s3777 + $0xc] sm:$0x3]
    %v6447 = vld [vmem:[%s3777 + $0x18] sm:$0x3]
    %v6448 = vld [vmem:[%s3777 + $0x1c] sm:$0x3]
    %v6449 = vld [vmem:[%s3777 + $0x20] sm:$0x3]
    %v6450 = vld [vmem:[%s3777 + $0x24] sm:$0x3]
    %s6451 = scalar_lea.vmem %s7, 384
    %v6452 = vld [vmem:[%s6451] sm:$0xf]
    %v6453 = vld [vmem:[%s6451 + $0x4] sm:$0xf]
    %v6454 = vld [vmem:[%s6451 + $0x8] sm:$0xf]
    %v6455 = vld [vmem:[%s6451 + $0xc] sm:$0xf]
    %v6456 = vld [vmem:[%s6451 + $0x10] sm:$0xf]
    %v6457 = vld [vmem:[%s6451 + $0x14] sm:$0xf]
    %v6458 = vld [vmem:[%s6451 + $0x18] sm:$0xf]
    %v6459 = vld [vmem:[%s6451 + $0x1c] sm:$0xf]
    %v6460 = vld [vmem:[%s6451 + $0x20] sm:$0xf]
    %v6461 = vld [vmem:[%s6451 + $0x24] sm:$0xf]
    %v6462 = vld [vmem:[%s6451 + $0x28] sm:$0xf]
    %v6463 = vld [vmem:[%s6451 + $0x2c] sm:$0xf]
    %v6464 = vld [vmem:[%s6451 + $0x30] sm:$0xf]
    %v6465 = vld [vmem:[%s6451 + $0x34] sm:$0xf]
    %v6466 = vld [vmem:[%s6451 + $0x38] sm:$0xf]
    %v6467 = vld [vmem:[%s6451 + $0x3c] sm:$0xf]
    %v6476 = vcombine.low %v6443, %v6444
    %v6477 = vcombine.low %v6445, %v6446
    %v6479 = vunpack.c.l.s4 1983009808
    %v6480 = vunpack.c.0.s8 %v6479
    %v6481 = vlaneseq
    %v6482 = vshrl.u32 %v6481, 7
    %v6483 = vsub.s32 %v6480, %v6482
    %v6484 = vrot.slane %v6476, %v6483
    %v6486 = vunpack.c.l.s4 1983009808
    %v6487 = vunpack.c.0.s8 %v6486
    %v6488 = vlaneseq
    %v6489 = vshrl.u32 %v6488, 7
    %v6490 = vsub.s32 %v6487, %v6489
    %v6491 = vrot.slane %v6477, %v6490
    %v6492 = vcombine.low %v6484, %v6491
    %v6493 = vcombine.low %v6447, %v6448
    %v6494 = vcombine.low %v6449, %v6450
    %v6496 = vunpack.c.l.s4 1983009808
    %v6497 = vunpack.c.0.s8 %v6496
    %v6498 = vlaneseq
    %v6499 = vshrl.u32 %v6498, 7
    %v6500 = vsub.s32 %v6497, %v6499
    %v6501 = vrot.slane %v6493, %v6500
    %v6503 = vunpack.c.l.s4 1983009808
    %v6504 = vunpack.c.0.s8 %v6503
    %v6505 = vlaneseq
    %v6506 = vshrl.u32 %v6505, 7
    %v6507 = vsub.s32 %v6504, %v6506
    %v6508 = vrot.slane %v6494, %v6507
    %v6509 = vcombine.low %v6501, %v6508
    %v6528 = vunpack.c.l.b16 %v6452
    %v6529 = vunpack.c.l.b16 %v6453
    %v6530 = vunpack.c.l.b16 %v6454
    %v6531 = vunpack.c.l.b16 %v6455
    %v6532 = vunpack.c.l.b16 %v6456
    %v6533 = vunpack.c.l.b16 %v6457
    %v6534 = vunpack.c.l.b16 %v6458
    %v6535 = vunpack.c.l.b16 %v6459
    %v6536 = vunpack.c.l.b16 %v6460
    %v6537 = vunpack.c.l.b16 %v6461
    %v6538 = vunpack.c.l.b16 %v6462
    %v6539 = vunpack.c.l.b16 %v6463
    %v6540 = vunpack.c.l.b16 %v6464
    %v6541 = vunpack.c.l.b16 %v6465
    %v6542 = vunpack.c.l.b16 %v6466
    %v6543 = vunpack.c.l.b16 %v6467
    %v6544 = vpack.c.b16 %v6529, %v6528
    %v6545 = vpack.c.b16 %v6531, %v6530
    %v6546 = vpack.c.b16 %v6533, %v6532
    %v6547 = vpack.c.b16 %v6535, %v6534
    %v6548 = vpack.c.b16 %v6537, %v6536
    %v6549 = vpack.c.b16 %v6539, %v6538
    %v6550 = vpack.c.b16 %v6541, %v6540
    %v6551 = vpack.c.b16 %v6543, %v6542
    %6560 = vmatprep.subr.bf16.mxu0 0
    %6561 = vmatpush1.bf16.msra.mxu0 %v6544
    %6562 = vmatprep.subr.bf16.mxu0 0
    %6563 = vmatpush1.bf16.msra.mxu0 %v6545
    %6564 = vmatprep.subr.bf16.mxu0 0
    %6565 = vmatpush1.bf16.msra.mxu0 %v6546
    %6566 = vmatprep.subr.bf16.mxu0 0
    %6567 = vmatpush1.bf16.msra.mxu0 %v6547
    %6568 = vmatprep.subr.bf16.mxu0 0
    %6569 = vmatpush1.bf16.msra.mxu0 %v6548
    %6570 = vmatprep.subr.bf16.mxu0 0
    %6571 = vmatpush1.bf16.msra.mxu0 %v6549
    %6572 = vmatprep.subr.bf16.mxu0 0
    %6573 = vmatpush1.bf16.msra.mxu0 %v6550
    %6574 = vmatprep.subr.bf16.mxu0 0
    %6575 = vmatpush1.bf16.msra.mxu0 %v6551
    %6576 = vmatprep.subr.bf16.mxu0 0
    %6577 = vmatpush1.bf16.msra.mxu0 0
    %6578 = vmatprep.subr.bf16.mxu0 0
    %6579 = vmatpush1.bf16.msra.mxu0 0
    %6580 = vmatprep.subr.bf16.mxu0 0
    %6581 = vmatpush1.bf16.msra.mxu0 0
    %6582 = vmatprep.subr.bf16.mxu0 0
    %6583 = vmatpush1.bf16.msra.mxu0 0
    %6584 = vmatprep.subr.bf16.mxu0 0
    %6585 = vmatpush1.bf16.msra.mxu0 0
    %6586 = vmatprep.subr.bf16.mxu0 0
    %6587 = vmatpush1.bf16.msra.mxu0 0
    %6588 = vmatprep.subr.bf16.mxu0 0
    %6589 = vmatpush1.bf16.msra.mxu0 0
    %6590 = vmatprep.subr.bf16.mxu0 0
    %6591 = vmatpush1.bf16.msra.mxu0 0
    %6592 = vmatprep.mubr.bf16.mxu0 0
    %6593 = vmatmul.mubr.bf16.gmra.mrb[0].mxu0 %v6492
    %v6594 = vpop.f32.mrb[0].mxu0
    %v6595 = vadd.f32 0.0, %v6594
    %v6596 = vpop.f32.mrb[0].mxu0
    %v6597 = vpop.f32.mrb[0].mxu0
    %v6598 = vadd.f32 0.0, %v6597
    %v6599 = vpop.f32.mrb[0].mxu0
    %6600 = vmatprep.mubr.bf16.mxu0 0
    %6601 = vmatmul.mubr.bf16.gmra.mrb[0].mxu0 %v6509
    %v6602 = vpop.f32.mrb[0].mxu0
    %v6603 = vadd.f32 0.0, %v6602
    %v6604 = vpop.f32.mrb[0].mxu0
    %v6605 = vpop.f32.mrb[0].mxu0
    %v6606 = vadd.f32 0.0, %v6605
    %v6607 = vpop.f32.mrb[0].mxu0
    %6608 = vdwg.mxu0
    %v6609 = vadd.f32 %v6439, %v6595
    %v6610 = vadd.f32 %v6440, %v6598
    %v6611 = vadd.f32 %v6441, %v6603
    %v6612 = vadd.f32 %v6442, %v6606
    %v6613 = vld [vmem:[%s3777] sm:$0x7]
    %v6614 = vld [vmem:[%s3777 + $0x4] sm:$0x7]
    %v6615 = vld [vmem:[%s3777 + $0x8] sm:$0x7]
    %v6616 = vld [vmem:[%s3777 + $0xc] sm:$0x7]
    %v6617 = vld [vmem:[%s3777 + $0x18] sm:$0x7]
    %v6618 = vld [vmem:[%s3777 + $0x1c] sm:$0x7]
    %v6619 = vld [vmem:[%s3777 + $0x20] sm:$0x7]
    %v6620 = vld [vmem:[%s3777 + $0x24] sm:$0x7]
    %v6630 = vunpack.c.l.s4 1983009808
    %v6631 = vunpack.c.0.s8 %v6630
    %v6632 = vlaneseq
    %v6633 = vshrl.u32 %v6632, 7
    %v6634 = vsub.s32 %v6631, %v6633
    %v6635 = vrot.slane %v6613, %v6634
    %v6636 = vcombine.high %v6635, %v6635
    %v6638 = vunpack.c.l.s4 1983009808
    %v6639 = vunpack.c.0.s8 %v6638
    %v6640 = vlaneseq
    %v6641 = vshrl.u32 %v6640, 7
    %v6642 = vsub.s32 %v6639, %v6641
    %v6643 = vrot.slane %v6614, %v6642
    %v6644 = vcombine.high %v6643, %v6643
    %v6646 = vunpack.c.l.s4 1983009808
    %v6647 = vunpack.c.0.s8 %v6646
    %v6648 = vlaneseq
    %v6649 = vshrl.u32 %v6648, 7
    %v6650 = vsub.s32 %v6647, %v6649
    %v6651 = vrot.slane %v6615, %v6650
    %v6652 = vcombine.high %v6651, %v6651
    %v6654 = vunpack.c.l.s4 1983009808
    %v6655 = vunpack.c.0.s8 %v6654
    %v6656 = vlaneseq
    %v6657 = vshrl.u32 %v6656, 7
    %v6658 = vsub.s32 %v6655, %v6657
    %v6659 = vrot.slane %v6616, %v6658
    %v6660 = vcombine.high %v6659, %v6659
    %v6662 = vunpack.c.l.s4 1983009808
    %v6663 = vunpack.c.0.s8 %v6662
    %v6664 = vlaneseq
    %v6665 = vshrl.u32 %v6664, 7
    %v6666 = vsub.s32 %v6663, %v6665
    %v6667 = vrot.slane %v6617, %v6666
    %v6668 = vcombine.high %v6667, %v6667
    %v6670 = vunpack.c.l.s4 1983009808
    %v6671 = vunpack.c.0.s8 %v6670
    %v6672 = vlaneseq
    %v6673 = vshrl.u32 %v6672, 7
    %v6674 = vsub.s32 %v6671, %v6673
    %v6675 = vrot.slane %v6618, %v6674
    %v6676 = vcombine.high %v6675, %v6675
    %v6678 = vunpack.c.l.s4 1983009808
    %v6679 = vunpack.c.0.s8 %v6678
    %v6680 = vlaneseq
    %v6681 = vshrl.u32 %v6680, 7
    %v6682 = vsub.s32 %v6679, %v6681
    %v6683 = vrot.slane %v6619, %v6682
    %v6684 = vcombine.high %v6683, %v6683
    %v6686 = vunpack.c.l.s4 1983009808
    %v6687 = vunpack.c.0.s8 %v6686
    %v6688 = vlaneseq
    %v6689 = vshrl.u32 %v6688, 7
    %v6690 = vsub.s32 %v6687, %v6689
    %v6691 = vrot.slane %v6620, %v6690
    %v6692 = vcombine.high %v6691, %v6691
    %v6694 = vshrl.u32 %v6635, 16
    %v6696 = vrot.slane %v6694, 6
    %v6697 = vshll.u32 %v6635, 16
    %v6699 = vrot.slane %v6697, 7
    %v6700 = vor.u32 %v6696, %v6699
    %v6701 = vrot.slane %v6700, 2
    %v6703 = vshll.u32 %v6636, 16
    %v6705 = vrot.slane %v6703, 7
    %v6706 = vsel %vm2318, %v6701, %v6705
    %v6708 = vshrl.u32 %v6643, 16
    %v6710 = vrot.slane %v6708, 6
    %v6711 = vshll.u32 %v6643, 16
    %v6713 = vrot.slane %v6711, 7
    %v6714 = vor.u32 %v6710, %v6713
    %v6715 = vrot.slane %v6714, 2
    %v6717 = vshll.u32 %v6644, 16
    %v6719 = vrot.slane %v6717, 7
    %v6720 = vsel %vm2318, %v6715, %v6719
    %v6722 = vshrl.u32 %v6651, 16
    %v6724 = vrot.slane %v6722, 6
    %v6725 = vshll.u32 %v6651, 16
    %v6727 = vrot.slane %v6725, 7
    %v6728 = vor.u32 %v6724, %v6727
    %v6729 = vrot.slane %v6728, 2
    %v6731 = vshll.u32 %v6652, 16
    %v6733 = vrot.slane %v6731, 7
    %v6734 = vsel %vm2318, %v6729, %v6733
    %v6736 = vshrl.u32 %v6659, 16
    %v6738 = vrot.slane %v6736, 6
    %v6739 = vshll.u32 %v6659, 16
    %v6741 = vrot.slane %v6739, 7
    %v6742 = vor.u32 %v6738, %v6741
    %v6743 = vrot.slane %v6742, 2
    %v6745 = vshll.u32 %v6660, 16
    %v6747 = vrot.slane %v6745, 7
    %v6748 = vsel %vm2318, %v6743, %v6747
    %v6750 = vshrl.u32 %v6667, 16
    %v6752 = vrot.slane %v6750, 6
    %v6753 = vshll.u32 %v6667, 16
    %v6755 = vrot.slane %v6753, 7
    %v6756 = vor.u32 %v6752, %v6755
    %v6757 = vrot.slane %v6756, 2
    %v6759 = vshll.u32 %v6668, 16
    %v6761 = vrot.slane %v6759, 7
    %v6762 = vsel %vm2318, %v6757, %v6761
    %v6764 = vshrl.u32 %v6675, 16
    %v6766 = vrot.slane %v6764, 6
    %v6767 = vshll.u32 %v6675, 16
    %v6769 = vrot.slane %v6767, 7
    %v6770 = vor.u32 %v6766, %v6769
    %v6771 = vrot.slane %v6770, 2
    %v6773 = vshll.u32 %v6676, 16
    %v6775 = vrot.slane %v6773, 7
    %v6776 = vsel %vm2318, %v6771, %v6775
    %v6778 = vshrl.u32 %v6683, 16
    %v6780 = vrot.slane %v6778, 6
    %v6781 = vshll.u32 %v6683, 16
    %v6783 = vrot.slane %v6781, 7
    %v6784 = vor.u32 %v6780, %v6783
    %v6785 = vrot.slane %v6784, 2
    %v6787 = vshll.u32 %v6684, 16
    %v6789 = vrot.slane %v6787, 7
    %v6790 = vsel %vm2318, %v6785, %v6789
    %v6792 = vshrl.u32 %v6691, 16
    %v6794 = vrot.slane %v6792, 6
    %v6795 = vshll.u32 %v6691, 16
    %v6797 = vrot.slane %v6795, 7
    %v6798 = vor.u32 %v6794, %v6797
    %v6799 = vrot.slane %v6798, 2
    %v6801 = vshll.u32 %v6692, 16
    %v6803 = vrot.slane %v6801, 7
    %v6804 = vsel %vm2318, %v6799, %v6803
    %s6805 = scalar_lea.vmem %s7, 448
    %v6806 = vld [vmem:[%s6805] sm:$0xf]
    %v6807 = vld [vmem:[%s6805 + $0x4] sm:$0xf]
    %v6808 = vld [vmem:[%s6805 + $0x8] sm:$0xf]
    %v6809 = vld [vmem:[%s6805 + $0xc] sm:$0xf]
    %v6810 = vld [vmem:[%s6805 + $0x10] sm:$0xf]
    %v6811 = vld [vmem:[%s6805 + $0x14] sm:$0xf]
    %v6812 = vld [vmem:[%s6805 + $0x18] sm:$0xf]
    %v6813 = vld [vmem:[%s6805 + $0x1c] sm:$0xf]
    %v6814 = vld [vmem:[%s6805 + $0x20] sm:$0xf]
    %v6815 = vld [vmem:[%s6805 + $0x24] sm:$0xf]
    %v6816 = vld [vmem:[%s6805 + $0x28] sm:$0xf]
    %v6817 = vld [vmem:[%s6805 + $0x2c] sm:$0xf]
    %v6818 = vld [vmem:[%s6805 + $0x30] sm:$0xf]
    %v6819 = vld [vmem:[%s6805 + $0x34] sm:$0xf]
    %v6820 = vld [vmem:[%s6805 + $0x38] sm:$0xf]
    %v6821 = vld [vmem:[%s6805 + $0x3c] sm:$0xf]
    %v6822 = vcombine.low %v6706, %v6720
    %v6823 = vcombine.low %v6734, %v6748
    %v6825 = vunpack.c.l.s4 1983009808
    %v6826 = vunpack.c.0.s8 %v6825
    %v6827 = vlaneseq
    %v6828 = vshrl.u32 %v6827, 7
    %v6829 = vsub.s32 %v6826, %v6828
    %v6830 = vrot.slane %v6822, %v6829
    %v6832 = vunpack.c.l.s4 1983009808
    %v6833 = vunpack.c.0.s8 %v6832
    %v6834 = vlaneseq
    %v6835 = vshrl.u32 %v6834, 7
    %v6836 = vsub.s32 %v6833, %v6835
    %v6837 = vrot.slane %v6823, %v6836
    %v6838 = vcombine.low %v6830, %v6837
    %v6839 = vcombine.low %v6762, %v6776
    %v6840 = vcombine.low %v6790, %v6804
    %v6842 = vunpack.c.l.s4 1983009808
    %v6843 = vunpack.c.0.s8 %v6842
    %v6844 = vlaneseq
    %v6845 = vshrl.u32 %v6844, 7
    %v6846 = vsub.s32 %v6843, %v6845
    %v6847 = vrot.slane %v6839, %v6846
    %v6849 = vunpack.c.l.s4 1983009808
    %v6850 = vunpack.c.0.s8 %v6849
    %v6851 = vlaneseq
    %v6852 = vshrl.u32 %v6851, 7
    %v6853 = vsub.s32 %v6850, %v6852
    %v6854 = vrot.slane %v6840, %v6853
    %v6855 = vcombine.low %v6847, %v6854
    %v6874 = vunpack.c.l.b16 %v6806
    %v6875 = vunpack.c.l.b16 %v6807
    %v6876 = vunpack.c.l.b16 %v6808
    %v6877 = vunpack.c.l.b16 %v6809
    %v6878 = vunpack.c.l.b16 %v6810
    %v6879 = vunpack.c.l.b16 %v6811
    %v6880 = vunpack.c.l.b16 %v6812
    %v6881 = vunpack.c.l.b16 %v6813
    %v6882 = vunpack.c.l.b16 %v6814
    %v6883 = vunpack.c.l.b16 %v6815
    %v6884 = vunpack.c.l.b16 %v6816
    %v6885 = vunpack.c.l.b16 %v6817
    %v6886 = vunpack.c.l.b16 %v6818
    %v6887 = vunpack.c.l.b16 %v6819
    %v6888 = vunpack.c.l.b16 %v6820
    %v6889 = vunpack.c.l.b16 %v6821
    %v6890 = vpack.c.b16 %v6875, %v6874
    %v6891 = vpack.c.b16 %v6877, %v6876
    %v6892 = vpack.c.b16 %v6879, %v6878
    %v6893 = vpack.c.b16 %v6881, %v6880
    %v6894 = vpack.c.b16 %v6883, %v6882
    %v6895 = vpack.c.b16 %v6885, %v6884
    %v6896 = vpack.c.b16 %v6887, %v6886
    %v6897 = vpack.c.b16 %v6889, %v6888
    %6906 = vmatprep.subr.bf16.mxu0 0
    %6907 = vmatpush1.bf16.msra.mxu0 %v6890
    %6908 = vmatprep.subr.bf16.mxu0 0
    %6909 = vmatpush1.bf16.msra.mxu0 %v6891
    %6910 = vmatprep.subr.bf16.mxu0 0
    %6911 = vmatpush1.bf16.msra.mxu0 %v6892
    %6912 = vmatprep.subr.bf16.mxu0 0
    %6913 = vmatpush1.bf16.msra.mxu0 %v6893
    %6914 = vmatprep.subr.bf16.mxu0 0
    %6915 = vmatpush1.bf16.msra.mxu0 %v6894
    %6916 = vmatprep.subr.bf16.mxu0 0
    %6917 = vmatpush1.bf16.msra.mxu0 %v6895
    %6918 = vmatprep.subr.bf16.mxu0 0
    %6919 = vmatpush1.bf16.msra.mxu0 %v6896
    %6920 = vmatprep.subr.bf16.mxu0 0
    %6921 = vmatpush1.bf16.msra.mxu0 %v6897
    %6922 = vmatprep.subr.bf16.mxu0 0
    %6923 = vmatpush1.bf16.msra.mxu0 0
    %6924 = vmatprep.subr.bf16.mxu0 0
    %6925 = vmatpush1.bf16.msra.mxu0 0
    %6926 = vmatprep.subr.bf16.mxu0 0
    %6927 = vmatpush1.bf16.msra.mxu0 0
    %6928 = vmatprep.subr.bf16.mxu0 0
    %6929 = vmatpush1.bf16.msra.mxu0 0
    %6930 = vmatprep.subr.bf16.mxu0 0
    %6931 = vmatpush1.bf16.msra.mxu0 0
    %6932 = vmatprep.subr.bf16.mxu0 0
    %6933 = vmatpush1.bf16.msra.mxu0 0
    %6934 = vmatprep.subr.bf16.mxu0 0
    %6935 = vmatpush1.bf16.msra.mxu0 0
    %6936 = vmatprep.subr.bf16.mxu0 0
    %6937 = vmatpush1.bf16.msra.mxu0 0
    %6938 = vmatprep.mubr.bf16.mxu0 0
    %6939 = vmatmul.mubr.bf16.gmra.mrb[0].mxu0 %v6838
    %v6940 = vpop.f32.mrb[0].mxu0
    %v6941 = vadd.f32 0.0, %v6940
    %v6942 = vpop.f32.mrb[0].mxu0
    %v6943 = vpop.f32.mrb[0].mxu0
    %v6944 = vadd.f32 0.0, %v6943
    %v6945 = vpop.f32.mrb[0].mxu0
    %6946 = vmatprep.mubr.bf16.mxu0 0
    %6947 = vmatmul.mubr.bf16.gmra.mrb[0].mxu0 %v6855
    %v6948 = vpop.f32.mrb[0].mxu0
    %v6949 = vadd.f32 0.0, %v6948
    %v6950 = vpop.f32.mrb[0].mxu0
    %v6951 = vpop.f32.mrb[0].mxu0
    %v6952 = vadd.f32 0.0, %v6951
    %v6953 = vpop.f32.mrb[0].mxu0
    %6954 = vdwg.mxu0
    %v6955 = vadd.f32 %v6609, %v6941
    %v6956 = vadd.f32 %v6610, %v6944
    %v6957 = vadd.f32 %v6611, %v6949
    %v6958 = vadd.f32 %v6612, %v6952
    %v6959 = vld [vmem:[%s3777] sm:$0x6]
    %v6960 = vld [vmem:[%s3777 + $0x4] sm:$0x6]
    %v6961 = vld [vmem:[%s3777 + $0x8] sm:$0x6]
    %v6962 = vld [vmem:[%s3777 + $0xc] sm:$0x6]
    %v6963 = vld [vmem:[%s3777 + $0x18] sm:$0x6]
    %v6964 = vld [vmem:[%s3777 + $0x1c] sm:$0x6]
    %v6965 = vld [vmem:[%s3777 + $0x20] sm:$0x6]
    %v6966 = vld [vmem:[%s3777 + $0x24] sm:$0x6]
    %v6976 = vunpack.c.l.s4 1983009808
    %v6977 = vunpack.c.0.s8 %v6976
    %v6978 = vlaneseq
    %v6979 = vshrl.u32 %v6978, 7
    %v6980 = vsub.s32 %v6977, %v6979
    %v6981 = vrot.slane %v6959, %v6980
    %v6982 = vcombine.high %v6981, %v6981
    %v6984 = vunpack.c.l.s4 1983009808
    %v6985 = vunpack.c.0.s8 %v6984
    %v6986 = vlaneseq
    %v6987 = vshrl.u32 %v6986, 7
    %v6988 = vsub.s32 %v6985, %v6987
    %v6989 = vrot.slane %v6960, %v6988
    %v6990 = vcombine.high %v6989, %v6989
    %v6992 = vunpack.c.l.s4 1983009808
    %v6993 = vunpack.c.0.s8 %v6992
    %v6994 = vlaneseq
    %v6995 = vshrl.u32 %v6994, 7
    %v6996 = vsub.s32 %v6993, %v6995
    %v6997 = vrot.slane %v6961, %v6996
    %v6998 = vcombine.high %v6997, %v6997
    %v7000 = vunpack.c.l.s4 1983009808
    %v7001 = vunpack.c.0.s8 %v7000
    %v7002 = vlaneseq
    %v7003 = vshrl.u32 %v7002, 7
    %v7004 = vsub.s32 %v7001, %v7003
    %v7005 = vrot.slane %v6962, %v7004
    %v7006 = vcombine.high %v7005, %v7005
    %v7008 = vunpack.c.l.s4 1983009808
    %v7009 = vunpack.c.0.s8 %v7008
    %v7010 = vlaneseq
    %v7011 = vshrl.u32 %v7010, 7
    %v7012 = vsub.s32 %v7009, %v7011
    %v7013 = vrot.slane %v6963, %v7012
    %v7014 = vcombine.high %v7013, %v7013
    %v7016 = vunpack.c.l.s4 1983009808
    %v7017 = vunpack.c.0.s8 %v7016
    %v7018 = vlaneseq
    %v7019 = vshrl.u32 %v7018, 7
    %v7020 = vsub.s32 %v7017, %v7019
    %v7021 = vrot.slane %v6964, %v7020
    %v7022 = vcombine.high %v7021, %v7021
    %v7024 = vunpack.c.l.s4 1983009808
    %v7025 = vunpack.c.0.s8 %v7024
    %v7026 = vlaneseq
    %v7027 = vshrl.u32 %v7026, 7
    %v7028 = vsub.s32 %v7025, %v7027
    %v7029 = vrot.slane %v6965, %v7028
    %v7030 = vcombine.high %v7029, %v7029
    %v7032 = vunpack.c.l.s4 1983009808
    %v7033 = vunpack.c.0.s8 %v7032
    %v7034 = vlaneseq
    %v7035 = vshrl.u32 %v7034, 7
    %v7036 = vsub.s32 %v7033, %v7035
    %v7037 = vrot.slane %v6966, %v7036
    %v7038 = vcombine.high %v7037, %v7037
    %v7039 = vrot.slane %v6981, 7
    %v7040 = vrot.slane %v7039, 2
    %v7041 = vrot.slane %v6982, 7
    %v7042 = vsel %vm2808, %v7040, %v7041
    %v7043 = vrot.slane %v6989, 7
    %v7044 = vrot.slane %v7043, 2
    %v7045 = vrot.slane %v6990, 7
    %v7046 = vsel %vm2808, %v7044, %v7045
    %v7047 = vrot.slane %v6997, 7
    %v7048 = vrot.slane %v7047, 2
    %v7049 = vrot.slane %v6998, 7
    %v7050 = vsel %vm2808, %v7048, %v7049
    %v7051 = vrot.slane %v7005, 7
    %v7052 = vrot.slane %v7051, 2
    %v7053 = vrot.slane %v7006, 7
    %v7054 = vsel %vm2808, %v7052, %v7053
    %v7055 = vrot.slane %v7013, 7
    %v7056 = vrot.slane %v7055, 2
    %v7057 = vrot.slane %v7014, 7
    %v7058 = vsel %vm2808, %v7056, %v7057
    %v7059 = vrot.slane %v7021, 7
    %v7060 = vrot.slane %v7059, 2
    %v7061 = vrot.slane %v7022, 7
    %v7062 = vsel %vm2808, %v7060, %v7061
    %v7063 = vrot.slane %v7029, 7
    %v7064 = vrot.slane %v7063, 2
    %v7065 = vrot.slane %v7030, 7
    %v7066 = vsel %vm2808, %v7064, %v7065
    %v7067 = vrot.slane %v7037, 7
    %v7068 = vrot.slane %v7067, 2
    %v7069 = vrot.slane %v7038, 7
    %v7070 = vsel %vm2808, %v7068, %v7069
    %s7071 = scalar_lea.vmem %s7, 512
    %v7072 = vld [vmem:[%s7071] sm:$0xf]
    %v7073 = vld [vmem:[%s7071 + $0x4] sm:$0xf]
    %v7074 = vld [vmem:[%s7071 + $0x8] sm:$0xf]
    %v7075 = vld [vmem:[%s7071 + $0xc] sm:$0xf]
    %v7076 = vld [vmem:[%s7071 + $0x10] sm:$0xf]
    %v7077 = vld [vmem:[%s7071 + $0x14] sm:$0xf]
    %v7078 = vld [vmem:[%s7071 + $0x18] sm:$0xf]
    %v7079 = vld [vmem:[%s7071 + $0x1c] sm:$0xf]
    %v7080 = vld [vmem:[%s7071 + $0x20] sm:$0xf]
    %v7081 = vld [vmem:[%s7071 + $0x24] sm:$0xf]
    %v7082 = vld [vmem:[%s7071 + $0x28] sm:$0xf]
    %v7083 = vld [vmem:[%s7071 + $0x2c] sm:$0xf]
    %v7084 = vld [vmem:[%s7071 + $0x30] sm:$0xf]
    %v7085 = vld [vmem:[%s7071 + $0x34] sm:$0xf]
    %v7086 = vld [vmem:[%s7071 + $0x38] sm:$0xf]
    %v7087 = vld [vmem:[%s7071 + $0x3c] sm:$0xf]
    %v7088 = vcombine.low %v7042, %v7046
    %v7089 = vcombine.low %v7050, %v7054
    %v7091 = vunpack.c.l.s4 1983009808
    %v7092 = vunpack.c.0.s8 %v7091
    %v7093 = vlaneseq
    %v7094 = vshrl.u32 %v7093, 7
    %v7095 = vsub.s32 %v7092, %v7094
    %v7096 = vrot.slane %v7088, %v7095
    %v7098 = vunpack.c.l.s4 1983009808
    %v7099 = vunpack.c.0.s8 %v7098
    %v7100 = vlaneseq
    %v7101 = vshrl.u32 %v7100, 7
    %v7102 = vsub.s32 %v7099, %v7101
    %v7103 = vrot.slane %v7089, %v7102
    %v7104 = vcombine.low %v7096, %v7103
    %v7105 = vcombine.low %v7058, %v7062
    %v7106 = vcombine.low %v7066, %v7070
    %v7108 = vunpack.c.l.s4 1983009808
    %v7109 = vunpack.c.0.s8 %v7108
    %v7110 = vlaneseq
    %v7111 = vshrl.u32 %v7110, 7
    %v7112 = vsub.s32 %v7109, %v7111
    %v7113 = vrot.slane %v7105, %v7112
    %v7115 = vunpack.c.l.s4 1983009808
    %v7116 = vunpack.c.0.s8 %v7115
    %v7117 = vlaneseq
    %v7118 = vshrl.u32 %v7117, 7
    %v7119 = vsub.s32 %v7116, %v7118
    %v7120 = vrot.slane %v7106, %v7119
    %v7121 = vcombine.low %v7113, %v7120
    %v7140 = vunpack.c.l.b16 %v7072
    %v7141 = vunpack.c.l.b16 %v7073
    %v7142 = vunpack.c.l.b16 %v7074
    %v7143 = vunpack.c.l.b16 %v7075
    %v7144 = vunpack.c.l.b16 %v7076
    %v7145 = vunpack.c.l.b16 %v7077
    %v7146 = vunpack.c.l.b16 %v7078
    %v7147 = vunpack.c.l.b16 %v7079
    %v7148 = vunpack.c.l.b16 %v7080
    %v7149 = vunpack.c.l.b16 %v7081
    %v7150 = vunpack.c.l.b16 %v7082
    %v7151 = vunpack.c.l.b16 %v7083
    %v7152 = vunpack.c.l.b16 %v7084
    %v7153 = vunpack.c.l.b16 %v7085
    %v7154 = vunpack.c.l.b16 %v7086
    %v7155 = vunpack.c.l.b16 %v7087
    %v7156 = vpack.c.b16 %v7141, %v7140
    %v7157 = vpack.c.b16 %v7143, %v7142
    %v7158 = vpack.c.b16 %v7145, %v7144
    %v7159 = vpack.c.b16 %v7147, %v7146
    %v7160 = vpack.c.b16 %v7149, %v7148
    %v7161 = vpack.c.b16 %v7151, %v7150
    %v7162 = vpack.c.b16 %v7153, %v7152
    %v7163 = vpack.c.b16 %v7155, %v7154
    %7172 = vmatprep.subr.bf16.mxu0 0
    %7173 = vmatpush1.bf16.msra.mxu0 %v7156
    %7174 = vmatprep.subr.bf16.mxu0 0
    %7175 = vmatpush1.bf16.msra.mxu0 %v7157
    %7176 = vmatprep.subr.bf16.mxu0 0
    %7177 = vmatpush1.bf16.msra.mxu0 %v7158
    %7178 = vmatprep.subr.bf16.mxu0 0
    %7179 = vmatpush1.bf16.msra.mxu0 %v7159
    %7180 = vmatprep.subr.bf16.mxu0 0
    %7181 = vmatpush1.bf16.msra.mxu0 %v7160
    %7182 = vmatprep.subr.bf16.mxu0 0
    %7183 = vmatpush1.bf16.msra.mxu0 %v7161
    %7184 = vmatprep.subr.bf16.mxu0 0
    %7185 = vmatpush1.bf16.msra.mxu0 %v7162
    %7186 = vmatprep.subr.bf16.mxu0 0
    %7187 = vmatpush1.bf16.msra.mxu0 %v7163
    %7188 = vmatprep.subr.bf16.mxu0 0
    %7189 = vmatpush1.bf16.msra.mxu0 0
    %7190 = vmatprep.subr.bf16.mxu0 0
    %7191 = vmatpush1.bf16.msra.mxu0 0
    %7192 = vmatprep.subr.bf16.mxu0 0
    %7193 = vmatpush1.bf16.msra.mxu0 0
    %7194 = vmatprep.subr.bf16.mxu0 0
    %7195 = vmatpush1.bf16.msra.mxu0 0
    %7196 = vmatprep.subr.bf16.mxu0 0
    %7197 = vmatpush1.bf16.msra.mxu0 0
    %7198 = vmatprep.subr.bf16.mxu0 0
    %7199 = vmatpush1.bf16.msra.mxu0 0
    %7200 = vmatprep.subr.bf16.mxu0 0
    %7201 = vmatpush1.bf16.msra.mxu0 0
    %7202 = vmatprep.subr.bf16.mxu0 0
    %7203 = vmatpush1.bf16.msra.mxu0 0
    %7204 = vmatprep.mubr.bf16.mxu0 0
    %7205 = vmatmul.mubr.bf16.gmra.mrb[0].mxu0 %v7104
    %v7206 = vpop.f32.mrb[0].mxu0
    %v7207 = vadd.f32 0.0, %v7206
    %v7208 = vpop.f32.mrb[0].mxu0
    %v7209 = vpop.f32.mrb[0].mxu0
    %v7210 = vadd.f32 0.0, %v7209
    %v7211 = vpop.f32.mrb[0].mxu0
    %7212 = vmatprep.mubr.bf16.mxu0 0
    %7213 = vmatmul.mubr.bf16.gmra.mrb[0].mxu0 %v7121
    %v7214 = vpop.f32.mrb[0].mxu0
    %v7215 = vadd.f32 0.0, %v7214
    %v7216 = vpop.f32.mrb[0].mxu0
    %v7217 = vpop.f32.mrb[0].mxu0
    %v7218 = vadd.f32 0.0, %v7217
    %v7219 = vpop.f32.mrb[0].mxu0
    %7220 = vdwg.mxu0
    %v7221 = vadd.f32 %v6955, %v7207
    %v7222 = vadd.f32 %v6956, %v7210
    %v7223 = vadd.f32 %v6957, %v7215
    %v7224 = vadd.f32 %v6958, %v7218
    %7225 = vmatprep.subr.mxu0 0.0
    %7226 = vmatpush1.msra.mxu0 %v7221
    %7227 = vmatprep.subr.mxu0 0.0
    %7228 = vmatpush1.msra.mxu0 %v7222
    %7229 = vmatprep.subr.mxu0 0.0
    %7230 = vmatpush1.msra.mxu0 %v7223
    %7231 = vmatprep.subr.mxu0 0.0
    %7232 = vmatpush1.msra.mxu0 %v7224
    %7233 = vmatprep.subr.mxu0 0.0
    %7234 = vmatpush1.msra.mxu0 0.0
    %7235 = vmatprep.subr.mxu0 0.0
    %7236 = vmatpush1.msra.mxu0 0.0
    %7237 = vmatprep.subr.mxu0 0.0
    %7238 = vmatpush1.msra.mxu0 0.0
    %7239 = vmatprep.subr.mxu0 0.0
    %7240 = vmatpush1.msra.mxu0 0.0
    %7241 = vmatprep.subr.mxu0 0.0
    %7242 = vmatpush1.msra.mxu0 0.0
    %7243 = vmatprep.subr.mxu0 0.0
    %7244 = vmatpush1.msra.mxu0 0.0
    %7245 = vmatprep.subr.mxu0 0.0
    %7246 = vmatpush1.msra.mxu0 0.0
    %7247 = vmatprep.subr.mxu0 0.0
    %7248 = vmatpush1.msra.mxu0 0.0
    %7249 = vmatprep.subr.mxu0 0.0
    %7250 = vmatpush1.msra.mxu0 0.0
    %7251 = vmatprep.subr.mxu0 0.0
    %7252 = vmatpush1.msra.mxu0 0.0
    %7253 = vmatprep.subr.mxu0 0.0
    %7254 = vmatpush1.msra.mxu0 0.0
    %7255 = vmatprep.subr.mxu0 0.0
    %7256 = vmatpush1.msra.mxu0 0.0
    %7257 = vmatprep.subr.mxu0 0.0
    %7258 = vmatpush1.msra.mxu0 0.0
    %7259 = vmatprep.subr.mxu0 0.0
    %7260 = vmatpush1.msra.mxu0 0.0
    %7261 = vmatprep.subr.mxu0 0.0
    %7262 = vmatpush1.msra.mxu0 0.0
    %7263 = vmatprep.subr.mxu0 0.0
    %7264 = vmatpush1.msra.mxu0 0.0
    %7265 = vmatprep.subr.mxu0 0.0
    %7266 = vmatpush1.msra.mxu0 0.0
    %7267 = vmatprep.subr.mxu0 0.0
    %7268 = vmatpush1.msra.mxu0 0.0
    %7269 = vmatprep.subr.mxu0 0.0
    %7270 = vmatpush1.msra.mxu0 0.0
    %7271 = vmatprep.subr.mxu0 0.0
    %7272 = vmatpush1.msra.mxu0 0.0
    %7273 = vmatprep.subr.mxu0 0.0
    %7274 = vmatpush1.msra.mxu0 0.0
    %7275 = vmatprep.subr.mxu0 0.0
    %7276 = vmatpush1.msra.mxu0 0.0
    %7277 = vmatprep.subr.mxu0 0.0
    %7278 = vmatpush1.msra.mxu0 0.0
    %7279 = vmatprep.subr.mxu0 0.0
    %7280 = vmatpush1.msra.mxu0 0.0
    %7281 = vmatprep.subr.mxu0 0.0
    %7282 = vmatpush1.msra.mxu0 0.0
    %7283 = vmatprep.subr.mxu0 0.0
    %7284 = vmatpush1.msra.mxu0 0.0
    %7285 = vmatprep.subr.mxu0 0.0
    %7286 = vmatpush1.msra.mxu0 0.0
    %7287 = vmatprep.subr.mxu0 0.0
    %7288 = vmatpush1.msra.mxu0 0.0
    %7289 = vmatprep.mubr.f32.mxu0 0.0
    %7290 = vmatmul.mubr.f32.gmra.mrb[0].mxu0 %v4562
    %v7291 = vpop.f32.mrb[0].mxu0
    %v7292 = vadd.f32 0.0, %v7291
    %v7293 = vpop.f32.mrb[0].mxu0
    %7294 = vdwg.mxu0
    %v7295 = vmul.f32 %v7221, %v7221
    %v7296 = vmul.f32 %v7222, %v7222
    %v7297 = vmul.f32 %v7223, %v7223
    %v7298 = vmul.f32 %v7224, %v7224
    %7299 = vmatprep.subr.mxu0 0.0
    %7300 = vmatpush1.msra.mxu0 %v7295
    %7301 = vmatprep.subr.mxu0 0.0
    %7302 = vmatpush1.msra.mxu0 %v7296
    %7303 = vmatprep.subr.mxu0 0.0
    %7304 = vmatpush1.msra.mxu0 %v7297
    %7305 = vmatprep.subr.mxu0 0.0
    %7306 = vmatpush1.msra.mxu0 %v7298
    %7307 = vmatprep.subr.mxu0 0.0
    %7308 = vmatpush1.msra.mxu0 0.0
    %7309 = vmatprep.subr.mxu0 0.0
    %7310 = vmatpush1.msra.mxu0 0.0
    %7311 = vmatprep.subr.mxu0 0.0
    %7312 = vmatpush1.msra.mxu0 0.0
    %7313 = vmatprep.subr.mxu0 0.0
    %7314 = vmatpush1.msra.mxu0 0.0
    %7315 = vmatprep.subr.mxu0 0.0
    %7316 = vmatpush1.msra.mxu0 0.0
    %7317 = vmatprep.subr.mxu0 0.0
    %7318 = vmatpush1.msra.mxu0 0.0
    %7319 = vmatprep.subr.mxu0 0.0
    %7320 = vmatpush1.msra.mxu0 0.0
    %7321 = vmatprep.subr.mxu0 0.0
    %7322 = vmatpush1.msra.mxu0 0.0
    %7323 = vmatprep.subr.mxu0 0.0
    %7324 = vmatpush1.msra.mxu0 0.0
    %7325 = vmatprep.subr.mxu0 0.0
    %7326 = vmatpush1.msra.mxu0 0.0
    %7327 = vmatprep.subr.mxu0 0.0
    %7328 = vmatpush1.msra.mxu0 0.0
    %7329 = vmatprep.subr.mxu0 0.0
    %7330 = vmatpush1.msra.mxu0 0.0
    %7331 = vmatprep.subr.mxu0 0.0
    %7332 = vmatpush1.msra.mxu0 0.0
    %7333 = vmatprep.subr.mxu0 0.0
    %7334 = vmatpush1.msra.mxu0 0.0
    %7335 = vmatprep.subr.mxu0 0.0
    %7336 = vmatpush1.msra.mxu0 0.0
    %7337 = vmatprep.subr.mxu0 0.0
    %7338 = vmatpush1.msra.mxu0 0.0
    %7339 = vmatprep.subr.mxu0 0.0
    %7340 = vmatpush1.msra.mxu0 0.0
    %7341 = vmatprep.subr.mxu0 0.0
    %7342 = vmatpush1.msra.mxu0 0.0
    %7343 = vmatprep.subr.mxu0 0.0
    %7344 = vmatpush1.msra.mxu0 0.0
    %7345 = vmatprep.subr.mxu0 0.0
    %7346 = vmatpush1.msra.mxu0 0.0
    %7347 = vmatprep.subr.mxu0 0.0
    %7348 = vmatpush1.msra.mxu0 0.0
    %7349 = vmatprep.subr.mxu0 0.0
    %7350 = vmatpush1.msra.mxu0 0.0
    %7351 = vmatprep.subr.mxu0 0.0
    %7352 = vmatpush1.msra.mxu0 0.0
    %7353 = vmatprep.subr.mxu0 0.0
    %7354 = vmatpush1.msra.mxu0 0.0
    %7355 = vmatprep.subr.mxu0 0.0
    %7356 = vmatpush1.msra.mxu0 0.0
    %7357 = vmatprep.subr.mxu0 0.0
    %7358 = vmatpush1.msra.mxu0 0.0
    %7359 = vmatprep.subr.mxu0 0.0
    %7360 = vmatpush1.msra.mxu0 0.0
    %7361 = vmatprep.subr.mxu0 0.0
    %7362 = vmatpush1.msra.mxu0 0.0
    %7363 = vmatprep.mubr.f32.mxu0 0.0
    %7364 = vmatmul.mubr.f32.gmra.mrb[0].mxu0 %v4562
    %v7365 = vpop.f32.mrb[0].mxu0
    %v7366 = vadd.f32 0.0, %v7365
    %v7367 = vpop.f32.mrb[0].mxu0
    %7368 = vdwg.mxu0
    %v7369 = vmul.f32 %v7292, 0.03125
    %v7370 = vmul.f32 %v7366, 0.03125
    %v7371 = vmul.f32 %v7369, %v7369
    %v7372 = vsub.f32 %v7370, %v7371
    %v7373 = vld [vmem:[%s8] sm:$0x1]
    %v7374 = vlaneseq
    %v7375 = vshrl.u32 %v7374, 7
    %v7376 = vsub.s32 0, %v7375
    %v7377 = vrot.slane %v7369, %v7376
    %v7378 = vsub.f32 %v7221, %v7377
    %v7379 = vsub.f32 %v7222, %v7377
    %v7380 = vsub.f32 %v7223, %v7377
    %v7381 = vsub.f32 %v7224, %v7377
    %v7382 = vadd.f32 %v7372, 1e-05
    %v7383 = vrsqrt.pop %v7382
    %v7384 = vlaneseq
    %v7385 = vshrl.u32 %v7384, 7
    %v7386 = vsub.s32 0, %v7385
    %v7387 = vrot.slane %v7383, %v7386
    %v7388 = vmul.f32 %v7378, %v7387
    %v7389 = vmul.f32 %v7379, %v7387
    %v7390 = vmul.f32 %v7380, %v7387
    %v7391 = vmul.f32 %v7381, %v7387
    %v7393 = vlaneseq
    %v7394 = vshrl.u32 %v7393, 7
    %v7395 = vsub.s32 0, %v7394
    %v7396 = vrot.slane %v7373, %v7395
    %v7398 = vmul.f32 %v7396, %v7388
    %v7399 = vmul.f32 %v7396, %v7389
    %v7400 = vmul.f32 %v7396, %v7390
    %v7401 = vmul.f32 %v7396, %v7391
    %v7402 = vld [vmem:[%s9] sm:$0x1]
    %v7404 = vlaneseq
    %v7405 = vshrl.u32 %v7404, 7
    %v7406 = vsub.s32 0, %v7405
    %v7407 = vrot.slane %v7402, %v7406
    %v7409 = vadd.f32 %v7398, %v7407
    %v7410 = vadd.f32 %v7399, %v7407
    %v7411 = vadd.f32 %v7400, %v7407
    %v7412 = vadd.f32 %v7401, %v7407
    %v7445 = vlaneseq
    %v7446 = vshrl.u32 %v7445, 7
    %v7447 = vsub.s32 0, %v7446
    %v7448 = vrot.slane %v1901, %v7447
    %v7449 = vlaneseq
    %v7450 = vshrl.u32 %v7449, 7
    %v7451 = vsub.s32 0, %v7450
    %v7452 = vrot.slane %v1902, %v7451
    %v7453 = vlaneseq
    %v7454 = vshrl.u32 %v7453, 7
    %v7455 = vsub.s32 0, %v7454
    %v7456 = vrot.slane %v1903, %v7455
    %v7457 = vlaneseq
    %v7458 = vshrl.u32 %v7457, 7
    %v7459 = vsub.s32 0, %v7458
    %v7460 = vrot.slane %v1904, %v7459
    %v7461 = vlaneseq
    %v7462 = vshrl.u32 %v7461, 7
    %v7463 = vsub.s32 0, %v7462
    %v7464 = vrot.slane %v1905, %v7463
    %v7465 = vlaneseq
    %v7466 = vshrl.u32 %v7465, 7
    %v7467 = vsub.s32 0, %v7466
    %v7468 = vrot.slane %v1906, %v7467
    %v7469 = vlaneseq
    %v7470 = vshrl.u32 %v7469, 7
    %v7471 = vsub.s32 0, %v7470
    %v7472 = vrot.slane %v1907, %v7471
    %v7473 = vlaneseq
    %v7474 = vshrl.u32 %v7473, 7
    %v7475 = vsub.s32 0, %v7474
    %v7476 = vrot.slane %v1908, %v7475
    %v7477 = vlaneseq
    %v7478 = vshrl.u32 %v7477, 7
    %v7479 = vsub.s32 0, %v7478
    %v7480 = vrot.slane %v1909, %v7479
    %v7481 = vlaneseq
    %v7482 = vshrl.u32 %v7481, 7
    %v7483 = vsub.s32 0, %v7482
    %v7484 = vrot.slane %v1910, %v7483
    %v7485 = vlaneseq
    %v7486 = vshrl.u32 %v7485, 7
    %v7487 = vsub.s32 0, %v7486
    %v7488 = vrot.slane %v1911, %v7487
    %v7489 = vlaneseq
    %v7490 = vshrl.u32 %v7489, 7
    %v7491 = vsub.s32 0, %v7490
    %v7492 = vrot.slane %v1912, %v7491
    %v7493 = vlaneseq
    %v7494 = vshrl.u32 %v7493, 7
    %v7495 = vsub.s32 0, %v7494
    %v7496 = vrot.slane %v1913, %v7495
    %v7497 = vlaneseq
    %v7498 = vshrl.u32 %v7497, 7
    %v7499 = vsub.s32 0, %v7498
    %v7500 = vrot.slane %v1914, %v7499
    %v7501 = vlaneseq
    %v7502 = vshrl.u32 %v7501, 7
    %v7503 = vsub.s32 0, %v7502
    %v7504 = vrot.slane %v1915, %v7503
    %v7505 = vlaneseq
    %v7506 = vshrl.u32 %v7505, 7
    %v7507 = vsub.s32 0, %v7506
    %v7508 = vrot.slane %v1916, %v7507
    %v7509 = vlaneseq
    %v7510 = vshrl.u32 %v7509, 7
    %v7511 = vsub.s32 0, %v7510
    %v7512 = vrot.slane %v1917, %v7511
    %v7513 = vlaneseq
    %v7514 = vshrl.u32 %v7513, 7
    %v7515 = vsub.s32 0, %v7514
    %v7516 = vrot.slane %v1918, %v7515
    %v7517 = vlaneseq
    %v7518 = vshrl.u32 %v7517, 7
    %v7519 = vsub.s32 0, %v7518
    %v7520 = vrot.slane %v1919, %v7519
    %v7521 = vlaneseq
    %v7522 = vshrl.u32 %v7521, 7
    %v7523 = vsub.s32 0, %v7522
    %v7524 = vrot.slane %v1920, %v7523
    %v7525 = vlaneseq
    %v7526 = vshrl.u32 %v7525, 7
    %v7527 = vsub.s32 0, %v7526
    %v7528 = vrot.slane %v1921, %v7527
    %v7529 = vlaneseq
    %v7530 = vshrl.u32 %v7529, 7
    %v7531 = vsub.s32 0, %v7530
    %v7532 = vrot.slane %v1922, %v7531
    %v7533 = vlaneseq
    %v7534 = vshrl.u32 %v7533, 7
    %v7535 = vsub.s32 0, %v7534
    %v7536 = vrot.slane %v1923, %v7535
    %v7537 = vlaneseq
    %v7538 = vshrl.u32 %v7537, 7
    %v7539 = vsub.s32 0, %v7538
    %v7540 = vrot.slane %v1924, %v7539
    %v7541 = vlaneseq
    %v7542 = vshrl.u32 %v7541, 7
    %v7543 = vsub.s32 0, %v7542
    %v7544 = vrot.slane %v1925, %v7543
    %v7545 = vlaneseq
    %v7546 = vshrl.u32 %v7545, 7
    %v7547 = vsub.s32 0, %v7546
    %v7548 = vrot.slane %v1926, %v7547
    %v7549 = vlaneseq
    %v7550 = vshrl.u32 %v7549, 7
    %v7551 = vsub.s32 0, %v7550
    %v7552 = vrot.slane %v1927, %v7551
    %v7553 = vlaneseq
    %v7554 = vshrl.u32 %v7553, 7
    %v7555 = vsub.s32 0, %v7554
    %v7556 = vrot.slane %v1928, %v7555
    %v7557 = vlaneseq
    %v7558 = vshrl.u32 %v7557, 7
    %v7559 = vsub.s32 0, %v7558
    %v7560 = vrot.slane %v1929, %v7559
    %v7561 = vlaneseq
    %v7562 = vshrl.u32 %v7561, 7
    %v7563 = vsub.s32 0, %v7562
    %v7564 = vrot.slane %v1930, %v7563
    %v7565 = vlaneseq
    %v7566 = vshrl.u32 %v7565, 7
    %v7567 = vsub.s32 0, %v7566
    %v7568 = vrot.slane %v1931, %v7567
    %v7569 = vlaneseq
    %v7570 = vshrl.u32 %v7569, 7
    %v7571 = vsub.s32 0, %v7570
    %v7572 = vrot.slane %v1932, %v7571
    %vm7573 = vcmask 1041409
    %v7574 = vsel %vm7573, %v7452, %v7448
    %v7575 = vsel %vm2107, %v7456, %v7574
    %v7576 = vsel %vm2110, %v7460, %v7575
    %v7577 = vsel %vm2113, %v7464, %v7576
    %vm7578 = vcmask 1045509
    %v7579 = vsel %vm7578, %v7468, %v7577
    %vm7580 = vcmask 1046534
    %v7581 = vsel %vm7580, %v7472, %v7579
    %vm7582 = vcmask 1047559
    %v7583 = vsel %vm7582, %v7476, %v7581
    %v7584 = vsel %vm7573, %v7484, %v7480
    %v7585 = vsel %vm2107, %v7488, %v7584
    %v7586 = vsel %vm2110, %v7492, %v7585
    %v7587 = vsel %vm2113, %v7496, %v7586
    %v7588 = vsel %vm7578, %v7500, %v7587
    %v7589 = vsel %vm7580, %v7504, %v7588
    %v7590 = vsel %vm7582, %v7508, %v7589
    %v7591 = vsel %vm7573, %v7516, %v7512
    %v7592 = vsel %vm2107, %v7520, %v7591
    %v7593 = vsel %vm2110, %v7524, %v7592
    %v7594 = vsel %vm2113, %v7528, %v7593
    %v7595 = vsel %vm7578, %v7532, %v7594
    %v7596 = vsel %vm7580, %v7536, %v7595
    %v7597 = vsel %vm7582, %v7540, %v7596
    %v7598 = vsel %vm7573, %v7548, %v7544
    %v7599 = vsel %vm2107, %v7552, %v7598
    %v7600 = vsel %vm2110, %v7556, %v7599
    %v7601 = vsel %vm2113, %v7560, %v7600
    %v7602 = vsel %vm7578, %v7564, %v7601
    %v7603 = vsel %vm7580, %v7568, %v7602
    %v7604 = vsel %vm7582, %v7572, %v7603
    %v7609 = vadd.f32 %v7409, %v7583
    %v7610 = vadd.f32 %v7410, %v7590
    %v7611 = vadd.f32 %v7411, %v7597
    %v7612 = vadd.f32 %v7412, %v7604
    %v7613 = vmax.f32 %v7609, 0.0
    %v7614 = vmax.f32 %v7610, 0.0
    %v7615 = vmax.f32 %v7611, 0.0
    %v7616 = vmax.f32 %v7612, 0.0
    %v7617 = vlaneseq
    %v7618 = vshrl.u32 %v7617, 7
    %v7619 = vlaneseq
    %v7620 = vand.u32 %v7619, 127
    %v7621 = vmul.u32 %v7618, 16
    %vm7622 = vcmp.ge.s32.totalorder %v7620, %v7621
    %v7623 = vadd.s32 %v7618, 1
    %v7624 = vmul.u32 %v7623, 16
    %vm7625 = vcmp.lt.s32.totalorder %v7620, %v7624
    %vm7626 = vmand %vm7622, %vm7625
    %v7627 = vsel %vm7626, 0.0625, 0.0
    %v7629 = vsel %vm4560, %v7627, 0
    %7631 = vmatprep.subr.mxu0 0.0
    %7632 = vmatpush1.msra.mxu0 %v7613
    %7633 = vmatprep.subr.mxu0 0.0
    %7634 = vmatpush1.msra.mxu0 %v7614
    %7635 = vmatprep.subr.mxu0 0.0
    %7636 = vmatpush1.msra.mxu0 %v7615
    %7637 = vmatprep.subr.mxu0 0.0
    %7638 = vmatpush1.msra.mxu0 %v7616
    %7639 = vmatprep.subr.mxu0 0.0
    %7640 = vmatpush1.msra.mxu0 0.0
    %7641 = vmatprep.subr.mxu0 0.0
    %7642 = vmatpush1.msra.mxu0 0.0
    %7643 = vmatprep.subr.mxu0 0.0
    %7644 = vmatpush1.msra.mxu0 0.0
    %7645 = vmatprep.subr.mxu0 0.0
    %7646 = vmatpush1.msra.mxu0 0.0
    %7647 = vmatprep.subr.mxu0 0.0
    %7648 = vmatpush1.msra.mxu0 0.0
    %7649 = vmatprep.subr.mxu0 0.0
    %7650 = vmatpush1.msra.mxu0 0.0
    %7651 = vmatprep.subr.mxu0 0.0
    %7652 = vmatpush1.msra.mxu0 0.0
    %7653 = vmatprep.subr.mxu0 0.0
    %7654 = vmatpush1.msra.mxu0 0.0
    %7655 = vmatprep.subr.mxu0 0.0
    %7656 = vmatpush1.msra.mxu0 0.0
    %7657 = vmatprep.subr.mxu0 0.0
    %7658 = vmatpush1.msra.mxu0 0.0
    %7659 = vmatprep.subr.mxu0 0.0
    %7660 = vmatpush1.msra.mxu0 0.0
    %7661 = vmatprep.subr.mxu0 0.0
    %7662 = vmatpush1.msra.mxu0 0.0
    %7663 = vmatprep.subr.mxu0 0.0
    %7664 = vmatpush1.msra.mxu0 0.0
    %7665 = vmatprep.subr.mxu0 0.0
    %7666 = vmatpush1.msra.mxu0 0.0
    %7667 = vmatprep.subr.mxu0 0.0
    %7668 = vmatpush1.msra.mxu0 0.0
    %7669 = vmatprep.subr.mxu0 0.0
    %7670 = vmatpush1.msra.mxu0 0.0
    %7671 = vmatprep.subr.mxu0 0.0
    %7672 = vmatpush1.msra.mxu0 0.0
    %7673 = vmatprep.subr.mxu0 0.0
    %7674 = vmatpush1.msra.mxu0 0.0
    %7675 = vmatprep.subr.mxu0 0.0
    %7676 = vmatpush1.msra.mxu0 0.0
    %7677 = vmatprep.subr.mxu0 0.0
    %7678 = vmatpush1.msra.mxu0 0.0
    %7679 = vmatprep.subr.mxu0 0.0
    %7680 = vmatpush1.msra.mxu0 0.0
    %7681 = vmatprep.subr.mxu0 0.0
    %7682 = vmatpush1.msra.mxu0 0.0
    %7683 = vmatprep.subr.mxu0 0.0
    %7684 = vmatpush1.msra.mxu0 0.0
    %7685 = vmatprep.subr.mxu0 0.0
    %7686 = vmatpush1.msra.mxu0 0.0
    %7687 = vmatprep.subr.mxu0 0.0
    %7688 = vmatpush1.msra.mxu0 0.0
    %7689 = vmatprep.subr.mxu0 0.0
    %7690 = vmatpush1.msra.mxu0 0.0
    %7691 = vmatprep.subr.mxu0 0.0
    %7692 = vmatpush1.msra.mxu0 0.0
    %7693 = vmatprep.subr.mxu0 0.0
    %7694 = vmatpush1.msra.mxu0 0.0
    %7695 = vmatprep.mubr.f32.mxu0 0.0
    %7696 = vmatmul.mubr.f32.gmra.mrb[0].mxu0 %v7629
    %v7697 = vpop.f32.mrb[0].mxu0
    %v7698 = vadd.f32 0.0, %v7697
    %v7699 = vpop.f32.mrb[0].mxu0
    %7700 = vdwg.mxu0
    %v7701 = vld [vmem:[%s10] sm:$0xff]
    %v7702 = vld [vmem:[%s10 + $0x8] sm:$0xff]
    %v7703 = vld [vmem:[%s10 + $0x10] sm:$0xff]
    %v7704 = vld [vmem:[%s10 + $0x18] sm:$0xff]
    %v7705 = vld [vmem:[%s10 + $0x20] sm:$0xff]
    %v7706 = vld [vmem:[%s10 + $0x28] sm:$0xff]
    %v7707 = vld [vmem:[%s10 + $0x30] sm:$0xff]
    %v7708 = vld [vmem:[%s10 + $0x38] sm:$0xff]
    %v7709 = vld [vmem:[%s10 + $0x40] sm:$0xff]
    %v7710 = vld [vmem:[%s10 + $0x48] sm:$0xff]
    %v7711 = vld [vmem:[%s10 + $0x50] sm:$0xff]
    %v7712 = vld [vmem:[%s10 + $0x58] sm:$0xff]
    %v7713 = vld [vmem:[%s10 + $0x60] sm:$0xff]
    %v7714 = vld [vmem:[%s10 + $0x68] sm:$0xff]
    %v7715 = vld [vmem:[%s10 + $0x70] sm:$0xff]
    %v7716 = vld [vmem:[%s10 + $0x78] sm:$0xff]
    %v7717 = vld [vmem:[%s11] sm:$0x1]
    %v7719 = vlaneseq
    %v7720 = vshrl.u32 %v7719, 7
    %v7721 = vsub.s32 0, %v7720
    %v7722 = vrot.slane %v7717, %v7721
    %7724 = vmatprep.subr.mxu0 0.0
    %7725 = vmatpush1.msra.mxu0 %v7701
    %7726 = vmatprep.subr.mxu0 0.0
    %7727 = vmatpush1.msra.mxu0 %v7702
    %7728 = vmatprep.subr.mxu0 0.0
    %7729 = vmatpush1.msra.mxu0 %v7703
    %7730 = vmatprep.subr.mxu0 0.0
    %7731 = vmatpush1.msra.mxu0 %v7704
    %7732 = vmatprep.subr.mxu0 0.0
    %7733 = vmatpush1.msra.mxu0 %v7705
    %7734 = vmatprep.subr.mxu0 0.0
    %7735 = vmatpush1.msra.mxu0 %v7706
    %7736 = vmatprep.subr.mxu0 0.0
    %7737 = vmatpush1.msra.mxu0 %v7707
    %7738 = vmatprep.subr.mxu0 0.0
    %7739 = vmatpush1.msra.mxu0 %v7708
    %7740 = vmatprep.subr.mxu0 0.0
    %7741 = vmatpush1.msra.mxu0 %v7709
    %7742 = vmatprep.subr.mxu0 0.0
    %7743 = vmatpush1.msra.mxu0 %v7710
    %7744 = vmatprep.subr.mxu0 0.0
    %7745 = vmatpush1.msra.mxu0 %v7711
    %7746 = vmatprep.subr.mxu0 0.0
    %7747 = vmatpush1.msra.mxu0 %v7712
    %7748 = vmatprep.subr.mxu0 0.0
    %7749 = vmatpush1.msra.mxu0 %v7713
    %7750 = vmatprep.subr.mxu0 0.0
    %7751 = vmatpush1.msra.mxu0 %v7714
    %7752 = vmatprep.subr.mxu0 0.0
    %7753 = vmatpush1.msra.mxu0 %v7715
    %7754 = vmatprep.subr.mxu0 0.0
    %7755 = vmatpush1.msra.mxu0 %v7716
    %7756 = vmatprep.subr.mxu0 0.0
    %7757 = vmatpush1.msra.mxu0 0.0
    %7758 = vmatprep.subr.mxu0 0.0
    %7759 = vmatpush1.msra.mxu0 0.0
    %7760 = vmatprep.subr.mxu0 0.0
    %7761 = vmatpush1.msra.mxu0 0.0
    %7762 = vmatprep.subr.mxu0 0.0
    %7763 = vmatpush1.msra.mxu0 0.0
    %7764 = vmatprep.subr.mxu0 0.0
    %7765 = vmatpush1.msra.mxu0 0.0
    %7766 = vmatprep.subr.mxu0 0.0
    %7767 = vmatpush1.msra.mxu0 0.0
    %7768 = vmatprep.subr.mxu0 0.0
    %7769 = vmatpush1.msra.mxu0 0.0
    %7770 = vmatprep.subr.mxu0 0.0
    %7771 = vmatpush1.msra.mxu0 0.0
    %7772 = vmatprep.subr.mxu0 0.0
    %7773 = vmatpush1.msra.mxu0 0.0
    %7774 = vmatprep.subr.mxu0 0.0
    %7775 = vmatpush1.msra.mxu0 0.0
    %7776 = vmatprep.subr.mxu0 0.0
    %7777 = vmatpush1.msra.mxu0 0.0
    %7778 = vmatprep.subr.mxu0 0.0
    %7779 = vmatpush1.msra.mxu0 0.0
    %7780 = vmatprep.subr.mxu0 0.0
    %7781 = vmatpush1.msra.mxu0 0.0
    %7782 = vmatprep.subr.mxu0 0.0
    %7783 = vmatpush1.msra.mxu0 0.0
    %7784 = vmatprep.subr.mxu0 0.0
    %7785 = vmatpush1.msra.mxu0 0.0
    %7786 = vmatprep.subr.mxu0 0.0
    %7787 = vmatpush1.msra.mxu0 0.0
    %7788 = vmatprep.mubr.f32.mxu0 0.0
    %7789 = vmatmul.mubr.f32.gmra.mrb[0].mxu0 %v7698
    %v7790 = vpop.f32.mrb[0].mxu0
    %v7791 = vadd.f32 %v7722, %v7790
    %v7792 = vpop.f32.mrb[0].mxu0
    %7793 = vdwg.mxu0
    %7794 = vst [vmem:[#allocation3] sm:$0x3] %v7791
    // Predicated region
    $region50: #{resnet_forward.1} parent=1 // pred_check
      _
    $region51: #{resnet_forward.1} parent=1 // pred_check_branch
      %7796 = sbr.rel (0) target = $region53
    $region52: #{resnet_forward.1} parent=1 // pred_region
      %s7798 = ssub.s32 32, 32
      %7799 = vsyncadd [#allocation4], %s7798
      %s7801 = sshll.u32 [#allocation3], 4
      %s7802 = int_to_ptr.vmem [resolvable:$true] %s7801
      %7804 = dma.vmem_to_hbm [thread:$0]  %s7802, 32, %s12, [#allocation4]
    $region53: #{resnet_forward.1} parent=1 // pred_fallthru
      _
    // Predicated region
    $region54: #{resnet_forward.1} parent=1 // pred_check
      _
    $region55: #{resnet_forward.1} parent=1 // pred_check_branch
      %7806 = sbr.rel (0) target = $region57
    $region56: #{resnet_forward.1} parent=1 // pred_region
      %7807 = dma.done [#allocation4], 32
    $region57: #{resnet_forward.1} parent=1 // pred_fallthru
      _
    %7808 = vsyncpa [#allocation4], 1

</llo_original>
